<compile_context>
chip_gen: v6e
topology: v6e:2x2x1
jax: 0.10.0
libtpu: 0.0.40
codegen_flags: <defaults>
</compile_context>

<pallas_src>
import functools

import numpy as np
import jax
import jax.numpy as jnp
from jax.experimental import pallas as pl
from jax.experimental.pallas import tpu as pltpu

# -------------------- scaled-down Wide-ResNet50-V2 config -------------------
BASE = 8            # scaled from 64
WIDTH_MUL = 2       # "wide" factor (width_per_group = 64*2 in the real model)
EXPANSION = 4       # bottleneck expansion
BLOCKS = (2, 2, 2)  # scaled from (3, 4, 6)
EXTRACT_LAYERS = ("layer1", "layer2", "layer3")

LANE = 128                 # channel padding target (lane-dense outputs)
MAX_TILE_ROWS = 512        # M-tile cap for the streamed GEMM kernel
ACT_DTYPE = jnp.bfloat16   # activation / weight dtype on the MXU


def _round_up(x, m):
    return (x + m - 1) // m * m


def _cparams(sem):
    return pltpu.CompilerParams(dimension_semantics=sem,
                                vmem_limit_bytes=32 * 1024 * 1024)


# ------------------------------ Pallas kernels ------------------------------
def _gemm_taps_kernel(x_ref, w_ref, b_ref, o_ref, acc_ref, *, relu):
    """acc += x[t] @ w[t]; epilogue (+bias, ReLU) on the last tap."""
    t = pl.program_id(1)

    @pl.when(t == 0)
    def _init():
        acc_ref[...] = jnp.zeros_like(acc_ref)

    acc_ref[...] += jnp.dot(x_ref[0], w_ref[0], preferred_element_type=jnp.float32)

    @pl.when(t == pl.num_programs(1) - 1)
    def _fin():
        y = acc_ref[...] + b_ref[...]
        if relu:
            y = jnp.maximum(y, 0.0)
        o_ref[...] = y.astype(o_ref.dtype)


def _gemm_taps_res_kernel(x_ref, w_ref, b_ref, r_ref, o_ref, acc_ref, *, relu):
    """Same as above, with a fused residual add before the ReLU."""
    t = pl.program_id(1)

    @pl.when(t == 0)
    def _init():
        acc_ref[...] = jnp.zeros_like(acc_ref)

    acc_ref[...] += jnp.dot(x_ref[0], w_ref[0], preferred_element_type=jnp.float32)

    @pl.when(t == pl.num_programs(1) - 1)
    def _fin():
        y = acc_ref[...] + b_ref[...] + r_ref[...].astype(jnp.float32)
        if relu:
            y = jnp.maximum(y, 0.0)
        o_ref[...] = y.astype(o_ref.dtype)


def _conv_flat_kernel(x_ref, w_ref, b_ref, o_ref, acc_ref, *, kw, wp, tm, relu):
    """Stride-1 KxK conv on a VMEM-resident flattened padded image.

    Output rows are indexed on the extended (Ho x Wp) grid, so every conv tap
    (ki, kj) is a *constant-offset* contiguous window of the flat input:
    no HBM im2col, the image is DMA'd into VMEM once per batch element.
    """
    t = pl.program_id(2)   # tap index (reduction axis)
    m = pl.program_id(1)   # output row-tile

    @pl.when(t == 0)
    def _init():
        acc_ref[...] = jnp.zeros_like(acc_ref)

    ki = t // kw
    kj = t - ki * kw
    start = m * tm + ki * wp + kj
    x = x_ref[0, pl.ds(start, tm), :]                     # (tm, Cin)
    acc_ref[...] += jnp.dot(x, w_ref[0], preferred_element_type=jnp.float32)

    @pl.when(t == pl.num_programs(2) - 1)
    def _fin():
        y = acc_ref[...] + b_ref[...]
        if relu:
            y = jnp.maximum(y, 0.0)
        o_ref[0] = y.astype(o_ref.dtype)


def _maxpool_kernel(x_ref, o_ref):
    """9-step running max over pooling taps (taps = trailing reduction axis)."""
    t = pl.program_id(1)

    @pl.when(t == 0)
    def _first():
        o_ref[...] = x_ref[0]

    @pl.when(t > 0)
    def _rest():
        o_ref[...] = jnp.maximum(o_ref[...], x_ref[0])


# ------------------------------ kernel wrappers ------------------------------
def gemm_taps(x_stack, w_taps, bias, residual=None, *, relu):
    """sum_t x_stack[t] @ w_taps[t] + bias (+ residual), optional ReLU.

    x_stack: (T, M, K) bf16, w_taps: (T, K, Co) bf16, bias: (1, Co) f32.
    Grid: (M tiles [parallel], T taps [arbitrary/reduction]).
    """
    T, M, K = x_stack.shape
    Co = w_taps.shape[2]
    tm = M if M <= MAX_TILE_ROWS else MAX_TILE_ROWS

    in_specs = [
        pl.BlockSpec((1, tm, K), lambda m, t: (t, m, 0)),
        pl.BlockSpec((1, K, Co), lambda m, t: (t, 0, 0)),
        pl.BlockSpec((1, Co), lambda m, t: (0, 0)),
    ]
    args = [x_stack, w_taps, bias]
    if residual is None:
        kernel = functools.partial(_gemm_taps_kernel, relu=relu)
    else:
        kernel = functools.partial(_gemm_taps_res_kernel, relu=relu)
        in_specs.append(pl.BlockSpec((tm, Co), lambda m, t: (m, 0)))
        args.append(residual)

    flops = 2 * T * M * K * Co
    bytes_acc = (x_stack.size * x_stack.dtype.itemsize
                 + w_taps.size * w_taps.dtype.itemsize
                 + bias.size * 4 + M * Co * 2
                 + (0 if residual is None
                    else residual.size * residual.dtype.itemsize))

    return pl.pallas_call(
        kernel,
        out_shape=jax.ShapeDtypeStruct((M, Co), ACT_DTYPE),
        grid=(pl.cdiv(M, tm), T),
        in_specs=in_specs,
        out_specs=pl.BlockSpec((tm, Co), lambda m, t: (m, 0)),
        scratch_shapes=[pltpu.VMEM((tm, Co), jnp.float32)],
        compiler_params=_cparams(("parallel", "arbitrary")),
        cost_estimate=pl.CostEstimate(flops=int(flops), transcendentals=0,
                                      bytes_accessed=int(bytes_acc)),
    )(*args)


def conv_s1_resident(x, w_taps, bias, *, kh, kw, relu):
    """Stride-1 'same' KxK conv, no HBM im2col.

    x: (N, H, W, C) bf16 (C lane-padded), w_taps: (kh*kw, C, Co) bf16.
    The spatially-padded image is flattened to (Hp*Wp + kw-1, C) and stays
    resident in VMEM; the kernel computes an extended (Ho x Wp) output whose
    junk columns are sliced off afterwards.
    """
    n, h, wd, c = x.shape
    ph, pw = (kh - 1) // 2, (kw - 1) // 2
    hp, wpad = h + 2 * ph, wd + 2 * pw
    ho, wo = h, wd
    co = w_taps.shape[2]

    xp = jnp.pad(x, ((0, 0), (ph, ph), (pw, pw), (0, 0)))
    flat = xp.reshape(n, hp * wpad, c)
    flat = jnp.pad(flat, ((0, 0), (0, kw - 1), (0, 0)))    # slack for tap offsets
    lp = hp * wpad + kw - 1
    m_ext = ho * wpad                                      # extended rows / image

    # pick the largest row tile (multiple of the image row width) that keeps the
    # M tile sublane-aligned and modest in VMEM
    toh = ho
    for cand in range(ho, 0, -1):
        if ho % cand == 0 and (cand * wpad) % 8 == 0 and cand * wpad <= 2048:
            toh = cand
            break
    tm = toh * wpad

    kernel = functools.partial(_conv_flat_kernel, kw=kw, wp=wpad, tm=tm, relu=relu)
    flops = 2 * n * m_ext * kh * kw * c * co
    bytes_acc = (flat.size * flat.dtype.itemsize
                 + w_taps.size * w_taps.dtype.itemsize
                 + bias.size * 4 + n * m_ext * co * 2)

    out = pl.pallas_call(
        kernel,
        out_shape=jax.ShapeDtypeStruct((n, m_ext, co), ACT_DTYPE),
        grid=(n, m_ext // tm, kh * kw),
        in_specs=[
            pl.BlockSpec((1, lp, c), lambda b, m, t: (b, 0, 0)),
            pl.BlockSpec((1, c, co), lambda b, m, t: (t, 0, 0)),
            pl.BlockSpec((1, co), lambda b, m, t: (0, 0)),
        ],
        out_specs=pl.BlockSpec((1, tm, co), lambda b, m, t: (b, m, 0)),
        scratch_shapes=[pltpu.VMEM((tm, co), jnp.float32)],
        compiler_params=_cparams(("parallel", "parallel", "arbitrary")),
        cost_estimate=pl.CostEstimate(flops=int(flops), transcendentals=0,
                                      bytes_accessed=int(bytes_acc)),
    )(flat, w_taps, bias)

    return out.reshape(n, ho, wpad, co)[:, :, :wo, :]      # drop junk columns


def conv_spatial_taps(x, w_taps, bias, *, kh, kw, stride, padding, relu):
    """KxK conv via a tap-stacked reduction GEMM (used for the few stride-2
    spatial convs, and as a fallback path for stride-1)."""
    n, h, wd, c = x.shape
    xp = jnp.pad(x, ((0, 0), (padding, padding), (padding, padding), (0, 0)))
    ho = (h + 2 * padding - kh) // stride + 1
    wo = (wd + 2 * padding - kw) // stride + 1
    taps = [xp[:, i:i + stride * ho:stride, j:j + stride * wo:stride, :]
            for i in range(kh) for j in range(kw)]
    stack = jnp.stack(taps, 0).reshape(kh * kw, n * ho * wo, c)
    out = gemm_taps(stack, w_taps, bias, relu=relu)
    return out.reshape(n, ho, wo, -1)


def conv_1x1(x, w_taps, bias, residual=None, *, stride=1, relu):
    """1x1 conv (+ folded BN + optional residual + ReLU) as a plain tiled GEMM."""
    if stride != 1:
        x = x[:, ::stride, ::stride, :]
    n, h, wd, c = x.shape
    co = w_taps.shape[2]
    x2 = x.reshape(1, n * h * wd, c)
    r2 = None if residual is None else residual.reshape(n * h * wd, co)
    out = gemm_taps(x2, w_taps, bias, r2, relu=relu)
    return out.reshape(n, h, wd, co)


def conv_stem(x, w_gemm, bias):
    """7x7 / stride-2 / pad-3 stem conv on the 3-channel input.

    Uses a small im2col (K = 7*7*3 padded to 256) since the input has only 3
    channels; all other spatial convs avoid HBM im2col.
    """
    n, h, wd, c = x.shape
    kh = kw = 7
    stride, padding = 2, 3
    xp = jnp.pad(x, ((0, 0), (padding, padding), (padding, padding), (0, 0)))
    ho = (h + 2 * padding - kh) // stride + 1
    wo = (wd + 2 * padding - kw) // stride + 1
    cols = [xp[:, i:i + stride * ho:stride, j:j + stride * wo:stride, :]
            for i in range(kh) for j in range(kw)]
    patches = jnp.concatenate(cols, -1).reshape(n * ho * wo, kh * kw * c)
    kpad = w_gemm.shape[1]
    patches = jnp.pad(patches, ((0, 0), (0, kpad - patches.shape[1])))
    patches = patches.astype(ACT_DTYPE)[None]              # (1, M, Kp)
    out = gemm_taps(patches, w_gemm, bias, relu=True)
    return out.reshape(n, ho, wo, -1)


def maxpool_3x3_s2_p1(x):
    """MaxPool2d(kernel_size=3, stride=2, padding=1) in NHWC (tiled, 9-tap
    reduction grid axis instead of a single whole-array program)."""
    n, h, w, c = x.shape
    big_neg = -1e30
    xp = jnp.pad(x, ((0, 0), (1, 1), (1, 1), (0, 0)), constant_values=big_neg)
    ho = (h + 2 - 3) // 2 + 1
    wo = (w + 2 - 3) // 2 + 1
    views = [xp[:, i:i + 2 * ho:2, j:j + 2 * wo:2, :]
             for i in range(3) for j in range(3)]
    stack = jnp.stack(views, 0).reshape(9, n * ho * wo, c)
    m = n * ho * wo
    tm = m if m <= MAX_TILE_ROWS else MAX_TILE_ROWS
    out = pl.pallas_call(
        _maxpool_kernel,
        out_shape=jax.ShapeDtypeStruct((m, c), x.dtype),
        grid=(pl.cdiv(m, tm), 9),
        in_specs=[pl.BlockSpec((1, tm, c), lambda i, t: (t, i, 0))],
        out_specs=pl.BlockSpec((tm, c), lambda i, t: (i, 0)),
        compiler_params=_cparams(("parallel", "arbitrary")),
    )(stack)
    return out.reshape(n, ho, wo, c)


# ------------------------------- parameters ---------------------------------
def _make_conv(key, kh, kw, cin, cout):
    fan_in = kh * kw * cin
    return (jax.random.normal(key, (kh, kw, cin, cout), jnp.float32)
            / np.sqrt(fan_in)).astype(jnp.float32)


def _make_bn(key, c):
    # eval-mode BatchNorm folded into (scale, bias)
    k1, k2 = jax.random.split(key)
    scale = 1.0 + 0.1 * jax.random.normal(k1, (c,), jnp.float32)
    bias = 0.05 * jax.random.normal(k2, (c,), jnp.float32)
    return scale, bias


def _pack_conv(w, bn):
    """Fold the BN scale into the weights, zero-pad channels to the lane width,
    lay taps out as a leading reduction axis and cast to bf16."""
    scale, bias = bn
    kh, kw, cin, cout = w.shape
    cin_p, cout_p = _round_up(cin, LANE), _round_up(cout, LANE)
    wf = w * scale[None, None, None, :]
    wp = jnp.zeros((kh, kw, cin_p, cout_p), jnp.float32).at[:, :, :cin, :cout].set(wf)
    w_taps = wp.reshape(kh * kw, cin_p, cout_p).astype(ACT_DTYPE)
    bp = jnp.zeros((1, cout_p), jnp.float32).at[0, :cout].set(bias)
    return w_taps, bp


def _pack_stem(w, bn):
    scale, bias = bn
    kh, kw, cin, cout = w.shape
    wf = (w * scale[None, None, None, :]).reshape(kh * kw * cin, cout)
    kp = _round_up(kh * kw * cin, LANE)
    wg = jnp.zeros((1, kp, LANE), jnp.float32).at[0, :kh * kw * cin, :cout].set(wf)
    bp = jnp.zeros((1, LANE), jnp.float32).at[0, :cout].set(bias)
    return wg.astype(ACT_DTYPE), bp


def _make_bottleneck(key, cin, width, cout, stride):
    ks = jax.random.split(key, 8)
    p = dict(
        conv1=_pack_conv(_make_conv(ks[0], 1, 1, cin, width), _make_bn(ks[1], width)),
        conv2=_pack_conv(_make_conv(ks[2], 3, 3, width, width), _make_bn(ks[3], width)),
        conv3=_pack_conv(_make_conv(ks[4], 1, 1, width, cout), _make_bn(ks[5], cout)),
        stride=stride,
    )
    if stride != 1 or cin != cout:
        p["down"] = _pack_conv(_make_conv(ks[6], 1, 1, cin, cout), _make_bn(ks[7], cout))
    return p


def build_params(key):
    it = iter(jax.random.split(key, 2 + sum(BLOCKS)))
    params = {"stem": _pack_stem(_make_conv(next(it), 7, 7, 3, BASE),
                                 _make_bn(next(it), BASE))}
    cin = BASE
    cfg = [
        ("layer1", BASE * WIDTH_MUL,     BASE * EXPANSION,     1, BLOCKS[0]),
        ("layer2", BASE * 2 * WIDTH_MUL, BASE * 2 * EXPANSION, 2, BLOCKS[1]),
        ("layer3", BASE * 4 * WIDTH_MUL, BASE * 4 * EXPANSION, 2, BLOCKS[2]),
    ]
    out_channels = {}
    for name, width, cout, stride, nblocks in cfg:
        blocks = []
        for b in range(nblocks):
            s = stride if b == 0 else 1
            blocks.append(_make_bottleneck(next(it), cin, width, cout, s))
            cin = cout
        params[name] = blocks
        out_channels[name] = cout
    return params, out_channels


# ------------------------------ model forward -------------------------------
def bottleneck(x, p, use_resident):
    stride = p["stride"]
    out = conv_1x1(x, *p["conv1"], relu=True)
    w2, b2 = p["conv2"]
    if stride == 1 and use_resident:
        out = conv_s1_resident(out, w2, b2, kh=3, kw=3, relu=True)
    else:
        out = conv_spatial_taps(out, w2, b2, kh=3, kw=3, stride=stride,
                                padding=1, relu=True)
    if "down" in p:
        identity = conv_1x1(x, *p["down"], stride=stride, relu=False)
    else:
        identity = x
    # residual add + final ReLU fused into the last 1x1 conv's epilogue
    return conv_1x1(out, *p["conv3"], residual=identity, relu=True)


def extract_features(params, x_nchw, use_resident):
    x = jnp.transpose(x_nchw, (0, 2, 3, 1)).astype(jnp.float32)   # NCHW -> NHWC
    x = conv_stem(x, *params["stem"])
    x = maxpool_3x3_s2_p1(x)
    feats = {}
    for name in EXTRACT_LAYERS:
        for blk in params[name]:
            x = bottleneck(x, blk, use_resident)
        feats[name] = x            # NHWC, channels lane-padded to 128
    return feats


def _extractor_spatial(hw):
    """Static spatial-size arithmetic of the extractor (no device probe)."""
    def conv_out(s, k, st, p):
        return (s + 2 * p - k) // st + 1
    s = conv_out(hw, 7, 2, 3)      # stem conv
    s = conv_out(s, 3, 2, 1)       # maxpool
    sizes = {}
    for name, st in (("layer1", 1), ("layer2", 2), ("layer3", 2)):
        s = conv_out(s, 3, st, 1)
        sizes[name] = s
    return sizes


def compute_inter_rate(probe_hw=224):
    # mirrors _set_interpolate (224x224 probe) without running the backbone
    sizes = _extractor_spatial(probe_hw)
    inter = max(sizes[name] for name in EXTRACT_LAYERS)
    return np.array([inter / probe_hw, inter / probe_hw], dtype=np.float64)


def nearest_resize(x_nhwc, out_h, out_w):
    # F.interpolate(..., mode='nearest'): idx = floor(i * in/out)
    _, h, w, _ = x_nhwc.shape
    if out_h % h == 0 and out_w % w == 0:
        # integer up-scale factor -> consecutive repeat (no gather)
        rh, rw = out_h // h, out_w // w
        if rh > 1:
            x_nhwc = jnp.repeat(x_nhwc, rh, axis=1)
        if rw > 1:
            x_nhwc = jnp.repeat(x_nhwc, rw, axis=2)
        return x_nhwc
    hi = np.floor(np.arange(out_h) * (h / out_h)).astype(np.int32)
    wi = np.floor(np.arange(out_w) * (w / out_w)).astype(np.int32)
    return x_nhwc[:, hi][:, :, wi]


def embed(params, out_channels, x_nchw, inter_rate, use_resident):
    input_size = np.array(x_nchw.shape[-2:])
    feat_size = tuple(int(v) for v in (inter_rate * input_size).astype(np.int32))
    feats = extract_features(params, x_nchw, use_resident)
    feats_list = []
    for name in EXTRACT_LAYERS:
        f = feats[name][..., :out_channels[name]]          # drop lane padding
        feats_list.append(nearest_resize(f, feat_size[0], feat_size[1]))
    cat = jnp.concatenate(feats_list, axis=-1)             # channel concat (NHWC)
    return jnp.transpose(cat, (0, 3, 1, 2)).astype(jnp.float32)   # back to NCHW


def make_forward(params, out_channels, inter_rate, use_resident):
    embed_fn = jax.jit(
        lambda x: embed(params, out_channels, x, inter_rate, use_resident))

    def forward(x1, x2, x3):
        # TODO(synk): the reference forward returns undefined (residual_map,
        # bboxes) and blocks on input(); we return the three embeddings instead.
        return embed_fn(x1), embed_fn(x2), embed_fn(x3)

    return forward


def _probe_resident_conv():
    """Verify the resident-image conv (dynamic in-kernel slices) lowers on this
    backend; otherwise route stride-1 3x3 convs through the tap-stack GEMM."""
    try:
        x = jnp.zeros((1, 4, 4, LANE), ACT_DTYPE)
        w = jnp.zeros((9, LANE, LANE), ACT_DTYPE)
        b = jnp.zeros((1, LANE), jnp.float32)
        jax.block_until_ready(conv_s1_resident(x, w, b, kh=3, kw=3, relu=True))
        return True
    except Exception:
        return False


# ---------------------------------- main -------------------------------------
if __name__ == "__main__":
    key = jax.random.PRNGKey(0)
    pkey, k1, k2, k3 = jax.random.split(key, 4)
    params, out_channels = build_params(pkey)

    H = W = 32                                   # small stand-in for 224x224
    inter_rate = compute_inter_rate(224)         # -> [0.25, 0.25]
    use_resident = _probe_resident_conv()

    x1 = jax.random.normal(k1, (2, 3, H, W), jnp.float32)
    x2 = jax.random.normal(k2, (2, 3, H, W), jnp.float32)
    x3 = jax.random.normal(k3, (2, 3, H, W), jnp.float32)

    forward = make_forward(params, out_channels, inter_rate, use_resident)
    f1, f2, f3 = forward(x1, x2, x3)
    jax.block_until_ready((f1, f2, f3))

    expect_c = (BASE + BASE * 2 + BASE * 4) * EXPANSION    # layer1+2+3 channels
    assert f1.shape == (2, expect_c, H // 4, W // 4), f1.shape
    assert f2.shape == f1.shape and f3.shape == f1.shape
    assert np.all(np.isfinite(np.asarray(f1)))
    print("KERNEL_OK")
</pallas_src>

<mosaic_0001>
module attributes {stable_mosaic.version = 11 : i64} {
  func.func @_gemm_taps_kernel(%arg0: i32, %arg1: i32, %arg2: memref<1x512x256xbf16, #tpu.memory_space<vmem>>, %arg3: memref<1x256x128xbf16, #tpu.memory_space<vmem>>, %arg4: memref<1x128xf32, #tpu.memory_space<vmem>>, %arg5: memref<512x128xbf16, #tpu.memory_space<vmem>>, %arg6: memref<512x128xf32, #tpu.memory_space<vmem>>) attributes {dimension_semantics = [#tpu.dimension_semantics<parallel>, #tpu.dimension_semantics<arbitrary>], iteration_bounds = array<i64: 1, 1>, scalar_prefetch = 0 : i64, scratch_operands = 1 : i64, tpu.core_type = #tpu.core_type<tc>, window_params = [{transform_indices = @transform_0, window_bounds = array<i64: 1, 512, 256>}, {transform_indices = @transform_1, window_bounds = array<i64: 1, 256, 128>}, {pipeline_mode = #tpu.pipeline_mode<synchronous>, transform_indices = @transform_2, window_bounds = array<i64: 1, 128>}, {transform_indices = @transform_3, window_bounds = array<i64: 512, 128>}]} {
    %c0_i32 = arith.constant 0 : i32
    %0 = arith.cmpi eq, %arg1, %c0_i32 : i32
    %1 = arith.extui %0 : i1 to i32
    %c0_i32_0 = arith.constant 0 : i32
    %2 = arith.cmpi ne, %1, %c0_i32_0 : i32
    scf.if %2 {
      %cst_12 = arith.constant 0.000000e+00 : f32
      %14 = vector.broadcast %cst_12 : f32 to vector<512x128xf32>
      %c0_13 = arith.constant 0 : index
      %c0_14 = arith.constant 0 : index
      %15 = vector.load %arg6[%c0_13, %c0_14] : memref<512x128xf32, #tpu.memory_space<vmem>>, vector<512x128xf32>
      tpu.vector_store %arg6[%c0_13, %c0_14], %14 {strides = array<i32>} : memref<512x128xf32, #tpu.memory_space<vmem>>, vector<512x128xf32>,
    } else {
    }
    %c0 = arith.constant 0 : index
    %c0_1 = arith.constant 0 : index
    %3 = vector.load %arg6[%c0, %c0_1] : memref<512x128xf32, #tpu.memory_space<vmem>>, vector<512x128xf32>
    %c0_2 = arith.constant 0 : index
    %c0_3 = arith.constant 0 : index
    %c0_4 = arith.constant 0 : index
    %4 = vector.load %arg2[%c0_2, %c0_3, %c0_4] : memref<1x512x256xbf16, #tpu.memory_space<vmem>>, vector<1x512x256xbf16>
    %5 = vector.shape_cast %4 : vector<1x512x256xbf16> to vector<512x256xbf16>
    %c0_5 = arith.constant 0 : index
    %c0_6 = arith.constant 0 : index
    %c0_7 = arith.constant 0 : index
    %6 = vector.load %arg3[%c0_5, %c0_6, %c0_7] : memref<1x256x128xbf16, #tpu.memory_space<vmem>>, vector<1x256x128xbf16>
    %7 = vector.shape_cast %6 : vector<1x256x128xbf16> to vector<256x128xbf16>
    %cst = arith.constant dense<0.000000e+00> : vector<512x128xf32>
    %8 = tpu.matmul %5, %7, %cst {dimension_numbers = #tpu.dot_dimension_numbers<[1], [0], [0], [1], [0, 0, 1, 1], [], []>} : vector<512x256xbf16>, vector<256x128xbf16>, vector<512x128xf32> -> vector<512x128xf32>
    %9 = arith.addf %3, %8 : vector<512x128xf32>
    %c0_8 = arith.constant 0 : index
    %c0_9 = arith.constant 0 : index
    %10 = vector.load %arg6[%c0_8, %c0_9] : memref<512x128xf32, #tpu.memory_space<vmem>>, vector<512x128xf32>
    tpu.vector_store %arg6[%c0_8, %c0_9], %9 {strides = array<i32>} : memref<512x128xf32, #tpu.memory_space<vmem>>, vector<512x128xf32>,
    %c0_i32_10 = arith.constant 0 : i32
    %11 = arith.cmpi eq, %arg1, %c0_i32_10 : i32
    %12 = arith.extui %11 : i1 to i32
    %c0_i32_11 = arith.constant 0 : i32
    %13 = arith.cmpi ne, %12, %c0_i32_11 : i32
    scf.if %13 {
      %c0_12 = arith.constant 0 : index
      %c0_13 = arith.constant 0 : index
      %14 = vector.load %arg6[%c0_12, %c0_13] : memref<512x128xf32, #tpu.memory_space<vmem>>, vector<512x128xf32>
      %c0_14 = arith.constant 0 : index
      %c0_15 = arith.constant 0 : index
      %15 = vector.load %arg4[%c0_14, %c0_15] : memref<1x128xf32, #tpu.memory_space<vmem>>, vector<1x128xf32>
      %16 = vector.broadcast %15 : vector<1x128xf32> to vector<512x128xf32>
      %17 = arith.addf %14, %16 : vector<512x128xf32>
      %cst_16 = arith.constant 0.000000e+00 : f32
      %18 = vector.broadcast %cst_16 : f32 to vector<512x128xf32>
      %19 = arith.maximumf %17, %18 : vector<512x128xf32>
      %20 = arith.truncf %19 : vector<512x128xf32> to vector<512x128xbf16>
      %c0_17 = arith.constant 0 : index
      %c0_18 = arith.constant 0 : index
      %21 = vector.load %arg5[%c0_17, %c0_18] : memref<512x128xbf16, #tpu.memory_space<vmem>>, vector<512x128xbf16>
      tpu.vector_store %arg5[%c0_17, %c0_18], %20 {strides = array<i32>} : memref<512x128xbf16, #tpu.memory_space<vmem>>, vector<512x128xbf16>,
    } else {
    }
    return
  }
  func.func @transform_0(%arg0: i32, %arg1: i32) -> (i32, i32, i32) {
    %c0_i32 = arith.constant 0 : i32
    %c0_i32_0 = arith.constant 0 : i32
    return %arg1, %arg0, %c0_i32 : i32, i32, i32
  }
  func.func @transform_1(%arg0: i32, %arg1: i32) -> (i32, i32, i32) {
    %c0_i32 = arith.constant 0 : i32
    %c0_i32_0 = arith.constant 0 : i32
    %c0_i32_1 = arith.constant 0 : i32
    return %arg1, %c0_i32, %c0_i32_0 : i32, i32, i32
  }
  func.func @transform_2(%arg0: i32, %arg1: i32) -> (i32, i32) {
    %c0_i32 = arith.constant 0 : i32
    %c0_i32_0 = arith.constant 0 : i32
    %c0_i32_1 = arith.constant 0 : i32
    return %c0_i32, %c0_i32_0 : i32, i32
  }
  func.func @transform_3(%arg0: i32, %arg1: i32) -> (i32, i32) {
    %c0_i32 = arith.constant 0 : i32
    %c0_i32_0 = arith.constant 0 : i32
    return %arg0, %c0_i32 : i32, i32
  }
}

module attributes {stable_mosaic.version = 11 : i64} {
  func.func @_gemm_taps_kernel(%arg0: i32, %arg1: i32, %arg2: memref<1x128x128xbf16, #tpu.memory_space<vmem>>, %arg3: memref<1x128x128xbf16, #tpu.memory_space<vmem>>, %arg4: memref<1x128xf32, #tpu.memory_space<vmem>>, %arg5: memref<128x128xbf16, #tpu.memory_space<vmem>>, %arg6: memref<128x128xf32, #tpu.memory_space<vmem>>) attributes {dimension_semantics = [#tpu.dimension_semantics<parallel>, #tpu.dimension_semantics<arbitrary>], iteration_bounds = array<i64: 1, 1>, scalar_prefetch = 0 : i64, scratch_operands = 1 : i64, tpu.core_type = #tpu.core_type<tc>, window_params = [{transform_indices = @transform_0, window_bounds = array<i64: 1, 128, 128>}, {transform_indices = @transform_1, window_bounds = array<i64: 1, 128, 128>}, {pipeline_mode = #tpu.pipeline_mode<synchronous>, transform_indices = @transform_2, window_bounds = array<i64: 1, 128>}, {transform_indices = @transform_3, window_bounds = array<i64: 128, 128>}]} {
    %c0_i32 = arith.constant 0 : i32
    %0 = arith.cmpi eq, %arg1, %c0_i32 : i32
    %1 = arith.extui %0 : i1 to i32
    %c0_i32_0 = arith.constant 0 : i32
    %2 = arith.cmpi ne, %1, %c0_i32_0 : i32
    scf.if %2 {
      %cst_12 = arith.constant 0.000000e+00 : f32
      %14 = vector.broadcast %cst_12 : f32 to vector<128x128xf32>
      %c0_13 = arith.constant 0 : index
      %c0_14 = arith.constant 0 : index
      %15 = vector.load %arg6[%c0_13, %c0_14] : memref<128x128xf32, #tpu.memory_space<vmem>>, vector<128x128xf32>
      tpu.vector_store %arg6[%c0_13, %c0_14], %14 {strides = array<i32>} : memref<128x128xf32, #tpu.memory_space<vmem>>, vector<128x128xf32>,
    } else {
    }
    %c0 = arith.constant 0 : index
    %c0_1 = arith.constant 0 : index
    %3 = vector.load %arg6[%c0, %c0_1] : memref<128x128xf32, #tpu.memory_space<vmem>>, vector<128x128xf32>
    %c0_2 = arith.constant 0 : index
    %c0_3 = arith.constant 0 : index
    %c0_4 = arith.constant 0 : index
    %4 = vector.load %arg2[%c0_2, %c0_3, %c0_4] : memref<1x128x128xbf16, #tpu.memory_space<vmem>>, vector<1x128x128xbf16>
    %5 = vector.shape_cast %4 : vector<1x128x128xbf16> to vector<128x128xbf16>
    %c0_5 = arith.constant 0 : index
    %c0_6 = arith.constant 0 : index
    %c0_7 = arith.constant 0 : index
    %6 = vector.load %arg3[%c0_5, %c0_6, %c0_7] : memref<1x128x128xbf16, #tpu.memory_space<vmem>>, vector<1x128x128xbf16>
    %7 = vector.shape_cast %6 : vector<1x128x128xbf16> to vector<128x128xbf16>
    %cst = arith.constant dense<0.000000e+00> : vector<128x128xf32>
    %8 = tpu.matmul %5, %7, %cst {dimension_numbers = #tpu.dot_dimension_numbers<[1], [0], [0], [1], [0, 0, 1, 1], [], []>} : vector<128x128xbf16>, vector<128x128xbf16>, vector<128x128xf32> -> vector<128x128xf32>
    %9 = arith.addf %3, %8 : vector<128x128xf32>
    %c0_8 = arith.constant 0 : index
    %c0_9 = arith.constant 0 : index
    %10 = vector.load %arg6[%c0_8, %c0_9] : memref<128x128xf32, #tpu.memory_space<vmem>>, vector<128x128xf32>
    tpu.vector_store %arg6[%c0_8, %c0_9], %9 {strides = array<i32>} : memref<128x128xf32, #tpu.memory_space<vmem>>, vector<128x128xf32>,
    %c0_i32_10 = arith.constant 0 : i32
    %11 = arith.cmpi eq, %arg1, %c0_i32_10 : i32
    %12 = arith.extui %11 : i1 to i32
    %c0_i32_11 = arith.constant 0 : i32
    %13 = arith.cmpi ne, %12, %c0_i32_11 : i32
    scf.if %13 {
      %c0_12 = arith.constant 0 : index
      %c0_13 = arith.constant 0 : index
      %14 = vector.load %arg6[%c0_12, %c0_13] : memref<128x128xf32, #tpu.memory_space<vmem>>, vector<128x128xf32>
      %c0_14 = arith.constant 0 : index
      %c0_15 = arith.constant 0 : index
      %15 = vector.load %arg4[%c0_14, %c0_15] : memref<1x128xf32, #tpu.memory_space<vmem>>, vector<1x128xf32>
      %16 = vector.broadcast %15 : vector<1x128xf32> to vector<128x128xf32>
      %17 = arith.addf %14, %16 : vector<128x128xf32>
      %cst_16 = arith.constant 0.000000e+00 : f32
      %18 = vector.broadcast %cst_16 : f32 to vector<128x128xf32>
      %19 = arith.maximumf %17, %18 : vector<128x128xf32>
      %20 = arith.truncf %19 : vector<128x128xf32> to vector<128x128xbf16>
      %c0_17 = arith.constant 0 : index
      %c0_18 = arith.constant 0 : index
      %21 = vector.load %arg5[%c0_17, %c0_18] : memref<128x128xbf16, #tpu.memory_space<vmem>>, vector<128x128xbf16>
      tpu.vector_store %arg5[%c0_17, %c0_18], %20 {strides = array<i32>} : memref<128x128xbf16, #tpu.memory_space<vmem>>, vector<128x128xbf16>,
    } else {
    }
    return
  }
  func.func @transform_0(%arg0: i32, %arg1: i32) -> (i32, i32, i32) {
    %c0_i32 = arith.constant 0 : i32
    %c0_i32_0 = arith.constant 0 : i32
    return %arg1, %arg0, %c0_i32 : i32, i32, i32
  }
  func.func @transform_1(%arg0: i32, %arg1: i32) -> (i32, i32, i32) {
    %c0_i32 = arith.constant 0 : i32
    %c0_i32_0 = arith.constant 0 : i32
    %c0_i32_1 = arith.constant 0 : i32
    return %arg1, %c0_i32, %c0_i32_0 : i32, i32, i32
  }
  func.func @transform_2(%arg0: i32, %arg1: i32) -> (i32, i32) {
    %c0_i32 = arith.constant 0 : i32
    %c0_i32_0 = arith.constant 0 : i32
    %c0_i32_1 = arith.constant 0 : i32
    return %c0_i32, %c0_i32_0 : i32, i32
  }
  func.func @transform_3(%arg0: i32, %arg1: i32) -> (i32, i32) {
    %c0_i32 = arith.constant 0 : i32
    %c0_i32_0 = arith.constant 0 : i32
    return %arg0, %c0_i32 : i32, i32
  }
}

module attributes {stable_mosaic.version = 11 : i64} {
  func.func @_gemm_taps_kernel(%arg0: i32, %arg1: i32, %arg2: memref<1x128x128xbf16, #tpu.memory_space<vmem>>, %arg3: memref<1x128x128xbf16, #tpu.memory_space<vmem>>, %arg4: memref<1x128xf32, #tpu.memory_space<vmem>>, %arg5: memref<128x128xbf16, #tpu.memory_space<vmem>>, %arg6: memref<128x128xf32, #tpu.memory_space<vmem>>) attributes {dimension_semantics = [#tpu.dimension_semantics<parallel>, #tpu.dimension_semantics<arbitrary>], iteration_bounds = array<i64: 1, 1>, scalar_prefetch = 0 : i64, scratch_operands = 1 : i64, tpu.core_type = #tpu.core_type<tc>, window_params = [{transform_indices = @transform_0, window_bounds = array<i64: 1, 128, 128>}, {transform_indices = @transform_1, window_bounds = array<i64: 1, 128, 128>}, {pipeline_mode = #tpu.pipeline_mode<synchronous>, transform_indices = @transform_2, window_bounds = array<i64: 1, 128>}, {transform_indices = @transform_3, window_bounds = array<i64: 128, 128>}]} {
    %c0_i32 = arith.constant 0 : i32
    %0 = arith.cmpi eq, %arg1, %c0_i32 : i32
    %1 = arith.extui %0 : i1 to i32
    %c0_i32_0 = arith.constant 0 : i32
    %2 = arith.cmpi ne, %1, %c0_i32_0 : i32
    scf.if %2 {
      %cst_12 = arith.constant 0.000000e+00 : f32
      %14 = vector.broadcast %cst_12 : f32 to vector<128x128xf32>
      %c0_13 = arith.constant 0 : index
      %c0_14 = arith.constant 0 : index
      %15 = vector.load %arg6[%c0_13, %c0_14] : memref<128x128xf32, #tpu.memory_space<vmem>>, vector<128x128xf32>
      tpu.vector_store %arg6[%c0_13, %c0_14], %14 {strides = array<i32>} : memref<128x128xf32, #tpu.memory_space<vmem>>, vector<128x128xf32>,
    } else {
    }
    %c0 = arith.constant 0 : index
    %c0_1 = arith.constant 0 : index
    %3 = vector.load %arg6[%c0, %c0_1] : memref<128x128xf32, #tpu.memory_space<vmem>>, vector<128x128xf32>
    %c0_2 = arith.constant 0 : index
    %c0_3 = arith.constant 0 : index
    %c0_4 = arith.constant 0 : index
    %4 = vector.load %arg2[%c0_2, %c0_3, %c0_4] : memref<1x128x128xbf16, #tpu.memory_space<vmem>>, vector<1x128x128xbf16>
    %5 = vector.shape_cast %4 : vector<1x128x128xbf16> to vector<128x128xbf16>
    %c0_5 = arith.constant 0 : index
    %c0_6 = arith.constant 0 : index
    %c0_7 = arith.constant 0 : index
    %6 = vector.load %arg3[%c0_5, %c0_6, %c0_7] : memref<1x128x128xbf16, #tpu.memory_space<vmem>>, vector<1x128x128xbf16>
    %7 = vector.shape_cast %6 : vector<1x128x128xbf16> to vector<128x128xbf16>
    %cst = arith.constant dense<0.000000e+00> : vector<128x128xf32>
    %8 = tpu.matmul %5, %7, %cst {dimension_numbers = #tpu.dot_dimension_numbers<[1], [0], [0], [1], [0, 0, 1, 1], [], []>} : vector<128x128xbf16>, vector<128x128xbf16>, vector<128x128xf32> -> vector<128x128xf32>
    %9 = arith.addf %3, %8 : vector<128x128xf32>
    %c0_8 = arith.constant 0 : index
    %c0_9 = arith.constant 0 : index
    %10 = vector.load %arg6[%c0_8, %c0_9] : memref<128x128xf32, #tpu.memory_space<vmem>>, vector<128x128xf32>
    tpu.vector_store %arg6[%c0_8, %c0_9], %9 {strides = array<i32>} : memref<128x128xf32, #tpu.memory_space<vmem>>, vector<128x128xf32>,
    %c0_i32_10 = arith.constant 0 : i32
    %11 = arith.cmpi eq, %arg1, %c0_i32_10 : i32
    %12 = arith.extui %11 : i1 to i32
    %c0_i32_11 = arith.constant 0 : i32
    %13 = arith.cmpi ne, %12, %c0_i32_11 : i32
    scf.if %13 {
      %c0_12 = arith.constant 0 : index
      %c0_13 = arith.constant 0 : index
      %14 = vector.load %arg6[%c0_12, %c0_13] : memref<128x128xf32, #tpu.memory_space<vmem>>, vector<128x128xf32>
      %c0_14 = arith.constant 0 : index
      %c0_15 = arith.constant 0 : index
      %15 = vector.load %arg4[%c0_14, %c0_15] : memref<1x128xf32, #tpu.memory_space<vmem>>, vector<1x128xf32>
      %16 = vector.broadcast %15 : vector<1x128xf32> to vector<128x128xf32>
      %17 = arith.addf %14, %16 : vector<128x128xf32>
      %18 = arith.truncf %17 : vector<128x128xf32> to vector<128x128xbf16>
      %c0_16 = arith.constant 0 : index
      %c0_17 = arith.constant 0 : index
      %19 = vector.load %arg5[%c0_16, %c0_17] : memref<128x128xbf16, #tpu.memory_space<vmem>>, vector<128x128xbf16>
      tpu.vector_store %arg5[%c0_16, %c0_17], %18 {strides = array<i32>} : memref<128x128xbf16, #tpu.memory_space<vmem>>, vector<128x128xbf16>,
    } else {
    }
    return
  }
  func.func @transform_0(%arg0: i32, %arg1: i32) -> (i32, i32, i32) {
    %c0_i32 = arith.constant 0 : i32
    %c0_i32_0 = arith.constant 0 : i32
    return %arg1, %arg0, %c0_i32 : i32, i32, i32
  }
  func.func @transform_1(%arg0: i32, %arg1: i32) -> (i32, i32, i32) {
    %c0_i32 = arith.constant 0 : i32
    %c0_i32_0 = arith.constant 0 : i32
    %c0_i32_1 = arith.constant 0 : i32
    return %arg1, %c0_i32, %c0_i32_0 : i32, i32, i32
  }
  func.func @transform_2(%arg0: i32, %arg1: i32) -> (i32, i32) {
    %c0_i32 = arith.constant 0 : i32
    %c0_i32_0 = arith.constant 0 : i32
    %c0_i32_1 = arith.constant 0 : i32
    return %c0_i32, %c0_i32_0 : i32, i32
  }
  func.func @transform_3(%arg0: i32, %arg1: i32) -> (i32, i32) {
    %c0_i32 = arith.constant 0 : i32
    %c0_i32_0 = arith.constant 0 : i32
    return %arg0, %c0_i32 : i32, i32
  }
}

module attributes {stable_mosaic.version = 11 : i64} {
  func.func @_maxpool_kernel(%arg0: i32, %arg1: i32, %arg2: memref<1x128x128xbf16, #tpu.memory_space<vmem>>, %arg3: memref<128x128xbf16, #tpu.memory_space<vmem>>) attributes {dimension_semantics = [#tpu.dimension_semantics<parallel>, #tpu.dimension_semantics<arbitrary>], iteration_bounds = array<i64: 1, 9>, scalar_prefetch = 0 : i64, scratch_operands = 0 : i64, tpu.core_type = #tpu.core_type<tc>, window_params = [{transform_indices = @transform_0, window_bounds = array<i64: 1, 128, 128>}, {transform_indices = @transform_1, window_bounds = array<i64: 128, 128>}]} {
    %c0_i32 = arith.constant 0 : i32
    %0 = arith.cmpi eq, %arg1, %c0_i32 : i32
    %1 = arith.extui %0 : i1 to i32
    %c0_i32_0 = arith.constant 0 : i32
    %2 = arith.cmpi ne, %1, %c0_i32_0 : i32
    scf.if %2 {
      %c0 = arith.constant 0 : index
      %c0_3 = arith.constant 0 : index
      %c0_4 = arith.constant 0 : index
      %6 = vector.load %arg2[%c0, %c0_3, %c0_4] : memref<1x128x128xbf16, #tpu.memory_space<vmem>>, vector<1x128x128xbf16>
      %7 = vector.shape_cast %6 : vector<1x128x128xbf16> to vector<128x128xbf16>
      %c0_5 = arith.constant 0 : index
      %c0_6 = arith.constant 0 : index
      %8 = vector.load %arg3[%c0_5, %c0_6] : memref<128x128xbf16, #tpu.memory_space<vmem>>, vector<128x128xbf16>
      tpu.vector_store %arg3[%c0_5, %c0_6], %7 {strides = array<i32>} : memref<128x128xbf16, #tpu.memory_space<vmem>>, vector<128x128xbf16>,
    } else {
    }
    %c0_i32_1 = arith.constant 0 : i32
    %3 = arith.cmpi sgt, %arg1, %c0_i32_1 : i32
    %4 = arith.extui %3 : i1 to i32
    %c0_i32_2 = arith.constant 0 : i32
    %5 = arith.cmpi ne, %4, %c0_i32_2 : i32
    scf.if %5 {
      %c0 = arith.constant 0 : index
      %c0_3 = arith.constant 0 : index
      %6 = vector.load %arg3[%c0, %c0_3] : memref<128x128xbf16, #tpu.memory_space<vmem>>, vector<128x128xbf16>
      %c0_4 = arith.constant 0 : index
      %c0_5 = arith.constant 0 : index
      %c0_6 = arith.constant 0 : index
      %7 = vector.load %arg2[%c0_4, %c0_5, %c0_6] : memref<1x128x128xbf16, #tpu.memory_space<vmem>>, vector<1x128x128xbf16>
      %8 = vector.shape_cast %7 : vector<1x128x128xbf16> to vector<128x128xbf16>
      %9 = arith.maximumf %6, %8 : vector<128x128xbf16>
      %c0_7 = arith.constant 0 : index
      %c0_8 = arith.constant 0 : index
      %10 = vector.load %arg3[%c0_7, %c0_8] : memref<128x128xbf16, #tpu.memory_space<vmem>>, vector<128x128xbf16>
      tpu.vector_store %arg3[%c0_7, %c0_8], %9 {strides = array<i32>} : memref<128x128xbf16, #tpu.memory_space<vmem>>, vector<128x128xbf16>,
    } else {
    }
    return
  }
  func.func @transform_0(%arg0: i32, %arg1: i32) -> (i32, i32, i32) {
    %c0_i32 = arith.constant 0 : i32
    %c0_i32_0 = arith.constant 0 : i32
    return %arg1, %arg0, %c0_i32 : i32, i32, i32
  }
  func.func @transform_1(%arg0: i32, %arg1: i32) -> (i32, i32) {
    %c0_i32 = arith.constant 0 : i32
    %c0_i32_0 = arith.constant 0 : i32
    return %arg0, %c0_i32 : i32, i32
  }
}

module attributes {stable_mosaic.version = 11 : i64} {
  func.func @_gemm_taps_kernel(%arg0: i32, %arg1: i32, %arg2: memref<1x128x128xbf16, #tpu.memory_space<vmem>>, %arg3: memref<1x128x128xbf16, #tpu.memory_space<vmem>>, %arg4: memref<1x128xf32, #tpu.memory_space<vmem>>, %arg5: memref<128x128xbf16, #tpu.memory_space<vmem>>, %arg6: memref<128x128xf32, #tpu.memory_space<vmem>>) attributes {dimension_semantics = [#tpu.dimension_semantics<parallel>, #tpu.dimension_semantics<arbitrary>], iteration_bounds = array<i64: 1, 9>, scalar_prefetch = 0 : i64, scratch_operands = 1 : i64, tpu.core_type = #tpu.core_type<tc>, window_params = [{transform_indices = @transform_0, window_bounds = array<i64: 1, 128, 128>}, {transform_indices = @transform_1, window_bounds = array<i64: 1, 128, 128>}, {pipeline_mode = #tpu.pipeline_mode<synchronous>, transform_indices = @transform_2, window_bounds = array<i64: 1, 128>}, {transform_indices = @transform_3, window_bounds = array<i64: 128, 128>}]} {
    %c0_i32 = arith.constant 0 : i32
    %0 = arith.cmpi eq, %arg1, %c0_i32 : i32
    %1 = arith.extui %0 : i1 to i32
    %c0_i32_0 = arith.constant 0 : i32
    %2 = arith.cmpi ne, %1, %c0_i32_0 : i32
    scf.if %2 {
      %cst_11 = arith.constant 0.000000e+00 : f32
      %14 = vector.broadcast %cst_11 : f32 to vector<128x128xf32>
      %c0_12 = arith.constant 0 : index
      %c0_13 = arith.constant 0 : index
      %15 = vector.load %arg6[%c0_12, %c0_13] : memref<128x128xf32, #tpu.memory_space<vmem>>, vector<128x128xf32>
      tpu.vector_store %arg6[%c0_12, %c0_13], %14 {strides = array<i32>} : memref<128x128xf32, #tpu.memory_space<vmem>>, vector<128x128xf32>,
    } else {
    }
    %c0 = arith.constant 0 : index
    %c0_1 = arith.constant 0 : index
    %3 = vector.load %arg6[%c0, %c0_1] : memref<128x128xf32, #tpu.memory_space<vmem>>, vector<128x128xf32>
    %c0_2 = arith.constant 0 : index
    %c0_3 = arith.constant 0 : index
    %c0_4 = arith.constant 0 : index
    %4 = vector.load %arg2[%c0_2, %c0_3, %c0_4] : memref<1x128x128xbf16, #tpu.memory_space<vmem>>, vector<1x128x128xbf16>
    %5 = vector.shape_cast %4 : vector<1x128x128xbf16> to vector<128x128xbf16>
    %c0_5 = arith.constant 0 : index
    %c0_6 = arith.constant 0 : index
    %c0_7 = arith.constant 0 : index
    %6 = vector.load %arg3[%c0_5, %c0_6, %c0_7] : memref<1x128x128xbf16, #tpu.memory_space<vmem>>, vector<1x128x128xbf16>
    %7 = vector.shape_cast %6 : vector<1x128x128xbf16> to vector<128x128xbf16>
    %cst = arith.constant dense<0.000000e+00> : vector<128x128xf32>
    %8 = tpu.matmul %5, %7, %cst {dimension_numbers = #tpu.dot_dimension_numbers<[1], [0], [0], [1], [0, 0, 1, 1], [], []>} : vector<128x128xbf16>, vector<128x128xbf16>, vector<128x128xf32> -> vector<128x128xf32>
    %9 = arith.addf %3, %8 : vector<128x128xf32>
    %c0_8 = arith.constant 0 : index
    %c0_9 = arith.constant 0 : index
    %10 = vector.load %arg6[%c0_8, %c0_9] : memref<128x128xf32, #tpu.memory_space<vmem>>, vector<128x128xf32>
    tpu.vector_store %arg6[%c0_8, %c0_9], %9 {strides = array<i32>} : memref<128x128xf32, #tpu.memory_space<vmem>>, vector<128x128xf32>,
    %c8_i32 = arith.constant 8 : i32
    %11 = arith.cmpi eq, %arg1, %c8_i32 : i32
    %12 = arith.extui %11 : i1 to i32
    %c0_i32_10 = arith.constant 0 : i32
    %13 = arith.cmpi ne, %12, %c0_i32_10 : i32
    scf.if %13 {
      %c0_11 = arith.constant 0 : index
      %c0_12 = arith.constant 0 : index
      %14 = vector.load %arg6[%c0_11, %c0_12] : memref<128x128xf32, #tpu.memory_space<vmem>>, vector<128x128xf32>
      %c0_13 = arith.constant 0 : index
      %c0_14 = arith.constant 0 : index
      %15 = vector.load %arg4[%c0_13, %c0_14] : memref<1x128xf32, #tpu.memory_space<vmem>>, vector<1x128xf32>
      %16 = vector.broadcast %15 : vector<1x128xf32> to vector<128x128xf32>
      %17 = arith.addf %14, %16 : vector<128x128xf32>
      %cst_15 = arith.constant 0.000000e+00 : f32
      %18 = vector.broadcast %cst_15 : f32 to vector<128x128xf32>
      %19 = arith.maximumf %17, %18 : vector<128x128xf32>
      %20 = arith.truncf %19 : vector<128x128xf32> to vector<128x128xbf16>
      %c0_16 = arith.constant 0 : index
      %c0_17 = arith.constant 0 : index
      %21 = vector.load %arg5[%c0_16, %c0_17] : memref<128x128xbf16, #tpu.memory_space<vmem>>, vector<128x128xbf16>
      tpu.vector_store %arg5[%c0_16, %c0_17], %20 {strides = array<i32>} : memref<128x128xbf16, #tpu.memory_space<vmem>>, vector<128x128xbf16>,
    } else {
    }
    return
  }
  func.func @transform_0(%arg0: i32, %arg1: i32) -> (i32, i32, i32) {
    %c0_i32 = arith.constant 0 : i32
    %c0_i32_0 = arith.constant 0 : i32
    return %arg1, %arg0, %c0_i32 : i32, i32, i32
  }
  func.func @transform_1(%arg0: i32, %arg1: i32) -> (i32, i32, i32) {
    %c0_i32 = arith.constant 0 : i32
    %c0_i32_0 = arith.constant 0 : i32
    %c0_i32_1 = arith.constant 0 : i32
    return %arg1, %c0_i32, %c0_i32_0 : i32, i32, i32
  }
  func.func @transform_2(%arg0: i32, %arg1: i32) -> (i32, i32) {
    %c0_i32 = arith.constant 0 : i32
    %c0_i32_0 = arith.constant 0 : i32
    %c0_i32_1 = arith.constant 0 : i32
    return %c0_i32, %c0_i32_0 : i32, i32
  }
  func.func @transform_3(%arg0: i32, %arg1: i32) -> (i32, i32) {
    %c0_i32 = arith.constant 0 : i32
    %c0_i32_0 = arith.constant 0 : i32
    return %arg0, %c0_i32 : i32, i32
  }
}

module attributes {stable_mosaic.version = 11 : i64} {
  func.func @_gemm_taps_res_kernel(%arg0: i32, %arg1: i32, %arg2: memref<1x128x128xbf16, #tpu.memory_space<vmem>>, %arg3: memref<1x128x128xbf16, #tpu.memory_space<vmem>>, %arg4: memref<1x128xf32, #tpu.memory_space<vmem>>, %arg5: memref<128x128xbf16, #tpu.memory_space<vmem>>, %arg6: memref<128x128xbf16, #tpu.memory_space<vmem>>, %arg7: memref<128x128xf32, #tpu.memory_space<vmem>>) attributes {dimension_semantics = [#tpu.dimension_semantics<parallel>, #tpu.dimension_semantics<arbitrary>], iteration_bounds = array<i64: 1, 1>, scalar_prefetch = 0 : i64, scratch_operands = 1 : i64, tpu.core_type = #tpu.core_type<tc>, window_params = [{transform_indices = @transform_0, window_bounds = array<i64: 1, 128, 128>}, {transform_indices = @transform_1, window_bounds = array<i64: 1, 128, 128>}, {pipeline_mode = #tpu.pipeline_mode<synchronous>, transform_indices = @transform_2, window_bounds = array<i64: 1, 128>}, {transform_indices = @transform_3, window_bounds = array<i64: 128, 128>}, {transform_indices = @transform_4, window_bounds = array<i64: 128, 128>}]} {
    %c0_i32 = arith.constant 0 : i32
    %0 = arith.cmpi eq, %arg1, %c0_i32 : i32
    %1 = arith.extui %0 : i1 to i32
    %c0_i32_0 = arith.constant 0 : i32
    %2 = arith.cmpi ne, %1, %c0_i32_0 : i32
    scf.if %2 {
      %cst_12 = arith.constant 0.000000e+00 : f32
      %14 = vector.broadcast %cst_12 : f32 to vector<128x128xf32>
      %c0_13 = arith.constant 0 : index
      %c0_14 = arith.constant 0 : index
      %15 = vector.load %arg7[%c0_13, %c0_14] : memref<128x128xf32, #tpu.memory_space<vmem>>, vector<128x128xf32>
      tpu.vector_store %arg7[%c0_13, %c0_14], %14 {strides = array<i32>} : memref<128x128xf32, #tpu.memory_space<vmem>>, vector<128x128xf32>,
    } else {
    }
    %c0 = arith.constant 0 : index
    %c0_1 = arith.constant 0 : index
    %3 = vector.load %arg7[%c0, %c0_1] : memref<128x128xf32, #tpu.memory_space<vmem>>, vector<128x128xf32>
    %c0_2 = arith.constant 0 : index
    %c0_3 = arith.constant 0 : index
    %c0_4 = arith.constant 0 : index
    %4 = vector.load %arg2[%c0_2, %c0_3, %c0_4] : memref<1x128x128xbf16, #tpu.memory_space<vmem>>, vector<1x128x128xbf16>
    %5 = vector.shape_cast %4 : vector<1x128x128xbf16> to vector<128x128xbf16>
    %c0_5 = arith.constant 0 : index
    %c0_6 = arith.constant 0 : index
    %c0_7 = arith.constant 0 : index
    %6 = vector.load %arg3[%c0_5, %c0_6, %c0_7] : memref<1x128x128xbf16, #tpu.memory_space<vmem>>, vector<1x128x128xbf16>
    %7 = vector.shape_cast %6 : vector<1x128x128xbf16> to vector<128x128xbf16>
    %cst = arith.constant dense<0.000000e+00> : vector<128x128xf32>
    %8 = tpu.matmul %5, %7, %cst {dimension_numbers = #tpu.dot_dimension_numbers<[1], [0], [0], [1], [0, 0, 1, 1], [], []>} : vector<128x128xbf16>, vector<128x128xbf16>, vector<128x128xf32> -> vector<128x128xf32>
    %9 = arith.addf %3, %8 : vector<128x128xf32>
    %c0_8 = arith.constant 0 : index
    %c0_9 = arith.constant 0 : index
    %10 = vector.load %arg7[%c0_8, %c0_9] : memref<128x128xf32, #tpu.memory_space<vmem>>, vector<128x128xf32>
    tpu.vector_store %arg7[%c0_8, %c0_9], %9 {strides = array<i32>} : memref<128x128xf32, #tpu.memory_space<vmem>>, vector<128x128xf32>,
    %c0_i32_10 = arith.constant 0 : i32
    %11 = arith.cmpi eq, %arg1, %c0_i32_10 : i32
    %12 = arith.extui %11 : i1 to i32
    %c0_i32_11 = arith.constant 0 : i32
    %13 = arith.cmpi ne, %12, %c0_i32_11 : i32
    scf.if %13 {
      %c0_12 = arith.constant 0 : index
      %c0_13 = arith.constant 0 : index
      %14 = vector.load %arg7[%c0_12, %c0_13] : memref<128x128xf32, #tpu.memory_space<vmem>>, vector<128x128xf32>
      %c0_14 = arith.constant 0 : index
      %c0_15 = arith.constant 0 : index
      %15 = vector.load %arg4[%c0_14, %c0_15] : memref<1x128xf32, #tpu.memory_space<vmem>>, vector<1x128xf32>
      %16 = vector.broadcast %15 : vector<1x128xf32> to vector<128x128xf32>
      %17 = arith.addf %14, %16 : vector<128x128xf32>
      %c0_16 = arith.constant 0 : index
      %c0_17 = arith.constant 0 : index
      %18 = vector.load %arg5[%c0_16, %c0_17] : memref<128x128xbf16, #tpu.memory_space<vmem>>, vector<128x128xbf16>
      %19 = arith.extf %18 : vector<128x128xbf16> to vector<128x128xf32>
      %20 = arith.addf %17, %19 : vector<128x128xf32>
      %cst_18 = arith.constant 0.000000e+00 : f32
      %21 = vector.broadcast %cst_18 : f32 to vector<128x128xf32>
      %22 = arith.maximumf %20, %21 : vector<128x128xf32>
      %23 = arith.truncf %22 : vector<128x128xf32> to vector<128x128xbf16>
      %c0_19 = arith.constant 0 : index
      %c0_20 = arith.constant 0 : index
      %24 = vector.load %arg6[%c0_19, %c0_20] : memref<128x128xbf16, #tpu.memory_space<vmem>>, vector<128x128xbf16>
      tpu.vector_store %arg6[%c0_19, %c0_20], %23 {strides = array<i32>} : memref<128x128xbf16, #tpu.memory_space<vmem>>, vector<128x128xbf16>,
    } else {
    }
    return
  }
  func.func @transform_0(%arg0: i32, %arg1: i32) -> (i32, i32, i32) {
    %c0_i32 = arith.constant 0 : i32
    %c0_i32_0 = arith.constant 0 : i32
    return %arg1, %arg0, %c0_i32 : i32, i32, i32
  }
  func.func @transform_1(%arg0: i32, %arg1: i32) -> (i32, i32, i32) {
    %c0_i32 = arith.constant 0 : i32
    %c0_i32_0 = arith.constant 0 : i32
    %c0_i32_1 = arith.constant 0 : i32
    return %arg1, %c0_i32, %c0_i32_0 : i32, i32, i32
  }
  func.func @transform_2(%arg0: i32, %arg1: i32) -> (i32, i32) {
    %c0_i32 = arith.constant 0 : i32
    %c0_i32_0 = arith.constant 0 : i32
    %c0_i32_1 = arith.constant 0 : i32
    return %c0_i32, %c0_i32_0 : i32, i32
  }
  func.func @transform_3(%arg0: i32, %arg1: i32) -> (i32, i32) {
    %c0_i32 = arith.constant 0 : i32
    %c0_i32_0 = arith.constant 0 : i32
    return %arg0, %c0_i32 : i32, i32
  }
  func.func @transform_4(%arg0: i32, %arg1: i32) -> (i32, i32) {
    %c0_i32 = arith.constant 0 : i32
    %c0_i32_0 = arith.constant 0 : i32
    return %arg0, %c0_i32 : i32, i32
  }
}

module attributes {stable_mosaic.version = 11 : i64} {
  func.func @_gemm_taps_kernel(%arg0: i32, %arg1: i32, %arg2: memref<1x32x128xbf16, #tpu.memory_space<vmem>>, %arg3: memref<1x128x128xbf16, #tpu.memory_space<vmem>>, %arg4: memref<1x128xf32, #tpu.memory_space<vmem>>, %arg5: memref<32x128xbf16, #tpu.memory_space<vmem>>, %arg6: memref<32x128xf32, #tpu.memory_space<vmem>>) attributes {dimension_semantics = [#tpu.dimension_semantics<parallel>, #tpu.dimension_semantics<arbitrary>], iteration_bounds = array<i64: 1, 1>, scalar_prefetch = 0 : i64, scratch_operands = 1 : i64, tpu.core_type = #tpu.core_type<tc>, window_params = [{transform_indices = @transform_0, window_bounds = array<i64: 1, 32, 128>}, {transform_indices = @transform_1, window_bounds = array<i64: 1, 128, 128>}, {pipeline_mode = #tpu.pipeline_mode<synchronous>, transform_indices = @transform_2, window_bounds = array<i64: 1, 128>}, {transform_indices = @transform_3, window_bounds = array<i64: 32, 128>}]} {
    %c0_i32 = arith.constant 0 : i32
    %0 = arith.cmpi eq, %arg1, %c0_i32 : i32
    %1 = arith.extui %0 : i1 to i32
    %c0_i32_0 = arith.constant 0 : i32
    %2 = arith.cmpi ne, %1, %c0_i32_0 : i32
    scf.if %2 {
      %cst_12 = arith.constant 0.000000e+00 : f32
      %14 = vector.broadcast %cst_12 : f32 to vector<32x128xf32>
      %c0_13 = arith.constant 0 : index
      %c0_14 = arith.constant 0 : index
      %15 = vector.load %arg6[%c0_13, %c0_14] : memref<32x128xf32, #tpu.memory_space<vmem>>, vector<32x128xf32>
      tpu.vector_store %arg6[%c0_13, %c0_14], %14 {strides = array<i32>} : memref<32x128xf32, #tpu.memory_space<vmem>>, vector<32x128xf32>,
    } else {
    }
    %c0 = arith.constant 0 : index
    %c0_1 = arith.constant 0 : index
    %3 = vector.load %arg6[%c0, %c0_1] : memref<32x128xf32, #tpu.memory_space<vmem>>, vector<32x128xf32>
    %c0_2 = arith.constant 0 : index
    %c0_3 = arith.constant 0 : index
    %c0_4 = arith.constant 0 : index
    %4 = vector.load %arg2[%c0_2, %c0_3, %c0_4] : memref<1x32x128xbf16, #tpu.memory_space<vmem>>, vector<1x32x128xbf16>
    %5 = vector.shape_cast %4 : vector<1x32x128xbf16> to vector<32x128xbf16>
    %c0_5 = arith.constant 0 : index
    %c0_6 = arith.constant 0 : index
    %c0_7 = arith.constant 0 : index
    %6 = vector.load %arg3[%c0_5, %c0_6, %c0_7] : memref<1x128x128xbf16, #tpu.memory_space<vmem>>, vector<1x128x128xbf16>
    %7 = vector.shape_cast %6 : vector<1x128x128xbf16> to vector<128x128xbf16>
    %cst = arith.constant dense<0.000000e+00> : vector<32x128xf32>
    %8 = tpu.matmul %5, %7, %cst {dimension_numbers = #tpu.dot_dimension_numbers<[1], [0], [0], [1], [0, 0, 1, 1], [], []>} : vector<32x128xbf16>, vector<128x128xbf16>, vector<32x128xf32> -> vector<32x128xf32>
    %9 = arith.addf %3, %8 : vector<32x128xf32>
    %c0_8 = arith.constant 0 : index
    %c0_9 = arith.constant 0 : index
    %10 = vector.load %arg6[%c0_8, %c0_9] : memref<32x128xf32, #tpu.memory_space<vmem>>, vector<32x128xf32>
    tpu.vector_store %arg6[%c0_8, %c0_9], %9 {strides = array<i32>} : memref<32x128xf32, #tpu.memory_space<vmem>>, vector<32x128xf32>,
    %c0_i32_10 = arith.constant 0 : i32
    %11 = arith.cmpi eq, %arg1, %c0_i32_10 : i32
    %12 = arith.extui %11 : i1 to i32
    %c0_i32_11 = arith.constant 0 : i32
    %13 = arith.cmpi ne, %12, %c0_i32_11 : i32
    scf.if %13 {
      %c0_12 = arith.constant 0 : index
      %c0_13 = arith.constant 0 : index
      %14 = vector.load %arg6[%c0_12, %c0_13] : memref<32x128xf32, #tpu.memory_space<vmem>>, vector<32x128xf32>
      %c0_14 = arith.constant 0 : index
      %c0_15 = arith.constant 0 : index
      %15 = vector.load %arg4[%c0_14, %c0_15] : memref<1x128xf32, #tpu.memory_space<vmem>>, vector<1x128xf32>
      %16 = vector.broadcast %15 : vector<1x128xf32> to vector<32x128xf32>
      %17 = arith.addf %14, %16 : vector<32x128xf32>
      %18 = arith.truncf %17 : vector<32x128xf32> to vector<32x128xbf16>
      %c0_16 = arith.constant 0 : index
      %c0_17 = arith.constant 0 : index
      %19 = vector.load %arg5[%c0_16, %c0_17] : memref<32x128xbf16, #tpu.memory_space<vmem>>, vector<32x128xbf16>
      tpu.vector_store %arg5[%c0_16, %c0_17], %18 {strides = array<i32>} : memref<32x128xbf16, #tpu.memory_space<vmem>>, vector<32x128xbf16>,
    } else {
    }
    return
  }
  func.func @transform_0(%arg0: i32, %arg1: i32) -> (i32, i32, i32) {
    %c0_i32 = arith.constant 0 : i32
    %c0_i32_0 = arith.constant 0 : i32
    return %arg1, %arg0, %c0_i32 : i32, i32, i32
  }
  func.func @transform_1(%arg0: i32, %arg1: i32) -> (i32, i32, i32) {
    %c0_i32 = arith.constant 0 : i32
    %c0_i32_0 = arith.constant 0 : i32
    %c0_i32_1 = arith.constant 0 : i32
    return %arg1, %c0_i32, %c0_i32_0 : i32, i32, i32
  }
  func.func @transform_2(%arg0: i32, %arg1: i32) -> (i32, i32) {
    %c0_i32 = arith.constant 0 : i32
    %c0_i32_0 = arith.constant 0 : i32
    %c0_i32_1 = arith.constant 0 : i32
    return %c0_i32, %c0_i32_0 : i32, i32
  }
  func.func @transform_3(%arg0: i32, %arg1: i32) -> (i32, i32) {
    %c0_i32 = arith.constant 0 : i32
    %c0_i32_0 = arith.constant 0 : i32
    return %arg0, %c0_i32 : i32, i32
  }
}

module attributes {stable_mosaic.version = 11 : i64} {
  func.func @_gemm_taps_res_kernel(%arg0: i32, %arg1: i32, %arg2: memref<1x32x128xbf16, #tpu.memory_space<vmem>>, %arg3: memref<1x128x128xbf16, #tpu.memory_space<vmem>>, %arg4: memref<1x128xf32, #tpu.memory_space<vmem>>, %arg5: memref<32x128xbf16, #tpu.memory_space<vmem>>, %arg6: memref<32x128xbf16, #tpu.memory_space<vmem>>, %arg7: memref<32x128xf32, #tpu.memory_space<vmem>>) attributes {dimension_semantics = [#tpu.dimension_semantics<parallel>, #tpu.dimension_semantics<arbitrary>], iteration_bounds = array<i64: 1, 1>, scalar_prefetch = 0 : i64, scratch_operands = 1 : i64, tpu.core_type = #tpu.core_type<tc>, window_params = [{transform_indices = @transform_0, window_bounds = array<i64: 1, 32, 128>}, {transform_indices = @transform_1, window_bounds = array<i64: 1, 128, 128>}, {pipeline_mode = #tpu.pipeline_mode<synchronous>, transform_indices = @transform_2, window_bounds = array<i64: 1, 128>}, {transform_indices = @transform_3, window_bounds = array<i64: 32, 128>}, {transform_indices = @transform_4, window_bounds = array<i64: 32, 128>}]} {
    %c0_i32 = arith.constant 0 : i32
    %0 = arith.cmpi eq, %arg1, %c0_i32 : i32
    %1 = arith.extui %0 : i1 to i32
    %c0_i32_0 = arith.constant 0 : i32
    %2 = arith.cmpi ne, %1, %c0_i32_0 : i32
    scf.if %2 {
      %cst_12 = arith.constant 0.000000e+00 : f32
      %14 = vector.broadcast %cst_12 : f32 to vector<32x128xf32>
      %c0_13 = arith.constant 0 : index
      %c0_14 = arith.constant 0 : index
      %15 = vector.load %arg7[%c0_13, %c0_14] : memref<32x128xf32, #tpu.memory_space<vmem>>, vector<32x128xf32>
      tpu.vector_store %arg7[%c0_13, %c0_14], %14 {strides = array<i32>} : memref<32x128xf32, #tpu.memory_space<vmem>>, vector<32x128xf32>,
    } else {
    }
    %c0 = arith.constant 0 : index
    %c0_1 = arith.constant 0 : index
    %3 = vector.load %arg7[%c0, %c0_1] : memref<32x128xf32, #tpu.memory_space<vmem>>, vector<32x128xf32>
    %c0_2 = arith.constant 0 : index
    %c0_3 = arith.constant 0 : index
    %c0_4 = arith.constant 0 : index
    %4 = vector.load %arg2[%c0_2, %c0_3, %c0_4] : memref<1x32x128xbf16, #tpu.memory_space<vmem>>, vector<1x32x128xbf16>
    %5 = vector.shape_cast %4 : vector<1x32x128xbf16> to vector<32x128xbf16>
    %c0_5 = arith.constant 0 : index
    %c0_6 = arith.constant 0 : index
    %c0_7 = arith.constant 0 : index
    %6 = vector.load %arg3[%c0_5, %c0_6, %c0_7] : memref<1x128x128xbf16, #tpu.memory_space<vmem>>, vector<1x128x128xbf16>
    %7 = vector.shape_cast %6 : vector<1x128x128xbf16> to vector<128x128xbf16>
    %cst = arith.constant dense<0.000000e+00> : vector<32x128xf32>
    %8 = tpu.matmul %5, %7, %cst {dimension_numbers = #tpu.dot_dimension_numbers<[1], [0], [0], [1], [0, 0, 1, 1], [], []>} : vector<32x128xbf16>, vector<128x128xbf16>, vector<32x128xf32> -> vector<32x128xf32>
    %9 = arith.addf %3, %8 : vector<32x128xf32>
    %c0_8 = arith.constant 0 : index
    %c0_9 = arith.constant 0 : index
    %10 = vector.load %arg7[%c0_8, %c0_9] : memref<32x128xf32, #tpu.memory_space<vmem>>, vector<32x128xf32>
    tpu.vector_store %arg7[%c0_8, %c0_9], %9 {strides = array<i32>} : memref<32x128xf32, #tpu.memory_space<vmem>>, vector<32x128xf32>,
    %c0_i32_10 = arith.constant 0 : i32
    %11 = arith.cmpi eq, %arg1, %c0_i32_10 : i32
    %12 = arith.extui %11 : i1 to i32
    %c0_i32_11 = arith.constant 0 : i32
    %13 = arith.cmpi ne, %12, %c0_i32_11 : i32
    scf.if %13 {
      %c0_12 = arith.constant 0 : index
      %c0_13 = arith.constant 0 : index
      %14 = vector.load %arg7[%c0_12, %c0_13] : memref<32x128xf32, #tpu.memory_space<vmem>>, vector<32x128xf32>
      %c0_14 = arith.constant 0 : index
      %c0_15 = arith.constant 0 : index
      %15 = vector.load %arg4[%c0_14, %c0_15] : memref<1x128xf32, #tpu.memory_space<vmem>>, vector<1x128xf32>
      %16 = vector.broadcast %15 : vector<1x128xf32> to vector<32x128xf32>
      %17 = arith.addf %14, %16 : vector<32x128xf32>
      %c0_16 = arith.constant 0 : index
      %c0_17 = arith.constant 0 : index
      %18 = vector.load %arg5[%c0_16, %c0_17] : memref<32x128xbf16, #tpu.memory_space<vmem>>, vector<32x128xbf16>
      %19 = arith.extf %18 : vector<32x128xbf16> to vector<32x128xf32>
      %20 = arith.addf %17, %19 : vector<32x128xf32>
      %cst_18 = arith.constant 0.000000e+00 : f32
      %21 = vector.broadcast %cst_18 : f32 to vector<32x128xf32>
      %22 = arith.maximumf %20, %21 : vector<32x128xf32>
      %23 = arith.truncf %22 : vector<32x128xf32> to vector<32x128xbf16>
      %c0_19 = arith.constant 0 : index
      %c0_20 = arith.constant 0 : index
      %24 = vector.load %arg6[%c0_19, %c0_20] : memref<32x128xbf16, #tpu.memory_space<vmem>>, vector<32x128xbf16>
      tpu.vector_store %arg6[%c0_19, %c0_20], %23 {strides = array<i32>} : memref<32x128xbf16, #tpu.memory_space<vmem>>, vector<32x128xbf16>,
    } else {
    }
    return
  }
  func.func @transform_0(%arg0: i32, %arg1: i32) -> (i32, i32, i32) {
    %c0_i32 = arith.constant 0 : i32
    %c0_i32_0 = arith.constant 0 : i32
    return %arg1, %arg0, %c0_i32 : i32, i32, i32
  }
  func.func @transform_1(%arg0: i32, %arg1: i32) -> (i32, i32, i32) {
    %c0_i32 = arith.constant 0 : i32
    %c0_i32_0 = arith.constant 0 : i32
    %c0_i32_1 = arith.constant 0 : i32
    return %arg1, %c0_i32, %c0_i32_0 : i32, i32, i32
  }
  func.func @transform_2(%arg0: i32, %arg1: i32) -> (i32, i32) {
    %c0_i32 = arith.constant 0 : i32
    %c0_i32_0 = arith.constant 0 : i32
    %c0_i32_1 = arith.constant 0 : i32
    return %c0_i32, %c0_i32_0 : i32, i32
  }
  func.func @transform_3(%arg0: i32, %arg1: i32) -> (i32, i32) {
    %c0_i32 = arith.constant 0 : i32
    %c0_i32_0 = arith.constant 0 : i32
    return %arg0, %c0_i32 : i32, i32
  }
  func.func @transform_4(%arg0: i32, %arg1: i32) -> (i32, i32) {
    %c0_i32 = arith.constant 0 : i32
    %c0_i32_0 = arith.constant 0 : i32
    return %arg0, %c0_i32 : i32, i32
  }
}

module attributes {stable_mosaic.version = 11 : i64} {
  func.func @_gemm_taps_kernel(%arg0: i32, %arg1: i32, %arg2: memref<1x32x128xbf16, #tpu.memory_space<vmem>>, %arg3: memref<1x128x128xbf16, #tpu.memory_space<vmem>>, %arg4: memref<1x128xf32, #tpu.memory_space<vmem>>, %arg5: memref<32x128xbf16, #tpu.memory_space<vmem>>, %arg6: memref<32x128xf32, #tpu.memory_space<vmem>>) attributes {dimension_semantics = [#tpu.dimension_semantics<parallel>, #tpu.dimension_semantics<arbitrary>], iteration_bounds = array<i64: 1, 1>, scalar_prefetch = 0 : i64, scratch_operands = 1 : i64, tpu.core_type = #tpu.core_type<tc>, window_params = [{transform_indices = @transform_0, window_bounds = array<i64: 1, 32, 128>}, {transform_indices = @transform_1, window_bounds = array<i64: 1, 128, 128>}, {pipeline_mode = #tpu.pipeline_mode<synchronous>, transform_indices = @transform_2, window_bounds = array<i64: 1, 128>}, {transform_indices = @transform_3, window_bounds = array<i64: 32, 128>}]} {
    %c0_i32 = arith.constant 0 : i32
    %0 = arith.cmpi eq, %arg1, %c0_i32 : i32
    %1 = arith.extui %0 : i1 to i32
    %c0_i32_0 = arith.constant 0 : i32
    %2 = arith.cmpi ne, %1, %c0_i32_0 : i32
    scf.if %2 {
      %cst_12 = arith.constant 0.000000e+00 : f32
      %14 = vector.broadcast %cst_12 : f32 to vector<32x128xf32>
      %c0_13 = arith.constant 0 : index
      %c0_14 = arith.constant 0 : index
      %15 = vector.load %arg6[%c0_13, %c0_14] : memref<32x128xf32, #tpu.memory_space<vmem>>, vector<32x128xf32>
      tpu.vector_store %arg6[%c0_13, %c0_14], %14 {strides = array<i32>} : memref<32x128xf32, #tpu.memory_space<vmem>>, vector<32x128xf32>,
    } else {
    }
    %c0 = arith.constant 0 : index
    %c0_1 = arith.constant 0 : index
    %3 = vector.load %arg6[%c0, %c0_1] : memref<32x128xf32, #tpu.memory_space<vmem>>, vector<32x128xf32>
    %c0_2 = arith.constant 0 : index
    %c0_3 = arith.constant 0 : index
    %c0_4 = arith.constant 0 : index
    %4 = vector.load %arg2[%c0_2, %c0_3, %c0_4] : memref<1x32x128xbf16, #tpu.memory_space<vmem>>, vector<1x32x128xbf16>
    %5 = vector.shape_cast %4 : vector<1x32x128xbf16> to vector<32x128xbf16>
    %c0_5 = arith.constant 0 : index
    %c0_6 = arith.constant 0 : index
    %c0_7 = arith.constant 0 : index
    %6 = vector.load %arg3[%c0_5, %c0_6, %c0_7] : memref<1x128x128xbf16, #tpu.memory_space<vmem>>, vector<1x128x128xbf16>
    %7 = vector.shape_cast %6 : vector<1x128x128xbf16> to vector<128x128xbf16>
    %cst = arith.constant dense<0.000000e+00> : vector<32x128xf32>
    %8 = tpu.matmul %5, %7, %cst {dimension_numbers = #tpu.dot_dimension_numbers<[1], [0], [0], [1], [0, 0, 1, 1], [], []>} : vector<32x128xbf16>, vector<128x128xbf16>, vector<32x128xf32> -> vector<32x128xf32>
    %9 = arith.addf %3, %8 : vector<32x128xf32>
    %c0_8 = arith.constant 0 : index
    %c0_9 = arith.constant 0 : index
    %10 = vector.load %arg6[%c0_8, %c0_9] : memref<32x128xf32, #tpu.memory_space<vmem>>, vector<32x128xf32>
    tpu.vector_store %arg6[%c0_8, %c0_9], %9 {strides = array<i32>} : memref<32x128xf32, #tpu.memory_space<vmem>>, vector<32x128xf32>,
    %c0_i32_10 = arith.constant 0 : i32
    %11 = arith.cmpi eq, %arg1, %c0_i32_10 : i32
    %12 = arith.extui %11 : i1 to i32
    %c0_i32_11 = arith.constant 0 : i32
    %13 = arith.cmpi ne, %12, %c0_i32_11 : i32
    scf.if %13 {
      %c0_12 = arith.constant 0 : index
      %c0_13 = arith.constant 0 : index
      %14 = vector.load %arg6[%c0_12, %c0_13] : memref<32x128xf32, #tpu.memory_space<vmem>>, vector<32x128xf32>
      %c0_14 = arith.constant 0 : index
      %c0_15 = arith.constant 0 : index
      %15 = vector.load %arg4[%c0_14, %c0_15] : memref<1x128xf32, #tpu.memory_space<vmem>>, vector<1x128xf32>
      %16 = vector.broadcast %15 : vector<1x128xf32> to vector<32x128xf32>
      %17 = arith.addf %14, %16 : vector<32x128xf32>
      %cst_16 = arith.constant 0.000000e+00 : f32
      %18 = vector.broadcast %cst_16 : f32 to vector<32x128xf32>
      %19 = arith.maximumf %17, %18 : vector<32x128xf32>
      %20 = arith.truncf %19 : vector<32x128xf32> to vector<32x128xbf16>
      %c0_17 = arith.constant 0 : index
      %c0_18 = arith.constant 0 : index
      %21 = vector.load %arg5[%c0_17, %c0_18] : memref<32x128xbf16, #tpu.memory_space<vmem>>, vector<32x128xbf16>
      tpu.vector_store %arg5[%c0_17, %c0_18], %20 {strides = array<i32>} : memref<32x128xbf16, #tpu.memory_space<vmem>>, vector<32x128xbf16>,
    } else {
    }
    return
  }
  func.func @transform_0(%arg0: i32, %arg1: i32) -> (i32, i32, i32) {
    %c0_i32 = arith.constant 0 : i32
    %c0_i32_0 = arith.constant 0 : i32
    return %arg1, %arg0, %c0_i32 : i32, i32, i32
  }
  func.func @transform_1(%arg0: i32, %arg1: i32) -> (i32, i32, i32) {
    %c0_i32 = arith.constant 0 : i32
    %c0_i32_0 = arith.constant 0 : i32
    %c0_i32_1 = arith.constant 0 : i32
    return %arg1, %c0_i32, %c0_i32_0 : i32, i32, i32
  }
  func.func @transform_2(%arg0: i32, %arg1: i32) -> (i32, i32) {
    %c0_i32 = arith.constant 0 : i32
    %c0_i32_0 = arith.constant 0 : i32
    %c0_i32_1 = arith.constant 0 : i32
    return %c0_i32, %c0_i32_0 : i32, i32
  }
  func.func @transform_3(%arg0: i32, %arg1: i32) -> (i32, i32) {
    %c0_i32 = arith.constant 0 : i32
    %c0_i32_0 = arith.constant 0 : i32
    return %arg0, %c0_i32 : i32, i32
  }
}

module attributes {stable_mosaic.version = 11 : i64} {
  func.func @_gemm_taps_kernel(%arg0: i32, %arg1: i32, %arg2: memref<1x32x128xbf16, #tpu.memory_space<vmem>>, %arg3: memref<1x128x128xbf16, #tpu.memory_space<vmem>>, %arg4: memref<1x128xf32, #tpu.memory_space<vmem>>, %arg5: memref<32x128xbf16, #tpu.memory_space<vmem>>, %arg6: memref<32x128xf32, #tpu.memory_space<vmem>>) attributes {dimension_semantics = [#tpu.dimension_semantics<parallel>, #tpu.dimension_semantics<arbitrary>], iteration_bounds = array<i64: 1, 9>, scalar_prefetch = 0 : i64, scratch_operands = 1 : i64, tpu.core_type = #tpu.core_type<tc>, window_params = [{transform_indices = @transform_0, window_bounds = array<i64: 1, 32, 128>}, {transform_indices = @transform_1, window_bounds = array<i64: 1, 128, 128>}, {pipeline_mode = #tpu.pipeline_mode<synchronous>, transform_indices = @transform_2, window_bounds = array<i64: 1, 128>}, {transform_indices = @transform_3, window_bounds = array<i64: 32, 128>}]} {
    %c0_i32 = arith.constant 0 : i32
    %0 = arith.cmpi eq, %arg1, %c0_i32 : i32
    %1 = arith.extui %0 : i1 to i32
    %c0_i32_0 = arith.constant 0 : i32
    %2 = arith.cmpi ne, %1, %c0_i32_0 : i32
    scf.if %2 {
      %cst_11 = arith.constant 0.000000e+00 : f32
      %14 = vector.broadcast %cst_11 : f32 to vector<32x128xf32>
      %c0_12 = arith.constant 0 : index
      %c0_13 = arith.constant 0 : index
      %15 = vector.load %arg6[%c0_12, %c0_13] : memref<32x128xf32, #tpu.memory_space<vmem>>, vector<32x128xf32>
      tpu.vector_store %arg6[%c0_12, %c0_13], %14 {strides = array<i32>} : memref<32x128xf32, #tpu.memory_space<vmem>>, vector<32x128xf32>,
    } else {
    }
    %c0 = arith.constant 0 : index
    %c0_1 = arith.constant 0 : index
    %3 = vector.load %arg6[%c0, %c0_1] : memref<32x128xf32, #tpu.memory_space<vmem>>, vector<32x128xf32>
    %c0_2 = arith.constant 0 : index
    %c0_3 = arith.constant 0 : index
    %c0_4 = arith.constant 0 : index
    %4 = vector.load %arg2[%c0_2, %c0_3, %c0_4] : memref<1x32x128xbf16, #tpu.memory_space<vmem>>, vector<1x32x128xbf16>
    %5 = vector.shape_cast %4 : vector<1x32x128xbf16> to vector<32x128xbf16>
    %c0_5 = arith.constant 0 : index
    %c0_6 = arith.constant 0 : index
    %c0_7 = arith.constant 0 : index
    %6 = vector.load %arg3[%c0_5, %c0_6, %c0_7] : memref<1x128x128xbf16, #tpu.memory_space<vmem>>, vector<1x128x128xbf16>
    %7 = vector.shape_cast %6 : vector<1x128x128xbf16> to vector<128x128xbf16>
    %cst = arith.constant dense<0.000000e+00> : vector<32x128xf32>
    %8 = tpu.matmul %5, %7, %cst {dimension_numbers = #tpu.dot_dimension_numbers<[1], [0], [0], [1], [0, 0, 1, 1], [], []>} : vector<32x128xbf16>, vector<128x128xbf16>, vector<32x128xf32> -> vector<32x128xf32>
    %9 = arith.addf %3, %8 : vector<32x128xf32>
    %c0_8 = arith.constant 0 : index
    %c0_9 = arith.constant 0 : index
    %10 = vector.load %arg6[%c0_8, %c0_9] : memref<32x128xf32, #tpu.memory_space<vmem>>, vector<32x128xf32>
    tpu.vector_store %arg6[%c0_8, %c0_9], %9 {strides = array<i32>} : memref<32x128xf32, #tpu.memory_space<vmem>>, vector<32x128xf32>,
    %c8_i32 = arith.constant 8 : i32
    %11 = arith.cmpi eq, %arg1, %c8_i32 : i32
    %12 = arith.extui %11 : i1 to i32
    %c0_i32_10 = arith.constant 0 : i32
    %13 = arith.cmpi ne, %12, %c0_i32_10 : i32
    scf.if %13 {
      %c0_11 = arith.constant 0 : index
      %c0_12 = arith.constant 0 : index
      %14 = vector.load %arg6[%c0_11, %c0_12] : memref<32x128xf32, #tpu.memory_space<vmem>>, vector<32x128xf32>
      %c0_13 = arith.constant 0 : index
      %c0_14 = arith.constant 0 : index
      %15 = vector.load %arg4[%c0_13, %c0_14] : memref<1x128xf32, #tpu.memory_space<vmem>>, vector<1x128xf32>
      %16 = vector.broadcast %15 : vector<1x128xf32> to vector<32x128xf32>
      %17 = arith.addf %14, %16 : vector<32x128xf32>
      %cst_15 = arith.constant 0.000000e+00 : f32
      %18 = vector.broadcast %cst_15 : f32 to vector<32x128xf32>
      %19 = arith.maximumf %17, %18 : vector<32x128xf32>
      %20 = arith.truncf %19 : vector<32x128xf32> to vector<32x128xbf16>
      %c0_16 = arith.constant 0 : index
      %c0_17 = arith.constant 0 : index
      %21 = vector.load %arg5[%c0_16, %c0_17] : memref<32x128xbf16, #tpu.memory_space<vmem>>, vector<32x128xbf16>
      tpu.vector_store %arg5[%c0_16, %c0_17], %20 {strides = array<i32>} : memref<32x128xbf16, #tpu.memory_space<vmem>>, vector<32x128xbf16>,
    } else {
    }
    return
  }
  func.func @transform_0(%arg0: i32, %arg1: i32) -> (i32, i32, i32) {
    %c0_i32 = arith.constant 0 : i32
    %c0_i32_0 = arith.constant 0 : i32
    return %arg1, %arg0, %c0_i32 : i32, i32, i32
  }
  func.func @transform_1(%arg0: i32, %arg1: i32) -> (i32, i32, i32) {
    %c0_i32 = arith.constant 0 : i32
    %c0_i32_0 = arith.constant 0 : i32
    %c0_i32_1 = arith.constant 0 : i32
    return %arg1, %c0_i32, %c0_i32_0 : i32, i32, i32
  }
  func.func @transform_2(%arg0: i32, %arg1: i32) -> (i32, i32) {
    %c0_i32 = arith.constant 0 : i32
    %c0_i32_0 = arith.constant 0 : i32
    %c0_i32_1 = arith.constant 0 : i32
    return %c0_i32, %c0_i32_0 : i32, i32
  }
  func.func @transform_3(%arg0: i32, %arg1: i32) -> (i32, i32) {
    %c0_i32 = arith.constant 0 : i32
    %c0_i32_0 = arith.constant 0 : i32
    return %arg0, %c0_i32 : i32, i32
  }
}

module attributes {stable_mosaic.version = 11 : i64} {
  func.func @_gemm_taps_kernel(%arg0: i32, %arg1: i32, %arg2: memref<1x8x128xbf16, #tpu.memory_space<vmem>>, %arg3: memref<1x128x128xbf16, #tpu.memory_space<vmem>>, %arg4: memref<1x128xf32, #tpu.memory_space<vmem>>, %arg5: memref<8x128xbf16, #tpu.memory_space<vmem>>, %arg6: memref<8x128xf32, #tpu.memory_space<vmem>>) attributes {dimension_semantics = [#tpu.dimension_semantics<parallel>, #tpu.dimension_semantics<arbitrary>], iteration_bounds = array<i64: 1, 1>, scalar_prefetch = 0 : i64, scratch_operands = 1 : i64, tpu.core_type = #tpu.core_type<tc>, window_params = [{transform_indices = @transform_0, window_bounds = array<i64: 1, 8, 128>}, {transform_indices = @transform_1, window_bounds = array<i64: 1, 128, 128>}, {pipeline_mode = #tpu.pipeline_mode<synchronous>, transform_indices = @transform_2, window_bounds = array<i64: 1, 128>}, {transform_indices = @transform_3, window_bounds = array<i64: 8, 128>}]} {
    %c0_i32 = arith.constant 0 : i32
    %0 = arith.cmpi eq, %arg1, %c0_i32 : i32
    %1 = arith.extui %0 : i1 to i32
    %c0_i32_0 = arith.constant 0 : i32
    %2 = arith.cmpi ne, %1, %c0_i32_0 : i32
    scf.if %2 {
      %cst_12 = arith.constant 0.000000e+00 : f32
      %14 = vector.broadcast %cst_12 : f32 to vector<8x128xf32>
      %c0_13 = arith.constant 0 : index
      %c0_14 = arith.constant 0 : index
      %15 = vector.load %arg6[%c0_13, %c0_14] : memref<8x128xf32, #tpu.memory_space<vmem>>, vector<8x128xf32>
      tpu.vector_store %arg6[%c0_13, %c0_14], %14 {strides = array<i32>} : memref<8x128xf32, #tpu.memory_space<vmem>>, vector<8x128xf32>,
    } else {
    }
    %c0 = arith.constant 0 : index
    %c0_1 = arith.constant 0 : index
    %3 = vector.load %arg6[%c0, %c0_1] : memref<8x128xf32, #tpu.memory_space<vmem>>, vector<8x128xf32>
    %c0_2 = arith.constant 0 : index
    %c0_3 = arith.constant 0 : index
    %c0_4 = arith.constant 0 : index
    %4 = vector.load %arg2[%c0_2, %c0_3, %c0_4] : memref<1x8x128xbf16, #tpu.memory_space<vmem>>, vector<1x8x128xbf16>
    %5 = vector.shape_cast %4 : vector<1x8x128xbf16> to vector<8x128xbf16>
    %c0_5 = arith.constant 0 : index
    %c0_6 = arith.constant 0 : index
    %c0_7 = arith.constant 0 : index
    %6 = vector.load %arg3[%c0_5, %c0_6, %c0_7] : memref<1x128x128xbf16, #tpu.memory_space<vmem>>, vector<1x128x128xbf16>
    %7 = vector.shape_cast %6 : vector<1x128x128xbf16> to vector<128x128xbf16>
    %cst = arith.constant dense<0.000000e+00> : vector<8x128xf32>
    %8 = tpu.matmul %5, %7, %cst {dimension_numbers = #tpu.dot_dimension_numbers<[1], [0], [0], [1], [0, 0, 1, 1], [], []>} : vector<8x128xbf16>, vector<128x128xbf16>, vector<8x128xf32> -> vector<8x128xf32>
    %9 = arith.addf %3, %8 : vector<8x128xf32>
    %c0_8 = arith.constant 0 : index
    %c0_9 = arith.constant 0 : index
    %10 = vector.load %arg6[%c0_8, %c0_9] : memref<8x128xf32, #tpu.memory_space<vmem>>, vector<8x128xf32>
    tpu.vector_store %arg6[%c0_8, %c0_9], %9 {strides = array<i32>} : memref<8x128xf32, #tpu.memory_space<vmem>>, vector<8x128xf32>,
    %c0_i32_10 = arith.constant 0 : i32
    %11 = arith.cmpi eq, %arg1, %c0_i32_10 : i32
    %12 = arith.extui %11 : i1 to i32
    %c0_i32_11 = arith.constant 0 : i32
    %13 = arith.cmpi ne, %12, %c0_i32_11 : i32
    scf.if %13 {
      %c0_12 = arith.constant 0 : index
      %c0_13 = arith.constant 0 : index
      %14 = vector.load %arg6[%c0_12, %c0_13] : memref<8x128xf32, #tpu.memory_space<vmem>>, vector<8x128xf32>
      %c0_14 = arith.constant 0 : index
      %c0_15 = arith.constant 0 : index
      %15 = vector.load %arg4[%c0_14, %c0_15] : memref<1x128xf32, #tpu.memory_space<vmem>>, vector<1x128xf32>
      %16 = vector.broadcast %15 : vector<1x128xf32> to vector<8x128xf32>
      %17 = arith.addf %14, %16 : vector<8x128xf32>
      %18 = arith.truncf %17 : vector<8x128xf32> to vector<8x128xbf16>
      %c0_16 = arith.constant 0 : index
      %c0_17 = arith.constant 0 : index
      %19 = vector.load %arg5[%c0_16, %c0_17] : memref<8x128xbf16, #tpu.memory_space<vmem>>, vector<8x128xbf16>
      tpu.vector_store %arg5[%c0_16, %c0_17], %18 {strides = array<i32>} : memref<8x128xbf16, #tpu.memory_space<vmem>>, vector<8x128xbf16>,
    } else {
    }
    return
  }
  func.func @transform_0(%arg0: i32, %arg1: i32) -> (i32, i32, i32) {
    %c0_i32 = arith.constant 0 : i32
    %c0_i32_0 = arith.constant 0 : i32
    return %arg1, %arg0, %c0_i32 : i32, i32, i32
  }
  func.func @transform_1(%arg0: i32, %arg1: i32) -> (i32, i32, i32) {
    %c0_i32 = arith.constant 0 : i32
    %c0_i32_0 = arith.constant 0 : i32
    %c0_i32_1 = arith.constant 0 : i32
    return %arg1, %c0_i32, %c0_i32_0 : i32, i32, i32
  }
  func.func @transform_2(%arg0: i32, %arg1: i32) -> (i32, i32) {
    %c0_i32 = arith.constant 0 : i32
    %c0_i32_0 = arith.constant 0 : i32
    %c0_i32_1 = arith.constant 0 : i32
    return %c0_i32, %c0_i32_0 : i32, i32
  }
  func.func @transform_3(%arg0: i32, %arg1: i32) -> (i32, i32) {
    %c0_i32 = arith.constant 0 : i32
    %c0_i32_0 = arith.constant 0 : i32
    return %arg0, %c0_i32 : i32, i32
  }
}

module attributes {stable_mosaic.version = 11 : i64} {
  func.func @_gemm_taps_res_kernel(%arg0: i32, %arg1: i32, %arg2: memref<1x8x128xbf16, #tpu.memory_space<vmem>>, %arg3: memref<1x128x128xbf16, #tpu.memory_space<vmem>>, %arg4: memref<1x128xf32, #tpu.memory_space<vmem>>, %arg5: memref<8x128xbf16, #tpu.memory_space<vmem>>, %arg6: memref<8x128xbf16, #tpu.memory_space<vmem>>, %arg7: memref<8x128xf32, #tpu.memory_space<vmem>>) attributes {dimension_semantics = [#tpu.dimension_semantics<parallel>, #tpu.dimension_semantics<arbitrary>], iteration_bounds = array<i64: 1, 1>, scalar_prefetch = 0 : i64, scratch_operands = 1 : i64, tpu.core_type = #tpu.core_type<tc>, window_params = [{transform_indices = @transform_0, window_bounds = array<i64: 1, 8, 128>}, {transform_indices = @transform_1, window_bounds = array<i64: 1, 128, 128>}, {pipeline_mode = #tpu.pipeline_mode<synchronous>, transform_indices = @transform_2, window_bounds = array<i64: 1, 128>}, {transform_indices = @transform_3, window_bounds = array<i64: 8, 128>}, {transform_indices = @transform_4, window_bounds = array<i64: 8, 128>}]} {
    %c0_i32 = arith.constant 0 : i32
    %0 = arith.cmpi eq, %arg1, %c0_i32 : i32
    %1 = arith.extui %0 : i1 to i32
    %c0_i32_0 = arith.constant 0 : i32
    %2 = arith.cmpi ne, %1, %c0_i32_0 : i32
    scf.if %2 {
      %cst_12 = arith.constant 0.000000e+00 : f32
      %14 = vector.broadcast %cst_12 : f32 to vector<8x128xf32>
      %c0_13 = arith.constant 0 : index
      %c0_14 = arith.constant 0 : index
      %15 = vector.load %arg7[%c0_13, %c0_14] : memref<8x128xf32, #tpu.memory_space<vmem>>, vector<8x128xf32>
      tpu.vector_store %arg7[%c0_13, %c0_14], %14 {strides = array<i32>} : memref<8x128xf32, #tpu.memory_space<vmem>>, vector<8x128xf32>,
    } else {
    }
    %c0 = arith.constant 0 : index
    %c0_1 = arith.constant 0 : index
    %3 = vector.load %arg7[%c0, %c0_1] : memref<8x128xf32, #tpu.memory_space<vmem>>, vector<8x128xf32>
    %c0_2 = arith.constant 0 : index
    %c0_3 = arith.constant 0 : index
    %c0_4 = arith.constant 0 : index
    %4 = vector.load %arg2[%c0_2, %c0_3, %c0_4] : memref<1x8x128xbf16, #tpu.memory_space<vmem>>, vector<1x8x128xbf16>
    %5 = vector.shape_cast %4 : vector<1x8x128xbf16> to vector<8x128xbf16>
    %c0_5 = arith.constant 0 : index
    %c0_6 = arith.constant 0 : index
    %c0_7 = arith.constant 0 : index
    %6 = vector.load %arg3[%c0_5, %c0_6, %c0_7] : memref<1x128x128xbf16, #tpu.memory_space<vmem>>, vector<1x128x128xbf16>
    %7 = vector.shape_cast %6 : vector<1x128x128xbf16> to vector<128x128xbf16>
    %cst = arith.constant dense<0.000000e+00> : vector<8x128xf32>
    %8 = tpu.matmul %5, %7, %cst {dimension_numbers = #tpu.dot_dimension_numbers<[1], [0], [0], [1], [0, 0, 1, 1], [], []>} : vector<8x128xbf16>, vector<128x128xbf16>, vector<8x128xf32> -> vector<8x128xf32>
    %9 = arith.addf %3, %8 : vector<8x128xf32>
    %c0_8 = arith.constant 0 : index
    %c0_9 = arith.constant 0 : index
    %10 = vector.load %arg7[%c0_8, %c0_9] : memref<8x128xf32, #tpu.memory_space<vmem>>, vector<8x128xf32>
    tpu.vector_store %arg7[%c0_8, %c0_9], %9 {strides = array<i32>} : memref<8x128xf32, #tpu.memory_space<vmem>>, vector<8x128xf32>,
    %c0_i32_10 = arith.constant 0 : i32
    %11 = arith.cmpi eq, %arg1, %c0_i32_10 : i32
    %12 = arith.extui %11 : i1 to i32
    %c0_i32_11 = arith.constant 0 : i32
    %13 = arith.cmpi ne, %12, %c0_i32_11 : i32
    scf.if %13 {
      %c0_12 = arith.constant 0 : index
      %c0_13 = arith.constant 0 : index
      %14 = vector.load %arg7[%c0_12, %c0_13] : memref<8x128xf32, #tpu.memory_space<vmem>>, vector<8x128xf32>
      %c0_14 = arith.constant 0 : index
      %c0_15 = arith.constant 0 : index
      %15 = vector.load %arg4[%c0_14, %c0_15] : memref<1x128xf32, #tpu.memory_space<vmem>>, vector<1x128xf32>
      %16 = vector.broadcast %15 : vector<1x128xf32> to vector<8x128xf32>
      %17 = arith.addf %14, %16 : vector<8x128xf32>
      %c0_16 = arith.constant 0 : index
      %c0_17 = arith.constant 0 : index
      %18 = vector.load %arg5[%c0_16, %c0_17] : memref<8x128xbf16, #tpu.memory_space<vmem>>, vector<8x128xbf16>
      %19 = arith.extf %18 : vector<8x128xbf16> to vector<8x128xf32>
      %20 = arith.addf %17, %19 : vector<8x128xf32>
      %cst_18 = arith.constant 0.000000e+00 : f32
      %21 = vector.broadcast %cst_18 : f32 to vector<8x128xf32>
      %22 = arith.maximumf %20, %21 : vector<8x128xf32>
      %23 = arith.truncf %22 : vector<8x128xf32> to vector<8x128xbf16>
      %c0_19 = arith.constant 0 : index
      %c0_20 = arith.constant 0 : index
      %24 = vector.load %arg6[%c0_19, %c0_20] : memref<8x128xbf16, #tpu.memory_space<vmem>>, vector<8x128xbf16>
      tpu.vector_store %arg6[%c0_19, %c0_20], %23 {strides = array<i32>} : memref<8x128xbf16, #tpu.memory_space<vmem>>, vector<8x128xbf16>,
    } else {
    }
    return
  }
  func.func @transform_0(%arg0: i32, %arg1: i32) -> (i32, i32, i32) {
    %c0_i32 = arith.constant 0 : i32
    %c0_i32_0 = arith.constant 0 : i32
    return %arg1, %arg0, %c0_i32 : i32, i32, i32
  }
  func.func @transform_1(%arg0: i32, %arg1: i32) -> (i32, i32, i32) {
    %c0_i32 = arith.constant 0 : i32
    %c0_i32_0 = arith.constant 0 : i32
    %c0_i32_1 = arith.constant 0 : i32
    return %arg1, %c0_i32, %c0_i32_0 : i32, i32, i32
  }
  func.func @transform_2(%arg0: i32, %arg1: i32) -> (i32, i32) {
    %c0_i32 = arith.constant 0 : i32
    %c0_i32_0 = arith.constant 0 : i32
    %c0_i32_1 = arith.constant 0 : i32
    return %c0_i32, %c0_i32_0 : i32, i32
  }
  func.func @transform_3(%arg0: i32, %arg1: i32) -> (i32, i32) {
    %c0_i32 = arith.constant 0 : i32
    %c0_i32_0 = arith.constant 0 : i32
    return %arg0, %c0_i32 : i32, i32
  }
  func.func @transform_4(%arg0: i32, %arg1: i32) -> (i32, i32) {
    %c0_i32 = arith.constant 0 : i32
    %c0_i32_0 = arith.constant 0 : i32
    return %arg0, %c0_i32 : i32, i32
  }
}

module attributes {stable_mosaic.version = 11 : i64} {
  func.func @_gemm_taps_kernel(%arg0: i32, %arg1: i32, %arg2: memref<1x8x128xbf16, #tpu.memory_space<vmem>>, %arg3: memref<1x128x128xbf16, #tpu.memory_space<vmem>>, %arg4: memref<1x128xf32, #tpu.memory_space<vmem>>, %arg5: memref<8x128xbf16, #tpu.memory_space<vmem>>, %arg6: memref<8x128xf32, #tpu.memory_space<vmem>>) attributes {dimension_semantics = [#tpu.dimension_semantics<parallel>, #tpu.dimension_semantics<arbitrary>], iteration_bounds = array<i64: 1, 1>, scalar_prefetch = 0 : i64, scratch_operands = 1 : i64, tpu.core_type = #tpu.core_type<tc>, window_params = [{transform_indices = @transform_0, window_bounds = array<i64: 1, 8, 128>}, {transform_indices = @transform_1, window_bounds = array<i64: 1, 128, 128>}, {pipeline_mode = #tpu.pipeline_mode<synchronous>, transform_indices = @transform_2, window_bounds = array<i64: 1, 128>}, {transform_indices = @transform_3, window_bounds = array<i64: 8, 128>}]} {
    %c0_i32 = arith.constant 0 : i32
    %0 = arith.cmpi eq, %arg1, %c0_i32 : i32
    %1 = arith.extui %0 : i1 to i32
    %c0_i32_0 = arith.constant 0 : i32
    %2 = arith.cmpi ne, %1, %c0_i32_0 : i32
    scf.if %2 {
      %cst_12 = arith.constant 0.000000e+00 : f32
      %14 = vector.broadcast %cst_12 : f32 to vector<8x128xf32>
      %c0_13 = arith.constant 0 : index
      %c0_14 = arith.constant 0 : index
      %15 = vector.load %arg6[%c0_13, %c0_14] : memref<8x128xf32, #tpu.memory_space<vmem>>, vector<8x128xf32>
      tpu.vector_store %arg6[%c0_13, %c0_14], %14 {strides = array<i32>} : memref<8x128xf32, #tpu.memory_space<vmem>>, vector<8x128xf32>,
    } else {
    }
    %c0 = arith.constant 0 : index
    %c0_1 = arith.constant 0 : index
    %3 = vector.load %arg6[%c0, %c0_1] : memref<8x128xf32, #tpu.memory_space<vmem>>, vector<8x128xf32>
    %c0_2 = arith.constant 0 : index
    %c0_3 = arith.constant 0 : index
    %c0_4 = arith.constant 0 : index
    %4 = vector.load %arg2[%c0_2, %c0_3, %c0_4] : memref<1x8x128xbf16, #tpu.memory_space<vmem>>, vector<1x8x128xbf16>
    %5 = vector.shape_cast %4 : vector<1x8x128xbf16> to vector<8x128xbf16>
    %c0_5 = arith.constant 0 : index
    %c0_6 = arith.constant 0 : index
    %c0_7 = arith.constant 0 : index
    %6 = vector.load %arg3[%c0_5, %c0_6, %c0_7] : memref<1x128x128xbf16, #tpu.memory_space<vmem>>, vector<1x128x128xbf16>
    %7 = vector.shape_cast %6 : vector<1x128x128xbf16> to vector<128x128xbf16>
    %cst = arith.constant dense<0.000000e+00> : vector<8x128xf32>
    %8 = tpu.matmul %5, %7, %cst {dimension_numbers = #tpu.dot_dimension_numbers<[1], [0], [0], [1], [0, 0, 1, 1], [], []>} : vector<8x128xbf16>, vector<128x128xbf16>, vector<8x128xf32> -> vector<8x128xf32>
    %9 = arith.addf %3, %8 : vector<8x128xf32>
    %c0_8 = arith.constant 0 : index
    %c0_9 = arith.constant 0 : index
    %10 = vector.load %arg6[%c0_8, %c0_9] : memref<8x128xf32, #tpu.memory_space<vmem>>, vector<8x128xf32>
    tpu.vector_store %arg6[%c0_8, %c0_9], %9 {strides = array<i32>} : memref<8x128xf32, #tpu.memory_space<vmem>>, vector<8x128xf32>,
    %c0_i32_10 = arith.constant 0 : i32
    %11 = arith.cmpi eq, %arg1, %c0_i32_10 : i32
    %12 = arith.extui %11 : i1 to i32
    %c0_i32_11 = arith.constant 0 : i32
    %13 = arith.cmpi ne, %12, %c0_i32_11 : i32
    scf.if %13 {
      %c0_12 = arith.constant 0 : index
      %c0_13 = arith.constant 0 : index
      %14 = vector.load %arg6[%c0_12, %c0_13] : memref<8x128xf32, #tpu.memory_space<vmem>>, vector<8x128xf32>
      %c0_14 = arith.constant 0 : index
      %c0_15 = arith.constant 0 : index
      %15 = vector.load %arg4[%c0_14, %c0_15] : memref<1x128xf32, #tpu.memory_space<vmem>>, vector<1x128xf32>
      %16 = vector.broadcast %15 : vector<1x128xf32> to vector<8x128xf32>
      %17 = arith.addf %14, %16 : vector<8x128xf32>
      %cst_16 = arith.constant 0.000000e+00 : f32
      %18 = vector.broadcast %cst_16 : f32 to vector<8x128xf32>
      %19 = arith.maximumf %17, %18 : vector<8x128xf32>
      %20 = arith.truncf %19 : vector<8x128xf32> to vector<8x128xbf16>
      %c0_17 = arith.constant 0 : index
      %c0_18 = arith.constant 0 : index
      %21 = vector.load %arg5[%c0_17, %c0_18] : memref<8x128xbf16, #tpu.memory_space<vmem>>, vector<8x128xbf16>
      tpu.vector_store %arg5[%c0_17, %c0_18], %20 {strides = array<i32>} : memref<8x128xbf16, #tpu.memory_space<vmem>>, vector<8x128xbf16>,
    } else {
    }
    return
  }
  func.func @transform_0(%arg0: i32, %arg1: i32) -> (i32, i32, i32) {
    %c0_i32 = arith.constant 0 : i32
    %c0_i32_0 = arith.constant 0 : i32
    return %arg1, %arg0, %c0_i32 : i32, i32, i32
  }
  func.func @transform_1(%arg0: i32, %arg1: i32) -> (i32, i32, i32) {
    %c0_i32 = arith.constant 0 : i32
    %c0_i32_0 = arith.constant 0 : i32
    %c0_i32_1 = arith.constant 0 : i32
    return %arg1, %c0_i32, %c0_i32_0 : i32, i32, i32
  }
  func.func @transform_2(%arg0: i32, %arg1: i32) -> (i32, i32) {
    %c0_i32 = arith.constant 0 : i32
    %c0_i32_0 = arith.constant 0 : i32
    %c0_i32_1 = arith.constant 0 : i32
    return %c0_i32, %c0_i32_0 : i32, i32
  }
  func.func @transform_3(%arg0: i32, %arg1: i32) -> (i32, i32) {
    %c0_i32 = arith.constant 0 : i32
    %c0_i32_0 = arith.constant 0 : i32
    return %arg0, %c0_i32 : i32, i32
  }
}

module attributes {stable_mosaic.version = 11 : i64} {
  func.func @_gemm_taps_kernel(%arg0: i32, %arg1: i32, %arg2: memref<1x8x128xbf16, #tpu.memory_space<vmem>>, %arg3: memref<1x128x128xbf16, #tpu.memory_space<vmem>>, %arg4: memref<1x128xf32, #tpu.memory_space<vmem>>, %arg5: memref<8x128xbf16, #tpu.memory_space<vmem>>, %arg6: memref<8x128xf32, #tpu.memory_space<vmem>>) attributes {dimension_semantics = [#tpu.dimension_semantics<parallel>, #tpu.dimension_semantics<arbitrary>], iteration_bounds = array<i64: 1, 9>, scalar_prefetch = 0 : i64, scratch_operands = 1 : i64, tpu.core_type = #tpu.core_type<tc>, window_params = [{transform_indices = @transform_0, window_bounds = array<i64: 1, 8, 128>}, {transform_indices = @transform_1, window_bounds = array<i64: 1, 128, 128>}, {pipeline_mode = #tpu.pipeline_mode<synchronous>, transform_indices = @transform_2, window_bounds = array<i64: 1, 128>}, {transform_indices = @transform_3, window_bounds = array<i64: 8, 128>}]} {
    %c0_i32 = arith.constant 0 : i32
    %0 = arith.cmpi eq, %arg1, %c0_i32 : i32
    %1 = arith.extui %0 : i1 to i32
    %c0_i32_0 = arith.constant 0 : i32
    %2 = arith.cmpi ne, %1, %c0_i32_0 : i32
    scf.if %2 {
      %cst_11 = arith.constant 0.000000e+00 : f32
      %14 = vector.broadcast %cst_11 : f32 to vector<8x128xf32>
      %c0_12 = arith.constant 0 : index
      %c0_13 = arith.constant 0 : index
      %15 = vector.load %arg6[%c0_12, %c0_13] : memref<8x128xf32, #tpu.memory_space<vmem>>, vector<8x128xf32>
      tpu.vector_store %arg6[%c0_12, %c0_13], %14 {strides = array<i32>} : memref<8x128xf32, #tpu.memory_space<vmem>>, vector<8x128xf32>,
    } else {
    }
    %c0 = arith.constant 0 : index
    %c0_1 = arith.constant 0 : index
    %3 = vector.load %arg6[%c0, %c0_1] : memref<8x128xf32, #tpu.memory_space<vmem>>, vector<8x128xf32>
    %c0_2 = arith.constant 0 : index
    %c0_3 = arith.constant 0 : index
    %c0_4 = arith.constant 0 : index
    %4 = vector.load %arg2[%c0_2, %c0_3, %c0_4] : memref<1x8x128xbf16, #tpu.memory_space<vmem>>, vector<1x8x128xbf16>
    %5 = vector.shape_cast %4 : vector<1x8x128xbf16> to vector<8x128xbf16>
    %c0_5 = arith.constant 0 : index
    %c0_6 = arith.constant 0 : index
    %c0_7 = arith.constant 0 : index
    %6 = vector.load %arg3[%c0_5, %c0_6, %c0_7] : memref<1x128x128xbf16, #tpu.memory_space<vmem>>, vector<1x128x128xbf16>
    %7 = vector.shape_cast %6 : vector<1x128x128xbf16> to vector<128x128xbf16>
    %cst = arith.constant dense<0.000000e+00> : vector<8x128xf32>
    %8 = tpu.matmul %5, %7, %cst {dimension_numbers = #tpu.dot_dimension_numbers<[1], [0], [0], [1], [0, 0, 1, 1], [], []>} : vector<8x128xbf16>, vector<128x128xbf16>, vector<8x128xf32> -> vector<8x128xf32>
    %9 = arith.addf %3, %8 : vector<8x128xf32>
    %c0_8 = arith.constant 0 : index
    %c0_9 = arith.constant 0 : index
    %10 = vector.load %arg6[%c0_8, %c0_9] : memref<8x128xf32, #tpu.memory_space<vmem>>, vector<8x128xf32>
    tpu.vector_store %arg6[%c0_8, %c0_9], %9 {strides = array<i32>} : memref<8x128xf32, #tpu.memory_space<vmem>>, vector<8x128xf32>,
    %c8_i32 = arith.constant 8 : i32
    %11 = arith.cmpi eq, %arg1, %c8_i32 : i32
    %12 = arith.extui %11 : i1 to i32
    %c0_i32_10 = arith.constant 0 : i32
    %13 = arith.cmpi ne, %12, %c0_i32_10 : i32
    scf.if %13 {
      %c0_11 = arith.constant 0 : index
      %c0_12 = arith.constant 0 : index
      %14 = vector.load %arg6[%c0_11, %c0_12] : memref<8x128xf32, #tpu.memory_space<vmem>>, vector<8x128xf32>
      %c0_13 = arith.constant 0 : index
      %c0_14 = arith.constant 0 : index
      %15 = vector.load %arg4[%c0_13, %c0_14] : memref<1x128xf32, #tpu.memory_space<vmem>>, vector<1x128xf32>
      %16 = vector.broadcast %15 : vector<1x128xf32> to vector<8x128xf32>
      %17 = arith.addf %14, %16 : vector<8x128xf32>
      %cst_15 = arith.constant 0.000000e+00 : f32
      %18 = vector.broadcast %cst_15 : f32 to vector<8x128xf32>
      %19 = arith.maximumf %17, %18 : vector<8x128xf32>
      %20 = arith.truncf %19 : vector<8x128xf32> to vector<8x128xbf16>
      %c0_16 = arith.constant 0 : index
      %c0_17 = arith.constant 0 : index
      %21 = vector.load %arg5[%c0_16, %c0_17] : memref<8x128xbf16, #tpu.memory_space<vmem>>, vector<8x128xbf16>
      tpu.vector_store %arg5[%c0_16, %c0_17], %20 {strides = array<i32>} : memref<8x128xbf16, #tpu.memory_space<vmem>>, vector<8x128xbf16>,
    } else {
    }
    return
  }
  func.func @transform_0(%arg0: i32, %arg1: i32) -> (i32, i32, i32) {
    %c0_i32 = arith.constant 0 : i32
    %c0_i32_0 = arith.constant 0 : i32
    return %arg1, %arg0, %c0_i32 : i32, i32, i32
  }
  func.func @transform_1(%arg0: i32, %arg1: i32) -> (i32, i32, i32) {
    %c0_i32 = arith.constant 0 : i32
    %c0_i32_0 = arith.constant 0 : i32
    %c0_i32_1 = arith.constant 0 : i32
    return %arg1, %c0_i32, %c0_i32_0 : i32, i32, i32
  }
  func.func @transform_2(%arg0: i32, %arg1: i32) -> (i32, i32) {
    %c0_i32 = arith.constant 0 : i32
    %c0_i32_0 = arith.constant 0 : i32
    %c0_i32_1 = arith.constant 0 : i32
    return %c0_i32, %c0_i32_0 : i32, i32
  }
  func.func @transform_3(%arg0: i32, %arg1: i32) -> (i32, i32) {
    %c0_i32 = arith.constant 0 : i32
    %c0_i32_0 = arith.constant 0 : i32
    return %arg0, %c0_i32 : i32, i32
  }
}

</mosaic_0001>

<llo_original>
// kernel: _lambda_.24
$region0: #{_lambda_.24}
  #allocation0 [shape = 'u32[]', space=smem, size = 0x4, offset = 0x4, fixed_abs, tag = 'smem constant byte address 0x4 - core index']
  #allocation1 [shape = 'u32[144,128]{1,0:T(1,128)}', space=vmem, size = 0x12000, scoped, tag = 'internal scratch']
  %s0 = inlined_call_operand.vmem [shape: bf16[9,128,128], index: 0, kind: input, shape index: {}]
  %s1 = inlined_call_operand.vmem [shape: bf16[128,128], index: 1, kind: output, shape index: {}]
  %s2 = sld [smem:[#allocation0]]
  $region45: #{_lambda_.24} parent=0
    _
  %s4 = ssub.s32 1, %s2
  %s5 = scalar_select 0, %s4, %s2
  loop: start=0, step=1, limit=11
  $region2: #{_lambda_.24} parent=0 // loop_pre_header
    _
  $region3: #{_lambda_.24} parent=0 // loop_header
    %s7 = sphi 0, %s11
    %p8 = scmp.ge.s32.totalorder %s7, 11
    %s14 = sphi 0, %s26
    %s15 = sphi 0, %s22
    %s16 = sphi 0, %s14
    %s17 = sphi 0, %s15
    %s18 = sphi 0, %s16
    %s19 = sphi 0, %s17
    %s31 = sphi 0, %s33
    %s34 = sphi 0, %s31
    %s35 = sphi 0, %s34
    %s51 = sphi 0, %s35
    %s57 = sphi 0, %s59
    %s60 = sphi 0, %s57
    %s61 = sphi 0, %s60
    %s77 = sphi 0, %s61
  $region4: #{_lambda_.24} parent=0 // loop_header_branch
    %10 = sbr.rel (%p8) target = $region8
  $region5: #{_lambda_.24} parent=0 // loop_body
    %s12 = ssub.s32 %s7, 1
    %s13 = ssub.s32 %s7, 2
    %s20 = sadd.s32 1, %s15
    %p21 = scmp.ge.s32.totalorder %s20, 9
    %s22 = scalar_select %p21, 0, %s20
    %s23 = sadd.s32 1, %s14
    %s24 = scalar_select %p21, %s23, %s14
    %p25 = scmp.ge.s32.totalorder %s24, 1
    %s26 = scalar_select %p25, 0, %s24
    %s27 = ssub.s32 %s15, %s22
    %s28 = ssub.s32 %s14, %s26
    %s29 = sor.u32 %s27, %s28
    %p30 = scmp.eq.s32.totalorder %s29, 0
    %s32 = sadd.s32 %s31, 1
    %s33 = scalar_select %p30, %s31, %s32
    %p36 = pneg %p30
    %p37 = scmp.eq.s32.totalorder %s7, 8
    %p38 = por %p36, %p37
    %p39 = scmp.ne.s32.totalorder %s31, %s34
    %p40 = scmp.eq.s32.totalorder %s7, 0
    %p41 = por %p39, %p40
    %p42 = scmp.ne.s32.totalorder %s31, %s34
    %p43 = scmp.eq.s32.totalorder %s12, 8
    %p44 = por %p42, %p43
    %p45 = scmp.ne.s32.totalorder %s34, %s35
    %p46 = scmp.eq.s32.totalorder %s12, 0
    %p47 = por %p45, %p46
    %p48 = scmp.ne.s32.totalorder %s34, %s35
    %p49 = scmp.eq.s32.totalorder %s13, 8
    %p50 = por %p48, %p49
    %p52 = scmp.ne.s32.totalorder %s35, %s51
    %p53 = scmp.eq.s32.totalorder %s13, 0
    %p54 = por %p52, %p53
    %s55 = ssub.s32 %s14, %s26
    %p56 = scmp.eq.s32.totalorder %s55, 0
    %s58 = sadd.s32 %s57, 1
    %s59 = scalar_select %p56, %s57, %s58
    %p62 = pneg %p56
    %p63 = scmp.eq.s32.totalorder %s7, 8
    %p64 = por %p62, %p63
    %p65 = scmp.ne.s32.totalorder %s57, %s60
    %p66 = scmp.eq.s32.totalorder %s7, 0
    %p67 = por %p65, %p66
    %p68 = scmp.ne.s32.totalorder %s57, %s60
    %p69 = scmp.eq.s32.totalorder %s12, 8
    %p70 = por %p68, %p69
    %p71 = scmp.ne.s32.totalorder %s60, %s61
    %p72 = scmp.eq.s32.totalorder %s12, 0
    %p73 = por %p71, %p72
    %p74 = scmp.ne.s32.totalorder %s60, %s61
    %p75 = scmp.eq.s32.totalorder %s13, 8
    %p76 = por %p74, %p75
    %p78 = scmp.ne.s32.totalorder %s61, %s77
    %p79 = scmp.eq.s32.totalorder %s13, 0
    %p80 = por %p78, %p79
    %p81 = scmp.le.s32.totalorder 1, %s7
    %p82 = scmp.lt.s32.totalorder %s7, 10
    %p83 = pnand %p81, %p82
    %p84 = pneg %p83
    // Predicated region
    $region9: #{_lambda_.24} parent=5 // pred_check
      _
    $region10: #{_lambda_.24} parent=5 // pred_check_branch
      %86 = sbr.rel (%p83) target = $region12
    $region11: #{_lambda_.24} parent=5 // pred_region
      %s87 = ssub.s32 %s7, 1
    $region12: #{_lambda_.24} parent=5 // pred_fallthru
      _
    %p88 = scmp.lt.s32.totalorder %s7, 9
    // Predicated region
    $region13: #{_lambda_.24} parent=5 // pred_check
      %p89 = pneg %p88
    $region14: #{_lambda_.24} parent=5 // pred_check_branch
      %91 = sbr.rel (%p89) target = $region16
    $region15: #{_lambda_.24} parent=5 // pred_region
      // Predicated region
      $region17: #{_lambda_.24} parent=15 // pred_check
        %p92 = pneg %p41
      $region18: #{_lambda_.24} parent=15 // pred_check_branch
        %94 = sbr.rel (%p92) target = $region20
      $region19: #{_lambda_.24} parent=15 // pred_region
        %s95 = smul.u32 16, %s14
        %p96 = scmp.lt.s32.totalorder %s15, 8
        %s97 = scalar_select %p96, %s15, 8
        %p98 = scmp.lt.s32.totalorder %s95, 15
        %s99 = scalar_select %p98, %s95, 15
        %s100 = smul.addr %s97, 16
        %s101 = sadd.s32 %s99, %s100
        %s102 = smul.addr %s101, 4
        %s103 = scalar_lea.vmem %s0, %s102
        %s104 = smul.u32 16, %s14
      $region20: #{_lambda_.24} parent=15 // pred_fallthru
        _
    $region16: #{_lambda_.24} parent=5 // pred_fallthru
      _
    %p105 = scmp.le.s32.totalorder 1, %s7
    %p106 = scmp.lt.s32.totalorder %s7, 10
    %p107 = pnand %p105, %p106
    %p108 = pneg %p107
    // Predicated region
    $region21: #{_lambda_.24} parent=5 // pred_check
      _
    $region22: #{_lambda_.24} parent=5 // pred_check_branch
      %110 = sbr.rel (%p107) target = $region24
    $region23: #{_lambda_.24} parent=5 // pred_region
      %s111 = ssub.s32 %s7, 1
      %s112 = smul.u32 16, %s16
      %p113 = scmp.lt.s32.totalorder %s17, 8
      %s114 = scalar_select %p113, %s17, 8
      %p115 = scmp.lt.s32.totalorder %s112, 15
      %s116 = scalar_select %p115, %s112, 15
      %s117 = smul.addr %s114, 16
      %s118 = sadd.s32 %s116, %s117
      %s119 = smul.addr %s118, 4
      %s120 = scalar_lea.vmem %s0, %s119
      %p121 = pneg %p47
      %p122 = pneg %p44
      %p123 = pneg %p73
      %p124 = pneg %p70
      %s125 = smul.u32 16, %s16
      %p126 = scmp.lt.s32.totalorder %s125, 15
      %s127 = scalar_select %p126, %s125, 15
      %s128 = smul.addr %s127, 4
      %s129 = scalar_lea.vmem %s1, %s128
      %s130 = smul.u32 16, %s16
      %p131 = scmp.lt.s32.totalorder %s17, 8
      %s132 = scalar_select %p131, %s17, 8
      %p133 = scmp.lt.s32.totalorder %s130, 15
      %s134 = scalar_select %p133, %s130, 15
      %s135 = smul.addr %s132, 16
      %s136 = sadd.s32 %s134, %s135
      %s137 = smul.addr %s136, 4
      %s138 = scalar_lea.vmem %s0, %s137
      %s139 = smul.u32 16, %s16
      %s140 = smul.u32 16, %s16
      %p141 = scmp.lt.s32.totalorder %s140, 15
      %s142 = scalar_select %p141, %s140, 15
      %s143 = smul.addr %s142, 4
      %s144 = scalar_lea.vmem %s1, %s143
      %s145 = smul.u32 16, %s16
      %p146 = scmp.eq.s32.totalorder %s17, 0
      // Predicated region
      $region25: #{_lambda_.24} parent=23 // pred_check
        %p147 = pneg %p146
      $region26: #{_lambda_.24} parent=23 // pred_check_branch
        %149 = sbr.rel (%p147) target = $region28
      $region27: #{_lambda_.24} parent=23 // pred_region
        %v150 = vld [vmem:[%s138] sm:$0xf]
        %v151 = vld [vmem:[%s138 + $0x4] sm:$0xf]
        %v152 = vld [vmem:[%s138 + $0x8] sm:$0xf]
        %v153 = vld [vmem:[%s138 + $0xc] sm:$0xf]
        %v154 = vld [vmem:[%s138 + $0x10] sm:$0xf]
        %v155 = vld [vmem:[%s138 + $0x14] sm:$0xf]
        %v156 = vld [vmem:[%s138 + $0x18] sm:$0xf]
        %v157 = vld [vmem:[%s138 + $0x1c] sm:$0xf]
        %v158 = vld [vmem:[%s138 + $0x20] sm:$0xf]
        %v159 = vld [vmem:[%s138 + $0x24] sm:$0xf]
        %v160 = vld [vmem:[%s138 + $0x28] sm:$0xf]
        %v161 = vld [vmem:[%s138 + $0x2c] sm:$0xf]
        %v162 = vld [vmem:[%s138 + $0x30] sm:$0xf]
        %v163 = vld [vmem:[%s138 + $0x34] sm:$0xf]
        %v164 = vld [vmem:[%s138 + $0x38] sm:$0xf]
        %v165 = vld [vmem:[%s138 + $0x3c] sm:$0xf]
        %166 = vst [vmem:[%s144] sm:$0xf] %v150
        %167 = vst [vmem:[%s144 + $0x4] sm:$0xf] %v151
        %168 = vst [vmem:[%s144 + $0x8] sm:$0xf] %v152
        %169 = vst [vmem:[%s144 + $0xc] sm:$0xf] %v153
        %170 = vst [vmem:[%s144 + $0x10] sm:$0xf] %v154
        %171 = vst [vmem:[%s144 + $0x14] sm:$0xf] %v155
        %172 = vst [vmem:[%s144 + $0x18] sm:$0xf] %v156
        %173 = vst [vmem:[%s144 + $0x1c] sm:$0xf] %v157
        %174 = vst [vmem:[%s144 + $0x20] sm:$0xf] %v158
        %175 = vst [vmem:[%s144 + $0x24] sm:$0xf] %v159
        %176 = vst [vmem:[%s144 + $0x28] sm:$0xf] %v160
        %177 = vst [vmem:[%s144 + $0x2c] sm:$0xf] %v161
        %178 = vst [vmem:[%s144 + $0x30] sm:$0xf] %v162
        %179 = vst [vmem:[%s144 + $0x34] sm:$0xf] %v163
        %180 = vst [vmem:[%s144 + $0x38] sm:$0xf] %v164
        %181 = vst [vmem:[%s144 + $0x3c] sm:$0xf] %v165
      $region28: #{_lambda_.24} parent=23 // pred_fallthru
        _
      %p182 = scmp.gt.s32.totalorder %s17, 0
      // Predicated region
      $region29: #{_lambda_.24} parent=23 // pred_check
        %p183 = pneg %p182
      $region30: #{_lambda_.24} parent=23 // pred_check_branch
        %185 = sbr.rel (%p183) target = $region32
      $region31: #{_lambda_.24} parent=23 // pred_region
        %v186 = vld [vmem:[%s144] sm:$0xf]
        %v187 = vld [vmem:[%s144 + $0x4] sm:$0xf]
        %v188 = vld [vmem:[%s144 + $0x8] sm:$0xf]
        %v189 = vld [vmem:[%s144 + $0xc] sm:$0xf]
        %v190 = vld [vmem:[%s144 + $0x10] sm:$0xf]
        %v191 = vld [vmem:[%s144 + $0x14] sm:$0xf]
        %v192 = vld [vmem:[%s144 + $0x18] sm:$0xf]
        %v193 = vld [vmem:[%s144 + $0x1c] sm:$0xf]
        %v194 = vld [vmem:[%s144 + $0x20] sm:$0xf]
        %v195 = vld [vmem:[%s144 + $0x24] sm:$0xf]
        %v196 = vld [vmem:[%s144 + $0x28] sm:$0xf]
        %v197 = vld [vmem:[%s144 + $0x2c] sm:$0xf]
        %v198 = vld [vmem:[%s144 + $0x30] sm:$0xf]
        %v199 = vld [vmem:[%s144 + $0x34] sm:$0xf]
        %v200 = vld [vmem:[%s144 + $0x38] sm:$0xf]
        %v201 = vld [vmem:[%s144 + $0x3c] sm:$0xf]
        %v202 = vld [vmem:[%s138] sm:$0xf]
        %v203 = vld [vmem:[%s138 + $0x4] sm:$0xf]
        %v204 = vld [vmem:[%s138 + $0x8] sm:$0xf]
        %v205 = vld [vmem:[%s138 + $0xc] sm:$0xf]
        %v206 = vld [vmem:[%s138 + $0x10] sm:$0xf]
        %v207 = vld [vmem:[%s138 + $0x14] sm:$0xf]
        %v208 = vld [vmem:[%s138 + $0x18] sm:$0xf]
        %v209 = vld [vmem:[%s138 + $0x1c] sm:$0xf]
        %v210 = vld [vmem:[%s138 + $0x20] sm:$0xf]
        %v211 = vld [vmem:[%s138 + $0x24] sm:$0xf]
        %v212 = vld [vmem:[%s138 + $0x28] sm:$0xf]
        %v213 = vld [vmem:[%s138 + $0x2c] sm:$0xf]
        %v214 = vld [vmem:[%s138 + $0x30] sm:$0xf]
        %v215 = vld [vmem:[%s138 + $0x34] sm:$0xf]
        %v216 = vld [vmem:[%s138 + $0x38] sm:$0xf]
        %v217 = vld [vmem:[%s138 + $0x3c] sm:$0xf]
        %v218 = vmax.bf16 %v186, %v202
        %v219 = vmax.bf16 %v187, %v203
        %v220 = vmax.bf16 %v188, %v204
        %v221 = vmax.bf16 %v189, %v205
        %v222 = vmax.bf16 %v190, %v206
        %v223 = vmax.bf16 %v191, %v207
        %v224 = vmax.bf16 %v192, %v208
        %v225 = vmax.bf16 %v193, %v209
        %v226 = vmax.bf16 %v194, %v210
        %v227 = vmax.bf16 %v195, %v211
        %v228 = vmax.bf16 %v196, %v212
        %v229 = vmax.bf16 %v197, %v213
        %v230 = vmax.bf16 %v198, %v214
        %v231 = vmax.bf16 %v199, %v215
        %v232 = vmax.bf16 %v200, %v216
        %v233 = vmax.bf16 %v201, %v217
        %234 = vst [vmem:[%s144] sm:$0xf] %v218
        %235 = vst [vmem:[%s144 + $0x4] sm:$0xf] %v219
        %236 = vst [vmem:[%s144 + $0x8] sm:$0xf] %v220
        %237 = vst [vmem:[%s144 + $0xc] sm:$0xf] %v221
        %238 = vst [vmem:[%s144 + $0x10] sm:$0xf] %v222
        %239 = vst [vmem:[%s144 + $0x14] sm:$0xf] %v223
        %240 = vst [vmem:[%s144 + $0x18] sm:$0xf] %v224
        %241 = vst [vmem:[%s144 + $0x1c] sm:$0xf] %v225
        %242 = vst [vmem:[%s144 + $0x20] sm:$0xf] %v226
        %243 = vst [vmem:[%s144 + $0x24] sm:$0xf] %v227
        %244 = vst [vmem:[%s144 + $0x28] sm:$0xf] %v228
        %245 = vst [vmem:[%s144 + $0x2c] sm:$0xf] %v229
        %246 = vst [vmem:[%s144 + $0x30] sm:$0xf] %v230
        %247 = vst [vmem:[%s144 + $0x34] sm:$0xf] %v231
        %248 = vst [vmem:[%s144 + $0x38] sm:$0xf] %v232
        %249 = vst [vmem:[%s144 + $0x3c] sm:$0xf] %v233
      $region32: #{_lambda_.24} parent=23 // pred_fallthru
        _
      %s250 = smul.u32 16, %s16
      %p251 = scmp.lt.s32.totalorder %s250, 15
      %s252 = scalar_select %p251, %s250, 15
      %s253 = smul.addr %s252, 4
      %s254 = scalar_lea.vmem %s1, %s253
      // Predicated region
      $region33: #{_lambda_.24} parent=23 // pred_check
        %p255 = pneg %p70
      $region34: #{_lambda_.24} parent=23 // pred_check_branch
        %257 = sbr.rel (%p255) target = $region36
      $region35: #{_lambda_.24} parent=23 // pred_region
        %s258 = smul.u32 16, %s16
      $region36: #{_lambda_.24} parent=23 // pred_fallthru
        _
      // Predicated region
      $region37: #{_lambda_.24} parent=23 // pred_check
        %p259 = pneg %p70
      $region38: #{_lambda_.24} parent=23 // pred_check_branch
        %261 = sbr.rel (%p259) target = $region40
      $region39: #{_lambda_.24} parent=23 // pred_region
        %s262 = smul.u32 16, %s16
        %p263 = scmp.lt.s32.totalorder %s262, 15
        %s264 = scalar_select %p263, %s262, 15
        %s265 = smul.addr %s264, 4
        %s266 = scalar_lea.vmem %s1, %s265
      $region40: #{_lambda_.24} parent=23 // pred_fallthru
        _
    $region24: #{_lambda_.24} parent=5 // pred_fallthru
      _
    %p267 = scmp.le.s32.totalorder 2, %s7
    // Predicated region
    $region41: #{_lambda_.24} parent=5 // pred_check
      %p268 = pneg %p267
    $region42: #{_lambda_.24} parent=5 // pred_check_branch
      %270 = sbr.rel (%p268) target = $region44
    $region43: #{_lambda_.24} parent=5 // pred_region
      %s271 = ssub.s32 %s7, 2
    $region44: #{_lambda_.24} parent=5 // pred_fallthru
      _
  $region6: #{_lambda_.24} parent=0 // loop_footer
    %s11 = sadd.s32 1, %s7
  $region7: #{_lambda_.24} parent=0 // loop_footer_branch
    %6 = sbr.rel target = $region3
  $region8: #{_lambda_.24} parent=0 // loop_exit
    _

// kernel: _lambda_.27
$region0: #{_lambda_.27}
  #allocation0 [shape = 'u32[]', space=smem, size = 0x4, offset = 0x4, fixed_abs, tag = 'smem constant byte address 0x4 - core index']
  #allocation1 [shape = 'u32[144,128]{1,0:T(1,128)}', space=vmem, size = 0x12000, scoped, tag = 'internal scratch']
  #allocation2 [shape = 'f32[128,128]{1,0:T(8,128)}', space=vmem, size = 0x10000, scoped, tag = 'scratch operand']
  %s0 = inlined_call_operand.vmem [shape: bf16[1,128,128], index: 0, kind: input, shape index: {}]
  %s1 = inlined_call_operand.vmem [shape: bf16[1,128,128], index: 1, kind: input, shape index: {}]
  %s2 = inlined_call_operand.vmem [shape: f32[1,128], index: 2, kind: input, shape index: {}]
  %s3 = inlined_call_operand.vmem [shape: bf16[128,128], index: 3, kind: output, shape index: {}]
  %s4 = sld [smem:[#allocation0]]
  $region30: #{_lambda_.27} parent=0
    _
  %s6 = ssub.s32 1, %s4
  %s7 = scalar_select 0, %s6, %s4
  // Predicated region
  $region2: #{_lambda_.27} parent=0 // pred_check
    _
  $region3: #{_lambda_.27} parent=0 // pred_check_branch
    %9 = sbr.rel (0) target = $region5
  $region4: #{_lambda_.27} parent=0 // pred_region
    _
  $region5: #{_lambda_.27} parent=0 // pred_fallthru
    _
  // Predicated region
  $region6: #{_lambda_.27} parent=0 // pred_check
    _
  $region7: #{_lambda_.27} parent=0 // pred_check_branch
    %11 = sbr.rel (0) target = $region9
  $region8: #{_lambda_.27} parent=0 // pred_region
    _
  $region9: #{_lambda_.27} parent=0 // pred_fallthru
    _
  // Predicated region
  $region10: #{_lambda_.27} parent=0 // pred_check
    _
  $region11: #{_lambda_.27} parent=0 // pred_check_branch
    %13 = sbr.rel (0) target = $region13
  $region12: #{_lambda_.27} parent=0 // pred_region
    _
  $region13: #{_lambda_.27} parent=0 // pred_fallthru
    _
  %p15 = scmp.eq.s32.totalorder 0, 0
  // Predicated region
  $region14: #{_lambda_.27} parent=0 // pred_check
    %p16 = pneg %p15
  $region15: #{_lambda_.27} parent=0 // pred_check_branch
    %18 = sbr.rel (%p16) target = $region17
  $region16: #{_lambda_.27} parent=0 // pred_region
    %19 = vst [vmem:[#allocation2] sm:$0xff] 0.0
    %20 = vst [vmem:[#allocation2 + $0x8] sm:$0xff] 0.0
    %21 = vst [vmem:[#allocation2 + $0x10] sm:$0xff] 0.0
    %22 = vst [vmem:[#allocation2 + $0x18] sm:$0xff] 0.0
    %23 = vst [vmem:[#allocation2 + $0x20] sm:$0xff] 0.0
    %24 = vst [vmem:[#allocation2 + $0x28] sm:$0xff] 0.0
    %25 = vst [vmem:[#allocation2 + $0x30] sm:$0xff] 0.0
    %26 = vst [vmem:[#allocation2 + $0x38] sm:$0xff] 0.0
    %27 = vst [vmem:[#allocation2 + $0x40] sm:$0xff] 0.0
    %28 = vst [vmem:[#allocation2 + $0x48] sm:$0xff] 0.0
    %29 = vst [vmem:[#allocation2 + $0x50] sm:$0xff] 0.0
    %30 = vst [vmem:[#allocation2 + $0x58] sm:$0xff] 0.0
    %31 = vst [vmem:[#allocation2 + $0x60] sm:$0xff] 0.0
    %32 = vst [vmem:[#allocation2 + $0x68] sm:$0xff] 0.0
    %33 = vst [vmem:[#allocation2 + $0x70] sm:$0xff] 0.0
    %34 = vst [vmem:[#allocation2 + $0x78] sm:$0xff] 0.0
  $region17: #{_lambda_.27} parent=0 // pred_fallthru
    _
  %v35 = vld [vmem:[#allocation2] sm:$0xff]
  %v36 = vld [vmem:[#allocation2 + $0x8] sm:$0xff]
  %v37 = vld [vmem:[#allocation2 + $0x10] sm:$0xff]
  %v38 = vld [vmem:[#allocation2 + $0x18] sm:$0xff]
  %v39 = vld [vmem:[#allocation2 + $0x20] sm:$0xff]
  %v40 = vld [vmem:[#allocation2 + $0x28] sm:$0xff]
  %v41 = vld [vmem:[#allocation2 + $0x30] sm:$0xff]
  %v42 = vld [vmem:[#allocation2 + $0x38] sm:$0xff]
  %v43 = vld [vmem:[#allocation2 + $0x40] sm:$0xff]
  %v44 = vld [vmem:[#allocation2 + $0x48] sm:$0xff]
  %v45 = vld [vmem:[#allocation2 + $0x50] sm:$0xff]
  %v46 = vld [vmem:[#allocation2 + $0x58] sm:$0xff]
  %v47 = vld [vmem:[#allocation2 + $0x60] sm:$0xff]
  %v48 = vld [vmem:[#allocation2 + $0x68] sm:$0xff]
  %v49 = vld [vmem:[#allocation2 + $0x70] sm:$0xff]
  %v50 = vld [vmem:[#allocation2 + $0x78] sm:$0xff]
  %v51 = vld [vmem:[%s0] sm:$0xf]
  %v52 = vld [vmem:[%s0 + $0x4] sm:$0xf]
  %v53 = vld [vmem:[%s0 + $0x8] sm:$0xf]
  %v54 = vld [vmem:[%s0 + $0xc] sm:$0xf]
  %v55 = vld [vmem:[%s0 + $0x10] sm:$0xf]
  %v56 = vld [vmem:[%s0 + $0x14] sm:$0xf]
  %v57 = vld [vmem:[%s0 + $0x18] sm:$0xf]
  %v58 = vld [vmem:[%s0 + $0x1c] sm:$0xf]
  %v59 = vld [vmem:[%s0 + $0x20] sm:$0xf]
  %v60 = vld [vmem:[%s0 + $0x24] sm:$0xf]
  %v61 = vld [vmem:[%s0 + $0x28] sm:$0xf]
  %v62 = vld [vmem:[%s0 + $0x2c] sm:$0xf]
  %v63 = vld [vmem:[%s0 + $0x30] sm:$0xf]
  %v64 = vld [vmem:[%s0 + $0x34] sm:$0xf]
  %v65 = vld [vmem:[%s0 + $0x38] sm:$0xf]
  %v66 = vld [vmem:[%s0 + $0x3c] sm:$0xf]
  %v67 = vld [vmem:[%s1] sm:$0xf]
  %v68 = vld [vmem:[%s1 + $0x4] sm:$0xf]
  %v69 = vld [vmem:[%s1 + $0x8] sm:$0xf]
  %v70 = vld [vmem:[%s1 + $0xc] sm:$0xf]
  %v71 = vld [vmem:[%s1 + $0x10] sm:$0xf]
  %v72 = vld [vmem:[%s1 + $0x14] sm:$0xf]
  %v73 = vld [vmem:[%s1 + $0x18] sm:$0xf]
  %v74 = vld [vmem:[%s1 + $0x1c] sm:$0xf]
  %v75 = vld [vmem:[%s1 + $0x20] sm:$0xf]
  %v76 = vld [vmem:[%s1 + $0x24] sm:$0xf]
  %v77 = vld [vmem:[%s1 + $0x28] sm:$0xf]
  %v78 = vld [vmem:[%s1 + $0x2c] sm:$0xf]
  %v79 = vld [vmem:[%s1 + $0x30] sm:$0xf]
  %v80 = vld [vmem:[%s1 + $0x34] sm:$0xf]
  %v81 = vld [vmem:[%s1 + $0x38] sm:$0xf]
  %v82 = vld [vmem:[%s1 + $0x3c] sm:$0xf]
  %v99 = vunpack.c.l.b16 %v51
  %v100 = vunpack.c.l.b16 %v52
  %v101 = vunpack.c.l.b16 %v53
  %v102 = vunpack.c.l.b16 %v54
  %v103 = vunpack.c.l.b16 %v55
  %v104 = vunpack.c.l.b16 %v56
  %v105 = vunpack.c.l.b16 %v57
  %v106 = vunpack.c.l.b16 %v58
  %v107 = vunpack.c.l.b16 %v59
  %v108 = vunpack.c.l.b16 %v60
  %v109 = vunpack.c.l.b16 %v61
  %v110 = vunpack.c.l.b16 %v62
  %v111 = vunpack.c.l.b16 %v63
  %v112 = vunpack.c.l.b16 %v64
  %v113 = vunpack.c.l.b16 %v65
  %v114 = vunpack.c.l.b16 %v66
  %v115 = vpack.c.b16 %v100, %v99
  %v116 = vpack.c.b16 %v102, %v101
  %v117 = vpack.c.b16 %v104, %v103
  %v118 = vpack.c.b16 %v106, %v105
  %v119 = vpack.c.b16 %v108, %v107
  %v120 = vpack.c.b16 %v110, %v109
  %v121 = vpack.c.b16 %v112, %v111
  %v122 = vpack.c.b16 %v114, %v113
  %v147 = vunpack.c.l.b16 %v67
  %v148 = vunpack.c.l.b16 %v68
  %v149 = vunpack.c.l.b16 %v69
  %v150 = vunpack.c.l.b16 %v70
  %v151 = vunpack.c.l.b16 %v71
  %v152 = vunpack.c.l.b16 %v72
  %v153 = vunpack.c.l.b16 %v73
  %v154 = vunpack.c.l.b16 %v74
  %v155 = vunpack.c.l.b16 %v75
  %v156 = vunpack.c.l.b16 %v76
  %v157 = vunpack.c.l.b16 %v77
  %v158 = vunpack.c.l.b16 %v78
  %v159 = vunpack.c.l.b16 %v79
  %v160 = vunpack.c.l.b16 %v80
  %v161 = vunpack.c.l.b16 %v81
  %v162 = vunpack.c.l.b16 %v82
  %v163 = vpack.c.b16 %v148, %v147
  %v164 = vpack.c.b16 %v150, %v149
  %v165 = vpack.c.b16 %v152, %v151
  %v166 = vpack.c.b16 %v154, %v153
  %v167 = vpack.c.b16 %v156, %v155
  %v168 = vpack.c.b16 %v158, %v157
  %v169 = vpack.c.b16 %v160, %v159
  %v170 = vpack.c.b16 %v162, %v161
  %179 = vmatprep.subr.bf16.mxu0 0
  %180 = vmatpush1.bf16.msra.mxu0 %v170
  %181 = vmatprep.subr.bf16.mxu0 0
  %182 = vmatpush1.bf16.msra.mxu0 %v169
  %183 = vmatprep.subr.bf16.mxu0 0
  %184 = vmatpush1.bf16.msra.mxu0 %v168
  %185 = vmatprep.subr.bf16.mxu0 0
  %186 = vmatpush1.bf16.msra.mxu0 %v167
  %187 = vmatprep.subr.bf16.mxu0 0
  %188 = vmatpush1.bf16.msra.mxu0 %v166
  %189 = vmatprep.subr.bf16.mxu0 0
  %190 = vmatpush1.bf16.msra.mxu0 %v165
  %191 = vmatprep.subr.bf16.mxu0 0
  %192 = vmatpush1.bf16.msra.mxu0 %v164
  %193 = vmatprep.subr.bf16.mxu0 0
  %194 = vmatpush1.bf16.msra.mxu0 %v163
  %195 = vmatprep.subr.bf16.mxu0 0
  %196 = vmatpush2.bf16.msra.mxu0 0
  %197 = vmatprep.subr.bf16.mxu0 0
  %198 = vmatpush2.bf16.msra.mxu0 0
  %199 = vmatprep.subr.bf16.mxu0 0
  %200 = vmatpush2.bf16.msra.mxu0 0
  %201 = vmatprep.subr.bf16.mxu0 0
  %202 = vmatpush2.bf16.msra.mxu0 0
  %203 = vmatprep.subr.bf16.mxu0 0
  %204 = vmatpush2.bf16.msra.mxu0 0
  %205 = vmatprep.subr.bf16.mxu0 0
  %206 = vmatpush2.bf16.msra.mxu0 0
  %207 = vmatprep.subr.bf16.mxu0 0
  %208 = vmatpush2.bf16.msra.mxu0 0
  %209 = vmatprep.subr.bf16.mxu0 0
  %210 = vmatpush2.bf16.msra.mxu0 0
  %211 = vmatprep.mubr.bf16.mxu0 0
  %212 = vmatmul.mubr.bf16.gmra.mxu0 %v115
  %v213 = vpop.f32.mrf.mxu0
  %v214 = vadd.f32 0.0, %v213
  %v215 = vpop.f32.mrf.mxu0
  %v216 = vpop.f32.mrf.mxu0
  %v217 = vadd.f32 0.0, %v216
  %v218 = vpop.f32.mrf.mxu0
  %219 = vmatprep.mubr.bf16.mxu0 0
  %220 = vmatmul.mubr.bf16.gmra.mxu0 %v116
  %v221 = vpop.f32.mrf.mxu0
  %v222 = vadd.f32 0.0, %v221
  %v223 = vpop.f32.mrf.mxu0
  %v224 = vpop.f32.mrf.mxu0
  %v225 = vadd.f32 0.0, %v224
  %v226 = vpop.f32.mrf.mxu0
  %227 = vmatprep.mubr.bf16.mxu0 0
  %228 = vmatmul.mubr.bf16.gmra.mxu0 %v117
  %v229 = vpop.f32.mrf.mxu0
  %v230 = vadd.f32 0.0, %v229
  %v231 = vpop.f32.mrf.mxu0
  %v232 = vpop.f32.mrf.mxu0
  %v233 = vadd.f32 0.0, %v232
  %v234 = vpop.f32.mrf.mxu0
  %235 = vmatprep.mubr.bf16.mxu0 0
  %236 = vmatmul.mubr.bf16.gmra.mxu0 %v118
  %v237 = vpop.f32.mrf.mxu0
  %v238 = vadd.f32 0.0, %v237
  %v239 = vpop.f32.mrf.mxu0
  %v240 = vpop.f32.mrf.mxu0
  %v241 = vadd.f32 0.0, %v240
  %v242 = vpop.f32.mrf.mxu0
  %243 = vmatprep.mubr.bf16.mxu0 0
  %244 = vmatmul.mubr.bf16.gmra.mxu0 %v119
  %v245 = vpop.f32.mrf.mxu0
  %v246 = vadd.f32 0.0, %v245
  %v247 = vpop.f32.mrf.mxu0
  %v248 = vpop.f32.mrf.mxu0
  %v249 = vadd.f32 0.0, %v248
  %v250 = vpop.f32.mrf.mxu0
  %251 = vmatprep.mubr.bf16.mxu0 0
  %252 = vmatmul.mubr.bf16.gmra.mxu0 %v120
  %v253 = vpop.f32.mrf.mxu0
  %v254 = vadd.f32 0.0, %v253
  %v255 = vpop.f32.mrf.mxu0
  %v256 = vpop.f32.mrf.mxu0
  %v257 = vadd.f32 0.0, %v256
  %v258 = vpop.f32.mrf.mxu0
  %259 = vmatprep.mubr.bf16.mxu0 0
  %260 = vmatmul.mubr.bf16.gmra.mxu0 %v121
  %v261 = vpop.f32.mrf.mxu0
  %v262 = vadd.f32 0.0, %v261
  %v263 = vpop.f32.mrf.mxu0
  %v264 = vpop.f32.mrf.mxu0
  %v265 = vadd.f32 0.0, %v264
  %v266 = vpop.f32.mrf.mxu0
  %267 = vmatprep.mubr.bf16.mxu0 0
  %268 = vmatmul.mubr.bf16.gmra.mxu0 %v122
  %v269 = vpop.f32.mrf.mxu0
  %v270 = vadd.f32 0.0, %v269
  %v271 = vpop.f32.mrf.mxu0
  %v272 = vpop.f32.mrf.mxu0
  %v273 = vadd.f32 0.0, %v272
  %v274 = vpop.f32.mrf.mxu0
  %275 = vdwg.mxu0
  %v276 = vadd.f32 %v35, %v214
  %v277 = vadd.f32 %v36, %v217
  %v278 = vadd.f32 %v37, %v222
  %v279 = vadd.f32 %v38, %v225
  %v280 = vadd.f32 %v39, %v230
  %v281 = vadd.f32 %v40, %v233
  %v282 = vadd.f32 %v41, %v238
  %v283 = vadd.f32 %v42, %v241
  %v284 = vadd.f32 %v43, %v246
  %v285 = vadd.f32 %v44, %v249
  %v286 = vadd.f32 %v45, %v254
  %v287 = vadd.f32 %v46, %v257
  %v288 = vadd.f32 %v47, %v262
  %v289 = vadd.f32 %v48, %v265
  %v290 = vadd.f32 %v49, %v270
  %v291 = vadd.f32 %v50, %v273
  %292 = vst [vmem:[#allocation2] sm:$0xff] %v276
  %293 = vst [vmem:[#allocation2 + $0x8] sm:$0xff] %v277
  %294 = vst [vmem:[#allocation2 + $0x10] sm:$0xff] %v278
  %295 = vst [vmem:[#allocation2 + $0x18] sm:$0xff] %v279
  %296 = vst [vmem:[#allocation2 + $0x20] sm:$0xff] %v280
  %297 = vst [vmem:[#allocation2 + $0x28] sm:$0xff] %v281
  %298 = vst [vmem:[#allocation2 + $0x30] sm:$0xff] %v282
  %299 = vst [vmem:[#allocation2 + $0x38] sm:$0xff] %v283
  %300 = vst [vmem:[#allocation2 + $0x40] sm:$0xff] %v284
  %301 = vst [vmem:[#allocation2 + $0x48] sm:$0xff] %v285
  %302 = vst [vmem:[#allocation2 + $0x50] sm:$0xff] %v286
  %303 = vst [vmem:[#allocation2 + $0x58] sm:$0xff] %v287
  %304 = vst [vmem:[#allocation2 + $0x60] sm:$0xff] %v288
  %305 = vst [vmem:[#allocation2 + $0x68] sm:$0xff] %v289
  %306 = vst [vmem:[#allocation2 + $0x70] sm:$0xff] %v290
  %307 = vst [vmem:[#allocation2 + $0x78] sm:$0xff] %v291
  // Predicated region
  $region18: #{_lambda_.27} parent=0 // pred_check
    %p308 = pneg %p15
  $region19: #{_lambda_.27} parent=0 // pred_check_branch
    %310 = sbr.rel (%p308) target = $region21
  $region20: #{_lambda_.27} parent=0 // pred_region
    %v311 = vld [vmem:[#allocation2] sm:$0xff]
    %v312 = vld [vmem:[#allocation2 + $0x8] sm:$0xff]
    %v313 = vld [vmem:[#allocation2 + $0x10] sm:$0xff]
    %v314 = vld [vmem:[#allocation2 + $0x18] sm:$0xff]
    %v315 = vld [vmem:[#allocation2 + $0x20] sm:$0xff]
    %v316 = vld [vmem:[#allocation2 + $0x28] sm:$0xff]
    %v317 = vld [vmem:[#allocation2 + $0x30] sm:$0xff]
    %v318 = vld [vmem:[#allocation2 + $0x38] sm:$0xff]
    %v319 = vld [vmem:[#allocation2 + $0x40] sm:$0xff]
    %v320 = vld [vmem:[#allocation2 + $0x48] sm:$0xff]
    %v321 = vld [vmem:[#allocation2 + $0x50] sm:$0xff]
    %v322 = vld [vmem:[#allocation2 + $0x58] sm:$0xff]
    %v323 = vld [vmem:[#allocation2 + $0x60] sm:$0xff]
    %v324 = vld [vmem:[#allocation2 + $0x68] sm:$0xff]
    %v325 = vld [vmem:[#allocation2 + $0x70] sm:$0xff]
    %v326 = vld [vmem:[#allocation2 + $0x78] sm:$0xff]
    %v327 = vld [vmem:[%s2] sm:$0x1]
    %v329 = vlaneseq
    %v330 = vshrl.u32 %v329, 7
    %v331 = vsub.s32 0, %v330
    %v332 = vrot.slane %v327, %v331
    %v334 = vadd.f32 %v311, %v332
    %v335 = vadd.f32 %v312, %v332
    %v336 = vadd.f32 %v313, %v332
    %v337 = vadd.f32 %v314, %v332
    %v338 = vadd.f32 %v315, %v332
    %v339 = vadd.f32 %v316, %v332
    %v340 = vadd.f32 %v317, %v332
    %v341 = vadd.f32 %v318, %v332
    %v342 = vadd.f32 %v319, %v332
    %v343 = vadd.f32 %v320, %v332
    %v344 = vadd.f32 %v321, %v332
    %v345 = vadd.f32 %v322, %v332
    %v346 = vadd.f32 %v323, %v332
    %v347 = vadd.f32 %v324, %v332
    %v348 = vadd.f32 %v325, %v332
    %v349 = vadd.f32 %v326, %v332
    %v350 = vpack.c.bf16 %v335, %v334
    %v351 = vpack.c.bf16 %v337, %v336
    %v352 = vpack.c.bf16 %v339, %v338
    %v353 = vpack.c.bf16 %v341, %v340
    %v354 = vpack.c.bf16 %v343, %v342
    %v355 = vpack.c.bf16 %v345, %v344
    %v356 = vpack.c.bf16 %v347, %v346
    %v357 = vpack.c.bf16 %v349, %v348
    %v366 = vunpack.c.l.b16 %v350
    %v367 = vunpack.c.h.b16 %v350
    %v368 = vunpack.c.l.b16 %v351
    %v369 = vunpack.c.h.b16 %v351
    %v370 = vunpack.c.l.b16 %v352
    %v371 = vunpack.c.h.b16 %v352
    %v372 = vunpack.c.l.b16 %v353
    %v373 = vunpack.c.h.b16 %v353
    %v374 = vunpack.c.l.b16 %v354
    %v375 = vunpack.c.h.b16 %v354
    %v376 = vunpack.c.l.b16 %v355
    %v377 = vunpack.c.h.b16 %v355
    %v378 = vunpack.c.l.b16 %v356
    %v379 = vunpack.c.h.b16 %v356
    %v380 = vunpack.c.l.b16 %v357
    %v381 = vunpack.c.h.b16 %v357
    %v382 = vpack.c.b16 %v366, %v366
    %v383 = vpack.c.b16 %v367, %v367
    %v384 = vpack.c.b16 %v368, %v368
    %v385 = vpack.c.b16 %v369, %v369
    %v386 = vpack.c.b16 %v370, %v370
    %v387 = vpack.c.b16 %v371, %v371
    %v388 = vpack.c.b16 %v372, %v372
    %v389 = vpack.c.b16 %v373, %v373
    %v390 = vpack.c.b16 %v374, %v374
    %v391 = vpack.c.b16 %v375, %v375
    %v392 = vpack.c.b16 %v376, %v376
    %v393 = vpack.c.b16 %v377, %v377
    %v394 = vpack.c.b16 %v378, %v378
    %v395 = vpack.c.b16 %v379, %v379
    %v396 = vpack.c.b16 %v380, %v380
    %v397 = vpack.c.b16 %v381, %v381
    %414 = vst [vmem:[%s3] sm:$0xf] %v382
    %415 = vst [vmem:[%s3 + $0x4] sm:$0xf] %v383
    %416 = vst [vmem:[%s3 + $0x8] sm:$0xf] %v384
    %417 = vst [vmem:[%s3 + $0xc] sm:$0xf] %v385
    %418 = vst [vmem:[%s3 + $0x10] sm:$0xf] %v386
    %419 = vst [vmem:[%s3 + $0x14] sm:$0xf] %v387
    %420 = vst [vmem:[%s3 + $0x18] sm:$0xf] %v388
    %421 = vst [vmem:[%s3 + $0x1c] sm:$0xf] %v389
    %422 = vst [vmem:[%s3 + $0x20] sm:$0xf] %v390
    %423 = vst [vmem:[%s3 + $0x24] sm:$0xf] %v391
    %424 = vst [vmem:[%s3 + $0x28] sm:$0xf] %v392
    %425 = vst [vmem:[%s3 + $0x2c] sm:$0xf] %v393
    %426 = vst [vmem:[%s3 + $0x30] sm:$0xf] %v394
    %427 = vst [vmem:[%s3 + $0x34] sm:$0xf] %v395
    %428 = vst [vmem:[%s3 + $0x38] sm:$0xf] %v396
    %429 = vst [vmem:[%s3 + $0x3c] sm:$0xf] %v397
  $region21: #{_lambda_.27} parent=0 // pred_fallthru
    _
  // Predicated region
  $region22: #{_lambda_.27} parent=0 // pred_check
    _
  $region23: #{_lambda_.27} parent=0 // pred_check_branch
    %431 = sbr.rel (0) target = $region25
  $region24: #{_lambda_.27} parent=0 // pred_region
    _
  $region25: #{_lambda_.27} parent=0 // pred_fallthru
    _
  // Predicated region
  $region26: #{_lambda_.27} parent=0 // pred_check
    _
  $region27: #{_lambda_.27} parent=0 // pred_check_branch
    %433 = sbr.rel (0) target = $region29
  $region28: #{_lambda_.27} parent=0 // pred_region
    _
  $region29: #{_lambda_.27} parent=0 // pred_fallthru
    _

// kernel: _lambda_.25
$region0: #{_lambda_.25}
  #allocation0 [shape = 'u32[]', space=smem, size = 0x4, offset = 0x4, fixed_abs, tag = 'smem constant byte address 0x4 - core index']
  #allocation1 [shape = 'u32[144,128]{1,0:T(1,128)}', space=vmem, size = 0x12000, scoped, tag = 'internal scratch']
  #allocation2 [shape = 'f32[128,128]{1,0:T(8,128)}', space=vmem, size = 0x10000, scoped, tag = 'scratch operand']
  %s0 = inlined_call_operand.vmem [shape: bf16[1,128,128], index: 0, kind: input, shape index: {}]
  %s1 = inlined_call_operand.vmem [shape: bf16[1,128,128], index: 1, kind: input, shape index: {}]
  %s2 = inlined_call_operand.vmem [shape: f32[1,128], index: 2, kind: input, shape index: {}]
  %s3 = inlined_call_operand.vmem [shape: bf16[128,128], index: 3, kind: output, shape index: {}]
  %s4 = sld [smem:[#allocation0]]
  $region30: #{_lambda_.25} parent=0
    _
  %s6 = ssub.s32 1, %s4
  %s7 = scalar_select 0, %s6, %s4
  // Predicated region
  $region2: #{_lambda_.25} parent=0 // pred_check
    _
  $region3: #{_lambda_.25} parent=0 // pred_check_branch
    %9 = sbr.rel (0) target = $region5
  $region4: #{_lambda_.25} parent=0 // pred_region
    _
  $region5: #{_lambda_.25} parent=0 // pred_fallthru
    _
  // Predicated region
  $region6: #{_lambda_.25} parent=0 // pred_check
    _
  $region7: #{_lambda_.25} parent=0 // pred_check_branch
    %11 = sbr.rel (0) target = $region9
  $region8: #{_lambda_.25} parent=0 // pred_region
    _
  $region9: #{_lambda_.25} parent=0 // pred_fallthru
    _
  // Predicated region
  $region10: #{_lambda_.25} parent=0 // pred_check
    _
  $region11: #{_lambda_.25} parent=0 // pred_check_branch
    %13 = sbr.rel (0) target = $region13
  $region12: #{_lambda_.25} parent=0 // pred_region
    _
  $region13: #{_lambda_.25} parent=0 // pred_fallthru
    _
  %p15 = scmp.eq.s32.totalorder 0, 0
  // Predicated region
  $region14: #{_lambda_.25} parent=0 // pred_check
    %p16 = pneg %p15
  $region15: #{_lambda_.25} parent=0 // pred_check_branch
    %18 = sbr.rel (%p16) target = $region17
  $region16: #{_lambda_.25} parent=0 // pred_region
    %19 = vst [vmem:[#allocation2] sm:$0xff] 0.0
    %20 = vst [vmem:[#allocation2 + $0x8] sm:$0xff] 0.0
    %21 = vst [vmem:[#allocation2 + $0x10] sm:$0xff] 0.0
    %22 = vst [vmem:[#allocation2 + $0x18] sm:$0xff] 0.0
    %23 = vst [vmem:[#allocation2 + $0x20] sm:$0xff] 0.0
    %24 = vst [vmem:[#allocation2 + $0x28] sm:$0xff] 0.0
    %25 = vst [vmem:[#allocation2 + $0x30] sm:$0xff] 0.0
    %26 = vst [vmem:[#allocation2 + $0x38] sm:$0xff] 0.0
    %27 = vst [vmem:[#allocation2 + $0x40] sm:$0xff] 0.0
    %28 = vst [vmem:[#allocation2 + $0x48] sm:$0xff] 0.0
    %29 = vst [vmem:[#allocation2 + $0x50] sm:$0xff] 0.0
    %30 = vst [vmem:[#allocation2 + $0x58] sm:$0xff] 0.0
    %31 = vst [vmem:[#allocation2 + $0x60] sm:$0xff] 0.0
    %32 = vst [vmem:[#allocation2 + $0x68] sm:$0xff] 0.0
    %33 = vst [vmem:[#allocation2 + $0x70] sm:$0xff] 0.0
    %34 = vst [vmem:[#allocation2 + $0x78] sm:$0xff] 0.0
  $region17: #{_lambda_.25} parent=0 // pred_fallthru
    _
  %v35 = vld [vmem:[#allocation2] sm:$0xff]
  %v36 = vld [vmem:[#allocation2 + $0x8] sm:$0xff]
  %v37 = vld [vmem:[#allocation2 + $0x10] sm:$0xff]
  %v38 = vld [vmem:[#allocation2 + $0x18] sm:$0xff]
  %v39 = vld [vmem:[#allocation2 + $0x20] sm:$0xff]
  %v40 = vld [vmem:[#allocation2 + $0x28] sm:$0xff]
  %v41 = vld [vmem:[#allocation2 + $0x30] sm:$0xff]
  %v42 = vld [vmem:[#allocation2 + $0x38] sm:$0xff]
  %v43 = vld [vmem:[#allocation2 + $0x40] sm:$0xff]
  %v44 = vld [vmem:[#allocation2 + $0x48] sm:$0xff]
  %v45 = vld [vmem:[#allocation2 + $0x50] sm:$0xff]
  %v46 = vld [vmem:[#allocation2 + $0x58] sm:$0xff]
  %v47 = vld [vmem:[#allocation2 + $0x60] sm:$0xff]
  %v48 = vld [vmem:[#allocation2 + $0x68] sm:$0xff]
  %v49 = vld [vmem:[#allocation2 + $0x70] sm:$0xff]
  %v50 = vld [vmem:[#allocation2 + $0x78] sm:$0xff]
  %v51 = vld [vmem:[%s0] sm:$0xf]
  %v52 = vld [vmem:[%s0 + $0x4] sm:$0xf]
  %v53 = vld [vmem:[%s0 + $0x8] sm:$0xf]
  %v54 = vld [vmem:[%s0 + $0xc] sm:$0xf]
  %v55 = vld [vmem:[%s0 + $0x10] sm:$0xf]
  %v56 = vld [vmem:[%s0 + $0x14] sm:$0xf]
  %v57 = vld [vmem:[%s0 + $0x18] sm:$0xf]
  %v58 = vld [vmem:[%s0 + $0x1c] sm:$0xf]
  %v59 = vld [vmem:[%s0 + $0x20] sm:$0xf]
  %v60 = vld [vmem:[%s0 + $0x24] sm:$0xf]
  %v61 = vld [vmem:[%s0 + $0x28] sm:$0xf]
  %v62 = vld [vmem:[%s0 + $0x2c] sm:$0xf]
  %v63 = vld [vmem:[%s0 + $0x30] sm:$0xf]
  %v64 = vld [vmem:[%s0 + $0x34] sm:$0xf]
  %v65 = vld [vmem:[%s0 + $0x38] sm:$0xf]
  %v66 = vld [vmem:[%s0 + $0x3c] sm:$0xf]
  %v67 = vld [vmem:[%s1] sm:$0xf]
  %v68 = vld [vmem:[%s1 + $0x4] sm:$0xf]
  %v69 = vld [vmem:[%s1 + $0x8] sm:$0xf]
  %v70 = vld [vmem:[%s1 + $0xc] sm:$0xf]
  %v71 = vld [vmem:[%s1 + $0x10] sm:$0xf]
  %v72 = vld [vmem:[%s1 + $0x14] sm:$0xf]
  %v73 = vld [vmem:[%s1 + $0x18] sm:$0xf]
  %v74 = vld [vmem:[%s1 + $0x1c] sm:$0xf]
  %v75 = vld [vmem:[%s1 + $0x20] sm:$0xf]
  %v76 = vld [vmem:[%s1 + $0x24] sm:$0xf]
  %v77 = vld [vmem:[%s1 + $0x28] sm:$0xf]
  %v78 = vld [vmem:[%s1 + $0x2c] sm:$0xf]
  %v79 = vld [vmem:[%s1 + $0x30] sm:$0xf]
  %v80 = vld [vmem:[%s1 + $0x34] sm:$0xf]
  %v81 = vld [vmem:[%s1 + $0x38] sm:$0xf]
  %v82 = vld [vmem:[%s1 + $0x3c] sm:$0xf]
  %v99 = vunpack.c.l.b16 %v51
  %v100 = vunpack.c.l.b16 %v52
  %v101 = vunpack.c.l.b16 %v53
  %v102 = vunpack.c.l.b16 %v54
  %v103 = vunpack.c.l.b16 %v55
  %v104 = vunpack.c.l.b16 %v56
  %v105 = vunpack.c.l.b16 %v57
  %v106 = vunpack.c.l.b16 %v58
  %v107 = vunpack.c.l.b16 %v59
  %v108 = vunpack.c.l.b16 %v60
  %v109 = vunpack.c.l.b16 %v61
  %v110 = vunpack.c.l.b16 %v62
  %v111 = vunpack.c.l.b16 %v63
  %v112 = vunpack.c.l.b16 %v64
  %v113 = vunpack.c.l.b16 %v65
  %v114 = vunpack.c.l.b16 %v66
  %v115 = vpack.c.b16 %v100, %v99
  %v116 = vpack.c.b16 %v102, %v101
  %v117 = vpack.c.b16 %v104, %v103
  %v118 = vpack.c.b16 %v106, %v105
  %v119 = vpack.c.b16 %v108, %v107
  %v120 = vpack.c.b16 %v110, %v109
  %v121 = vpack.c.b16 %v112, %v111
  %v122 = vpack.c.b16 %v114, %v113
  %v147 = vunpack.c.l.b16 %v67
  %v148 = vunpack.c.l.b16 %v68
  %v149 = vunpack.c.l.b16 %v69
  %v150 = vunpack.c.l.b16 %v70
  %v151 = vunpack.c.l.b16 %v71
  %v152 = vunpack.c.l.b16 %v72
  %v153 = vunpack.c.l.b16 %v73
  %v154 = vunpack.c.l.b16 %v74
  %v155 = vunpack.c.l.b16 %v75
  %v156 = vunpack.c.l.b16 %v76
  %v157 = vunpack.c.l.b16 %v77
  %v158 = vunpack.c.l.b16 %v78
  %v159 = vunpack.c.l.b16 %v79
  %v160 = vunpack.c.l.b16 %v80
  %v161 = vunpack.c.l.b16 %v81
  %v162 = vunpack.c.l.b16 %v82
  %v163 = vpack.c.b16 %v148, %v147
  %v164 = vpack.c.b16 %v150, %v149
  %v165 = vpack.c.b16 %v152, %v151
  %v166 = vpack.c.b16 %v154, %v153
  %v167 = vpack.c.b16 %v156, %v155
  %v168 = vpack.c.b16 %v158, %v157
  %v169 = vpack.c.b16 %v160, %v159
  %v170 = vpack.c.b16 %v162, %v161
  %179 = vmatprep.subr.bf16.mxu0 0
  %180 = vmatpush1.bf16.msra.mxu0 %v170
  %181 = vmatprep.subr.bf16.mxu0 0
  %182 = vmatpush1.bf16.msra.mxu0 %v169
  %183 = vmatprep.subr.bf16.mxu0 0
  %184 = vmatpush1.bf16.msra.mxu0 %v168
  %185 = vmatprep.subr.bf16.mxu0 0
  %186 = vmatpush1.bf16.msra.mxu0 %v167
  %187 = vmatprep.subr.bf16.mxu0 0
  %188 = vmatpush1.bf16.msra.mxu0 %v166
  %189 = vmatprep.subr.bf16.mxu0 0
  %190 = vmatpush1.bf16.msra.mxu0 %v165
  %191 = vmatprep.subr.bf16.mxu0 0
  %192 = vmatpush1.bf16.msra.mxu0 %v164
  %193 = vmatprep.subr.bf16.mxu0 0
  %194 = vmatpush1.bf16.msra.mxu0 %v163
  %195 = vmatprep.subr.bf16.mxu0 0
  %196 = vmatpush2.bf16.msra.mxu0 0
  %197 = vmatprep.subr.bf16.mxu0 0
  %198 = vmatpush2.bf16.msra.mxu0 0
  %199 = vmatprep.subr.bf16.mxu0 0
  %200 = vmatpush2.bf16.msra.mxu0 0
  %201 = vmatprep.subr.bf16.mxu0 0
  %202 = vmatpush2.bf16.msra.mxu0 0
  %203 = vmatprep.subr.bf16.mxu0 0
  %204 = vmatpush2.bf16.msra.mxu0 0
  %205 = vmatprep.subr.bf16.mxu0 0
  %206 = vmatpush2.bf16.msra.mxu0 0
  %207 = vmatprep.subr.bf16.mxu0 0
  %208 = vmatpush2.bf16.msra.mxu0 0
  %209 = vmatprep.subr.bf16.mxu0 0
  %210 = vmatpush2.bf16.msra.mxu0 0
  %211 = vmatprep.mubr.bf16.mxu0 0
  %212 = vmatmul.mubr.bf16.gmra.mxu0 %v115
  %v213 = vpop.f32.mrf.mxu0
  %v214 = vadd.f32 0.0, %v213
  %v215 = vpop.f32.mrf.mxu0
  %v216 = vpop.f32.mrf.mxu0
  %v217 = vadd.f32 0.0, %v216
  %v218 = vpop.f32.mrf.mxu0
  %219 = vmatprep.mubr.bf16.mxu0 0
  %220 = vmatmul.mubr.bf16.gmra.mxu0 %v116
  %v221 = vpop.f32.mrf.mxu0
  %v222 = vadd.f32 0.0, %v221
  %v223 = vpop.f32.mrf.mxu0
  %v224 = vpop.f32.mrf.mxu0
  %v225 = vadd.f32 0.0, %v224
  %v226 = vpop.f32.mrf.mxu0
  %227 = vmatprep.mubr.bf16.mxu0 0
  %228 = vmatmul.mubr.bf16.gmra.mxu0 %v117
  %v229 = vpop.f32.mrf.mxu0
  %v230 = vadd.f32 0.0, %v229
  %v231 = vpop.f32.mrf.mxu0
  %v232 = vpop.f32.mrf.mxu0
  %v233 = vadd.f32 0.0, %v232
  %v234 = vpop.f32.mrf.mxu0
  %235 = vmatprep.mubr.bf16.mxu0 0
  %236 = vmatmul.mubr.bf16.gmra.mxu0 %v118
  %v237 = vpop.f32.mrf.mxu0
  %v238 = vadd.f32 0.0, %v237
  %v239 = vpop.f32.mrf.mxu0
  %v240 = vpop.f32.mrf.mxu0
  %v241 = vadd.f32 0.0, %v240
  %v242 = vpop.f32.mrf.mxu0
  %243 = vmatprep.mubr.bf16.mxu0 0
  %244 = vmatmul.mubr.bf16.gmra.mxu0 %v119
  %v245 = vpop.f32.mrf.mxu0
  %v246 = vadd.f32 0.0, %v245
  %v247 = vpop.f32.mrf.mxu0
  %v248 = vpop.f32.mrf.mxu0
  %v249 = vadd.f32 0.0, %v248
  %v250 = vpop.f32.mrf.mxu0
  %251 = vmatprep.mubr.bf16.mxu0 0
  %252 = vmatmul.mubr.bf16.gmra.mxu0 %v120
  %v253 = vpop.f32.mrf.mxu0
  %v254 = vadd.f32 0.0, %v253
  %v255 = vpop.f32.mrf.mxu0
  %v256 = vpop.f32.mrf.mxu0
  %v257 = vadd.f32 0.0, %v256
  %v258 = vpop.f32.mrf.mxu0
  %259 = vmatprep.mubr.bf16.mxu0 0
  %260 = vmatmul.mubr.bf16.gmra.mxu0 %v121
  %v261 = vpop.f32.mrf.mxu0
  %v262 = vadd.f32 0.0, %v261
  %v263 = vpop.f32.mrf.mxu0
  %v264 = vpop.f32.mrf.mxu0
  %v265 = vadd.f32 0.0, %v264
  %v266 = vpop.f32.mrf.mxu0
  %267 = vmatprep.mubr.bf16.mxu0 0
  %268 = vmatmul.mubr.bf16.gmra.mxu0 %v122
  %v269 = vpop.f32.mrf.mxu0
  %v270 = vadd.f32 0.0, %v269
  %v271 = vpop.f32.mrf.mxu0
  %v272 = vpop.f32.mrf.mxu0
  %v273 = vadd.f32 0.0, %v272
  %v274 = vpop.f32.mrf.mxu0
  %275 = vdwg.mxu0
  %v276 = vadd.f32 %v35, %v214
  %v277 = vadd.f32 %v36, %v217
  %v278 = vadd.f32 %v37, %v222
  %v279 = vadd.f32 %v38, %v225
  %v280 = vadd.f32 %v39, %v230
  %v281 = vadd.f32 %v40, %v233
  %v282 = vadd.f32 %v41, %v238
  %v283 = vadd.f32 %v42, %v241
  %v284 = vadd.f32 %v43, %v246
  %v285 = vadd.f32 %v44, %v249
  %v286 = vadd.f32 %v45, %v254
  %v287 = vadd.f32 %v46, %v257
  %v288 = vadd.f32 %v47, %v262
  %v289 = vadd.f32 %v48, %v265
  %v290 = vadd.f32 %v49, %v270
  %v291 = vadd.f32 %v50, %v273
  %292 = vst [vmem:[#allocation2] sm:$0xff] %v276
  %293 = vst [vmem:[#allocation2 + $0x8] sm:$0xff] %v277
  %294 = vst [vmem:[#allocation2 + $0x10] sm:$0xff] %v278
  %295 = vst [vmem:[#allocation2 + $0x18] sm:$0xff] %v279
  %296 = vst [vmem:[#allocation2 + $0x20] sm:$0xff] %v280
  %297 = vst [vmem:[#allocation2 + $0x28] sm:$0xff] %v281
  %298 = vst [vmem:[#allocation2 + $0x30] sm:$0xff] %v282
  %299 = vst [vmem:[#allocation2 + $0x38] sm:$0xff] %v283
  %300 = vst [vmem:[#allocation2 + $0x40] sm:$0xff] %v284
  %301 = vst [vmem:[#allocation2 + $0x48] sm:$0xff] %v285
  %302 = vst [vmem:[#allocation2 + $0x50] sm:$0xff] %v286
  %303 = vst [vmem:[#allocation2 + $0x58] sm:$0xff] %v287
  %304 = vst [vmem:[#allocation2 + $0x60] sm:$0xff] %v288
  %305 = vst [vmem:[#allocation2 + $0x68] sm:$0xff] %v289
  %306 = vst [vmem:[#allocation2 + $0x70] sm:$0xff] %v290
  %307 = vst [vmem:[#allocation2 + $0x78] sm:$0xff] %v291
  // Predicated region
  $region18: #{_lambda_.25} parent=0 // pred_check
    %p308 = pneg %p15
  $region19: #{_lambda_.25} parent=0 // pred_check_branch
    %310 = sbr.rel (%p308) target = $region21
  $region20: #{_lambda_.25} parent=0 // pred_region
    %v311 = vld [vmem:[#allocation2] sm:$0xff]
    %v312 = vld [vmem:[#allocation2 + $0x8] sm:$0xff]
    %v313 = vld [vmem:[#allocation2 + $0x10] sm:$0xff]
    %v314 = vld [vmem:[#allocation2 + $0x18] sm:$0xff]
    %v315 = vld [vmem:[#allocation2 + $0x20] sm:$0xff]
    %v316 = vld [vmem:[#allocation2 + $0x28] sm:$0xff]
    %v317 = vld [vmem:[#allocation2 + $0x30] sm:$0xff]
    %v318 = vld [vmem:[#allocation2 + $0x38] sm:$0xff]
    %v319 = vld [vmem:[#allocation2 + $0x40] sm:$0xff]
    %v320 = vld [vmem:[#allocation2 + $0x48] sm:$0xff]
    %v321 = vld [vmem:[#allocation2 + $0x50] sm:$0xff]
    %v322 = vld [vmem:[#allocation2 + $0x58] sm:$0xff]
    %v323 = vld [vmem:[#allocation2 + $0x60] sm:$0xff]
    %v324 = vld [vmem:[#allocation2 + $0x68] sm:$0xff]
    %v325 = vld [vmem:[#allocation2 + $0x70] sm:$0xff]
    %v326 = vld [vmem:[#allocation2 + $0x78] sm:$0xff]
    %v327 = vld [vmem:[%s2] sm:$0x1]
    %v329 = vlaneseq
    %v330 = vshrl.u32 %v329, 7
    %v331 = vsub.s32 0, %v330
    %v332 = vrot.slane %v327, %v331
    %v334 = vadd.f32 %v311, %v332
    %v335 = vadd.f32 %v312, %v332
    %v336 = vadd.f32 %v313, %v332
    %v337 = vadd.f32 %v314, %v332
    %v338 = vadd.f32 %v315, %v332
    %v339 = vadd.f32 %v316, %v332
    %v340 = vadd.f32 %v317, %v332
    %v341 = vadd.f32 %v318, %v332
    %v342 = vadd.f32 %v319, %v332
    %v343 = vadd.f32 %v320, %v332
    %v344 = vadd.f32 %v321, %v332
    %v345 = vadd.f32 %v322, %v332
    %v346 = vadd.f32 %v323, %v332
    %v347 = vadd.f32 %v324, %v332
    %v348 = vadd.f32 %v325, %v332
    %v349 = vadd.f32 %v326, %v332
    %v350 = vmax.f32 %v334, 0.0
    %v351 = vmax.f32 %v335, 0.0
    %v352 = vmax.f32 %v336, 0.0
    %v353 = vmax.f32 %v337, 0.0
    %v354 = vmax.f32 %v338, 0.0
    %v355 = vmax.f32 %v339, 0.0
    %v356 = vmax.f32 %v340, 0.0
    %v357 = vmax.f32 %v341, 0.0
    %v358 = vmax.f32 %v342, 0.0
    %v359 = vmax.f32 %v343, 0.0
    %v360 = vmax.f32 %v344, 0.0
    %v361 = vmax.f32 %v345, 0.0
    %v362 = vmax.f32 %v346, 0.0
    %v363 = vmax.f32 %v347, 0.0
    %v364 = vmax.f32 %v348, 0.0
    %v365 = vmax.f32 %v349, 0.0
    %v366 = vpack.c.bf16 %v351, %v350
    %v367 = vpack.c.bf16 %v353, %v352
    %v368 = vpack.c.bf16 %v355, %v354
    %v369 = vpack.c.bf16 %v357, %v356
    %v370 = vpack.c.bf16 %v359, %v358
    %v371 = vpack.c.bf16 %v361, %v360
    %v372 = vpack.c.bf16 %v363, %v362
    %v373 = vpack.c.bf16 %v365, %v364
    %v382 = vunpack.c.l.b16 %v366
    %v383 = vunpack.c.h.b16 %v366
    %v384 = vunpack.c.l.b16 %v367
    %v385 = vunpack.c.h.b16 %v367
    %v386 = vunpack.c.l.b16 %v368
    %v387 = vunpack.c.h.b16 %v368
    %v388 = vunpack.c.l.b16 %v369
    %v389 = vunpack.c.h.b16 %v369
    %v390 = vunpack.c.l.b16 %v370
    %v391 = vunpack.c.h.b16 %v370
    %v392 = vunpack.c.l.b16 %v371
    %v393 = vunpack.c.h.b16 %v371
    %v394 = vunpack.c.l.b16 %v372
    %v395 = vunpack.c.h.b16 %v372
    %v396 = vunpack.c.l.b16 %v373
    %v397 = vunpack.c.h.b16 %v373
    %v398 = vpack.c.b16 %v382, %v382
    %v399 = vpack.c.b16 %v383, %v383
    %v400 = vpack.c.b16 %v384, %v384
    %v401 = vpack.c.b16 %v385, %v385
    %v402 = vpack.c.b16 %v386, %v386
    %v403 = vpack.c.b16 %v387, %v387
    %v404 = vpack.c.b16 %v388, %v388
    %v405 = vpack.c.b16 %v389, %v389
    %v406 = vpack.c.b16 %v390, %v390
    %v407 = vpack.c.b16 %v391, %v391
    %v408 = vpack.c.b16 %v392, %v392
    %v409 = vpack.c.b16 %v393, %v393
    %v410 = vpack.c.b16 %v394, %v394
    %v411 = vpack.c.b16 %v395, %v395
    %v412 = vpack.c.b16 %v396, %v396
    %v413 = vpack.c.b16 %v397, %v397
    %430 = vst [vmem:[%s3] sm:$0xf] %v398
    %431 = vst [vmem:[%s3 + $0x4] sm:$0xf] %v399
    %432 = vst [vmem:[%s3 + $0x8] sm:$0xf] %v400
    %433 = vst [vmem:[%s3 + $0xc] sm:$0xf] %v401
    %434 = vst [vmem:[%s3 + $0x10] sm:$0xf] %v402
    %435 = vst [vmem:[%s3 + $0x14] sm:$0xf] %v403
    %436 = vst [vmem:[%s3 + $0x18] sm:$0xf] %v404
    %437 = vst [vmem:[%s3 + $0x1c] sm:$0xf] %v405
    %438 = vst [vmem:[%s3 + $0x20] sm:$0xf] %v406
    %439 = vst [vmem:[%s3 + $0x24] sm:$0xf] %v407
    %440 = vst [vmem:[%s3 + $0x28] sm:$0xf] %v408
    %441 = vst [vmem:[%s3 + $0x2c] sm:$0xf] %v409
    %442 = vst [vmem:[%s3 + $0x30] sm:$0xf] %v410
    %443 = vst [vmem:[%s3 + $0x34] sm:$0xf] %v411
    %444 = vst [vmem:[%s3 + $0x38] sm:$0xf] %v412
    %445 = vst [vmem:[%s3 + $0x3c] sm:$0xf] %v413
  $region21: #{_lambda_.25} parent=0 // pred_fallthru
    _
  // Predicated region
  $region22: #{_lambda_.25} parent=0 // pred_check
    _
  $region23: #{_lambda_.25} parent=0 // pred_check_branch
    %447 = sbr.rel (0) target = $region25
  $region24: #{_lambda_.25} parent=0 // pred_region
    _
  $region25: #{_lambda_.25} parent=0 // pred_fallthru
    _
  // Predicated region
  $region26: #{_lambda_.25} parent=0 // pred_check
    _
  $region27: #{_lambda_.25} parent=0 // pred_check_branch
    %449 = sbr.rel (0) target = $region29
  $region28: #{_lambda_.25} parent=0 // pred_region
    _
  $region29: #{_lambda_.25} parent=0 // pred_fallthru
    _

// kernel: _lambda_.23
$region0: #{_lambda_.23}
  #allocation0 [shape = 'u32[]', space=smem, size = 0x4, offset = 0x4, fixed_abs, tag = 'smem constant byte address 0x4 - core index']
  #allocation1 [shape = 'u32[144,128]{1,0:T(1,128)}', space=vmem, size = 0x12000, scoped, tag = 'internal scratch']
  #allocation2 [shape = 'f32[512,128]{1,0:T(8,128)}', space=vmem, size = 0x40000, scoped, tag = 'scratch operand']
  %s0 = inlined_call_operand.vmem [shape: bf16[1,512,256], index: 0, kind: input, shape index: {}]
  %s1 = inlined_call_operand.vmem [shape: bf16[1,256,128], index: 1, kind: input, shape index: {}]
  %s2 = inlined_call_operand.vmem [shape: f32[1,128], index: 2, kind: input, shape index: {}]
  %s3 = inlined_call_operand.vmem [shape: bf16[512,128], index: 3, kind: output, shape index: {}]
  %s4 = sld [smem:[#allocation0]]
  $region30: #{_lambda_.23} parent=0
    _
  %s6 = ssub.s32 1, %s4
  %s7 = scalar_select 0, %s6, %s4
  // Predicated region
  $region2: #{_lambda_.23} parent=0 // pred_check
    _
  $region3: #{_lambda_.23} parent=0 // pred_check_branch
    %9 = sbr.rel (0) target = $region5
  $region4: #{_lambda_.23} parent=0 // pred_region
    _
  $region5: #{_lambda_.23} parent=0 // pred_fallthru
    _
  // Predicated region
  $region6: #{_lambda_.23} parent=0 // pred_check
    _
  $region7: #{_lambda_.23} parent=0 // pred_check_branch
    %11 = sbr.rel (0) target = $region9
  $region8: #{_lambda_.23} parent=0 // pred_region
    _
  $region9: #{_lambda_.23} parent=0 // pred_fallthru
    _
  // Predicated region
  $region10: #{_lambda_.23} parent=0 // pred_check
    _
  $region11: #{_lambda_.23} parent=0 // pred_check_branch
    %13 = sbr.rel (0) target = $region13
  $region12: #{_lambda_.23} parent=0 // pred_region
    _
  $region13: #{_lambda_.23} parent=0 // pred_fallthru
    _
  %p15 = scmp.eq.s32.totalorder 0, 0
  // Predicated region
  $region14: #{_lambda_.23} parent=0 // pred_check
    %p16 = pneg %p15
  $region15: #{_lambda_.23} parent=0 // pred_check_branch
    %18 = sbr.rel (%p16) target = $region17
  $region16: #{_lambda_.23} parent=0 // pred_region
    %19 = vst [vmem:[#allocation2] sm:$0xff] 0.0
    %20 = vst [vmem:[#allocation2 + $0x8] sm:$0xff] 0.0
    %21 = vst [vmem:[#allocation2 + $0x10] sm:$0xff] 0.0
    %22 = vst [vmem:[#allocation2 + $0x18] sm:$0xff] 0.0
    %23 = vst [vmem:[#allocation2 + $0x20] sm:$0xff] 0.0
    %24 = vst [vmem:[#allocation2 + $0x28] sm:$0xff] 0.0
    %25 = vst [vmem:[#allocation2 + $0x30] sm:$0xff] 0.0
    %26 = vst [vmem:[#allocation2 + $0x38] sm:$0xff] 0.0
    %27 = vst [vmem:[#allocation2 + $0x40] sm:$0xff] 0.0
    %28 = vst [vmem:[#allocation2 + $0x48] sm:$0xff] 0.0
    %29 = vst [vmem:[#allocation2 + $0x50] sm:$0xff] 0.0
    %30 = vst [vmem:[#allocation2 + $0x58] sm:$0xff] 0.0
    %31 = vst [vmem:[#allocation2 + $0x60] sm:$0xff] 0.0
    %32 = vst [vmem:[#allocation2 + $0x68] sm:$0xff] 0.0
    %33 = vst [vmem:[#allocation2 + $0x70] sm:$0xff] 0.0
    %34 = vst [vmem:[#allocation2 + $0x78] sm:$0xff] 0.0
    %35 = vst [vmem:[#allocation2 + $0x80] sm:$0xff] 0.0
    %36 = vst [vmem:[#allocation2 + $0x88] sm:$0xff] 0.0
    %37 = vst [vmem:[#allocation2 + $0x90] sm:$0xff] 0.0
    %38 = vst [vmem:[#allocation2 + $0x98] sm:$0xff] 0.0
    %39 = vst [vmem:[#allocation2 + $0xa0] sm:$0xff] 0.0
    %40 = vst [vmem:[#allocation2 + $0xa8] sm:$0xff] 0.0
    %41 = vst [vmem:[#allocation2 + $0xb0] sm:$0xff] 0.0
    %42 = vst [vmem:[#allocation2 + $0xb8] sm:$0xff] 0.0
    %43 = vst [vmem:[#allocation2 + $0xc0] sm:$0xff] 0.0
    %44 = vst [vmem:[#allocation2 + $0xc8] sm:$0xff] 0.0
    %45 = vst [vmem:[#allocation2 + $0xd0] sm:$0xff] 0.0
    %46 = vst [vmem:[#allocation2 + $0xd8] sm:$0xff] 0.0
    %47 = vst [vmem:[#allocation2 + $0xe0] sm:$0xff] 0.0
    %48 = vst [vmem:[#allocation2 + $0xe8] sm:$0xff] 0.0
    %49 = vst [vmem:[#allocation2 + $0xf0] sm:$0xff] 0.0
    %50 = vst [vmem:[#allocation2 + $0xf8] sm:$0xff] 0.0
    %51 = vst [vmem:[#allocation2 + $0x100] sm:$0xff] 0.0
    %52 = vst [vmem:[#allocation2 + $0x108] sm:$0xff] 0.0
    %53 = vst [vmem:[#allocation2 + $0x110] sm:$0xff] 0.0
    %54 = vst [vmem:[#allocation2 + $0x118] sm:$0xff] 0.0
    %55 = vst [vmem:[#allocation2 + $0x120] sm:$0xff] 0.0
    %56 = vst [vmem:[#allocation2 + $0x128] sm:$0xff] 0.0
    %57 = vst [vmem:[#allocation2 + $0x130] sm:$0xff] 0.0
    %58 = vst [vmem:[#allocation2 + $0x138] sm:$0xff] 0.0
    %59 = vst [vmem:[#allocation2 + $0x140] sm:$0xff] 0.0
    %60 = vst [vmem:[#allocation2 + $0x148] sm:$0xff] 0.0
    %61 = vst [vmem:[#allocation2 + $0x150] sm:$0xff] 0.0
    %62 = vst [vmem:[#allocation2 + $0x158] sm:$0xff] 0.0
    %63 = vst [vmem:[#allocation2 + $0x160] sm:$0xff] 0.0
    %64 = vst [vmem:[#allocation2 + $0x168] sm:$0xff] 0.0
    %65 = vst [vmem:[#allocation2 + $0x170] sm:$0xff] 0.0
    %66 = vst [vmem:[#allocation2 + $0x178] sm:$0xff] 0.0
    %67 = vst [vmem:[#allocation2 + $0x180] sm:$0xff] 0.0
    %68 = vst [vmem:[#allocation2 + $0x188] sm:$0xff] 0.0
    %69 = vst [vmem:[#allocation2 + $0x190] sm:$0xff] 0.0
    %70 = vst [vmem:[#allocation2 + $0x198] sm:$0xff] 0.0
    %71 = vst [vmem:[#allocation2 + $0x1a0] sm:$0xff] 0.0
    %72 = vst [vmem:[#allocation2 + $0x1a8] sm:$0xff] 0.0
    %73 = vst [vmem:[#allocation2 + $0x1b0] sm:$0xff] 0.0
    %74 = vst [vmem:[#allocation2 + $0x1b8] sm:$0xff] 0.0
    %75 = vst [vmem:[#allocation2 + $0x1c0] sm:$0xff] 0.0
    %76 = vst [vmem:[#allocation2 + $0x1c8] sm:$0xff] 0.0
    %77 = vst [vmem:[#allocation2 + $0x1d0] sm:$0xff] 0.0
    %78 = vst [vmem:[#allocation2 + $0x1d8] sm:$0xff] 0.0
    %79 = vst [vmem:[#allocation2 + $0x1e0] sm:$0xff] 0.0
    %80 = vst [vmem:[#allocation2 + $0x1e8] sm:$0xff] 0.0
    %81 = vst [vmem:[#allocation2 + $0x1f0] sm:$0xff] 0.0
    %82 = vst [vmem:[#allocation2 + $0x1f8] sm:$0xff] 0.0
  $region17: #{_lambda_.23} parent=0 // pred_fallthru
    _
  %v83 = vld [vmem:[#allocation2] sm:$0xff]
  %v84 = vld [vmem:[#allocation2 + $0x8] sm:$0xff]
  %v85 = vld [vmem:[#allocation2 + $0x10] sm:$0xff]
  %v86 = vld [vmem:[#allocation2 + $0x18] sm:$0xff]
  %v87 = vld [vmem:[#allocation2 + $0x20] sm:$0xff]
  %v88 = vld [vmem:[#allocation2 + $0x28] sm:$0xff]
  %v89 = vld [vmem:[#allocation2 + $0x30] sm:$0xff]
  %v90 = vld [vmem:[#allocation2 + $0x38] sm:$0xff]
  %v91 = vld [vmem:[#allocation2 + $0x40] sm:$0xff]
  %v92 = vld [vmem:[#allocation2 + $0x48] sm:$0xff]
  %v93 = vld [vmem:[#allocation2 + $0x50] sm:$0xff]
  %v94 = vld [vmem:[#allocation2 + $0x58] sm:$0xff]
  %v95 = vld [vmem:[#allocation2 + $0x60] sm:$0xff]
  %v96 = vld [vmem:[#allocation2 + $0x68] sm:$0xff]
  %v97 = vld [vmem:[#allocation2 + $0x70] sm:$0xff]
  %v98 = vld [vmem:[#allocation2 + $0x78] sm:$0xff]
  %v99 = vld [vmem:[#allocation2 + $0x80] sm:$0xff]
  %v100 = vld [vmem:[#allocation2 + $0x88] sm:$0xff]
  %v101 = vld [vmem:[#allocation2 + $0x90] sm:$0xff]
  %v102 = vld [vmem:[#allocation2 + $0x98] sm:$0xff]
  %v103 = vld [vmem:[#allocation2 + $0xa0] sm:$0xff]
  %v104 = vld [vmem:[#allocation2 + $0xa8] sm:$0xff]
  %v105 = vld [vmem:[#allocation2 + $0xb0] sm:$0xff]
  %v106 = vld [vmem:[#allocation2 + $0xb8] sm:$0xff]
  %v107 = vld [vmem:[#allocation2 + $0xc0] sm:$0xff]
  %v108 = vld [vmem:[#allocation2 + $0xc8] sm:$0xff]
  %v109 = vld [vmem:[#allocation2 + $0xd0] sm:$0xff]
  %v110 = vld [vmem:[#allocation2 + $0xd8] sm:$0xff]
  %v111 = vld [vmem:[#allocation2 + $0xe0] sm:$0xff]
  %v112 = vld [vmem:[#allocation2 + $0xe8] sm:$0xff]
  %v113 = vld [vmem:[#allocation2 + $0xf0] sm:$0xff]
  %v114 = vld [vmem:[#allocation2 + $0xf8] sm:$0xff]
  %v115 = vld [vmem:[#allocation2 + $0x100] sm:$0xff]
  %v116 = vld [vmem:[#allocation2 + $0x108] sm:$0xff]
  %v117 = vld [vmem:[#allocation2 + $0x110] sm:$0xff]
  %v118 = vld [vmem:[#allocation2 + $0x118] sm:$0xff]
  %v119 = vld [vmem:[#allocation2 + $0x120] sm:$0xff]
  %v120 = vld [vmem:[#allocation2 + $0x128] sm:$0xff]
  %v121 = vld [vmem:[#allocation2 + $0x130] sm:$0xff]
  %v122 = vld [vmem:[#allocation2 + $0x138] sm:$0xff]
  %v123 = vld [vmem:[#allocation2 + $0x140] sm:$0xff]
  %v124 = vld [vmem:[#allocation2 + $0x148] sm:$0xff]
  %v125 = vld [vmem:[#allocation2 + $0x150] sm:$0xff]
  %v126 = vld [vmem:[#allocation2 + $0x158] sm:$0xff]
  %v127 = vld [vmem:[#allocation2 + $0x160] sm:$0xff]
  %v128 = vld [vmem:[#allocation2 + $0x168] sm:$0xff]
  %v129 = vld [vmem:[#allocation2 + $0x170] sm:$0xff]
  %v130 = vld [vmem:[#allocation2 + $0x178] sm:$0xff]
  %v131 = vld [vmem:[#allocation2 + $0x180] sm:$0xff]
  %v132 = vld [vmem:[#allocation2 + $0x188] sm:$0xff]
  %v133 = vld [vmem:[#allocation2 + $0x190] sm:$0xff]
  %v134 = vld [vmem:[#allocation2 + $0x198] sm:$0xff]
  %v135 = vld [vmem:[#allocation2 + $0x1a0] sm:$0xff]
  %v136 = vld [vmem:[#allocation2 + $0x1a8] sm:$0xff]
  %v137 = vld [vmem:[#allocation2 + $0x1b0] sm:$0xff]
  %v138 = vld [vmem:[#allocation2 + $0x1b8] sm:$0xff]
  %v139 = vld [vmem:[#allocation2 + $0x1c0] sm:$0xff]
  %v140 = vld [vmem:[#allocation2 + $0x1c8] sm:$0xff]
  %v141 = vld [vmem:[#allocation2 + $0x1d0] sm:$0xff]
  %v142 = vld [vmem:[#allocation2 + $0x1d8] sm:$0xff]
  %v143 = vld [vmem:[#allocation2 + $0x1e0] sm:$0xff]
  %v144 = vld [vmem:[#allocation2 + $0x1e8] sm:$0xff]
  %v145 = vld [vmem:[#allocation2 + $0x1f0] sm:$0xff]
  %v146 = vld [vmem:[#allocation2 + $0x1f8] sm:$0xff]
  %v147 = vld [vmem:[%s0] sm:$0xff]
  %v148 = vld [vmem:[%s0 + $0x8] sm:$0xff]
  %v149 = vld [vmem:[%s0 + $0x10] sm:$0xff]
  %v150 = vld [vmem:[%s0 + $0x18] sm:$0xff]
  %v151 = vld [vmem:[%s0 + $0x20] sm:$0xff]
  %v152 = vld [vmem:[%s0 + $0x28] sm:$0xff]
  %v153 = vld [vmem:[%s0 + $0x30] sm:$0xff]
  %v154 = vld [vmem:[%s0 + $0x38] sm:$0xff]
  %v155 = vld [vmem:[%s0 + $0x40] sm:$0xff]
  %v156 = vld [vmem:[%s0 + $0x48] sm:$0xff]
  %v157 = vld [vmem:[%s0 + $0x50] sm:$0xff]
  %v158 = vld [vmem:[%s0 + $0x58] sm:$0xff]
  %v159 = vld [vmem:[%s0 + $0x60] sm:$0xff]
  %v160 = vld [vmem:[%s0 + $0x68] sm:$0xff]
  %v161 = vld [vmem:[%s0 + $0x70] sm:$0xff]
  %v162 = vld [vmem:[%s0 + $0x78] sm:$0xff]
  %v163 = vld [vmem:[%s0 + $0x80] sm:$0xff]
  %v164 = vld [vmem:[%s0 + $0x88] sm:$0xff]
  %v165 = vld [vmem:[%s0 + $0x90] sm:$0xff]
  %v166 = vld [vmem:[%s0 + $0x98] sm:$0xff]
  %v167 = vld [vmem:[%s0 + $0xa0] sm:$0xff]
  %v168 = vld [vmem:[%s0 + $0xa8] sm:$0xff]
  %v169 = vld [vmem:[%s0 + $0xb0] sm:$0xff]
  %v170 = vld [vmem:[%s0 + $0xb8] sm:$0xff]
  %v171 = vld [vmem:[%s0 + $0xc0] sm:$0xff]
  %v172 = vld [vmem:[%s0 + $0xc8] sm:$0xff]
  %v173 = vld [vmem:[%s0 + $0xd0] sm:$0xff]
  %v174 = vld [vmem:[%s0 + $0xd8] sm:$0xff]
  %v175 = vld [vmem:[%s0 + $0xe0] sm:$0xff]
  %v176 = vld [vmem:[%s0 + $0xe8] sm:$0xff]
  %v177 = vld [vmem:[%s0 + $0xf0] sm:$0xff]
  %v178 = vld [vmem:[%s0 + $0xf8] sm:$0xff]
  %v179 = vld [vmem:[%s0 + $0x100] sm:$0xff]
  %v180 = vld [vmem:[%s0 + $0x108] sm:$0xff]
  %v181 = vld [vmem:[%s0 + $0x110] sm:$0xff]
  %v182 = vld [vmem:[%s0 + $0x118] sm:$0xff]
  %v183 = vld [vmem:[%s0 + $0x120] sm:$0xff]
  %v184 = vld [vmem:[%s0 + $0x128] sm:$0xff]
  %v185 = vld [vmem:[%s0 + $0x130] sm:$0xff]
  %v186 = vld [vmem:[%s0 + $0x138] sm:$0xff]
  %v187 = vld [vmem:[%s0 + $0x140] sm:$0xff]
  %v188 = vld [vmem:[%s0 + $0x148] sm:$0xff]
  %v189 = vld [vmem:[%s0 + $0x150] sm:$0xff]
  %v190 = vld [vmem:[%s0 + $0x158] sm:$0xff]
  %v191 = vld [vmem:[%s0 + $0x160] sm:$0xff]
  %v192 = vld [vmem:[%s0 + $0x168] sm:$0xff]
  %v193 = vld [vmem:[%s0 + $0x170] sm:$0xff]
  %v194 = vld [vmem:[%s0 + $0x178] sm:$0xff]
  %v195 = vld [vmem:[%s0 + $0x180] sm:$0xff]
  %v196 = vld [vmem:[%s0 + $0x188] sm:$0xff]
  %v197 = vld [vmem:[%s0 + $0x190] sm:$0xff]
  %v198 = vld [vmem:[%s0 + $0x198] sm:$0xff]
  %v199 = vld [vmem:[%s0 + $0x1a0] sm:$0xff]
  %v200 = vld [vmem:[%s0 + $0x1a8] sm:$0xff]
  %v201 = vld [vmem:[%s0 + $0x1b0] sm:$0xff]
  %v202 = vld [vmem:[%s0 + $0x1b8] sm:$0xff]
  %v203 = vld [vmem:[%s0 + $0x1c0] sm:$0xff]
  %v204 = vld [vmem:[%s0 + $0x1c8] sm:$0xff]
  %v205 = vld [vmem:[%s0 + $0x1d0] sm:$0xff]
  %v206 = vld [vmem:[%s0 + $0x1d8] sm:$0xff]
  %v207 = vld [vmem:[%s0 + $0x1e0] sm:$0xff]
  %v208 = vld [vmem:[%s0 + $0x1e8] sm:$0xff]
  %v209 = vld [vmem:[%s0 + $0x1f0] sm:$0xff]
  %v210 = vld [vmem:[%s0 + $0x1f8] sm:$0xff]
  %v211 = vld [vmem:[%s1] sm:$0xf]
  %v212 = vld [vmem:[%s1 + $0x4] sm:$0xf]
  %v213 = vld [vmem:[%s1 + $0x8] sm:$0xf]
  %v214 = vld [vmem:[%s1 + $0xc] sm:$0xf]
  %v215 = vld [vmem:[%s1 + $0x10] sm:$0xf]
  %v216 = vld [vmem:[%s1 + $0x14] sm:$0xf]
  %v217 = vld [vmem:[%s1 + $0x18] sm:$0xf]
  %v218 = vld [vmem:[%s1 + $0x1c] sm:$0xf]
  %v219 = vld [vmem:[%s1 + $0x20] sm:$0xf]
  %v220 = vld [vmem:[%s1 + $0x24] sm:$0xf]
  %v221 = vld [vmem:[%s1 + $0x28] sm:$0xf]
  %v222 = vld [vmem:[%s1 + $0x2c] sm:$0xf]
  %v223 = vld [vmem:[%s1 + $0x30] sm:$0xf]
  %v224 = vld [vmem:[%s1 + $0x34] sm:$0xf]
  %v225 = vld [vmem:[%s1 + $0x38] sm:$0xf]
  %v226 = vld [vmem:[%s1 + $0x3c] sm:$0xf]
  %v227 = vld [vmem:[%s1 + $0x40] sm:$0xf]
  %v228 = vld [vmem:[%s1 + $0x44] sm:$0xf]
  %v229 = vld [vmem:[%s1 + $0x48] sm:$0xf]
  %v230 = vld [vmem:[%s1 + $0x4c] sm:$0xf]
  %v231 = vld [vmem:[%s1 + $0x50] sm:$0xf]
  %v232 = vld [vmem:[%s1 + $0x54] sm:$0xf]
  %v233 = vld [vmem:[%s1 + $0x58] sm:$0xf]
  %v234 = vld [vmem:[%s1 + $0x5c] sm:$0xf]
  %v235 = vld [vmem:[%s1 + $0x60] sm:$0xf]
  %v236 = vld [vmem:[%s1 + $0x64] sm:$0xf]
  %v237 = vld [vmem:[%s1 + $0x68] sm:$0xf]
  %v238 = vld [vmem:[%s1 + $0x6c] sm:$0xf]
  %v239 = vld [vmem:[%s1 + $0x70] sm:$0xf]
  %v240 = vld [vmem:[%s1 + $0x74] sm:$0xf]
  %v241 = vld [vmem:[%s1 + $0x78] sm:$0xf]
  %v242 = vld [vmem:[%s1 + $0x7c] sm:$0xf]
  %v307 = vunpack.c.l.b16 %v147
  %v308 = vunpack.c.h.b16 %v147
  %v309 = vunpack.c.l.b16 %v148
  %v310 = vunpack.c.h.b16 %v148
  %v311 = vunpack.c.l.b16 %v149
  %v312 = vunpack.c.h.b16 %v149
  %v313 = vunpack.c.l.b16 %v150
  %v314 = vunpack.c.h.b16 %v150
  %v315 = vunpack.c.l.b16 %v151
  %v316 = vunpack.c.h.b16 %v151
  %v317 = vunpack.c.l.b16 %v152
  %v318 = vunpack.c.h.b16 %v152
  %v319 = vunpack.c.l.b16 %v153
  %v320 = vunpack.c.h.b16 %v153
  %v321 = vunpack.c.l.b16 %v154
  %v322 = vunpack.c.h.b16 %v154
  %v323 = vunpack.c.l.b16 %v155
  %v324 = vunpack.c.h.b16 %v155
  %v325 = vunpack.c.l.b16 %v156
  %v326 = vunpack.c.h.b16 %v156
  %v327 = vunpack.c.l.b16 %v157
  %v328 = vunpack.c.h.b16 %v157
  %v329 = vunpack.c.l.b16 %v158
  %v330 = vunpack.c.h.b16 %v158
  %v331 = vunpack.c.l.b16 %v159
  %v332 = vunpack.c.h.b16 %v159
  %v333 = vunpack.c.l.b16 %v160
  %v334 = vunpack.c.h.b16 %v160
  %v335 = vunpack.c.l.b16 %v161
  %v336 = vunpack.c.h.b16 %v161
  %v337 = vunpack.c.l.b16 %v162
  %v338 = vunpack.c.h.b16 %v162
  %v339 = vunpack.c.l.b16 %v163
  %v340 = vunpack.c.h.b16 %v163
  %v341 = vunpack.c.l.b16 %v164
  %v342 = vunpack.c.h.b16 %v164
  %v343 = vunpack.c.l.b16 %v165
  %v344 = vunpack.c.h.b16 %v165
  %v345 = vunpack.c.l.b16 %v166
  %v346 = vunpack.c.h.b16 %v166
  %v347 = vunpack.c.l.b16 %v167
  %v348 = vunpack.c.h.b16 %v167
  %v349 = vunpack.c.l.b16 %v168
  %v350 = vunpack.c.h.b16 %v168
  %v351 = vunpack.c.l.b16 %v169
  %v352 = vunpack.c.h.b16 %v169
  %v353 = vunpack.c.l.b16 %v170
  %v354 = vunpack.c.h.b16 %v170
  %v355 = vunpack.c.l.b16 %v171
  %v356 = vunpack.c.h.b16 %v171
  %v357 = vunpack.c.l.b16 %v172
  %v358 = vunpack.c.h.b16 %v172
  %v359 = vunpack.c.l.b16 %v173
  %v360 = vunpack.c.h.b16 %v173
  %v361 = vunpack.c.l.b16 %v174
  %v362 = vunpack.c.h.b16 %v174
  %v363 = vunpack.c.l.b16 %v175
  %v364 = vunpack.c.h.b16 %v175
  %v365 = vunpack.c.l.b16 %v176
  %v366 = vunpack.c.h.b16 %v176
  %v367 = vunpack.c.l.b16 %v177
  %v368 = vunpack.c.h.b16 %v177
  %v369 = vunpack.c.l.b16 %v178
  %v370 = vunpack.c.h.b16 %v178
  %v371 = vunpack.c.l.b16 %v179
  %v372 = vunpack.c.h.b16 %v179
  %v373 = vunpack.c.l.b16 %v180
  %v374 = vunpack.c.h.b16 %v180
  %v375 = vunpack.c.l.b16 %v181
  %v376 = vunpack.c.h.b16 %v181
  %v377 = vunpack.c.l.b16 %v182
  %v378 = vunpack.c.h.b16 %v182
  %v379 = vunpack.c.l.b16 %v183
  %v380 = vunpack.c.h.b16 %v183
  %v381 = vunpack.c.l.b16 %v184
  %v382 = vunpack.c.h.b16 %v184
  %v383 = vunpack.c.l.b16 %v185
  %v384 = vunpack.c.h.b16 %v185
  %v385 = vunpack.c.l.b16 %v186
  %v386 = vunpack.c.h.b16 %v186
  %v387 = vunpack.c.l.b16 %v187
  %v388 = vunpack.c.h.b16 %v187
  %v389 = vunpack.c.l.b16 %v188
  %v390 = vunpack.c.h.b16 %v188
  %v391 = vunpack.c.l.b16 %v189
  %v392 = vunpack.c.h.b16 %v189
  %v393 = vunpack.c.l.b16 %v190
  %v394 = vunpack.c.h.b16 %v190
  %v395 = vunpack.c.l.b16 %v191
  %v396 = vunpack.c.h.b16 %v191
  %v397 = vunpack.c.l.b16 %v192
  %v398 = vunpack.c.h.b16 %v192
  %v399 = vunpack.c.l.b16 %v193
  %v400 = vunpack.c.h.b16 %v193
  %v401 = vunpack.c.l.b16 %v194
  %v402 = vunpack.c.h.b16 %v194
  %v403 = vunpack.c.l.b16 %v195
  %v404 = vunpack.c.h.b16 %v195
  %v405 = vunpack.c.l.b16 %v196
  %v406 = vunpack.c.h.b16 %v196
  %v407 = vunpack.c.l.b16 %v197
  %v408 = vunpack.c.h.b16 %v197
  %v409 = vunpack.c.l.b16 %v198
  %v410 = vunpack.c.h.b16 %v198
  %v411 = vunpack.c.l.b16 %v199
  %v412 = vunpack.c.h.b16 %v199
  %v413 = vunpack.c.l.b16 %v200
  %v414 = vunpack.c.h.b16 %v200
  %v415 = vunpack.c.l.b16 %v201
  %v416 = vunpack.c.h.b16 %v201
  %v417 = vunpack.c.l.b16 %v202
  %v418 = vunpack.c.h.b16 %v202
  %v419 = vunpack.c.l.b16 %v203
  %v420 = vunpack.c.h.b16 %v203
  %v421 = vunpack.c.l.b16 %v204
  %v422 = vunpack.c.h.b16 %v204
  %v423 = vunpack.c.l.b16 %v205
  %v424 = vunpack.c.h.b16 %v205
  %v425 = vunpack.c.l.b16 %v206
  %v426 = vunpack.c.h.b16 %v206
  %v427 = vunpack.c.l.b16 %v207
  %v428 = vunpack.c.h.b16 %v207
  %v429 = vunpack.c.l.b16 %v208
  %v430 = vunpack.c.h.b16 %v208
  %v431 = vunpack.c.l.b16 %v209
  %v432 = vunpack.c.h.b16 %v209
  %v433 = vunpack.c.l.b16 %v210
  %v434 = vunpack.c.h.b16 %v210
  %v435 = vpack.c.b16 %v309, %v307
  %v436 = vpack.c.b16 %v310, %v308
  %v437 = vpack.c.b16 %v313, %v311
  %v438 = vpack.c.b16 %v314, %v312
  %v439 = vpack.c.b16 %v317, %v315
  %v440 = vpack.c.b16 %v318, %v316
  %v441 = vpack.c.b16 %v321, %v319
  %v442 = vpack.c.b16 %v322, %v320
  %v443 = vpack.c.b16 %v325, %v323
  %v444 = vpack.c.b16 %v326, %v324
  %v445 = vpack.c.b16 %v329, %v327
  %v446 = vpack.c.b16 %v330, %v328
  %v447 = vpack.c.b16 %v333, %v331
  %v448 = vpack.c.b16 %v334, %v332
  %v449 = vpack.c.b16 %v337, %v335
  %v450 = vpack.c.b16 %v338, %v336
  %v451 = vpack.c.b16 %v341, %v339
  %v452 = vpack.c.b16 %v342, %v340
  %v453 = vpack.c.b16 %v345, %v343
  %v454 = vpack.c.b16 %v346, %v344
  %v455 = vpack.c.b16 %v349, %v347
  %v456 = vpack.c.b16 %v350, %v348
  %v457 = vpack.c.b16 %v353, %v351
  %v458 = vpack.c.b16 %v354, %v352
  %v459 = vpack.c.b16 %v357, %v355
  %v460 = vpack.c.b16 %v358, %v356
  %v461 = vpack.c.b16 %v361, %v359
  %v462 = vpack.c.b16 %v362, %v360
  %v463 = vpack.c.b16 %v365, %v363
  %v464 = vpack.c.b16 %v366, %v364
  %v465 = vpack.c.b16 %v369, %v367
  %v466 = vpack.c.b16 %v370, %v368
  %v467 = vpack.c.b16 %v373, %v371
  %v468 = vpack.c.b16 %v374, %v372
  %v469 = vpack.c.b16 %v377, %v375
  %v470 = vpack.c.b16 %v378, %v376
  %v471 = vpack.c.b16 %v381, %v379
  %v472 = vpack.c.b16 %v382, %v380
  %v473 = vpack.c.b16 %v385, %v383
  %v474 = vpack.c.b16 %v386, %v384
  %v475 = vpack.c.b16 %v389, %v387
  %v476 = vpack.c.b16 %v390, %v388
  %v477 = vpack.c.b16 %v393, %v391
  %v478 = vpack.c.b16 %v394, %v392
  %v479 = vpack.c.b16 %v397, %v395
  %v480 = vpack.c.b16 %v398, %v396
  %v481 = vpack.c.b16 %v401, %v399
  %v482 = vpack.c.b16 %v402, %v400
  %v483 = vpack.c.b16 %v405, %v403
  %v484 = vpack.c.b16 %v406, %v404
  %v485 = vpack.c.b16 %v409, %v407
  %v486 = vpack.c.b16 %v410, %v408
  %v487 = vpack.c.b16 %v413, %v411
  %v488 = vpack.c.b16 %v414, %v412
  %v489 = vpack.c.b16 %v417, %v415
  %v490 = vpack.c.b16 %v418, %v416
  %v491 = vpack.c.b16 %v421, %v419
  %v492 = vpack.c.b16 %v422, %v420
  %v493 = vpack.c.b16 %v425, %v423
  %v494 = vpack.c.b16 %v426, %v424
  %v495 = vpack.c.b16 %v429, %v427
  %v496 = vpack.c.b16 %v430, %v428
  %v497 = vpack.c.b16 %v433, %v431
  %v498 = vpack.c.b16 %v434, %v432
  %v595 = vunpack.c.l.b16 %v211
  %v596 = vunpack.c.l.b16 %v212
  %v597 = vunpack.c.l.b16 %v213
  %v598 = vunpack.c.l.b16 %v214
  %v599 = vunpack.c.l.b16 %v215
  %v600 = vunpack.c.l.b16 %v216
  %v601 = vunpack.c.l.b16 %v217
  %v602 = vunpack.c.l.b16 %v218
  %v603 = vunpack.c.l.b16 %v219
  %v604 = vunpack.c.l.b16 %v220
  %v605 = vunpack.c.l.b16 %v221
  %v606 = vunpack.c.l.b16 %v222
  %v607 = vunpack.c.l.b16 %v223
  %v608 = vunpack.c.l.b16 %v224
  %v609 = vunpack.c.l.b16 %v225
  %v610 = vunpack.c.l.b16 %v226
  %v611 = vunpack.c.l.b16 %v227
  %v612 = vunpack.c.l.b16 %v228
  %v613 = vunpack.c.l.b16 %v229
  %v614 = vunpack.c.l.b16 %v230
  %v615 = vunpack.c.l.b16 %v231
  %v616 = vunpack.c.l.b16 %v232
  %v617 = vunpack.c.l.b16 %v233
  %v618 = vunpack.c.l.b16 %v234
  %v619 = vunpack.c.l.b16 %v235
  %v620 = vunpack.c.l.b16 %v236
  %v621 = vunpack.c.l.b16 %v237
  %v622 = vunpack.c.l.b16 %v238
  %v623 = vunpack.c.l.b16 %v239
  %v624 = vunpack.c.l.b16 %v240
  %v625 = vunpack.c.l.b16 %v241
  %v626 = vunpack.c.l.b16 %v242
  %v627 = vpack.c.b16 %v596, %v595
  %v628 = vpack.c.b16 %v598, %v597
  %v629 = vpack.c.b16 %v600, %v599
  %v630 = vpack.c.b16 %v602, %v601
  %v631 = vpack.c.b16 %v604, %v603
  %v632 = vpack.c.b16 %v606, %v605
  %v633 = vpack.c.b16 %v608, %v607
  %v634 = vpack.c.b16 %v610, %v609
  %v635 = vpack.c.b16 %v612, %v611
  %v636 = vpack.c.b16 %v614, %v613
  %v637 = vpack.c.b16 %v616, %v615
  %v638 = vpack.c.b16 %v618, %v617
  %v639 = vpack.c.b16 %v620, %v619
  %v640 = vpack.c.b16 %v622, %v621
  %v641 = vpack.c.b16 %v624, %v623
  %v642 = vpack.c.b16 %v626, %v625
  %659 = vmatprep.subr.bf16.mxu0 0
  %660 = vmatpush1.bf16.msra.mxu0 %v634
  %661 = vmatprep.subr.bf16.mxu0 0
  %662 = vmatpush1.bf16.msra.mxu0 %v633
  %663 = vmatprep.subr.bf16.mxu0 0
  %664 = vmatpush1.bf16.msra.mxu0 %v632
  %665 = vmatprep.subr.bf16.mxu0 0
  %666 = vmatpush1.bf16.msra.mxu0 %v631
  %667 = vmatprep.subr.bf16.mxu0 0
  %668 = vmatpush1.bf16.msra.mxu0 %v630
  %669 = vmatprep.subr.bf16.mxu0 0
  %670 = vmatpush1.bf16.msra.mxu0 %v629
  %671 = vmatprep.subr.bf16.mxu0 0
  %672 = vmatpush1.bf16.msra.mxu0 %v628
  %673 = vmatprep.subr.bf16.mxu0 0
  %674 = vmatpush1.bf16.msra.mxu0 %v627
  %675 = vmatprep.subr.bf16.mxu0 0
  %676 = vmatpush2.bf16.msra.mxu0 %v642
  %677 = vmatprep.subr.bf16.mxu0 0
  %678 = vmatpush2.bf16.msra.mxu0 %v641
  %679 = vmatprep.subr.bf16.mxu0 0
  %680 = vmatpush2.bf16.msra.mxu0 %v640
  %681 = vmatprep.subr.bf16.mxu0 0
  %682 = vmatpush2.bf16.msra.mxu0 %v639
  %683 = vmatprep.subr.bf16.mxu0 0
  %684 = vmatpush2.bf16.msra.mxu0 %v638
  %685 = vmatprep.subr.bf16.mxu0 0
  %686 = vmatpush2.bf16.msra.mxu0 %v637
  %687 = vmatprep.subr.bf16.mxu0 0
  %688 = vmatpush2.bf16.msra.mxu0 %v636
  %689 = vmatprep.subr.bf16.mxu0 0
  %690 = vmatpush2.bf16.msra.mxu0 %v635
  %691 = vmatprep.mubr.bf16.mxu0 %v436
  %692 = vmatmul.mubr.bf16.gmra.mxu0 %v435
  %v693 = vpop.f32.mrf.mxu0
  %v694 = vadd.f32 0.0, %v693
  %v695 = vpop.f32.mrf.mxu0
  %v696 = vpop.f32.mrf.mxu0
  %v697 = vadd.f32 0.0, %v696
  %v698 = vpop.f32.mrf.mxu0
  %699 = vmatprep.mubr.bf16.mxu0 %v438
  %700 = vmatmul.mubr.bf16.gmra.mxu0 %v437
  %v701 = vpop.f32.mrf.mxu0
  %v702 = vadd.f32 0.0, %v701
  %v703 = vpop.f32.mrf.mxu0
  %v704 = vpop.f32.mrf.mxu0
  %v705 = vadd.f32 0.0, %v704
  %v706 = vpop.f32.mrf.mxu0
  %707 = vmatprep.mubr.bf16.mxu0 %v440
  %708 = vmatmul.mubr.bf16.gmra.mxu0 %v439
  %v709 = vpop.f32.mrf.mxu0
  %v710 = vadd.f32 0.0, %v709
  %v711 = vpop.f32.mrf.mxu0
  %v712 = vpop.f32.mrf.mxu0
  %v713 = vadd.f32 0.0, %v712
  %v714 = vpop.f32.mrf.mxu0
  %715 = vmatprep.mubr.bf16.mxu0 %v442
  %716 = vmatmul.mubr.bf16.gmra.mxu0 %v441
  %v717 = vpop.f32.mrf.mxu0
  %v718 = vadd.f32 0.0, %v717
  %v719 = vpop.f32.mrf.mxu0
  %v720 = vpop.f32.mrf.mxu0
  %v721 = vadd.f32 0.0, %v720
  %v722 = vpop.f32.mrf.mxu0
  %723 = vmatprep.mubr.bf16.mxu0 %v444
  %724 = vmatmul.mubr.bf16.gmra.mxu0 %v443
  %v725 = vpop.f32.mrf.mxu0
  %v726 = vadd.f32 0.0, %v725
  %v727 = vpop.f32.mrf.mxu0
  %v728 = vpop.f32.mrf.mxu0
  %v729 = vadd.f32 0.0, %v728
  %v730 = vpop.f32.mrf.mxu0
  %731 = vmatprep.mubr.bf16.mxu0 %v446
  %732 = vmatmul.mubr.bf16.gmra.mxu0 %v445
  %v733 = vpop.f32.mrf.mxu0
  %v734 = vadd.f32 0.0, %v733
  %v735 = vpop.f32.mrf.mxu0
  %v736 = vpop.f32.mrf.mxu0
  %v737 = vadd.f32 0.0, %v736
  %v738 = vpop.f32.mrf.mxu0
  %739 = vmatprep.mubr.bf16.mxu0 %v448
  %740 = vmatmul.mubr.bf16.gmra.mxu0 %v447
  %v741 = vpop.f32.mrf.mxu0
  %v742 = vadd.f32 0.0, %v741
  %v743 = vpop.f32.mrf.mxu0
  %v744 = vpop.f32.mrf.mxu0
  %v745 = vadd.f32 0.0, %v744
  %v746 = vpop.f32.mrf.mxu0
  %747 = vmatprep.mubr.bf16.mxu0 %v450
  %748 = vmatmul.mubr.bf16.gmra.mxu0 %v449
  %v749 = vpop.f32.mrf.mxu0
  %v750 = vadd.f32 0.0, %v749
  %v751 = vpop.f32.mrf.mxu0
  %v752 = vpop.f32.mrf.mxu0
  %v753 = vadd.f32 0.0, %v752
  %v754 = vpop.f32.mrf.mxu0
  %755 = vmatprep.mubr.bf16.mxu0 %v452
  %756 = vmatmul.mubr.bf16.gmra.mxu0 %v451
  %v757 = vpop.f32.mrf.mxu0
  %v758 = vadd.f32 0.0, %v757
  %v759 = vpop.f32.mrf.mxu0
  %v760 = vpop.f32.mrf.mxu0
  %v761 = vadd.f32 0.0, %v760
  %v762 = vpop.f32.mrf.mxu0
  %763 = vmatprep.mubr.bf16.mxu0 %v454
  %764 = vmatmul.mubr.bf16.gmra.mxu0 %v453
  %v765 = vpop.f32.mrf.mxu0
  %v766 = vadd.f32 0.0, %v765
  %v767 = vpop.f32.mrf.mxu0
  %v768 = vpop.f32.mrf.mxu0
  %v769 = vadd.f32 0.0, %v768
  %v770 = vpop.f32.mrf.mxu0
  %771 = vmatprep.mubr.bf16.mxu0 %v456
  %772 = vmatmul.mubr.bf16.gmra.mxu0 %v455
  %v773 = vpop.f32.mrf.mxu0
  %v774 = vadd.f32 0.0, %v773
  %v775 = vpop.f32.mrf.mxu0
  %v776 = vpop.f32.mrf.mxu0
  %v777 = vadd.f32 0.0, %v776
  %v778 = vpop.f32.mrf.mxu0
  %779 = vmatprep.mubr.bf16.mxu0 %v458
  %780 = vmatmul.mubr.bf16.gmra.mxu0 %v457
  %v781 = vpop.f32.mrf.mxu0
  %v782 = vadd.f32 0.0, %v781
  %v783 = vpop.f32.mrf.mxu0
  %v784 = vpop.f32.mrf.mxu0
  %v785 = vadd.f32 0.0, %v784
  %v786 = vpop.f32.mrf.mxu0
  %787 = vmatprep.mubr.bf16.mxu0 %v460
  %788 = vmatmul.mubr.bf16.gmra.mxu0 %v459
  %v789 = vpop.f32.mrf.mxu0
  %v790 = vadd.f32 0.0, %v789
  %v791 = vpop.f32.mrf.mxu0
  %v792 = vpop.f32.mrf.mxu0
  %v793 = vadd.f32 0.0, %v792
  %v794 = vpop.f32.mrf.mxu0
  %795 = vmatprep.mubr.bf16.mxu0 %v462
  %796 = vmatmul.mubr.bf16.gmra.mxu0 %v461
  %v797 = vpop.f32.mrf.mxu0
  %v798 = vadd.f32 0.0, %v797
  %v799 = vpop.f32.mrf.mxu0
  %v800 = vpop.f32.mrf.mxu0
  %v801 = vadd.f32 0.0, %v800
  %v802 = vpop.f32.mrf.mxu0
  %803 = vmatprep.mubr.bf16.mxu0 %v464
  %804 = vmatmul.mubr.bf16.gmra.mxu0 %v463
  %v805 = vpop.f32.mrf.mxu0
  %v806 = vadd.f32 0.0, %v805
  %v807 = vpop.f32.mrf.mxu0
  %v808 = vpop.f32.mrf.mxu0
  %v809 = vadd.f32 0.0, %v808
  %v810 = vpop.f32.mrf.mxu0
  %811 = vmatprep.mubr.bf16.mxu0 %v466
  %812 = vmatmul.mubr.bf16.gmra.mxu0 %v465
  %v813 = vpop.f32.mrf.mxu0
  %v814 = vadd.f32 0.0, %v813
  %v815 = vpop.f32.mrf.mxu0
  %v816 = vpop.f32.mrf.mxu0
  %v817 = vadd.f32 0.0, %v816
  %v818 = vpop.f32.mrf.mxu0
  %819 = vmatprep.mubr.bf16.mxu0 %v468
  %820 = vmatmul.mubr.bf16.gmra.mxu0 %v467
  %v821 = vpop.f32.mrf.mxu0
  %v822 = vadd.f32 0.0, %v821
  %v823 = vpop.f32.mrf.mxu0
  %v824 = vpop.f32.mrf.mxu0
  %v825 = vadd.f32 0.0, %v824
  %v826 = vpop.f32.mrf.mxu0
  %827 = vmatprep.mubr.bf16.mxu0 %v470
  %828 = vmatmul.mubr.bf16.gmra.mxu0 %v469
  %v829 = vpop.f32.mrf.mxu0
  %v830 = vadd.f32 0.0, %v829
  %v831 = vpop.f32.mrf.mxu0
  %v832 = vpop.f32.mrf.mxu0
  %v833 = vadd.f32 0.0, %v832
  %v834 = vpop.f32.mrf.mxu0
  %835 = vmatprep.mubr.bf16.mxu0 %v472
  %836 = vmatmul.mubr.bf16.gmra.mxu0 %v471
  %v837 = vpop.f32.mrf.mxu0
  %v838 = vadd.f32 0.0, %v837
  %v839 = vpop.f32.mrf.mxu0
  %v840 = vpop.f32.mrf.mxu0
  %v841 = vadd.f32 0.0, %v840
  %v842 = vpop.f32.mrf.mxu0
  %843 = vmatprep.mubr.bf16.mxu0 %v474
  %844 = vmatmul.mubr.bf16.gmra.mxu0 %v473
  %v845 = vpop.f32.mrf.mxu0
  %v846 = vadd.f32 0.0, %v845
  %v847 = vpop.f32.mrf.mxu0
  %v848 = vpop.f32.mrf.mxu0
  %v849 = vadd.f32 0.0, %v848
  %v850 = vpop.f32.mrf.mxu0
  %851 = vmatprep.mubr.bf16.mxu0 %v476
  %852 = vmatmul.mubr.bf16.gmra.mxu0 %v475
  %v853 = vpop.f32.mrf.mxu0
  %v854 = vadd.f32 0.0, %v853
  %v855 = vpop.f32.mrf.mxu0
  %v856 = vpop.f32.mrf.mxu0
  %v857 = vadd.f32 0.0, %v856
  %v858 = vpop.f32.mrf.mxu0
  %859 = vmatprep.mubr.bf16.mxu0 %v478
  %860 = vmatmul.mubr.bf16.gmra.mxu0 %v477
  %v861 = vpop.f32.mrf.mxu0
  %v862 = vadd.f32 0.0, %v861
  %v863 = vpop.f32.mrf.mxu0
  %v864 = vpop.f32.mrf.mxu0
  %v865 = vadd.f32 0.0, %v864
  %v866 = vpop.f32.mrf.mxu0
  %867 = vmatprep.mubr.bf16.mxu0 %v480
  %868 = vmatmul.mubr.bf16.gmra.mxu0 %v479
  %v869 = vpop.f32.mrf.mxu0
  %v870 = vadd.f32 0.0, %v869
  %v871 = vpop.f32.mrf.mxu0
  %v872 = vpop.f32.mrf.mxu0
  %v873 = vadd.f32 0.0, %v872
  %v874 = vpop.f32.mrf.mxu0
  %875 = vmatprep.mubr.bf16.mxu0 %v482
  %876 = vmatmul.mubr.bf16.gmra.mxu0 %v481
  %v877 = vpop.f32.mrf.mxu0
  %v878 = vadd.f32 0.0, %v877
  %v879 = vpop.f32.mrf.mxu0
  %v880 = vpop.f32.mrf.mxu0
  %v881 = vadd.f32 0.0, %v880
  %v882 = vpop.f32.mrf.mxu0
  %883 = vmatprep.mubr.bf16.mxu0 %v484
  %884 = vmatmul.mubr.bf16.gmra.mxu0 %v483
  %v885 = vpop.f32.mrf.mxu0
  %v886 = vadd.f32 0.0, %v885
  %v887 = vpop.f32.mrf.mxu0
  %v888 = vpop.f32.mrf.mxu0
  %v889 = vadd.f32 0.0, %v888
  %v890 = vpop.f32.mrf.mxu0
  %891 = vmatprep.mubr.bf16.mxu0 %v486
  %892 = vmatmul.mubr.bf16.gmra.mxu0 %v485
  %v893 = vpop.f32.mrf.mxu0
  %v894 = vadd.f32 0.0, %v893
  %v895 = vpop.f32.mrf.mxu0
  %v896 = vpop.f32.mrf.mxu0
  %v897 = vadd.f32 0.0, %v896
  %v898 = vpop.f32.mrf.mxu0
  %899 = vmatprep.mubr.bf16.mxu0 %v488
  %900 = vmatmul.mubr.bf16.gmra.mxu0 %v487
  %v901 = vpop.f32.mrf.mxu0
  %v902 = vadd.f32 0.0, %v901
  %v903 = vpop.f32.mrf.mxu0
  %v904 = vpop.f32.mrf.mxu0
  %v905 = vadd.f32 0.0, %v904
  %v906 = vpop.f32.mrf.mxu0
  %907 = vmatprep.mubr.bf16.mxu0 %v490
  %908 = vmatmul.mubr.bf16.gmra.mxu0 %v489
  %v909 = vpop.f32.mrf.mxu0
  %v910 = vadd.f32 0.0, %v909
  %v911 = vpop.f32.mrf.mxu0
  %v912 = vpop.f32.mrf.mxu0
  %v913 = vadd.f32 0.0, %v912
  %v914 = vpop.f32.mrf.mxu0
  %915 = vmatprep.mubr.bf16.mxu0 %v492
  %916 = vmatmul.mubr.bf16.gmra.mxu0 %v491
  %v917 = vpop.f32.mrf.mxu0
  %v918 = vadd.f32 0.0, %v917
  %v919 = vpop.f32.mrf.mxu0
  %v920 = vpop.f32.mrf.mxu0
  %v921 = vadd.f32 0.0, %v920
  %v922 = vpop.f32.mrf.mxu0
  %923 = vmatprep.mubr.bf16.mxu0 %v494
  %924 = vmatmul.mubr.bf16.gmra.mxu0 %v493
  %v925 = vpop.f32.mrf.mxu0
  %v926 = vadd.f32 0.0, %v925
  %v927 = vpop.f32.mrf.mxu0
  %v928 = vpop.f32.mrf.mxu0
  %v929 = vadd.f32 0.0, %v928
  %v930 = vpop.f32.mrf.mxu0
  %931 = vmatprep.mubr.bf16.mxu0 %v496
  %932 = vmatmul.mubr.bf16.gmra.mxu0 %v495
  %v933 = vpop.f32.mrf.mxu0
  %v934 = vadd.f32 0.0, %v933
  %v935 = vpop.f32.mrf.mxu0
  %v936 = vpop.f32.mrf.mxu0
  %v937 = vadd.f32 0.0, %v936
  %v938 = vpop.f32.mrf.mxu0
  %939 = vmatprep.mubr.bf16.mxu0 %v498
  %940 = vmatmul.mubr.bf16.gmra.mxu0 %v497
  %v941 = vpop.f32.mrf.mxu0
  %v942 = vadd.f32 0.0, %v941
  %v943 = vpop.f32.mrf.mxu0
  %v944 = vpop.f32.mrf.mxu0
  %v945 = vadd.f32 0.0, %v944
  %v946 = vpop.f32.mrf.mxu0
  %947 = vdwg.mxu0
  %v948 = vadd.f32 %v83, %v694
  %v949 = vadd.f32 %v84, %v697
  %v950 = vadd.f32 %v85, %v702
  %v951 = vadd.f32 %v86, %v705
  %v952 = vadd.f32 %v87, %v710
  %v953 = vadd.f32 %v88, %v713
  %v954 = vadd.f32 %v89, %v718
  %v955 = vadd.f32 %v90, %v721
  %v956 = vadd.f32 %v91, %v726
  %v957 = vadd.f32 %v92, %v729
  %v958 = vadd.f32 %v93, %v734
  %v959 = vadd.f32 %v94, %v737
  %v960 = vadd.f32 %v95, %v742
  %v961 = vadd.f32 %v96, %v745
  %v962 = vadd.f32 %v97, %v750
  %v963 = vadd.f32 %v98, %v753
  %v964 = vadd.f32 %v99, %v758
  %v965 = vadd.f32 %v100, %v761
  %v966 = vadd.f32 %v101, %v766
  %v967 = vadd.f32 %v102, %v769
  %v968 = vadd.f32 %v103, %v774
  %v969 = vadd.f32 %v104, %v777
  %v970 = vadd.f32 %v105, %v782
  %v971 = vadd.f32 %v106, %v785
  %v972 = vadd.f32 %v107, %v790
  %v973 = vadd.f32 %v108, %v793
  %v974 = vadd.f32 %v109, %v798
  %v975 = vadd.f32 %v110, %v801
  %v976 = vadd.f32 %v111, %v806
  %v977 = vadd.f32 %v112, %v809
  %v978 = vadd.f32 %v113, %v814
  %v979 = vadd.f32 %v114, %v817
  %v980 = vadd.f32 %v115, %v822
  %v981 = vadd.f32 %v116, %v825
  %v982 = vadd.f32 %v117, %v830
  %v983 = vadd.f32 %v118, %v833
  %v984 = vadd.f32 %v119, %v838
  %v985 = vadd.f32 %v120, %v841
  %v986 = vadd.f32 %v121, %v846
  %v987 = vadd.f32 %v122, %v849
  %v988 = vadd.f32 %v123, %v854
  %v989 = vadd.f32 %v124, %v857
  %v990 = vadd.f32 %v125, %v862
  %v991 = vadd.f32 %v126, %v865
  %v992 = vadd.f32 %v127, %v870
  %v993 = vadd.f32 %v128, %v873
  %v994 = vadd.f32 %v129, %v878
  %v995 = vadd.f32 %v130, %v881
  %v996 = vadd.f32 %v131, %v886
  %v997 = vadd.f32 %v132, %v889
  %v998 = vadd.f32 %v133, %v894
  %v999 = vadd.f32 %v134, %v897
  %v1000 = vadd.f32 %v135, %v902
  %v1001 = vadd.f32 %v136, %v905
  %v1002 = vadd.f32 %v137, %v910
  %v1003 = vadd.f32 %v138, %v913
  %v1004 = vadd.f32 %v139, %v918
  %v1005 = vadd.f32 %v140, %v921
  %v1006 = vadd.f32 %v141, %v926
  %v1007 = vadd.f32 %v142, %v929
  %v1008 = vadd.f32 %v143, %v934
  %v1009 = vadd.f32 %v144, %v937
  %v1010 = vadd.f32 %v145, %v942
  %v1011 = vadd.f32 %v146, %v945
  %1012 = vst [vmem:[#allocation2] sm:$0xff] %v948
  %1013 = vst [vmem:[#allocation2 + $0x8] sm:$0xff] %v949
  %1014 = vst [vmem:[#allocation2 + $0x10] sm:$0xff] %v950
  %1015 = vst [vmem:[#allocation2 + $0x18] sm:$0xff] %v951
  %1016 = vst [vmem:[#allocation2 + $0x20] sm:$0xff] %v952
  %1017 = vst [vmem:[#allocation2 + $0x28] sm:$0xff] %v953
  %1018 = vst [vmem:[#allocation2 + $0x30] sm:$0xff] %v954
  %1019 = vst [vmem:[#allocation2 + $0x38] sm:$0xff] %v955
  %1020 = vst [vmem:[#allocation2 + $0x40] sm:$0xff] %v956
  %1021 = vst [vmem:[#allocation2 + $0x48] sm:$0xff] %v957
  %1022 = vst [vmem:[#allocation2 + $0x50] sm:$0xff] %v958
  %1023 = vst [vmem:[#allocation2 + $0x58] sm:$0xff] %v959
  %1024 = vst [vmem:[#allocation2 + $0x60] sm:$0xff] %v960
  %1025 = vst [vmem:[#allocation2 + $0x68] sm:$0xff] %v961
  %1026 = vst [vmem:[#allocation2 + $0x70] sm:$0xff] %v962
  %1027 = vst [vmem:[#allocation2 + $0x78] sm:$0xff] %v963
  %1028 = vst [vmem:[#allocation2 + $0x80] sm:$0xff] %v964
  %1029 = vst [vmem:[#allocation2 + $0x88] sm:$0xff] %v965
  %1030 = vst [vmem:[#allocation2 + $0x90] sm:$0xff] %v966
  %1031 = vst [vmem:[#allocation2 + $0x98] sm:$0xff] %v967
  %1032 = vst [vmem:[#allocation2 + $0xa0] sm:$0xff] %v968
  %1033 = vst [vmem:[#allocation2 + $0xa8] sm:$0xff] %v969
  %1034 = vst [vmem:[#allocation2 + $0xb0] sm:$0xff] %v970
  %1035 = vst [vmem:[#allocation2 + $0xb8] sm:$0xff] %v971
  %1036 = vst [vmem:[#allocation2 + $0xc0] sm:$0xff] %v972
  %1037 = vst [vmem:[#allocation2 + $0xc8] sm:$0xff] %v973
  %1038 = vst [vmem:[#allocation2 + $0xd0] sm:$0xff] %v974
  %1039 = vst [vmem:[#allocation2 + $0xd8] sm:$0xff] %v975
  %1040 = vst [vmem:[#allocation2 + $0xe0] sm:$0xff] %v976
  %1041 = vst [vmem:[#allocation2 + $0xe8] sm:$0xff] %v977
  %1042 = vst [vmem:[#allocation2 + $0xf0] sm:$0xff] %v978
  %1043 = vst [vmem:[#allocation2 + $0xf8] sm:$0xff] %v979
  %1044 = vst [vmem:[#allocation2 + $0x100] sm:$0xff] %v980
  %1045 = vst [vmem:[#allocation2 + $0x108] sm:$0xff] %v981
  %1046 = vst [vmem:[#allocation2 + $0x110] sm:$0xff] %v982
  %1047 = vst [vmem:[#allocation2 + $0x118] sm:$0xff] %v983
  %1048 = vst [vmem:[#allocation2 + $0x120] sm:$0xff] %v984
  %1049 = vst [vmem:[#allocation2 + $0x128] sm:$0xff] %v985
  %1050 = vst [vmem:[#allocation2 + $0x130] sm:$0xff] %v986
  %1051 = vst [vmem:[#allocation2 + $0x138] sm:$0xff] %v987
  %1052 = vst [vmem:[#allocation2 + $0x140] sm:$0xff] %v988
  %1053 = vst [vmem:[#allocation2 + $0x148] sm:$0xff] %v989
  %1054 = vst [vmem:[#allocation2 + $0x150] sm:$0xff] %v990
  %1055 = vst [vmem:[#allocation2 + $0x158] sm:$0xff] %v991
  %1056 = vst [vmem:[#allocation2 + $0x160] sm:$0xff] %v992
  %1057 = vst [vmem:[#allocation2 + $0x168] sm:$0xff] %v993
  %1058 = vst [vmem:[#allocation2 + $0x170] sm:$0xff] %v994
  %1059 = vst [vmem:[#allocation2 + $0x178] sm:$0xff] %v995
  %1060 = vst [vmem:[#allocation2 + $0x180] sm:$0xff] %v996
  %1061 = vst [vmem:[#allocation2 + $0x188] sm:$0xff] %v997
  %1062 = vst [vmem:[#allocation2 + $0x190] sm:$0xff] %v998
  %1063 = vst [vmem:[#allocation2 + $0x198] sm:$0xff] %v999
  %1064 = vst [vmem:[#allocation2 + $0x1a0] sm:$0xff] %v1000
  %1065 = vst [vmem:[#allocation2 + $0x1a8] sm:$0xff] %v1001
  %1066 = vst [vmem:[#allocation2 + $0x1b0] sm:$0xff] %v1002
  %1067 = vst [vmem:[#allocation2 + $0x1b8] sm:$0xff] %v1003
  %1068 = vst [vmem:[#allocation2 + $0x1c0] sm:$0xff] %v1004
  %1069 = vst [vmem:[#allocation2 + $0x1c8] sm:$0xff] %v1005
  %1070 = vst [vmem:[#allocation2 + $0x1d0] sm:$0xff] %v1006
  %1071 = vst [vmem:[#allocation2 + $0x1d8] sm:$0xff] %v1007
  %1072 = vst [vmem:[#allocation2 + $0x1e0] sm:$0xff] %v1008
  %1073 = vst [vmem:[#allocation2 + $0x1e8] sm:$0xff] %v1009
  %1074 = vst [vmem:[#allocation2 + $0x1f0] sm:$0xff] %v1010
  %1075 = vst [vmem:[#allocation2 + $0x1f8] sm:$0xff] %v1011
  // Predicated region
  $region18: #{_lambda_.23} parent=0 // pred_check
    %p1076 = pneg %p15
  $region19: #{_lambda_.23} parent=0 // pred_check_branch
    %1078 = sbr.rel (%p1076) target = $region21
  $region20: #{_lambda_.23} parent=0 // pred_region
    %v1079 = vld [vmem:[#allocation2] sm:$0xff]
    %v1080 = vld [vmem:[#allocation2 + $0x8] sm:$0xff]
    %v1081 = vld [vmem:[#allocation2 + $0x10] sm:$0xff]
    %v1082 = vld [vmem:[#allocation2 + $0x18] sm:$0xff]
    %v1083 = vld [vmem:[#allocation2 + $0x20] sm:$0xff]
    %v1084 = vld [vmem:[#allocation2 + $0x28] sm:$0xff]
    %v1085 = vld [vmem:[#allocation2 + $0x30] sm:$0xff]
    %v1086 = vld [vmem:[#allocation2 + $0x38] sm:$0xff]
    %v1087 = vld [vmem:[#allocation2 + $0x40] sm:$0xff]
    %v1088 = vld [vmem:[#allocation2 + $0x48] sm:$0xff]
    %v1089 = vld [vmem:[#allocation2 + $0x50] sm:$0xff]
    %v1090 = vld [vmem:[#allocation2 + $0x58] sm:$0xff]
    %v1091 = vld [vmem:[#allocation2 + $0x60] sm:$0xff]
    %v1092 = vld [vmem:[#allocation2 + $0x68] sm:$0xff]
    %v1093 = vld [vmem:[#allocation2 + $0x70] sm:$0xff]
    %v1094 = vld [vmem:[#allocation2 + $0x78] sm:$0xff]
    %v1095 = vld [vmem:[#allocation2 + $0x80] sm:$0xff]
    %v1096 = vld [vmem:[#allocation2 + $0x88] sm:$0xff]
    %v1097 = vld [vmem:[#allocation2 + $0x90] sm:$0xff]
    %v1098 = vld [vmem:[#allocation2 + $0x98] sm:$0xff]
    %v1099 = vld [vmem:[#allocation2 + $0xa0] sm:$0xff]
    %v1100 = vld [vmem:[#allocation2 + $0xa8] sm:$0xff]
    %v1101 = vld [vmem:[#allocation2 + $0xb0] sm:$0xff]
    %v1102 = vld [vmem:[#allocation2 + $0xb8] sm:$0xff]
    %v1103 = vld [vmem:[#allocation2 + $0xc0] sm:$0xff]
    %v1104 = vld [vmem:[#allocation2 + $0xc8] sm:$0xff]
    %v1105 = vld [vmem:[#allocation2 + $0xd0] sm:$0xff]
    %v1106 = vld [vmem:[#allocation2 + $0xd8] sm:$0xff]
    %v1107 = vld [vmem:[#allocation2 + $0xe0] sm:$0xff]
    %v1108 = vld [vmem:[#allocation2 + $0xe8] sm:$0xff]
    %v1109 = vld [vmem:[#allocation2 + $0xf0] sm:$0xff]
    %v1110 = vld [vmem:[#allocation2 + $0xf8] sm:$0xff]
    %v1111 = vld [vmem:[#allocation2 + $0x100] sm:$0xff]
    %v1112 = vld [vmem:[#allocation2 + $0x108] sm:$0xff]
    %v1113 = vld [vmem:[#allocation2 + $0x110] sm:$0xff]
    %v1114 = vld [vmem:[#allocation2 + $0x118] sm:$0xff]
    %v1115 = vld [vmem:[#allocation2 + $0x120] sm:$0xff]
    %v1116 = vld [vmem:[#allocation2 + $0x128] sm:$0xff]
    %v1117 = vld [vmem:[#allocation2 + $0x130] sm:$0xff]
    %v1118 = vld [vmem:[#allocation2 + $0x138] sm:$0xff]
    %v1119 = vld [vmem:[#allocation2 + $0x140] sm:$0xff]
    %v1120 = vld [vmem:[#allocation2 + $0x148] sm:$0xff]
    %v1121 = vld [vmem:[#allocation2 + $0x150] sm:$0xff]
    %v1122 = vld [vmem:[#allocation2 + $0x158] sm:$0xff]
    %v1123 = vld [vmem:[#allocation2 + $0x160] sm:$0xff]
    %v1124 = vld [vmem:[#allocation2 + $0x168] sm:$0xff]
    %v1125 = vld [vmem:[#allocation2 + $0x170] sm:$0xff]
    %v1126 = vld [vmem:[#allocation2 + $0x178] sm:$0xff]
    %v1127 = vld [vmem:[#allocation2 + $0x180] sm:$0xff]
    %v1128 = vld [vmem:[#allocation2 + $0x188] sm:$0xff]
    %v1129 = vld [vmem:[#allocation2 + $0x190] sm:$0xff]
    %v1130 = vld [vmem:[#allocation2 + $0x198] sm:$0xff]
    %v1131 = vld [vmem:[#allocation2 + $0x1a0] sm:$0xff]
    %v1132 = vld [vmem:[#allocation2 + $0x1a8] sm:$0xff]
    %v1133 = vld [vmem:[#allocation2 + $0x1b0] sm:$0xff]
    %v1134 = vld [vmem:[#allocation2 + $0x1b8] sm:$0xff]
    %v1135 = vld [vmem:[#allocation2 + $0x1c0] sm:$0xff]
    %v1136 = vld [vmem:[#allocation2 + $0x1c8] sm:$0xff]
    %v1137 = vld [vmem:[#allocation2 + $0x1d0] sm:$0xff]
    %v1138 = vld [vmem:[#allocation2 + $0x1d8] sm:$0xff]
    %v1139 = vld [vmem:[#allocation2 + $0x1e0] sm:$0xff]
    %v1140 = vld [vmem:[#allocation2 + $0x1e8] sm:$0xff]
    %v1141 = vld [vmem:[#allocation2 + $0x1f0] sm:$0xff]
    %v1142 = vld [vmem:[#allocation2 + $0x1f8] sm:$0xff]
    %v1143 = vld [vmem:[%s2] sm:$0x1]
    %v1145 = vlaneseq
    %v1146 = vshrl.u32 %v1145, 7
    %v1147 = vsub.s32 0, %v1146
    %v1148 = vrot.slane %v1143, %v1147
    %v1150 = vadd.f32 %v1079, %v1148
    %v1151 = vadd.f32 %v1080, %v1148
    %v1152 = vadd.f32 %v1081, %v1148
    %v1153 = vadd.f32 %v1082, %v1148
    %v1154 = vadd.f32 %v1083, %v1148
    %v1155 = vadd.f32 %v1084, %v1148
    %v1156 = vadd.f32 %v1085, %v1148
    %v1157 = vadd.f32 %v1086, %v1148
    %v1158 = vadd.f32 %v1087, %v1148
    %v1159 = vadd.f32 %v1088, %v1148
    %v1160 = vadd.f32 %v1089, %v1148
    %v1161 = vadd.f32 %v1090, %v1148
    %v1162 = vadd.f32 %v1091, %v1148
    %v1163 = vadd.f32 %v1092, %v1148
    %v1164 = vadd.f32 %v1093, %v1148
    %v1165 = vadd.f32 %v1094, %v1148
    %v1166 = vadd.f32 %v1095, %v1148
    %v1167 = vadd.f32 %v1096, %v1148
    %v1168 = vadd.f32 %v1097, %v1148
    %v1169 = vadd.f32 %v1098, %v1148
    %v1170 = vadd.f32 %v1099, %v1148
    %v1171 = vadd.f32 %v1100, %v1148
    %v1172 = vadd.f32 %v1101, %v1148
    %v1173 = vadd.f32 %v1102, %v1148
    %v1174 = vadd.f32 %v1103, %v1148
    %v1175 = vadd.f32 %v1104, %v1148
    %v1176 = vadd.f32 %v1105, %v1148
    %v1177 = vadd.f32 %v1106, %v1148
    %v1178 = vadd.f32 %v1107, %v1148
    %v1179 = vadd.f32 %v1108, %v1148
    %v1180 = vadd.f32 %v1109, %v1148
    %v1181 = vadd.f32 %v1110, %v1148
    %v1182 = vadd.f32 %v1111, %v1148
    %v1183 = vadd.f32 %v1112, %v1148
    %v1184 = vadd.f32 %v1113, %v1148
    %v1185 = vadd.f32 %v1114, %v1148
    %v1186 = vadd.f32 %v1115, %v1148
    %v1187 = vadd.f32 %v1116, %v1148
    %v1188 = vadd.f32 %v1117, %v1148
    %v1189 = vadd.f32 %v1118, %v1148
    %v1190 = vadd.f32 %v1119, %v1148
    %v1191 = vadd.f32 %v1120, %v1148
    %v1192 = vadd.f32 %v1121, %v1148
    %v1193 = vadd.f32 %v1122, %v1148
    %v1194 = vadd.f32 %v1123, %v1148
    %v1195 = vadd.f32 %v1124, %v1148
    %v1196 = vadd.f32 %v1125, %v1148
    %v1197 = vadd.f32 %v1126, %v1148
    %v1198 = vadd.f32 %v1127, %v1148
    %v1199 = vadd.f32 %v1128, %v1148
    %v1200 = vadd.f32 %v1129, %v1148
    %v1201 = vadd.f32 %v1130, %v1148
    %v1202 = vadd.f32 %v1131, %v1148
    %v1203 = vadd.f32 %v1132, %v1148
    %v1204 = vadd.f32 %v1133, %v1148
    %v1205 = vadd.f32 %v1134, %v1148
    %v1206 = vadd.f32 %v1135, %v1148
    %v1207 = vadd.f32 %v1136, %v1148
    %v1208 = vadd.f32 %v1137, %v1148
    %v1209 = vadd.f32 %v1138, %v1148
    %v1210 = vadd.f32 %v1139, %v1148
    %v1211 = vadd.f32 %v1140, %v1148
    %v1212 = vadd.f32 %v1141, %v1148
    %v1213 = vadd.f32 %v1142, %v1148
    %v1214 = vmax.f32 %v1150, 0.0
    %v1215 = vmax.f32 %v1151, 0.0
    %v1216 = vmax.f32 %v1152, 0.0
    %v1217 = vmax.f32 %v1153, 0.0
    %v1218 = vmax.f32 %v1154, 0.0
    %v1219 = vmax.f32 %v1155, 0.0
    %v1220 = vmax.f32 %v1156, 0.0
    %v1221 = vmax.f32 %v1157, 0.0
    %v1222 = vmax.f32 %v1158, 0.0
    %v1223 = vmax.f32 %v1159, 0.0
    %v1224 = vmax.f32 %v1160, 0.0
    %v1225 = vmax.f32 %v1161, 0.0
    %v1226 = vmax.f32 %v1162, 0.0
    %v1227 = vmax.f32 %v1163, 0.0
    %v1228 = vmax.f32 %v1164, 0.0
    %v1229 = vmax.f32 %v1165, 0.0
    %v1230 = vmax.f32 %v1166, 0.0
    %v1231 = vmax.f32 %v1167, 0.0
    %v1232 = vmax.f32 %v1168, 0.0
    %v1233 = vmax.f32 %v1169, 0.0
    %v1234 = vmax.f32 %v1170, 0.0
    %v1235 = vmax.f32 %v1171, 0.0
    %v1236 = vmax.f32 %v1172, 0.0
    %v1237 = vmax.f32 %v1173, 0.0
    %v1238 = vmax.f32 %v1174, 0.0
    %v1239 = vmax.f32 %v1175, 0.0
    %v1240 = vmax.f32 %v1176, 0.0
    %v1241 = vmax.f32 %v1177, 0.0
    %v1242 = vmax.f32 %v1178, 0.0
    %v1243 = vmax.f32 %v1179, 0.0
    %v1244 = vmax.f32 %v1180, 0.0
    %v1245 = vmax.f32 %v1181, 0.0
    %v1246 = vmax.f32 %v1182, 0.0
    %v1247 = vmax.f32 %v1183, 0.0
    %v1248 = vmax.f32 %v1184, 0.0
    %v1249 = vmax.f32 %v1185, 0.0
    %v1250 = vmax.f32 %v1186, 0.0
    %v1251 = vmax.f32 %v1187, 0.0
    %v1252 = vmax.f32 %v1188, 0.0
    %v1253 = vmax.f32 %v1189, 0.0
    %v1254 = vmax.f32 %v1190, 0.0
    %v1255 = vmax.f32 %v1191, 0.0
    %v1256 = vmax.f32 %v1192, 0.0
    %v1257 = vmax.f32 %v1193, 0.0
    %v1258 = vmax.f32 %v1194, 0.0
    %v1259 = vmax.f32 %v1195, 0.0
    %v1260 = vmax.f32 %v1196, 0.0
    %v1261 = vmax.f32 %v1197, 0.0
    %v1262 = vmax.f32 %v1198, 0.0
    %v1263 = vmax.f32 %v1199, 0.0
    %v1264 = vmax.f32 %v1200, 0.0
    %v1265 = vmax.f32 %v1201, 0.0
    %v1266 = vmax.f32 %v1202, 0.0
    %v1267 = vmax.f32 %v1203, 0.0
    %v1268 = vmax.f32 %v1204, 0.0
    %v1269 = vmax.f32 %v1205, 0.0
    %v1270 = vmax.f32 %v1206, 0.0
    %v1271 = vmax.f32 %v1207, 0.0
    %v1272 = vmax.f32 %v1208, 0.0
    %v1273 = vmax.f32 %v1209, 0.0
    %v1274 = vmax.f32 %v1210, 0.0
    %v1275 = vmax.f32 %v1211, 0.0
    %v1276 = vmax.f32 %v1212, 0.0
    %v1277 = vmax.f32 %v1213, 0.0
    %v1278 = vpack.c.bf16 %v1215, %v1214
    %v1279 = vpack.c.bf16 %v1217, %v1216
    %v1280 = vpack.c.bf16 %v1219, %v1218
    %v1281 = vpack.c.bf16 %v1221, %v1220
    %v1282 = vpack.c.bf16 %v1223, %v1222
    %v1283 = vpack.c.bf16 %v1225, %v1224
    %v1284 = vpack.c.bf16 %v1227, %v1226
    %v1285 = vpack.c.bf16 %v1229, %v1228
    %v1286 = vpack.c.bf16 %v1231, %v1230
    %v1287 = vpack.c.bf16 %v1233, %v1232
    %v1288 = vpack.c.bf16 %v1235, %v1234
    %v1289 = vpack.c.bf16 %v1237, %v1236
    %v1290 = vpack.c.bf16 %v1239, %v1238
    %v1291 = vpack.c.bf16 %v1241, %v1240
    %v1292 = vpack.c.bf16 %v1243, %v1242
    %v1293 = vpack.c.bf16 %v1245, %v1244
    %v1294 = vpack.c.bf16 %v1247, %v1246
    %v1295 = vpack.c.bf16 %v1249, %v1248
    %v1296 = vpack.c.bf16 %v1251, %v1250
    %v1297 = vpack.c.bf16 %v1253, %v1252
    %v1298 = vpack.c.bf16 %v1255, %v1254
    %v1299 = vpack.c.bf16 %v1257, %v1256
    %v1300 = vpack.c.bf16 %v1259, %v1258
    %v1301 = vpack.c.bf16 %v1261, %v1260
    %v1302 = vpack.c.bf16 %v1263, %v1262
    %v1303 = vpack.c.bf16 %v1265, %v1264
    %v1304 = vpack.c.bf16 %v1267, %v1266
    %v1305 = vpack.c.bf16 %v1269, %v1268
    %v1306 = vpack.c.bf16 %v1271, %v1270
    %v1307 = vpack.c.bf16 %v1273, %v1272
    %v1308 = vpack.c.bf16 %v1275, %v1274
    %v1309 = vpack.c.bf16 %v1277, %v1276
    %v1342 = vunpack.c.l.b16 %v1278
    %v1343 = vunpack.c.h.b16 %v1278
    %v1344 = vunpack.c.l.b16 %v1279
    %v1345 = vunpack.c.h.b16 %v1279
    %v1346 = vunpack.c.l.b16 %v1280
    %v1347 = vunpack.c.h.b16 %v1280
    %v1348 = vunpack.c.l.b16 %v1281
    %v1349 = vunpack.c.h.b16 %v1281
    %v1350 = vunpack.c.l.b16 %v1282
    %v1351 = vunpack.c.h.b16 %v1282
    %v1352 = vunpack.c.l.b16 %v1283
    %v1353 = vunpack.c.h.b16 %v1283
    %v1354 = vunpack.c.l.b16 %v1284
    %v1355 = vunpack.c.h.b16 %v1284
    %v1356 = vunpack.c.l.b16 %v1285
    %v1357 = vunpack.c.h.b16 %v1285
    %v1358 = vunpack.c.l.b16 %v1286
    %v1359 = vunpack.c.h.b16 %v1286
    %v1360 = vunpack.c.l.b16 %v1287
    %v1361 = vunpack.c.h.b16 %v1287
    %v1362 = vunpack.c.l.b16 %v1288
    %v1363 = vunpack.c.h.b16 %v1288
    %v1364 = vunpack.c.l.b16 %v1289
    %v1365 = vunpack.c.h.b16 %v1289
    %v1366 = vunpack.c.l.b16 %v1290
    %v1367 = vunpack.c.h.b16 %v1290
    %v1368 = vunpack.c.l.b16 %v1291
    %v1369 = vunpack.c.h.b16 %v1291
    %v1370 = vunpack.c.l.b16 %v1292
    %v1371 = vunpack.c.h.b16 %v1292
    %v1372 = vunpack.c.l.b16 %v1293
    %v1373 = vunpack.c.h.b16 %v1293
    %v1374 = vunpack.c.l.b16 %v1294
    %v1375 = vunpack.c.h.b16 %v1294
    %v1376 = vunpack.c.l.b16 %v1295
    %v1377 = vunpack.c.h.b16 %v1295
    %v1378 = vunpack.c.l.b16 %v1296
    %v1379 = vunpack.c.h.b16 %v1296
    %v1380 = vunpack.c.l.b16 %v1297
    %v1381 = vunpack.c.h.b16 %v1297
    %v1382 = vunpack.c.l.b16 %v1298
    %v1383 = vunpack.c.h.b16 %v1298
    %v1384 = vunpack.c.l.b16 %v1299
    %v1385 = vunpack.c.h.b16 %v1299
    %v1386 = vunpack.c.l.b16 %v1300
    %v1387 = vunpack.c.h.b16 %v1300
    %v1388 = vunpack.c.l.b16 %v1301
    %v1389 = vunpack.c.h.b16 %v1301
    %v1390 = vunpack.c.l.b16 %v1302
    %v1391 = vunpack.c.h.b16 %v1302
    %v1392 = vunpack.c.l.b16 %v1303
    %v1393 = vunpack.c.h.b16 %v1303
    %v1394 = vunpack.c.l.b16 %v1304
    %v1395 = vunpack.c.h.b16 %v1304
    %v1396 = vunpack.c.l.b16 %v1305
    %v1397 = vunpack.c.h.b16 %v1305
    %v1398 = vunpack.c.l.b16 %v1306
    %v1399 = vunpack.c.h.b16 %v1306
    %v1400 = vunpack.c.l.b16 %v1307
    %v1401 = vunpack.c.h.b16 %v1307
    %v1402 = vunpack.c.l.b16 %v1308
    %v1403 = vunpack.c.h.b16 %v1308
    %v1404 = vunpack.c.l.b16 %v1309
    %v1405 = vunpack.c.h.b16 %v1309
    %v1406 = vpack.c.b16 %v1342, %v1342
    %v1407 = vpack.c.b16 %v1343, %v1343
    %v1408 = vpack.c.b16 %v1344, %v1344
    %v1409 = vpack.c.b16 %v1345, %v1345
    %v1410 = vpack.c.b16 %v1346, %v1346
    %v1411 = vpack.c.b16 %v1347, %v1347
    %v1412 = vpack.c.b16 %v1348, %v1348
    %v1413 = vpack.c.b16 %v1349, %v1349
    %v1414 = vpack.c.b16 %v1350, %v1350
    %v1415 = vpack.c.b16 %v1351, %v1351
    %v1416 = vpack.c.b16 %v1352, %v1352
    %v1417 = vpack.c.b16 %v1353, %v1353
    %v1418 = vpack.c.b16 %v1354, %v1354
    %v1419 = vpack.c.b16 %v1355, %v1355
    %v1420 = vpack.c.b16 %v1356, %v1356
    %v1421 = vpack.c.b16 %v1357, %v1357
    %v1422 = vpack.c.b16 %v1358, %v1358
    %v1423 = vpack.c.b16 %v1359, %v1359
    %v1424 = vpack.c.b16 %v1360, %v1360
    %v1425 = vpack.c.b16 %v1361, %v1361
    %v1426 = vpack.c.b16 %v1362, %v1362
    %v1427 = vpack.c.b16 %v1363, %v1363
    %v1428 = vpack.c.b16 %v1364, %v1364
    %v1429 = vpack.c.b16 %v1365, %v1365
    %v1430 = vpack.c.b16 %v1366, %v1366
    %v1431 = vpack.c.b16 %v1367, %v1367
    %v1432 = vpack.c.b16 %v1368, %v1368
    %v1433 = vpack.c.b16 %v1369, %v1369
    %v1434 = vpack.c.b16 %v1370, %v1370
    %v1435 = vpack.c.b16 %v1371, %v1371
    %v1436 = vpack.c.b16 %v1372, %v1372
    %v1437 = vpack.c.b16 %v1373, %v1373
    %v1438 = vpack.c.b16 %v1374, %v1374
    %v1439 = vpack.c.b16 %v1375, %v1375
    %v1440 = vpack.c.b16 %v1376, %v1376
    %v1441 = vpack.c.b16 %v1377, %v1377
    %v1442 = vpack.c.b16 %v1378, %v1378
    %v1443 = vpack.c.b16 %v1379, %v1379
    %v1444 = vpack.c.b16 %v1380, %v1380
    %v1445 = vpack.c.b16 %v1381, %v1381
    %v1446 = vpack.c.b16 %v1382, %v1382
    %v1447 = vpack.c.b16 %v1383, %v1383
    %v1448 = vpack.c.b16 %v1384, %v1384
    %v1449 = vpack.c.b16 %v1385, %v1385
    %v1450 = vpack.c.b16 %v1386, %v1386
    %v1451 = vpack.c.b16 %v1387, %v1387
    %v1452 = vpack.c.b16 %v1388, %v1388
    %v1453 = vpack.c.b16 %v1389, %v1389
    %v1454 = vpack.c.b16 %v1390, %v1390
    %v1455 = vpack.c.b16 %v1391, %v1391
    %v1456 = vpack.c.b16 %v1392, %v1392
    %v1457 = vpack.c.b16 %v1393, %v1393
    %v1458 = vpack.c.b16 %v1394, %v1394
    %v1459 = vpack.c.b16 %v1395, %v1395
    %v1460 = vpack.c.b16 %v1396, %v1396
    %v1461 = vpack.c.b16 %v1397, %v1397
    %v1462 = vpack.c.b16 %v1398, %v1398
    %v1463 = vpack.c.b16 %v1399, %v1399
    %v1464 = vpack.c.b16 %v1400, %v1400
    %v1465 = vpack.c.b16 %v1401, %v1401
    %v1466 = vpack.c.b16 %v1402, %v1402
    %v1467 = vpack.c.b16 %v1403, %v1403
    %v1468 = vpack.c.b16 %v1404, %v1404
    %v1469 = vpack.c.b16 %v1405, %v1405
    %1534 = vst [vmem:[%s3] sm:$0xf] %v1406
    %1535 = vst [vmem:[%s3 + $0x4] sm:$0xf] %v1407
    %1536 = vst [vmem:[%s3 + $0x8] sm:$0xf] %v1408
    %1537 = vst [vmem:[%s3 + $0xc] sm:$0xf] %v1409
    %1538 = vst [vmem:[%s3 + $0x10] sm:$0xf] %v1410
    %1539 = vst [vmem:[%s3 + $0x14] sm:$0xf] %v1411
    %1540 = vst [vmem:[%s3 + $0x18] sm:$0xf] %v1412
    %1541 = vst [vmem:[%s3 + $0x1c] sm:$0xf] %v1413
    %1542 = vst [vmem:[%s3 + $0x20] sm:$0xf] %v1414
    %1543 = vst [vmem:[%s3 + $0x24] sm:$0xf] %v1415
    %1544 = vst [vmem:[%s3 + $0x28] sm:$0xf] %v1416
    %1545 = vst [vmem:[%s3 + $0x2c] sm:$0xf] %v1417
    %1546 = vst [vmem:[%s3 + $0x30] sm:$0xf] %v1418
    %1547 = vst [vmem:[%s3 + $0x34] sm:$0xf] %v1419
    %1548 = vst [vmem:[%s3 + $0x38] sm:$0xf] %v1420
    %1549 = vst [vmem:[%s3 + $0x3c] sm:$0xf] %v1421
    %1550 = vst [vmem:[%s3 + $0x40] sm:$0xf] %v1422
    %1551 = vst [vmem:[%s3 + $0x44] sm:$0xf] %v1423
    %1552 = vst [vmem:[%s3 + $0x48] sm:$0xf] %v1424
    %1553 = vst [vmem:[%s3 + $0x4c] sm:$0xf] %v1425
    %1554 = vst [vmem:[%s3 + $0x50] sm:$0xf] %v1426
    %1555 = vst [vmem:[%s3 + $0x54] sm:$0xf] %v1427
    %1556 = vst [vmem:[%s3 + $0x58] sm:$0xf] %v1428
    %1557 = vst [vmem:[%s3 + $0x5c] sm:$0xf] %v1429
    %1558 = vst [vmem:[%s3 + $0x60] sm:$0xf] %v1430
    %1559 = vst [vmem:[%s3 + $0x64] sm:$0xf] %v1431
    %1560 = vst [vmem:[%s3 + $0x68] sm:$0xf] %v1432
    %1561 = vst [vmem:[%s3 + $0x6c] sm:$0xf] %v1433
    %1562 = vst [vmem:[%s3 + $0x70] sm:$0xf] %v1434
    %1563 = vst [vmem:[%s3 + $0x74] sm:$0xf] %v1435
    %1564 = vst [vmem:[%s3 + $0x78] sm:$0xf] %v1436
    %1565 = vst [vmem:[%s3 + $0x7c] sm:$0xf] %v1437
    %1566 = vst [vmem:[%s3 + $0x80] sm:$0xf] %v1438
    %1567 = vst [vmem:[%s3 + $0x84] sm:$0xf] %v1439
    %1568 = vst [vmem:[%s3 + $0x88] sm:$0xf] %v1440
    %1569 = vst [vmem:[%s3 + $0x8c] sm:$0xf] %v1441
    %1570 = vst [vmem:[%s3 + $0x90] sm:$0xf] %v1442
    %1571 = vst [vmem:[%s3 + $0x94] sm:$0xf] %v1443
    %1572 = vst [vmem:[%s3 + $0x98] sm:$0xf] %v1444
    %1573 = vst [vmem:[%s3 + $0x9c] sm:$0xf] %v1445
    %1574 = vst [vmem:[%s3 + $0xa0] sm:$0xf] %v1446
    %1575 = vst [vmem:[%s3 + $0xa4] sm:$0xf] %v1447
    %1576 = vst [vmem:[%s3 + $0xa8] sm:$0xf] %v1448
    %1577 = vst [vmem:[%s3 + $0xac] sm:$0xf] %v1449
    %1578 = vst [vmem:[%s3 + $0xb0] sm:$0xf] %v1450
    %1579 = vst [vmem:[%s3 + $0xb4] sm:$0xf] %v1451
    %1580 = vst [vmem:[%s3 + $0xb8] sm:$0xf] %v1452
    %1581 = vst [vmem:[%s3 + $0xbc] sm:$0xf] %v1453
    %1582 = vst [vmem:[%s3 + $0xc0] sm:$0xf] %v1454
    %1583 = vst [vmem:[%s3 + $0xc4] sm:$0xf] %v1455
    %1584 = vst [vmem:[%s3 + $0xc8] sm:$0xf] %v1456
    %1585 = vst [vmem:[%s3 + $0xcc] sm:$0xf] %v1457
    %1586 = vst [vmem:[%s3 + $0xd0] sm:$0xf] %v1458
    %1587 = vst [vmem:[%s3 + $0xd4] sm:$0xf] %v1459
    %1588 = vst [vmem:[%s3 + $0xd8] sm:$0xf] %v1460
    %1589 = vst [vmem:[%s3 + $0xdc] sm:$0xf] %v1461
    %1590 = vst [vmem:[%s3 + $0xe0] sm:$0xf] %v1462
    %1591 = vst [vmem:[%s3 + $0xe4] sm:$0xf] %v1463
    %1592 = vst [vmem:[%s3 + $0xe8] sm:$0xf] %v1464
    %1593 = vst [vmem:[%s3 + $0xec] sm:$0xf] %v1465
    %1594 = vst [vmem:[%s3 + $0xf0] sm:$0xf] %v1466
    %1595 = vst [vmem:[%s3 + $0xf4] sm:$0xf] %v1467
    %1596 = vst [vmem:[%s3 + $0xf8] sm:$0xf] %v1468
    %1597 = vst [vmem:[%s3 + $0xfc] sm:$0xf] %v1469
  $region21: #{_lambda_.23} parent=0 // pred_fallthru
    _
  // Predicated region
  $region22: #{_lambda_.23} parent=0 // pred_check
    _
  $region23: #{_lambda_.23} parent=0 // pred_check_branch
    %1599 = sbr.rel (0) target = $region25
  $region24: #{_lambda_.23} parent=0 // pred_region
    _
  $region25: #{_lambda_.23} parent=0 // pred_fallthru
    _
  // Predicated region
  $region26: #{_lambda_.23} parent=0 // pred_check
    _
  $region27: #{_lambda_.23} parent=0 // pred_check_branch
    %1601 = sbr.rel (0) target = $region29
  $region28: #{_lambda_.23} parent=0 // pred_region
    _
  $region29: #{_lambda_.23} parent=0 // pred_fallthru
    _

// kernel: _lambda_.26
$region0: #{_lambda_.26}
  #allocation0 [shape = 'u32[]', space=smem, size = 0x4, offset = 0x4, fixed_abs, tag = 'smem constant byte address 0x4 - core index']
  #allocation1 [shape = 'u32[144,128]{1,0:T(1,128)}', space=vmem, size = 0x12000, scoped, tag = 'internal scratch']
  #allocation2 [shape = 'f32[128,128]{1,0:T(8,128)}', space=vmem, size = 0x10000, scoped, tag = 'scratch operand']
  %s0 = inlined_call_operand.vmem [shape: bf16[9,128,128], index: 0, kind: input, shape index: {}]
  %s1 = inlined_call_operand.vmem [shape: bf16[9,128,128], index: 1, kind: input, shape index: {}]
  %s2 = inlined_call_operand.vmem [shape: f32[1,128], index: 2, kind: input, shape index: {}]
  %s3 = inlined_call_operand.vmem [shape: bf16[128,128], index: 3, kind: output, shape index: {}]
  %s4 = sld [smem:[#allocation0]]
  $region53: #{_lambda_.26} parent=0
    _
  %s6 = ssub.s32 1, %s4
  %s7 = scalar_select 0, %s6, %s4
  loop: start=0, step=1, limit=11
  $region2: #{_lambda_.26} parent=0 // loop_pre_header
    _
  $region3: #{_lambda_.26} parent=0 // loop_header
    %s9 = sphi 0, %s13
    %p10 = scmp.ge.s32.totalorder %s9, 11
    %s16 = sphi 0, %s28
    %s17 = sphi 0, %s24
    %s18 = sphi 0, %s16
    %s19 = sphi 0, %s17
    %s20 = sphi 0, %s18
    %s21 = sphi 0, %s19
    %s33 = sphi 0, %s35
    %s36 = sphi 0, %s33
    %s37 = sphi 0, %s36
    %s53 = sphi 0, %s37
    %s59 = sphi 0, %s61
    %s62 = sphi 0, %s59
    %s63 = sphi 0, %s62
    %s79 = sphi 0, %s63
    %s83 = sphi 0, %s83
    %s85 = sphi 0, %s83
    %s86 = sphi 0, %s85
    %s100 = sphi 0, %s86
    %s106 = sphi 0, %s108
    %s109 = sphi 0, %s106
    %s110 = sphi 0, %s109
    %s126 = sphi 0, %s110
  $region4: #{_lambda_.26} parent=0 // loop_header_branch
    %12 = sbr.rel (%p10) target = $region8
  $region5: #{_lambda_.26} parent=0 // loop_body
    %s14 = ssub.s32 %s9, 1
    %s15 = ssub.s32 %s9, 2
    %s22 = sadd.s32 1, %s17
    %p23 = scmp.ge.s32.totalorder %s22, 9
    %s24 = scalar_select %p23, 0, %s22
    %s25 = sadd.s32 1, %s16
    %s26 = scalar_select %p23, %s25, %s16
    %p27 = scmp.ge.s32.totalorder %s26, 1
    %s28 = scalar_select %p27, 0, %s26
    %s29 = ssub.s32 %s17, %s24
    %s30 = ssub.s32 %s16, %s28
    %s31 = sor.u32 %s29, %s30
    %p32 = scmp.eq.s32.totalorder %s31, 0
    %s34 = sadd.s32 %s33, 1
    %s35 = scalar_select %p32, %s33, %s34
    %p38 = pneg %p32
    %p39 = scmp.eq.s32.totalorder %s9, 8
    %p40 = por %p38, %p39
    %p41 = scmp.ne.s32.totalorder %s33, %s36
    %p42 = scmp.eq.s32.totalorder %s9, 0
    %p43 = por %p41, %p42
    %p44 = scmp.ne.s32.totalorder %s33, %s36
    %p45 = scmp.eq.s32.totalorder %s14, 8
    %p46 = por %p44, %p45
    %p47 = scmp.ne.s32.totalorder %s36, %s37
    %p48 = scmp.eq.s32.totalorder %s14, 0
    %p49 = por %p47, %p48
    %p50 = scmp.ne.s32.totalorder %s36, %s37
    %p51 = scmp.eq.s32.totalorder %s15, 8
    %p52 = por %p50, %p51
    %p54 = scmp.ne.s32.totalorder %s37, %s53
    %p55 = scmp.eq.s32.totalorder %s15, 0
    %p56 = por %p54, %p55
    %s57 = ssub.s32 %s17, %s24
    %p58 = scmp.eq.s32.totalorder %s57, 0
    %s60 = sadd.s32 %s59, 1
    %s61 = scalar_select %p58, %s59, %s60
    %p64 = pneg %p58
    %p65 = scmp.eq.s32.totalorder %s9, 8
    %p66 = por %p64, %p65
    %p67 = scmp.ne.s32.totalorder %s59, %s62
    %p68 = scmp.eq.s32.totalorder %s9, 0
    %p69 = por %p67, %p68
    %p70 = scmp.ne.s32.totalorder %s59, %s62
    %p71 = scmp.eq.s32.totalorder %s14, 8
    %p72 = por %p70, %p71
    %p73 = scmp.ne.s32.totalorder %s62, %s63
    %p74 = scmp.eq.s32.totalorder %s14, 0
    %p75 = por %p73, %p74
    %p76 = scmp.ne.s32.totalorder %s62, %s63
    %p77 = scmp.eq.s32.totalorder %s15, 8
    %p78 = por %p76, %p77
    %p80 = scmp.ne.s32.totalorder %s63, %s79
    %p81 = scmp.eq.s32.totalorder %s15, 0
    %p82 = por %p80, %p81
    %s84 = sadd.s32 %s83, 1
    %p87 = scmp.eq.s32.totalorder %s9, 8
    %p88 = scmp.ne.s32.totalorder %s83, %s85
    %p89 = scmp.eq.s32.totalorder %s9, 0
    %p90 = por %p88, %p89
    %p91 = scmp.ne.s32.totalorder %s83, %s85
    %p92 = scmp.eq.s32.totalorder %s14, 8
    %p93 = por %p91, %p92
    %p94 = scmp.ne.s32.totalorder %s85, %s86
    %p95 = scmp.eq.s32.totalorder %s14, 0
    %p96 = por %p94, %p95
    %p97 = scmp.ne.s32.totalorder %s85, %s86
    %p98 = scmp.eq.s32.totalorder %s15, 8
    %p99 = por %p97, %p98
    %p101 = scmp.ne.s32.totalorder %s86, %s100
    %p102 = scmp.eq.s32.totalorder %s15, 0
    %p103 = por %p101, %p102
    %s104 = ssub.s32 %s16, %s28
    %p105 = scmp.eq.s32.totalorder %s104, 0
    %s107 = sadd.s32 %s106, 1
    %s108 = scalar_select %p105, %s106, %s107
    %p111 = pneg %p105
    %p112 = scmp.eq.s32.totalorder %s9, 8
    %p113 = por %p111, %p112
    %p114 = scmp.ne.s32.totalorder %s106, %s109
    %p115 = scmp.eq.s32.totalorder %s9, 0
    %p116 = por %p114, %p115
    %p117 = scmp.ne.s32.totalorder %s106, %s109
    %p118 = scmp.eq.s32.totalorder %s14, 8
    %p119 = por %p117, %p118
    %p120 = scmp.ne.s32.totalorder %s109, %s110
    %p121 = scmp.eq.s32.totalorder %s14, 0
    %p122 = por %p120, %p121
    %p123 = scmp.ne.s32.totalorder %s109, %s110
    %p124 = scmp.eq.s32.totalorder %s15, 8
    %p125 = por %p123, %p124
    %p127 = scmp.ne.s32.totalorder %s110, %s126
    %p128 = scmp.eq.s32.totalorder %s15, 0
    %p129 = por %p127, %p128
    %p130 = scmp.le.s32.totalorder 1, %s9
    %p131 = scmp.lt.s32.totalorder %s9, 10
    %p132 = pnand %p130, %p131
    %p133 = pneg %p132
    // Predicated region
    $region9: #{_lambda_.26} parent=5 // pred_check
      _
    $region10: #{_lambda_.26} parent=5 // pred_check_branch
      %135 = sbr.rel (%p132) target = $region12
    $region11: #{_lambda_.26} parent=5 // pred_region
      %s136 = ssub.s32 %s9, 1
      // Predicated region
      $region13: #{_lambda_.26} parent=11 // pred_check
        %p137 = pneg %p96
      $region14: #{_lambda_.26} parent=11 // pred_check_branch
        %139 = sbr.rel (%p137) target = $region16
      $region15: #{_lambda_.26} parent=11 // pred_region
        _
      $region16: #{_lambda_.26} parent=11 // pred_fallthru
        _
    $region12: #{_lambda_.26} parent=5 // pred_fallthru
      _
    %p140 = scmp.lt.s32.totalorder %s9, 9
    // Predicated region
    $region17: #{_lambda_.26} parent=5 // pred_check
      %p141 = pneg %p140
    $region18: #{_lambda_.26} parent=5 // pred_check_branch
      %143 = sbr.rel (%p141) target = $region20
    $region19: #{_lambda_.26} parent=5 // pred_region
      // Predicated region
      $region21: #{_lambda_.26} parent=19 // pred_check
        %p144 = pneg %p43
      $region22: #{_lambda_.26} parent=19 // pred_check_branch
        %146 = sbr.rel (%p144) target = $region24
      $region23: #{_lambda_.26} parent=19 // pred_region
        %s147 = smul.u32 16, %s16
        %p148 = scmp.lt.s32.totalorder %s17, 8
        %s149 = scalar_select %p148, %s17, 8
        %p150 = scmp.lt.s32.totalorder %s147, 15
        %s151 = scalar_select %p150, %s147, 15
        %s152 = smul.addr %s149, 16
        %s153 = sadd.s32 %s151, %s152
        %s154 = smul.addr %s153, 4
        %s155 = scalar_lea.vmem %s0, %s154
        %s156 = smul.u32 16, %s16
      $region24: #{_lambda_.26} parent=19 // pred_fallthru
        _
      // Predicated region
      $region25: #{_lambda_.26} parent=19 // pred_check
        %p157 = pneg %p69
      $region26: #{_lambda_.26} parent=19 // pred_check_branch
        %159 = sbr.rel (%p157) target = $region28
      $region27: #{_lambda_.26} parent=19 // pred_region
        %p160 = scmp.lt.s32.totalorder %s17, 8
        %s161 = scalar_select %p160, %s17, 8
        %s162 = smul.addr %s161, 16
        %s163 = smul.addr %s162, 4
        %s164 = scalar_lea.vmem %s1, %s163
      $region28: #{_lambda_.26} parent=19 // pred_fallthru
        _
    $region20: #{_lambda_.26} parent=5 // pred_fallthru
      _
    %p165 = scmp.le.s32.totalorder 1, %s9
    %p166 = scmp.lt.s32.totalorder %s9, 10
    %p167 = pnand %p165, %p166
    %p168 = pneg %p167
    // Predicated region
    $region29: #{_lambda_.26} parent=5 // pred_check
      _
    $region30: #{_lambda_.26} parent=5 // pred_check_branch
      %170 = sbr.rel (%p167) target = $region32
    $region31: #{_lambda_.26} parent=5 // pred_region
      %s171 = ssub.s32 %s9, 1
      %s172 = smul.u32 16, %s18
      %p173 = scmp.lt.s32.totalorder %s19, 8
      %s174 = scalar_select %p173, %s19, 8
      %p175 = scmp.lt.s32.totalorder %s172, 15
      %s176 = scalar_select %p175, %s172, 15
      %s177 = smul.addr %s174, 16
      %s178 = sadd.s32 %s176, %s177
      %s179 = smul.addr %s178, 4
      %s180 = scalar_lea.vmem %s0, %s179
      %p181 = pneg %p49
      %p182 = pneg %p46
      %p183 = scmp.lt.s32.totalorder %s19, 8
      %s184 = scalar_select %p183, %s19, 8
      %s185 = smul.addr %s184, 16
      %s186 = smul.addr %s185, 4
      %s187 = scalar_lea.vmem %s1, %s186
      %p188 = pneg %p75
      %p189 = pneg %p72
      %p190 = pneg %p96
      %p191 = pneg %p93
      %p192 = pneg %p122
      %p193 = pneg %p119
      %s194 = smul.u32 16, %s18
      %p195 = scmp.lt.s32.totalorder %s194, 15
      %s196 = scalar_select %p195, %s194, 15
      %s197 = smul.addr %s196, 4
      %s198 = scalar_lea.vmem %s3, %s197
      %s199 = smul.u32 16, %s18
      %p200 = scmp.lt.s32.totalorder %s19, 8
      %s201 = scalar_select %p200, %s19, 8
      %p202 = scmp.lt.s32.totalorder %s199, 15
      %s203 = scalar_select %p202, %s199, 15
      %s204 = smul.addr %s201, 16
      %s205 = sadd.s32 %s203, %s204
      %s206 = smul.addr %s205, 4
      %s207 = scalar_lea.vmem %s0, %s206
      %s208 = smul.u32 16, %s18
      %p209 = scmp.lt.s32.totalorder %s19, 8
      %s210 = scalar_select %p209, %s19, 8
      %s211 = smul.addr %s210, 16
      %s212 = smul.addr %s211, 4
      %s213 = scalar_lea.vmem %s1, %s212
      %s214 = smul.u32 16, %s18
      %p215 = scmp.lt.s32.totalorder %s214, 15
      %s216 = scalar_select %p215, %s214, 15
      %s217 = smul.addr %s216, 4
      %s218 = scalar_lea.vmem %s3, %s217
      %s219 = smul.u32 16, %s18
      %p221 = scmp.eq.s32.totalorder %s19, 0
      // Predicated region
      $region33: #{_lambda_.26} parent=31 // pred_check
        %p222 = pneg %p221
      $region34: #{_lambda_.26} parent=31 // pred_check_branch
        %224 = sbr.rel (%p222) target = $region36
      $region35: #{_lambda_.26} parent=31 // pred_region
        %225 = vst [vmem:[#allocation2] sm:$0xff] 0.0
        %226 = vst [vmem:[#allocation2 + $0x8] sm:$0xff] 0.0
        %227 = vst [vmem:[#allocation2 + $0x10] sm:$0xff] 0.0
        %228 = vst [vmem:[#allocation2 + $0x18] sm:$0xff] 0.0
        %229 = vst [vmem:[#allocation2 + $0x20] sm:$0xff] 0.0
        %230 = vst [vmem:[#allocation2 + $0x28] sm:$0xff] 0.0
        %231 = vst [vmem:[#allocation2 + $0x30] sm:$0xff] 0.0
        %232 = vst [vmem:[#allocation2 + $0x38] sm:$0xff] 0.0
        %233 = vst [vmem:[#allocation2 + $0x40] sm:$0xff] 0.0
        %234 = vst [vmem:[#allocation2 + $0x48] sm:$0xff] 0.0
        %235 = vst [vmem:[#allocation2 + $0x50] sm:$0xff] 0.0
        %236 = vst [vmem:[#allocation2 + $0x58] sm:$0xff] 0.0
        %237 = vst [vmem:[#allocation2 + $0x60] sm:$0xff] 0.0
        %238 = vst [vmem:[#allocation2 + $0x68] sm:$0xff] 0.0
        %239 = vst [vmem:[#allocation2 + $0x70] sm:$0xff] 0.0
        %240 = vst [vmem:[#allocation2 + $0x78] sm:$0xff] 0.0
      $region36: #{_lambda_.26} parent=31 // pred_fallthru
        _
      %v241 = vld [vmem:[#allocation2] sm:$0xff]
      %v242 = vld [vmem:[#allocation2 + $0x8] sm:$0xff]
      %v243 = vld [vmem:[#allocation2 + $0x10] sm:$0xff]
      %v244 = vld [vmem:[#allocation2 + $0x18] sm:$0xff]
      %v245 = vld [vmem:[#allocation2 + $0x20] sm:$0xff]
      %v246 = vld [vmem:[#allocation2 + $0x28] sm:$0xff]
      %v247 = vld [vmem:[#allocation2 + $0x30] sm:$0xff]
      %v248 = vld [vmem:[#allocation2 + $0x38] sm:$0xff]
      %v249 = vld [vmem:[#allocation2 + $0x40] sm:$0xff]
      %v250 = vld [vmem:[#allocation2 + $0x48] sm:$0xff]
      %v251 = vld [vmem:[#allocation2 + $0x50] sm:$0xff]
      %v252 = vld [vmem:[#allocation2 + $0x58] sm:$0xff]
      %v253 = vld [vmem:[#allocation2 + $0x60] sm:$0xff]
      %v254 = vld [vmem:[#allocation2 + $0x68] sm:$0xff]
      %v255 = vld [vmem:[#allocation2 + $0x70] sm:$0xff]
      %v256 = vld [vmem:[#allocation2 + $0x78] sm:$0xff]
      %v257 = vld [vmem:[%s207] sm:$0xf]
      %v258 = vld [vmem:[%s207 + $0x4] sm:$0xf]
      %v259 = vld [vmem:[%s207 + $0x8] sm:$0xf]
      %v260 = vld [vmem:[%s207 + $0xc] sm:$0xf]
      %v261 = vld [vmem:[%s207 + $0x10] sm:$0xf]
      %v262 = vld [vmem:[%s207 + $0x14] sm:$0xf]
      %v263 = vld [vmem:[%s207 + $0x18] sm:$0xf]
      %v264 = vld [vmem:[%s207 + $0x1c] sm:$0xf]
      %v265 = vld [vmem:[%s207 + $0x20] sm:$0xf]
      %v266 = vld [vmem:[%s207 + $0x24] sm:$0xf]
      %v267 = vld [vmem:[%s207 + $0x28] sm:$0xf]
      %v268 = vld [vmem:[%s207 + $0x2c] sm:$0xf]
      %v269 = vld [vmem:[%s207 + $0x30] sm:$0xf]
      %v270 = vld [vmem:[%s207 + $0x34] sm:$0xf]
      %v271 = vld [vmem:[%s207 + $0x38] sm:$0xf]
      %v272 = vld [vmem:[%s207 + $0x3c] sm:$0xf]
      %v273 = vld [vmem:[%s213] sm:$0xf]
      %v274 = vld [vmem:[%s213 + $0x4] sm:$0xf]
      %v275 = vld [vmem:[%s213 + $0x8] sm:$0xf]
      %v276 = vld [vmem:[%s213 + $0xc] sm:$0xf]
      %v277 = vld [vmem:[%s213 + $0x10] sm:$0xf]
      %v278 = vld [vmem:[%s213 + $0x14] sm:$0xf]
      %v279 = vld [vmem:[%s213 + $0x18] sm:$0xf]
      %v280 = vld [vmem:[%s213 + $0x1c] sm:$0xf]
      %v281 = vld [vmem:[%s213 + $0x20] sm:$0xf]
      %v282 = vld [vmem:[%s213 + $0x24] sm:$0xf]
      %v283 = vld [vmem:[%s213 + $0x28] sm:$0xf]
      %v284 = vld [vmem:[%s213 + $0x2c] sm:$0xf]
      %v285 = vld [vmem:[%s213 + $0x30] sm:$0xf]
      %v286 = vld [vmem:[%s213 + $0x34] sm:$0xf]
      %v287 = vld [vmem:[%s213 + $0x38] sm:$0xf]
      %v288 = vld [vmem:[%s213 + $0x3c] sm:$0xf]
      %v305 = vunpack.c.l.b16 %v257
      %v306 = vunpack.c.l.b16 %v258
      %v307 = vunpack.c.l.b16 %v259
      %v308 = vunpack.c.l.b16 %v260
      %v309 = vunpack.c.l.b16 %v261
      %v310 = vunpack.c.l.b16 %v262
      %v311 = vunpack.c.l.b16 %v263
      %v312 = vunpack.c.l.b16 %v264
      %v313 = vunpack.c.l.b16 %v265
      %v314 = vunpack.c.l.b16 %v266
      %v315 = vunpack.c.l.b16 %v267
      %v316 = vunpack.c.l.b16 %v268
      %v317 = vunpack.c.l.b16 %v269
      %v318 = vunpack.c.l.b16 %v270
      %v319 = vunpack.c.l.b16 %v271
      %v320 = vunpack.c.l.b16 %v272
      %v321 = vpack.c.b16 %v306, %v305
      %v322 = vpack.c.b16 %v308, %v307
      %v323 = vpack.c.b16 %v310, %v309
      %v324 = vpack.c.b16 %v312, %v311
      %v325 = vpack.c.b16 %v314, %v313
      %v326 = vpack.c.b16 %v316, %v315
      %v327 = vpack.c.b16 %v318, %v317
      %v328 = vpack.c.b16 %v320, %v319
      %v353 = vunpack.c.l.b16 %v273
      %v354 = vunpack.c.l.b16 %v274
      %v355 = vunpack.c.l.b16 %v275
      %v356 = vunpack.c.l.b16 %v276
      %v357 = vunpack.c.l.b16 %v277
      %v358 = vunpack.c.l.b16 %v278
      %v359 = vunpack.c.l.b16 %v279
      %v360 = vunpack.c.l.b16 %v280
      %v361 = vunpack.c.l.b16 %v281
      %v362 = vunpack.c.l.b16 %v282
      %v363 = vunpack.c.l.b16 %v283
      %v364 = vunpack.c.l.b16 %v284
      %v365 = vunpack.c.l.b16 %v285
      %v366 = vunpack.c.l.b16 %v286
      %v367 = vunpack.c.l.b16 %v287
      %v368 = vunpack.c.l.b16 %v288
      %v369 = vpack.c.b16 %v354, %v353
      %v370 = vpack.c.b16 %v356, %v355
      %v371 = vpack.c.b16 %v358, %v357
      %v372 = vpack.c.b16 %v360, %v359
      %v373 = vpack.c.b16 %v362, %v361
      %v374 = vpack.c.b16 %v364, %v363
      %v375 = vpack.c.b16 %v366, %v365
      %v376 = vpack.c.b16 %v368, %v367
      %385 = vmatprep.subr.bf16.mxu0 0
      %386 = vmatpush1.bf16.msra.mxu0 %v376
      %387 = vmatprep.subr.bf16.mxu0 0
      %388 = vmatpush1.bf16.msra.mxu0 %v375
      %389 = vmatprep.subr.bf16.mxu0 0
      %390 = vmatpush1.bf16.msra.mxu0 %v374
      %391 = vmatprep.subr.bf16.mxu0 0
      %392 = vmatpush1.bf16.msra.mxu0 %v373
      %393 = vmatprep.subr.bf16.mxu0 0
      %394 = vmatpush1.bf16.msra.mxu0 %v372
      %395 = vmatprep.subr.bf16.mxu0 0
      %396 = vmatpush1.bf16.msra.mxu0 %v371
      %397 = vmatprep.subr.bf16.mxu0 0
      %398 = vmatpush1.bf16.msra.mxu0 %v370
      %399 = vmatprep.subr.bf16.mxu0 0
      %400 = vmatpush1.bf16.msra.mxu0 %v369
      %401 = vmatprep.subr.bf16.mxu0 0
      %402 = vmatpush2.bf16.msra.mxu0 0
      %403 = vmatprep.subr.bf16.mxu0 0
      %404 = vmatpush2.bf16.msra.mxu0 0
      %405 = vmatprep.subr.bf16.mxu0 0
      %406 = vmatpush2.bf16.msra.mxu0 0
      %407 = vmatprep.subr.bf16.mxu0 0
      %408 = vmatpush2.bf16.msra.mxu0 0
      %409 = vmatprep.subr.bf16.mxu0 0
      %410 = vmatpush2.bf16.msra.mxu0 0
      %411 = vmatprep.subr.bf16.mxu0 0
      %412 = vmatpush2.bf16.msra.mxu0 0
      %413 = vmatprep.subr.bf16.mxu0 0
      %414 = vmatpush2.bf16.msra.mxu0 0
      %415 = vmatprep.subr.bf16.mxu0 0
      %416 = vmatpush2.bf16.msra.mxu0 0
      %417 = vmatprep.mubr.bf16.mxu0 0
      %418 = vmatmul.mubr.bf16.gmra.mxu0 %v321
      %v419 = vpop.f32.mrf.mxu0
      %v420 = vadd.f32 0.0, %v419
      %v421 = vpop.f32.mrf.mxu0
      %v422 = vpop.f32.mrf.mxu0
      %v423 = vadd.f32 0.0, %v422
      %v424 = vpop.f32.mrf.mxu0
      %425 = vmatprep.mubr.bf16.mxu0 0
      %426 = vmatmul.mubr.bf16.gmra.mxu0 %v322
      %v427 = vpop.f32.mrf.mxu0
      %v428 = vadd.f32 0.0, %v427
      %v429 = vpop.f32.mrf.mxu0
      %v430 = vpop.f32.mrf.mxu0
      %v431 = vadd.f32 0.0, %v430
      %v432 = vpop.f32.mrf.mxu0
      %433 = vmatprep.mubr.bf16.mxu0 0
      %434 = vmatmul.mubr.bf16.gmra.mxu0 %v323
      %v435 = vpop.f32.mrf.mxu0
      %v436 = vadd.f32 0.0, %v435
      %v437 = vpop.f32.mrf.mxu0
      %v438 = vpop.f32.mrf.mxu0
      %v439 = vadd.f32 0.0, %v438
      %v440 = vpop.f32.mrf.mxu0
      %441 = vmatprep.mubr.bf16.mxu0 0
      %442 = vmatmul.mubr.bf16.gmra.mxu0 %v324
      %v443 = vpop.f32.mrf.mxu0
      %v444 = vadd.f32 0.0, %v443
      %v445 = vpop.f32.mrf.mxu0
      %v446 = vpop.f32.mrf.mxu0
      %v447 = vadd.f32 0.0, %v446
      %v448 = vpop.f32.mrf.mxu0
      %449 = vmatprep.mubr.bf16.mxu0 0
      %450 = vmatmul.mubr.bf16.gmra.mxu0 %v325
      %v451 = vpop.f32.mrf.mxu0
      %v452 = vadd.f32 0.0, %v451
      %v453 = vpop.f32.mrf.mxu0
      %v454 = vpop.f32.mrf.mxu0
      %v455 = vadd.f32 0.0, %v454
      %v456 = vpop.f32.mrf.mxu0
      %457 = vmatprep.mubr.bf16.mxu0 0
      %458 = vmatmul.mubr.bf16.gmra.mxu0 %v326
      %v459 = vpop.f32.mrf.mxu0
      %v460 = vadd.f32 0.0, %v459
      %v461 = vpop.f32.mrf.mxu0
      %v462 = vpop.f32.mrf.mxu0
      %v463 = vadd.f32 0.0, %v462
      %v464 = vpop.f32.mrf.mxu0
      %465 = vmatprep.mubr.bf16.mxu0 0
      %466 = vmatmul.mubr.bf16.gmra.mxu0 %v327
      %v467 = vpop.f32.mrf.mxu0
      %v468 = vadd.f32 0.0, %v467
      %v469 = vpop.f32.mrf.mxu0
      %v470 = vpop.f32.mrf.mxu0
      %v471 = vadd.f32 0.0, %v470
      %v472 = vpop.f32.mrf.mxu0
      %473 = vmatprep.mubr.bf16.mxu0 0
      %474 = vmatmul.mubr.bf16.gmra.mxu0 %v328
      %v475 = vpop.f32.mrf.mxu0
      %v476 = vadd.f32 0.0, %v475
      %v477 = vpop.f32.mrf.mxu0
      %v478 = vpop.f32.mrf.mxu0
      %v479 = vadd.f32 0.0, %v478
      %v480 = vpop.f32.mrf.mxu0
      %481 = vdwg.mxu0
      %v482 = vadd.f32 %v241, %v420
      %v483 = vadd.f32 %v242, %v423
      %v484 = vadd.f32 %v243, %v428
      %v485 = vadd.f32 %v244, %v431
      %v486 = vadd.f32 %v245, %v436
      %v487 = vadd.f32 %v246, %v439
      %v488 = vadd.f32 %v247, %v444
      %v489 = vadd.f32 %v248, %v447
      %v490 = vadd.f32 %v249, %v452
      %v491 = vadd.f32 %v250, %v455
      %v492 = vadd.f32 %v251, %v460
      %v493 = vadd.f32 %v252, %v463
      %v494 = vadd.f32 %v253, %v468
      %v495 = vadd.f32 %v254, %v471
      %v496 = vadd.f32 %v255, %v476
      %v497 = vadd.f32 %v256, %v479
      %498 = vst [vmem:[#allocation2] sm:$0xff] %v482
      %499 = vst [vmem:[#allocation2 + $0x8] sm:$0xff] %v483
      %500 = vst [vmem:[#allocation2 + $0x10] sm:$0xff] %v484
      %501 = vst [vmem:[#allocation2 + $0x18] sm:$0xff] %v485
      %502 = vst [vmem:[#allocation2 + $0x20] sm:$0xff] %v486
      %503 = vst [vmem:[#allocation2 + $0x28] sm:$0xff] %v487
      %504 = vst [vmem:[#allocation2 + $0x30] sm:$0xff] %v488
      %505 = vst [vmem:[#allocation2 + $0x38] sm:$0xff] %v489
      %506 = vst [vmem:[#allocation2 + $0x40] sm:$0xff] %v490
      %507 = vst [vmem:[#allocation2 + $0x48] sm:$0xff] %v491
      %508 = vst [vmem:[#allocation2 + $0x50] sm:$0xff] %v492
      %509 = vst [vmem:[#allocation2 + $0x58] sm:$0xff] %v493
      %510 = vst [vmem:[#allocation2 + $0x60] sm:$0xff] %v494
      %511 = vst [vmem:[#allocation2 + $0x68] sm:$0xff] %v495
      %512 = vst [vmem:[#allocation2 + $0x70] sm:$0xff] %v496
      %513 = vst [vmem:[#allocation2 + $0x78] sm:$0xff] %v497
      %p514 = scmp.eq.s32.totalorder %s19, 8
      // Predicated region
      $region37: #{_lambda_.26} parent=31 // pred_check
        %p515 = pneg %p514
      $region38: #{_lambda_.26} parent=31 // pred_check_branch
        %517 = sbr.rel (%p515) target = $region40
      $region39: #{_lambda_.26} parent=31 // pred_region
        %v518 = vld [vmem:[#allocation2] sm:$0xff]
        %v519 = vld [vmem:[#allocation2 + $0x8] sm:$0xff]
        %v520 = vld [vmem:[#allocation2 + $0x10] sm:$0xff]
        %v521 = vld [vmem:[#allocation2 + $0x18] sm:$0xff]
        %v522 = vld [vmem:[#allocation2 + $0x20] sm:$0xff]
        %v523 = vld [vmem:[#allocation2 + $0x28] sm:$0xff]
        %v524 = vld [vmem:[#allocation2 + $0x30] sm:$0xff]
        %v525 = vld [vmem:[#allocation2 + $0x38] sm:$0xff]
        %v526 = vld [vmem:[#allocation2 + $0x40] sm:$0xff]
        %v527 = vld [vmem:[#allocation2 + $0x48] sm:$0xff]
        %v528 = vld [vmem:[#allocation2 + $0x50] sm:$0xff]
        %v529 = vld [vmem:[#allocation2 + $0x58] sm:$0xff]
        %v530 = vld [vmem:[#allocation2 + $0x60] sm:$0xff]
        %v531 = vld [vmem:[#allocation2 + $0x68] sm:$0xff]
        %v532 = vld [vmem:[#allocation2 + $0x70] sm:$0xff]
        %v533 = vld [vmem:[#allocation2 + $0x78] sm:$0xff]
        %v534 = vld [vmem:[%s2] sm:$0x1]
        %v536 = vlaneseq
        %v537 = vshrl.u32 %v536, 7
        %v538 = vsub.s32 0, %v537
        %v539 = vrot.slane %v534, %v538
        %v541 = vadd.f32 %v518, %v539
        %v542 = vadd.f32 %v519, %v539
        %v543 = vadd.f32 %v520, %v539
        %v544 = vadd.f32 %v521, %v539
        %v545 = vadd.f32 %v522, %v539
        %v546 = vadd.f32 %v523, %v539
        %v547 = vadd.f32 %v524, %v539
        %v548 = vadd.f32 %v525, %v539
        %v549 = vadd.f32 %v526, %v539
        %v550 = vadd.f32 %v527, %v539
        %v551 = vadd.f32 %v528, %v539
        %v552 = vadd.f32 %v529, %v539
        %v553 = vadd.f32 %v530, %v539
        %v554 = vadd.f32 %v531, %v539
        %v555 = vadd.f32 %v532, %v539
        %v556 = vadd.f32 %v533, %v539
        %v557 = vmax.f32 %v541, 0.0
        %v558 = vmax.f32 %v542, 0.0
        %v559 = vmax.f32 %v543, 0.0
        %v560 = vmax.f32 %v544, 0.0
        %v561 = vmax.f32 %v545, 0.0
        %v562 = vmax.f32 %v546, 0.0
        %v563 = vmax.f32 %v547, 0.0
        %v564 = vmax.f32 %v548, 0.0
        %v565 = vmax.f32 %v549, 0.0
        %v566 = vmax.f32 %v550, 0.0
        %v567 = vmax.f32 %v551, 0.0
        %v568 = vmax.f32 %v552, 0.0
        %v569 = vmax.f32 %v553, 0.0
        %v570 = vmax.f32 %v554, 0.0
        %v571 = vmax.f32 %v555, 0.0
        %v572 = vmax.f32 %v556, 0.0
        %v573 = vpack.c.bf16 %v558, %v557
        %v574 = vpack.c.bf16 %v560, %v559
        %v575 = vpack.c.bf16 %v562, %v561
        %v576 = vpack.c.bf16 %v564, %v563
        %v577 = vpack.c.bf16 %v566, %v565
        %v578 = vpack.c.bf16 %v568, %v567
        %v579 = vpack.c.bf16 %v570, %v569
        %v580 = vpack.c.bf16 %v572, %v571
        %v589 = vunpack.c.l.b16 %v573
        %v590 = vunpack.c.h.b16 %v573
        %v591 = vunpack.c.l.b16 %v574
        %v592 = vunpack.c.h.b16 %v574
        %v593 = vunpack.c.l.b16 %v575
        %v594 = vunpack.c.h.b16 %v575
        %v595 = vunpack.c.l.b16 %v576
        %v596 = vunpack.c.h.b16 %v576
        %v597 = vunpack.c.l.b16 %v577
        %v598 = vunpack.c.h.b16 %v577
        %v599 = vunpack.c.l.b16 %v578
        %v600 = vunpack.c.h.b16 %v578
        %v601 = vunpack.c.l.b16 %v579
        %v602 = vunpack.c.h.b16 %v579
        %v603 = vunpack.c.l.b16 %v580
        %v604 = vunpack.c.h.b16 %v580
        %v605 = vpack.c.b16 %v589, %v589
        %v606 = vpack.c.b16 %v590, %v590
        %v607 = vpack.c.b16 %v591, %v591
        %v608 = vpack.c.b16 %v592, %v592
        %v609 = vpack.c.b16 %v593, %v593
        %v610 = vpack.c.b16 %v594, %v594
        %v611 = vpack.c.b16 %v595, %v595
        %v612 = vpack.c.b16 %v596, %v596
        %v613 = vpack.c.b16 %v597, %v597
        %v614 = vpack.c.b16 %v598, %v598
        %v615 = vpack.c.b16 %v599, %v599
        %v616 = vpack.c.b16 %v600, %v600
        %v617 = vpack.c.b16 %v601, %v601
        %v618 = vpack.c.b16 %v602, %v602
        %v619 = vpack.c.b16 %v603, %v603
        %v620 = vpack.c.b16 %v604, %v604
        %637 = vst [vmem:[%s218] sm:$0xf] %v605
        %638 = vst [vmem:[%s218 + $0x4] sm:$0xf] %v606
        %639 = vst [vmem:[%s218 + $0x8] sm:$0xf] %v607
        %640 = vst [vmem:[%s218 + $0xc] sm:$0xf] %v608
        %641 = vst [vmem:[%s218 + $0x10] sm:$0xf] %v609
        %642 = vst [vmem:[%s218 + $0x14] sm:$0xf] %v610
        %643 = vst [vmem:[%s218 + $0x18] sm:$0xf] %v611
        %644 = vst [vmem:[%s218 + $0x1c] sm:$0xf] %v612
        %645 = vst [vmem:[%s218 + $0x20] sm:$0xf] %v613
        %646 = vst [vmem:[%s218 + $0x24] sm:$0xf] %v614
        %647 = vst [vmem:[%s218 + $0x28] sm:$0xf] %v615
        %648 = vst [vmem:[%s218 + $0x2c] sm:$0xf] %v616
        %649 = vst [vmem:[%s218 + $0x30] sm:$0xf] %v617
        %650 = vst [vmem:[%s218 + $0x34] sm:$0xf] %v618
        %651 = vst [vmem:[%s218 + $0x38] sm:$0xf] %v619
        %652 = vst [vmem:[%s218 + $0x3c] sm:$0xf] %v620
      $region40: #{_lambda_.26} parent=31 // pred_fallthru
        _
      %s653 = smul.u32 16, %s18
      %p654 = scmp.lt.s32.totalorder %s653, 15
      %s655 = scalar_select %p654, %s653, 15
      %s656 = smul.addr %s655, 4
      %s657 = scalar_lea.vmem %s3, %s656
      // Predicated region
      $region41: #{_lambda_.26} parent=31 // pred_check
        %p658 = pneg %p119
      $region42: #{_lambda_.26} parent=31 // pred_check_branch
        %660 = sbr.rel (%p658) target = $region44
      $region43: #{_lambda_.26} parent=31 // pred_region
        %s661 = smul.u32 16, %s18
      $region44: #{_lambda_.26} parent=31 // pred_fallthru
        _
      // Predicated region
      $region45: #{_lambda_.26} parent=31 // pred_check
        %p662 = pneg %p119
      $region46: #{_lambda_.26} parent=31 // pred_check_branch
        %664 = sbr.rel (%p662) target = $region48
      $region47: #{_lambda_.26} parent=31 // pred_region
        %s665 = smul.u32 16, %s18
        %p666 = scmp.lt.s32.totalorder %s665, 15
        %s667 = scalar_select %p666, %s665, 15
        %s668 = smul.addr %s667, 4
        %s669 = scalar_lea.vmem %s3, %s668
      $region48: #{_lambda_.26} parent=31 // pred_fallthru
        _
    $region32: #{_lambda_.26} parent=5 // pred_fallthru
      _
    %p670 = scmp.le.s32.totalorder 2, %s9
    // Predicated region
    $region49: #{_lambda_.26} parent=5 // pred_check
      %p671 = pneg %p670
    $region50: #{_lambda_.26} parent=5 // pred_check_branch
      %673 = sbr.rel (%p671) target = $region52
    $region51: #{_lambda_.26} parent=5 // pred_region
      %s674 = ssub.s32 %s9, 2
    $region52: #{_lambda_.26} parent=5 // pred_fallthru
      _
  $region6: #{_lambda_.26} parent=0 // loop_footer
    %s13 = sadd.s32 1, %s9
  $region7: #{_lambda_.26} parent=0 // loop_footer_branch
    %8 = sbr.rel target = $region3
  $region8: #{_lambda_.26} parent=0 // loop_exit
    _

// kernel: _lambda_.28
$region0: #{_lambda_.28}
  #allocation0 [shape = 'u32[]', space=smem, size = 0x4, offset = 0x4, fixed_abs, tag = 'smem constant byte address 0x4 - core index']
  #allocation1 [shape = 'u32[144,128]{1,0:T(1,128)}', space=vmem, size = 0x12000, scoped, tag = 'internal scratch']
  #allocation2 [shape = 'f32[128,128]{1,0:T(8,128)}', space=vmem, size = 0x10000, scoped, tag = 'scratch operand']
  %s0 = inlined_call_operand.vmem [shape: bf16[1,128,128], index: 0, kind: input, shape index: {}]
  %s1 = inlined_call_operand.vmem [shape: bf16[1,128,128], index: 1, kind: input, shape index: {}]
  %s2 = inlined_call_operand.vmem [shape: f32[1,128], index: 2, kind: input, shape index: {}]
  %s3 = inlined_call_operand.vmem [shape: bf16[128,128], index: 3, kind: input, shape index: {}]
  %s4 = inlined_call_operand.vmem [shape: bf16[128,128], index: 4, kind: output, shape index: {}]
  %s5 = sld [smem:[#allocation0]]
  $region34: #{_lambda_.28} parent=0
    _
  %s7 = ssub.s32 1, %s5
  %s8 = scalar_select 0, %s7, %s5
  // Predicated region
  $region2: #{_lambda_.28} parent=0 // pred_check
    _
  $region3: #{_lambda_.28} parent=0 // pred_check_branch
    %10 = sbr.rel (0) target = $region5
  $region4: #{_lambda_.28} parent=0 // pred_region
    _
  $region5: #{_lambda_.28} parent=0 // pred_fallthru
    _
  // Predicated region
  $region6: #{_lambda_.28} parent=0 // pred_check
    _
  $region7: #{_lambda_.28} parent=0 // pred_check_branch
    %12 = sbr.rel (0) target = $region9
  $region8: #{_lambda_.28} parent=0 // pred_region
    _
  $region9: #{_lambda_.28} parent=0 // pred_fallthru
    _
  // Predicated region
  $region10: #{_lambda_.28} parent=0 // pred_check
    _
  $region11: #{_lambda_.28} parent=0 // pred_check_branch
    %14 = sbr.rel (0) target = $region13
  $region12: #{_lambda_.28} parent=0 // pred_region
    _
  $region13: #{_lambda_.28} parent=0 // pred_fallthru
    _
  // Predicated region
  $region14: #{_lambda_.28} parent=0 // pred_check
    _
  $region15: #{_lambda_.28} parent=0 // pred_check_branch
    %16 = sbr.rel (0) target = $region17
  $region16: #{_lambda_.28} parent=0 // pred_region
    _
  $region17: #{_lambda_.28} parent=0 // pred_fallthru
    _
  %p18 = scmp.eq.s32.totalorder 0, 0
  // Predicated region
  $region18: #{_lambda_.28} parent=0 // pred_check
    %p19 = pneg %p18
  $region19: #{_lambda_.28} parent=0 // pred_check_branch
    %21 = sbr.rel (%p19) target = $region21
  $region20: #{_lambda_.28} parent=0 // pred_region
    %22 = vst [vmem:[#allocation2] sm:$0xff] 0.0
    %23 = vst [vmem:[#allocation2 + $0x8] sm:$0xff] 0.0
    %24 = vst [vmem:[#allocation2 + $0x10] sm:$0xff] 0.0
    %25 = vst [vmem:[#allocation2 + $0x18] sm:$0xff] 0.0
    %26 = vst [vmem:[#allocation2 + $0x20] sm:$0xff] 0.0
    %27 = vst [vmem:[#allocation2 + $0x28] sm:$0xff] 0.0
    %28 = vst [vmem:[#allocation2 + $0x30] sm:$0xff] 0.0
    %29 = vst [vmem:[#allocation2 + $0x38] sm:$0xff] 0.0
    %30 = vst [vmem:[#allocation2 + $0x40] sm:$0xff] 0.0
    %31 = vst [vmem:[#allocation2 + $0x48] sm:$0xff] 0.0
    %32 = vst [vmem:[#allocation2 + $0x50] sm:$0xff] 0.0
    %33 = vst [vmem:[#allocation2 + $0x58] sm:$0xff] 0.0
    %34 = vst [vmem:[#allocation2 + $0x60] sm:$0xff] 0.0
    %35 = vst [vmem:[#allocation2 + $0x68] sm:$0xff] 0.0
    %36 = vst [vmem:[#allocation2 + $0x70] sm:$0xff] 0.0
    %37 = vst [vmem:[#allocation2 + $0x78] sm:$0xff] 0.0
  $region21: #{_lambda_.28} parent=0 // pred_fallthru
    _
  %v38 = vld [vmem:[#allocation2] sm:$0xff]
  %v39 = vld [vmem:[#allocation2 + $0x8] sm:$0xff]
  %v40 = vld [vmem:[#allocation2 + $0x10] sm:$0xff]
  %v41 = vld [vmem:[#allocation2 + $0x18] sm:$0xff]
  %v42 = vld [vmem:[#allocation2 + $0x20] sm:$0xff]
  %v43 = vld [vmem:[#allocation2 + $0x28] sm:$0xff]
  %v44 = vld [vmem:[#allocation2 + $0x30] sm:$0xff]
  %v45 = vld [vmem:[#allocation2 + $0x38] sm:$0xff]
  %v46 = vld [vmem:[#allocation2 + $0x40] sm:$0xff]
  %v47 = vld [vmem:[#allocation2 + $0x48] sm:$0xff]
  %v48 = vld [vmem:[#allocation2 + $0x50] sm:$0xff]
  %v49 = vld [vmem:[#allocation2 + $0x58] sm:$0xff]
  %v50 = vld [vmem:[#allocation2 + $0x60] sm:$0xff]
  %v51 = vld [vmem:[#allocation2 + $0x68] sm:$0xff]
  %v52 = vld [vmem:[#allocation2 + $0x70] sm:$0xff]
  %v53 = vld [vmem:[#allocation2 + $0x78] sm:$0xff]
  %v54 = vld [vmem:[%s0] sm:$0xf]
  %v55 = vld [vmem:[%s0 + $0x4] sm:$0xf]
  %v56 = vld [vmem:[%s0 + $0x8] sm:$0xf]
  %v57 = vld [vmem:[%s0 + $0xc] sm:$0xf]
  %v58 = vld [vmem:[%s0 + $0x10] sm:$0xf]
  %v59 = vld [vmem:[%s0 + $0x14] sm:$0xf]
  %v60 = vld [vmem:[%s0 + $0x18] sm:$0xf]
  %v61 = vld [vmem:[%s0 + $0x1c] sm:$0xf]
  %v62 = vld [vmem:[%s0 + $0x20] sm:$0xf]
  %v63 = vld [vmem:[%s0 + $0x24] sm:$0xf]
  %v64 = vld [vmem:[%s0 + $0x28] sm:$0xf]
  %v65 = vld [vmem:[%s0 + $0x2c] sm:$0xf]
  %v66 = vld [vmem:[%s0 + $0x30] sm:$0xf]
  %v67 = vld [vmem:[%s0 + $0x34] sm:$0xf]
  %v68 = vld [vmem:[%s0 + $0x38] sm:$0xf]
  %v69 = vld [vmem:[%s0 + $0x3c] sm:$0xf]
  %v70 = vld [vmem:[%s1] sm:$0xf]
  %v71 = vld [vmem:[%s1 + $0x4] sm:$0xf]
  %v72 = vld [vmem:[%s1 + $0x8] sm:$0xf]
  %v73 = vld [vmem:[%s1 + $0xc] sm:$0xf]
  %v74 = vld [vmem:[%s1 + $0x10] sm:$0xf]
  %v75 = vld [vmem:[%s1 + $0x14] sm:$0xf]
  %v76 = vld [vmem:[%s1 + $0x18] sm:$0xf]
  %v77 = vld [vmem:[%s1 + $0x1c] sm:$0xf]
  %v78 = vld [vmem:[%s1 + $0x20] sm:$0xf]
  %v79 = vld [vmem:[%s1 + $0x24] sm:$0xf]
  %v80 = vld [vmem:[%s1 + $0x28] sm:$0xf]
  %v81 = vld [vmem:[%s1 + $0x2c] sm:$0xf]
  %v82 = vld [vmem:[%s1 + $0x30] sm:$0xf]
  %v83 = vld [vmem:[%s1 + $0x34] sm:$0xf]
  %v84 = vld [vmem:[%s1 + $0x38] sm:$0xf]
  %v85 = vld [vmem:[%s1 + $0x3c] sm:$0xf]
  %v102 = vunpack.c.l.b16 %v54
  %v103 = vunpack.c.l.b16 %v55
  %v104 = vunpack.c.l.b16 %v56
  %v105 = vunpack.c.l.b16 %v57
  %v106 = vunpack.c.l.b16 %v58
  %v107 = vunpack.c.l.b16 %v59
  %v108 = vunpack.c.l.b16 %v60
  %v109 = vunpack.c.l.b16 %v61
  %v110 = vunpack.c.l.b16 %v62
  %v111 = vunpack.c.l.b16 %v63
  %v112 = vunpack.c.l.b16 %v64
  %v113 = vunpack.c.l.b16 %v65
  %v114 = vunpack.c.l.b16 %v66
  %v115 = vunpack.c.l.b16 %v67
  %v116 = vunpack.c.l.b16 %v68
  %v117 = vunpack.c.l.b16 %v69
  %v118 = vpack.c.b16 %v103, %v102
  %v119 = vpack.c.b16 %v105, %v104
  %v120 = vpack.c.b16 %v107, %v106
  %v121 = vpack.c.b16 %v109, %v108
  %v122 = vpack.c.b16 %v111, %v110
  %v123 = vpack.c.b16 %v113, %v112
  %v124 = vpack.c.b16 %v115, %v114
  %v125 = vpack.c.b16 %v117, %v116
  %v150 = vunpack.c.l.b16 %v70
  %v151 = vunpack.c.l.b16 %v71
  %v152 = vunpack.c.l.b16 %v72
  %v153 = vunpack.c.l.b16 %v73
  %v154 = vunpack.c.l.b16 %v74
  %v155 = vunpack.c.l.b16 %v75
  %v156 = vunpack.c.l.b16 %v76
  %v157 = vunpack.c.l.b16 %v77
  %v158 = vunpack.c.l.b16 %v78
  %v159 = vunpack.c.l.b16 %v79
  %v160 = vunpack.c.l.b16 %v80
  %v161 = vunpack.c.l.b16 %v81
  %v162 = vunpack.c.l.b16 %v82
  %v163 = vunpack.c.l.b16 %v83
  %v164 = vunpack.c.l.b16 %v84
  %v165 = vunpack.c.l.b16 %v85
  %v166 = vpack.c.b16 %v151, %v150
  %v167 = vpack.c.b16 %v153, %v152
  %v168 = vpack.c.b16 %v155, %v154
  %v169 = vpack.c.b16 %v157, %v156
  %v170 = vpack.c.b16 %v159, %v158
  %v171 = vpack.c.b16 %v161, %v160
  %v172 = vpack.c.b16 %v163, %v162
  %v173 = vpack.c.b16 %v165, %v164
  %182 = vmatprep.subr.bf16.mxu0 0
  %183 = vmatpush1.bf16.msra.mxu0 %v173
  %184 = vmatprep.subr.bf16.mxu0 0
  %185 = vmatpush1.bf16.msra.mxu0 %v172
  %186 = vmatprep.subr.bf16.mxu0 0
  %187 = vmatpush1.bf16.msra.mxu0 %v171
  %188 = vmatprep.subr.bf16.mxu0 0
  %189 = vmatpush1.bf16.msra.mxu0 %v170
  %190 = vmatprep.subr.bf16.mxu0 0
  %191 = vmatpush1.bf16.msra.mxu0 %v169
  %192 = vmatprep.subr.bf16.mxu0 0
  %193 = vmatpush1.bf16.msra.mxu0 %v168
  %194 = vmatprep.subr.bf16.mxu0 0
  %195 = vmatpush1.bf16.msra.mxu0 %v167
  %196 = vmatprep.subr.bf16.mxu0 0
  %197 = vmatpush1.bf16.msra.mxu0 %v166
  %198 = vmatprep.subr.bf16.mxu0 0
  %199 = vmatpush2.bf16.msra.mxu0 0
  %200 = vmatprep.subr.bf16.mxu0 0
  %201 = vmatpush2.bf16.msra.mxu0 0
  %202 = vmatprep.subr.bf16.mxu0 0
  %203 = vmatpush2.bf16.msra.mxu0 0
  %204 = vmatprep.subr.bf16.mxu0 0
  %205 = vmatpush2.bf16.msra.mxu0 0
  %206 = vmatprep.subr.bf16.mxu0 0
  %207 = vmatpush2.bf16.msra.mxu0 0
  %208 = vmatprep.subr.bf16.mxu0 0
  %209 = vmatpush2.bf16.msra.mxu0 0
  %210 = vmatprep.subr.bf16.mxu0 0
  %211 = vmatpush2.bf16.msra.mxu0 0
  %212 = vmatprep.subr.bf16.mxu0 0
  %213 = vmatpush2.bf16.msra.mxu0 0
  %214 = vmatprep.mubr.bf16.mxu0 0
  %215 = vmatmul.mubr.bf16.gmra.mxu0 %v118
  %v216 = vpop.f32.mrf.mxu0
  %v217 = vadd.f32 0.0, %v216
  %v218 = vpop.f32.mrf.mxu0
  %v219 = vpop.f32.mrf.mxu0
  %v220 = vadd.f32 0.0, %v219
  %v221 = vpop.f32.mrf.mxu0
  %222 = vmatprep.mubr.bf16.mxu0 0
  %223 = vmatmul.mubr.bf16.gmra.mxu0 %v119
  %v224 = vpop.f32.mrf.mxu0
  %v225 = vadd.f32 0.0, %v224
  %v226 = vpop.f32.mrf.mxu0
  %v227 = vpop.f32.mrf.mxu0
  %v228 = vadd.f32 0.0, %v227
  %v229 = vpop.f32.mrf.mxu0
  %230 = vmatprep.mubr.bf16.mxu0 0
  %231 = vmatmul.mubr.bf16.gmra.mxu0 %v120
  %v232 = vpop.f32.mrf.mxu0
  %v233 = vadd.f32 0.0, %v232
  %v234 = vpop.f32.mrf.mxu0
  %v235 = vpop.f32.mrf.mxu0
  %v236 = vadd.f32 0.0, %v235
  %v237 = vpop.f32.mrf.mxu0
  %238 = vmatprep.mubr.bf16.mxu0 0
  %239 = vmatmul.mubr.bf16.gmra.mxu0 %v121
  %v240 = vpop.f32.mrf.mxu0
  %v241 = vadd.f32 0.0, %v240
  %v242 = vpop.f32.mrf.mxu0
  %v243 = vpop.f32.mrf.mxu0
  %v244 = vadd.f32 0.0, %v243
  %v245 = vpop.f32.mrf.mxu0
  %246 = vmatprep.mubr.bf16.mxu0 0
  %247 = vmatmul.mubr.bf16.gmra.mxu0 %v122
  %v248 = vpop.f32.mrf.mxu0
  %v249 = vadd.f32 0.0, %v248
  %v250 = vpop.f32.mrf.mxu0
  %v251 = vpop.f32.mrf.mxu0
  %v252 = vadd.f32 0.0, %v251
  %v253 = vpop.f32.mrf.mxu0
  %254 = vmatprep.mubr.bf16.mxu0 0
  %255 = vmatmul.mubr.bf16.gmra.mxu0 %v123
  %v256 = vpop.f32.mrf.mxu0
  %v257 = vadd.f32 0.0, %v256
  %v258 = vpop.f32.mrf.mxu0
  %v259 = vpop.f32.mrf.mxu0
  %v260 = vadd.f32 0.0, %v259
  %v261 = vpop.f32.mrf.mxu0
  %262 = vmatprep.mubr.bf16.mxu0 0
  %263 = vmatmul.mubr.bf16.gmra.mxu0 %v124
  %v264 = vpop.f32.mrf.mxu0
  %v265 = vadd.f32 0.0, %v264
  %v266 = vpop.f32.mrf.mxu0
  %v267 = vpop.f32.mrf.mxu0
  %v268 = vadd.f32 0.0, %v267
  %v269 = vpop.f32.mrf.mxu0
  %270 = vmatprep.mubr.bf16.mxu0 0
  %271 = vmatmul.mubr.bf16.gmra.mxu0 %v125
  %v272 = vpop.f32.mrf.mxu0
  %v273 = vadd.f32 0.0, %v272
  %v274 = vpop.f32.mrf.mxu0
  %v275 = vpop.f32.mrf.mxu0
  %v276 = vadd.f32 0.0, %v275
  %v277 = vpop.f32.mrf.mxu0
  %278 = vdwg.mxu0
  %v279 = vadd.f32 %v38, %v217
  %v280 = vadd.f32 %v39, %v220
  %v281 = vadd.f32 %v40, %v225
  %v282 = vadd.f32 %v41, %v228
  %v283 = vadd.f32 %v42, %v233
  %v284 = vadd.f32 %v43, %v236
  %v285 = vadd.f32 %v44, %v241
  %v286 = vadd.f32 %v45, %v244
  %v287 = vadd.f32 %v46, %v249
  %v288 = vadd.f32 %v47, %v252
  %v289 = vadd.f32 %v48, %v257
  %v290 = vadd.f32 %v49, %v260
  %v291 = vadd.f32 %v50, %v265
  %v292 = vadd.f32 %v51, %v268
  %v293 = vadd.f32 %v52, %v273
  %v294 = vadd.f32 %v53, %v276
  %295 = vst [vmem:[#allocation2] sm:$0xff] %v279
  %296 = vst [vmem:[#allocation2 + $0x8] sm:$0xff] %v280
  %297 = vst [vmem:[#allocation2 + $0x10] sm:$0xff] %v281
  %298 = vst [vmem:[#allocation2 + $0x18] sm:$0xff] %v282
  %299 = vst [vmem:[#allocation2 + $0x20] sm:$0xff] %v283
  %300 = vst [vmem:[#allocation2 + $0x28] sm:$0xff] %v284
  %301 = vst [vmem:[#allocation2 + $0x30] sm:$0xff] %v285
  %302 = vst [vmem:[#allocation2 + $0x38] sm:$0xff] %v286
  %303 = vst [vmem:[#allocation2 + $0x40] sm:$0xff] %v287
  %304 = vst [vmem:[#allocation2 + $0x48] sm:$0xff] %v288
  %305 = vst [vmem:[#allocation2 + $0x50] sm:$0xff] %v289
  %306 = vst [vmem:[#allocation2 + $0x58] sm:$0xff] %v290
  %307 = vst [vmem:[#allocation2 + $0x60] sm:$0xff] %v291
  %308 = vst [vmem:[#allocation2 + $0x68] sm:$0xff] %v292
  %309 = vst [vmem:[#allocation2 + $0x70] sm:$0xff] %v293
  %310 = vst [vmem:[#allocation2 + $0x78] sm:$0xff] %v294
  // Predicated region
  $region22: #{_lambda_.28} parent=0 // pred_check
    %p311 = pneg %p18
  $region23: #{_lambda_.28} parent=0 // pred_check_branch
    %313 = sbr.rel (%p311) target = $region25
  $region24: #{_lambda_.28} parent=0 // pred_region
    %v314 = vld [vmem:[#allocation2] sm:$0xff]
    %v315 = vld [vmem:[#allocation2 + $0x8] sm:$0xff]
    %v316 = vld [vmem:[#allocation2 + $0x10] sm:$0xff]
    %v317 = vld [vmem:[#allocation2 + $0x18] sm:$0xff]
    %v318 = vld [vmem:[#allocation2 + $0x20] sm:$0xff]
    %v319 = vld [vmem:[#allocation2 + $0x28] sm:$0xff]
    %v320 = vld [vmem:[#allocation2 + $0x30] sm:$0xff]
    %v321 = vld [vmem:[#allocation2 + $0x38] sm:$0xff]
    %v322 = vld [vmem:[#allocation2 + $0x40] sm:$0xff]
    %v323 = vld [vmem:[#allocation2 + $0x48] sm:$0xff]
    %v324 = vld [vmem:[#allocation2 + $0x50] sm:$0xff]
    %v325 = vld [vmem:[#allocation2 + $0x58] sm:$0xff]
    %v326 = vld [vmem:[#allocation2 + $0x60] sm:$0xff]
    %v327 = vld [vmem:[#allocation2 + $0x68] sm:$0xff]
    %v328 = vld [vmem:[#allocation2 + $0x70] sm:$0xff]
    %v329 = vld [vmem:[#allocation2 + $0x78] sm:$0xff]
    %v330 = vld [vmem:[%s2] sm:$0x1]
    %v332 = vlaneseq
    %v333 = vshrl.u32 %v332, 7
    %v334 = vsub.s32 0, %v333
    %v335 = vrot.slane %v330, %v334
    %v337 = vadd.f32 %v314, %v335
    %v338 = vadd.f32 %v315, %v335
    %v339 = vadd.f32 %v316, %v335
    %v340 = vadd.f32 %v317, %v335
    %v341 = vadd.f32 %v318, %v335
    %v342 = vadd.f32 %v319, %v335
    %v343 = vadd.f32 %v320, %v335
    %v344 = vadd.f32 %v321, %v335
    %v345 = vadd.f32 %v322, %v335
    %v346 = vadd.f32 %v323, %v335
    %v347 = vadd.f32 %v324, %v335
    %v348 = vadd.f32 %v325, %v335
    %v349 = vadd.f32 %v326, %v335
    %v350 = vadd.f32 %v327, %v335
    %v351 = vadd.f32 %v328, %v335
    %v352 = vadd.f32 %v329, %v335
    %v353 = vld [vmem:[%s3] sm:$0xf]
    %v354 = vld [vmem:[%s3 + $0x4] sm:$0xf]
    %v355 = vld [vmem:[%s3 + $0x8] sm:$0xf]
    %v356 = vld [vmem:[%s3 + $0xc] sm:$0xf]
    %v357 = vld [vmem:[%s3 + $0x10] sm:$0xf]
    %v358 = vld [vmem:[%s3 + $0x14] sm:$0xf]
    %v359 = vld [vmem:[%s3 + $0x18] sm:$0xf]
    %v360 = vld [vmem:[%s3 + $0x1c] sm:$0xf]
    %v361 = vld [vmem:[%s3 + $0x20] sm:$0xf]
    %v362 = vld [vmem:[%s3 + $0x24] sm:$0xf]
    %v363 = vld [vmem:[%s3 + $0x28] sm:$0xf]
    %v364 = vld [vmem:[%s3 + $0x2c] sm:$0xf]
    %v365 = vld [vmem:[%s3 + $0x30] sm:$0xf]
    %v366 = vld [vmem:[%s3 + $0x34] sm:$0xf]
    %v367 = vld [vmem:[%s3 + $0x38] sm:$0xf]
    %v368 = vld [vmem:[%s3 + $0x3c] sm:$0xf]
    %v369 = vunpack.c.l.bf16 %v353
    %v370 = vunpack.c.l.bf16 %v354
    %v371 = vunpack.c.l.bf16 %v355
    %v372 = vunpack.c.l.bf16 %v356
    %v373 = vunpack.c.l.bf16 %v357
    %v374 = vunpack.c.l.bf16 %v358
    %v375 = vunpack.c.l.bf16 %v359
    %v376 = vunpack.c.l.bf16 %v360
    %v377 = vunpack.c.l.bf16 %v361
    %v378 = vunpack.c.l.bf16 %v362
    %v379 = vunpack.c.l.bf16 %v363
    %v380 = vunpack.c.l.bf16 %v364
    %v381 = vunpack.c.l.bf16 %v365
    %v382 = vunpack.c.l.bf16 %v366
    %v383 = vunpack.c.l.bf16 %v367
    %v384 = vunpack.c.l.bf16 %v368
    %v385 = vadd.f32 %v337, %v369
    %v386 = vadd.f32 %v338, %v370
    %v387 = vadd.f32 %v339, %v371
    %v388 = vadd.f32 %v340, %v372
    %v389 = vadd.f32 %v341, %v373
    %v390 = vadd.f32 %v342, %v374
    %v391 = vadd.f32 %v343, %v375
    %v392 = vadd.f32 %v344, %v376
    %v393 = vadd.f32 %v345, %v377
    %v394 = vadd.f32 %v346, %v378
    %v395 = vadd.f32 %v347, %v379
    %v396 = vadd.f32 %v348, %v380
    %v397 = vadd.f32 %v349, %v381
    %v398 = vadd.f32 %v350, %v382
    %v399 = vadd.f32 %v351, %v383
    %v400 = vadd.f32 %v352, %v384
    %v401 = vmax.f32 %v385, 0.0
    %v402 = vmax.f32 %v386, 0.0
    %v403 = vmax.f32 %v387, 0.0
    %v404 = vmax.f32 %v388, 0.0
    %v405 = vmax.f32 %v389, 0.0
    %v406 = vmax.f32 %v390, 0.0
    %v407 = vmax.f32 %v391, 0.0
    %v408 = vmax.f32 %v392, 0.0
    %v409 = vmax.f32 %v393, 0.0
    %v410 = vmax.f32 %v394, 0.0
    %v411 = vmax.f32 %v395, 0.0
    %v412 = vmax.f32 %v396, 0.0
    %v413 = vmax.f32 %v397, 0.0
    %v414 = vmax.f32 %v398, 0.0
    %v415 = vmax.f32 %v399, 0.0
    %v416 = vmax.f32 %v400, 0.0
    %v417 = vpack.c.bf16 %v402, %v401
    %v418 = vpack.c.bf16 %v404, %v403
    %v419 = vpack.c.bf16 %v406, %v405
    %v420 = vpack.c.bf16 %v408, %v407
    %v421 = vpack.c.bf16 %v410, %v409
    %v422 = vpack.c.bf16 %v412, %v411
    %v423 = vpack.c.bf16 %v414, %v413
    %v424 = vpack.c.bf16 %v416, %v415
    %v433 = vunpack.c.l.b16 %v417
    %v434 = vunpack.c.h.b16 %v417
    %v435 = vunpack.c.l.b16 %v418
    %v436 = vunpack.c.h.b16 %v418
    %v437 = vunpack.c.l.b16 %v419
    %v438 = vunpack.c.h.b16 %v419
    %v439 = vunpack.c.l.b16 %v420
    %v440 = vunpack.c.h.b16 %v420
    %v441 = vunpack.c.l.b16 %v421
    %v442 = vunpack.c.h.b16 %v421
    %v443 = vunpack.c.l.b16 %v422
    %v444 = vunpack.c.h.b16 %v422
    %v445 = vunpack.c.l.b16 %v423
    %v446 = vunpack.c.h.b16 %v423
    %v447 = vunpack.c.l.b16 %v424
    %v448 = vunpack.c.h.b16 %v424
    %v449 = vpack.c.b16 %v433, %v433
    %v450 = vpack.c.b16 %v434, %v434
    %v451 = vpack.c.b16 %v435, %v435
    %v452 = vpack.c.b16 %v436, %v436
    %v453 = vpack.c.b16 %v437, %v437
    %v454 = vpack.c.b16 %v438, %v438
    %v455 = vpack.c.b16 %v439, %v439
    %v456 = vpack.c.b16 %v440, %v440
    %v457 = vpack.c.b16 %v441, %v441
    %v458 = vpack.c.b16 %v442, %v442
    %v459 = vpack.c.b16 %v443, %v443
    %v460 = vpack.c.b16 %v444, %v444
    %v461 = vpack.c.b16 %v445, %v445
    %v462 = vpack.c.b16 %v446, %v446
    %v463 = vpack.c.b16 %v447, %v447
    %v464 = vpack.c.b16 %v448, %v448
    %481 = vst [vmem:[%s4] sm:$0xf] %v449
    %482 = vst [vmem:[%s4 + $0x4] sm:$0xf] %v450
    %483 = vst [vmem:[%s4 + $0x8] sm:$0xf] %v451
    %484 = vst [vmem:[%s4 + $0xc] sm:$0xf] %v452
    %485 = vst [vmem:[%s4 + $0x10] sm:$0xf] %v453
    %486 = vst [vmem:[%s4 + $0x14] sm:$0xf] %v454
    %487 = vst [vmem:[%s4 + $0x18] sm:$0xf] %v455
    %488 = vst [vmem:[%s4 + $0x1c] sm:$0xf] %v456
    %489 = vst [vmem:[%s4 + $0x20] sm:$0xf] %v457
    %490 = vst [vmem:[%s4 + $0x24] sm:$0xf] %v458
    %491 = vst [vmem:[%s4 + $0x28] sm:$0xf] %v459
    %492 = vst [vmem:[%s4 + $0x2c] sm:$0xf] %v460
    %493 = vst [vmem:[%s4 + $0x30] sm:$0xf] %v461
    %494 = vst [vmem:[%s4 + $0x34] sm:$0xf] %v462
    %495 = vst [vmem:[%s4 + $0x38] sm:$0xf] %v463
    %496 = vst [vmem:[%s4 + $0x3c] sm:$0xf] %v464
  $region25: #{_lambda_.28} parent=0 // pred_fallthru
    _
  // Predicated region
  $region26: #{_lambda_.28} parent=0 // pred_check
    _
  $region27: #{_lambda_.28} parent=0 // pred_check_branch
    %498 = sbr.rel (0) target = $region29
  $region28: #{_lambda_.28} parent=0 // pred_region
    _
  $region29: #{_lambda_.28} parent=0 // pred_fallthru
    _
  // Predicated region
  $region30: #{_lambda_.28} parent=0 // pred_check
    _
  $region31: #{_lambda_.28} parent=0 // pred_check_branch
    %500 = sbr.rel (0) target = $region33
  $region32: #{_lambda_.28} parent=0 // pred_region
    _
  $region33: #{_lambda_.28} parent=0 // pred_fallthru
    _

// kernel: _lambda_.34
$region0: #{_lambda_.34}
  #allocation0 [shape = 'u32[]', space=smem, size = 0x4, offset = 0x4, fixed_abs, tag = 'smem constant byte address 0x4 - core index']
  #allocation1 [shape = 'u32[144,128]{1,0:T(1,128)}', space=vmem, size = 0x12000, scoped, tag = 'internal scratch']
  #allocation2 [shape = 'f32[32,128]{1,0:T(8,128)}', space=vmem, size = 0x4000, scoped, tag = 'scratch operand']
  %s0 = inlined_call_operand.vmem [shape: bf16[1,32,128], index: 0, kind: input, shape index: {}]
  %s1 = inlined_call_operand.vmem [shape: bf16[1,128,128], index: 1, kind: input, shape index: {}]
  %s2 = inlined_call_operand.vmem [shape: f32[1,128], index: 2, kind: input, shape index: {}]
  %s3 = inlined_call_operand.vmem [shape: bf16[32,128], index: 3, kind: output, shape index: {}]
  %s4 = sld [smem:[#allocation0]]
  $region30: #{_lambda_.34} parent=0
    _
  %s6 = ssub.s32 1, %s4
  %s7 = scalar_select 0, %s6, %s4
  // Predicated region
  $region2: #{_lambda_.34} parent=0 // pred_check
    _
  $region3: #{_lambda_.34} parent=0 // pred_check_branch
    %9 = sbr.rel (0) target = $region5
  $region4: #{_lambda_.34} parent=0 // pred_region
    _
  $region5: #{_lambda_.34} parent=0 // pred_fallthru
    _
  // Predicated region
  $region6: #{_lambda_.34} parent=0 // pred_check
    _
  $region7: #{_lambda_.34} parent=0 // pred_check_branch
    %11 = sbr.rel (0) target = $region9
  $region8: #{_lambda_.34} parent=0 // pred_region
    _
  $region9: #{_lambda_.34} parent=0 // pred_fallthru
    _
  // Predicated region
  $region10: #{_lambda_.34} parent=0 // pred_check
    _
  $region11: #{_lambda_.34} parent=0 // pred_check_branch
    %13 = sbr.rel (0) target = $region13
  $region12: #{_lambda_.34} parent=0 // pred_region
    _
  $region13: #{_lambda_.34} parent=0 // pred_fallthru
    _
  %p15 = scmp.eq.s32.totalorder 0, 0
  // Predicated region
  $region14: #{_lambda_.34} parent=0 // pred_check
    %p16 = pneg %p15
  $region15: #{_lambda_.34} parent=0 // pred_check_branch
    %18 = sbr.rel (%p16) target = $region17
  $region16: #{_lambda_.34} parent=0 // pred_region
    %19 = vst [vmem:[#allocation2] sm:$0xff] 0.0
    %20 = vst [vmem:[#allocation2 + $0x8] sm:$0xff] 0.0
    %21 = vst [vmem:[#allocation2 + $0x10] sm:$0xff] 0.0
    %22 = vst [vmem:[#allocation2 + $0x18] sm:$0xff] 0.0
  $region17: #{_lambda_.34} parent=0 // pred_fallthru
    _
  %v23 = vld [vmem:[#allocation2] sm:$0xff]
  %v24 = vld [vmem:[#allocation2 + $0x8] sm:$0xff]
  %v25 = vld [vmem:[#allocation2 + $0x10] sm:$0xff]
  %v26 = vld [vmem:[#allocation2 + $0x18] sm:$0xff]
  %v27 = vld [vmem:[%s0] sm:$0xf]
  %v28 = vld [vmem:[%s0 + $0x4] sm:$0xf]
  %v29 = vld [vmem:[%s0 + $0x8] sm:$0xf]
  %v30 = vld [vmem:[%s0 + $0xc] sm:$0xf]
  %v31 = vld [vmem:[%s1] sm:$0xf]
  %v32 = vld [vmem:[%s1 + $0x4] sm:$0xf]
  %v33 = vld [vmem:[%s1 + $0x8] sm:$0xf]
  %v34 = vld [vmem:[%s1 + $0xc] sm:$0xf]
  %v35 = vld [vmem:[%s1 + $0x10] sm:$0xf]
  %v36 = vld [vmem:[%s1 + $0x14] sm:$0xf]
  %v37 = vld [vmem:[%s1 + $0x18] sm:$0xf]
  %v38 = vld [vmem:[%s1 + $0x1c] sm:$0xf]
  %v39 = vld [vmem:[%s1 + $0x20] sm:$0xf]
  %v40 = vld [vmem:[%s1 + $0x24] sm:$0xf]
  %v41 = vld [vmem:[%s1 + $0x28] sm:$0xf]
  %v42 = vld [vmem:[%s1 + $0x2c] sm:$0xf]
  %v43 = vld [vmem:[%s1 + $0x30] sm:$0xf]
  %v44 = vld [vmem:[%s1 + $0x34] sm:$0xf]
  %v45 = vld [vmem:[%s1 + $0x38] sm:$0xf]
  %v46 = vld [vmem:[%s1 + $0x3c] sm:$0xf]
  %v51 = vunpack.c.l.b16 %v27
  %v52 = vunpack.c.l.b16 %v28
  %v53 = vunpack.c.l.b16 %v29
  %v54 = vunpack.c.l.b16 %v30
  %v55 = vpack.c.b16 %v52, %v51
  %v56 = vpack.c.b16 %v54, %v53
  %v75 = vunpack.c.l.b16 %v31
  %v76 = vunpack.c.l.b16 %v32
  %v77 = vunpack.c.l.b16 %v33
  %v78 = vunpack.c.l.b16 %v34
  %v79 = vunpack.c.l.b16 %v35
  %v80 = vunpack.c.l.b16 %v36
  %v81 = vunpack.c.l.b16 %v37
  %v82 = vunpack.c.l.b16 %v38
  %v83 = vunpack.c.l.b16 %v39
  %v84 = vunpack.c.l.b16 %v40
  %v85 = vunpack.c.l.b16 %v41
  %v86 = vunpack.c.l.b16 %v42
  %v87 = vunpack.c.l.b16 %v43
  %v88 = vunpack.c.l.b16 %v44
  %v89 = vunpack.c.l.b16 %v45
  %v90 = vunpack.c.l.b16 %v46
  %v91 = vpack.c.b16 %v76, %v75
  %v92 = vpack.c.b16 %v78, %v77
  %v93 = vpack.c.b16 %v80, %v79
  %v94 = vpack.c.b16 %v82, %v81
  %v95 = vpack.c.b16 %v84, %v83
  %v96 = vpack.c.b16 %v86, %v85
  %v97 = vpack.c.b16 %v88, %v87
  %v98 = vpack.c.b16 %v90, %v89
  %107 = vmatprep.subr.bf16.mxu0 0
  %108 = vmatpush1.bf16.msra.mxu0 %v98
  %109 = vmatprep.subr.bf16.mxu0 0
  %110 = vmatpush1.bf16.msra.mxu0 %v97
  %111 = vmatprep.subr.bf16.mxu0 0
  %112 = vmatpush1.bf16.msra.mxu0 %v96
  %113 = vmatprep.subr.bf16.mxu0 0
  %114 = vmatpush1.bf16.msra.mxu0 %v95
  %115 = vmatprep.subr.bf16.mxu0 0
  %116 = vmatpush1.bf16.msra.mxu0 %v94
  %117 = vmatprep.subr.bf16.mxu0 0
  %118 = vmatpush1.bf16.msra.mxu0 %v93
  %119 = vmatprep.subr.bf16.mxu0 0
  %120 = vmatpush1.bf16.msra.mxu0 %v92
  %121 = vmatprep.subr.bf16.mxu0 0
  %122 = vmatpush1.bf16.msra.mxu0 %v91
  %123 = vmatprep.subr.bf16.mxu0 0
  %124 = vmatpush2.bf16.msra.mxu0 0
  %125 = vmatprep.subr.bf16.mxu0 0
  %126 = vmatpush2.bf16.msra.mxu0 0
  %127 = vmatprep.subr.bf16.mxu0 0
  %128 = vmatpush2.bf16.msra.mxu0 0
  %129 = vmatprep.subr.bf16.mxu0 0
  %130 = vmatpush2.bf16.msra.mxu0 0
  %131 = vmatprep.subr.bf16.mxu0 0
  %132 = vmatpush2.bf16.msra.mxu0 0
  %133 = vmatprep.subr.bf16.mxu0 0
  %134 = vmatpush2.bf16.msra.mxu0 0
  %135 = vmatprep.subr.bf16.mxu0 0
  %136 = vmatpush2.bf16.msra.mxu0 0
  %137 = vmatprep.subr.bf16.mxu0 0
  %138 = vmatpush2.bf16.msra.mxu0 0
  %139 = vmatprep.mubr.bf16.mxu0 0
  %140 = vmatmul.mubr.bf16.gmra.mxu0 %v55
  %v141 = vpop.f32.mrf.mxu0
  %v142 = vadd.f32 0.0, %v141
  %v143 = vpop.f32.mrf.mxu0
  %v144 = vpop.f32.mrf.mxu0
  %v145 = vadd.f32 0.0, %v144
  %v146 = vpop.f32.mrf.mxu0
  %147 = vmatprep.mubr.bf16.mxu0 0
  %148 = vmatmul.mubr.bf16.gmra.mxu0 %v56
  %v149 = vpop.f32.mrf.mxu0
  %v150 = vadd.f32 0.0, %v149
  %v151 = vpop.f32.mrf.mxu0
  %v152 = vpop.f32.mrf.mxu0
  %v153 = vadd.f32 0.0, %v152
  %v154 = vpop.f32.mrf.mxu0
  %155 = vdwg.mxu0
  %v156 = vadd.f32 %v23, %v142
  %v157 = vadd.f32 %v24, %v145
  %v158 = vadd.f32 %v25, %v150
  %v159 = vadd.f32 %v26, %v153
  %160 = vst [vmem:[#allocation2] sm:$0xff] %v156
  %161 = vst [vmem:[#allocation2 + $0x8] sm:$0xff] %v157
  %162 = vst [vmem:[#allocation2 + $0x10] sm:$0xff] %v158
  %163 = vst [vmem:[#allocation2 + $0x18] sm:$0xff] %v159
  // Predicated region
  $region18: #{_lambda_.34} parent=0 // pred_check
    %p164 = pneg %p15
  $region19: #{_lambda_.34} parent=0 // pred_check_branch
    %166 = sbr.rel (%p164) target = $region21
  $region20: #{_lambda_.34} parent=0 // pred_region
    %v167 = vld [vmem:[#allocation2] sm:$0xff]
    %v168 = vld [vmem:[#allocation2 + $0x8] sm:$0xff]
    %v169 = vld [vmem:[#allocation2 + $0x10] sm:$0xff]
    %v170 = vld [vmem:[#allocation2 + $0x18] sm:$0xff]
    %v171 = vld [vmem:[%s2] sm:$0x1]
    %v173 = vlaneseq
    %v174 = vshrl.u32 %v173, 7
    %v175 = vsub.s32 0, %v174
    %v176 = vrot.slane %v171, %v175
    %v178 = vadd.f32 %v167, %v176
    %v179 = vadd.f32 %v168, %v176
    %v180 = vadd.f32 %v169, %v176
    %v181 = vadd.f32 %v170, %v176
    %v182 = vpack.c.bf16 %v179, %v178
    %v183 = vpack.c.bf16 %v181, %v180
    %v186 = vunpack.c.l.b16 %v182
    %v187 = vunpack.c.h.b16 %v182
    %v188 = vunpack.c.l.b16 %v183
    %v189 = vunpack.c.h.b16 %v183
    %v190 = vpack.c.b16 %v186, %v186
    %v191 = vpack.c.b16 %v187, %v187
    %v192 = vpack.c.b16 %v188, %v188
    %v193 = vpack.c.b16 %v189, %v189
    %198 = vst [vmem:[%s3] sm:$0xf] %v190
    %199 = vst [vmem:[%s3 + $0x4] sm:$0xf] %v191
    %200 = vst [vmem:[%s3 + $0x8] sm:$0xf] %v192
    %201 = vst [vmem:[%s3 + $0xc] sm:$0xf] %v193
  $region21: #{_lambda_.34} parent=0 // pred_fallthru
    _
  // Predicated region
  $region22: #{_lambda_.34} parent=0 // pred_check
    _
  $region23: #{_lambda_.34} parent=0 // pred_check_branch
    %203 = sbr.rel (0) target = $region25
  $region24: #{_lambda_.34} parent=0 // pred_region
    _
  $region25: #{_lambda_.34} parent=0 // pred_fallthru
    _
  // Predicated region
  $region26: #{_lambda_.34} parent=0 // pred_check
    _
  $region27: #{_lambda_.34} parent=0 // pred_check_branch
    %205 = sbr.rel (0) target = $region29
  $region28: #{_lambda_.34} parent=0 // pred_region
    _
  $region29: #{_lambda_.34} parent=0 // pred_fallthru
    _

// kernel: _lambda_.36
$region0: #{_lambda_.36}
  #allocation0 [shape = 'u32[]', space=smem, size = 0x4, offset = 0x4, fixed_abs, tag = 'smem constant byte address 0x4 - core index']
  #allocation1 [shape = 'u32[144,128]{1,0:T(1,128)}', space=vmem, size = 0x12000, scoped, tag = 'internal scratch']
  #allocation2 [shape = 'f32[32,128]{1,0:T(8,128)}', space=vmem, size = 0x4000, scoped, tag = 'scratch operand']
  %s0 = inlined_call_operand.vmem [shape: bf16[1,32,128], index: 0, kind: input, shape index: {}]
  %s1 = inlined_call_operand.vmem [shape: bf16[1,128,128], index: 1, kind: input, shape index: {}]
  %s2 = inlined_call_operand.vmem [shape: f32[1,128], index: 2, kind: input, shape index: {}]
  %s3 = inlined_call_operand.vmem [shape: bf16[32,128], index: 3, kind: output, shape index: {}]
  %s4 = sld [smem:[#allocation0]]
  $region30: #{_lambda_.36} parent=0
    _
  %s6 = ssub.s32 1, %s4
  %s7 = scalar_select 0, %s6, %s4
  // Predicated region
  $region2: #{_lambda_.36} parent=0 // pred_check
    _
  $region3: #{_lambda_.36} parent=0 // pred_check_branch
    %9 = sbr.rel (0) target = $region5
  $region4: #{_lambda_.36} parent=0 // pred_region
    _
  $region5: #{_lambda_.36} parent=0 // pred_fallthru
    _
  // Predicated region
  $region6: #{_lambda_.36} parent=0 // pred_check
    _
  $region7: #{_lambda_.36} parent=0 // pred_check_branch
    %11 = sbr.rel (0) target = $region9
  $region8: #{_lambda_.36} parent=0 // pred_region
    _
  $region9: #{_lambda_.36} parent=0 // pred_fallthru
    _
  // Predicated region
  $region10: #{_lambda_.36} parent=0 // pred_check
    _
  $region11: #{_lambda_.36} parent=0 // pred_check_branch
    %13 = sbr.rel (0) target = $region13
  $region12: #{_lambda_.36} parent=0 // pred_region
    _
  $region13: #{_lambda_.36} parent=0 // pred_fallthru
    _
  %p15 = scmp.eq.s32.totalorder 0, 0
  // Predicated region
  $region14: #{_lambda_.36} parent=0 // pred_check
    %p16 = pneg %p15
  $region15: #{_lambda_.36} parent=0 // pred_check_branch
    %18 = sbr.rel (%p16) target = $region17
  $region16: #{_lambda_.36} parent=0 // pred_region
    %19 = vst [vmem:[#allocation2] sm:$0xff] 0.0
    %20 = vst [vmem:[#allocation2 + $0x8] sm:$0xff] 0.0
    %21 = vst [vmem:[#allocation2 + $0x10] sm:$0xff] 0.0
    %22 = vst [vmem:[#allocation2 + $0x18] sm:$0xff] 0.0
  $region17: #{_lambda_.36} parent=0 // pred_fallthru
    _
  %v23 = vld [vmem:[#allocation2] sm:$0xff]
  %v24 = vld [vmem:[#allocation2 + $0x8] sm:$0xff]
  %v25 = vld [vmem:[#allocation2 + $0x10] sm:$0xff]
  %v26 = vld [vmem:[#allocation2 + $0x18] sm:$0xff]
  %v27 = vld [vmem:[%s0] sm:$0xf]
  %v28 = vld [vmem:[%s0 + $0x4] sm:$0xf]
  %v29 = vld [vmem:[%s0 + $0x8] sm:$0xf]
  %v30 = vld [vmem:[%s0 + $0xc] sm:$0xf]
  %v31 = vld [vmem:[%s1] sm:$0xf]
  %v32 = vld [vmem:[%s1 + $0x4] sm:$0xf]
  %v33 = vld [vmem:[%s1 + $0x8] sm:$0xf]
  %v34 = vld [vmem:[%s1 + $0xc] sm:$0xf]
  %v35 = vld [vmem:[%s1 + $0x10] sm:$0xf]
  %v36 = vld [vmem:[%s1 + $0x14] sm:$0xf]
  %v37 = vld [vmem:[%s1 + $0x18] sm:$0xf]
  %v38 = vld [vmem:[%s1 + $0x1c] sm:$0xf]
  %v39 = vld [vmem:[%s1 + $0x20] sm:$0xf]
  %v40 = vld [vmem:[%s1 + $0x24] sm:$0xf]
  %v41 = vld [vmem:[%s1 + $0x28] sm:$0xf]
  %v42 = vld [vmem:[%s1 + $0x2c] sm:$0xf]
  %v43 = vld [vmem:[%s1 + $0x30] sm:$0xf]
  %v44 = vld [vmem:[%s1 + $0x34] sm:$0xf]
  %v45 = vld [vmem:[%s1 + $0x38] sm:$0xf]
  %v46 = vld [vmem:[%s1 + $0x3c] sm:$0xf]
  %v51 = vunpack.c.l.b16 %v27
  %v52 = vunpack.c.l.b16 %v28
  %v53 = vunpack.c.l.b16 %v29
  %v54 = vunpack.c.l.b16 %v30
  %v55 = vpack.c.b16 %v52, %v51
  %v56 = vpack.c.b16 %v54, %v53
  %v75 = vunpack.c.l.b16 %v31
  %v76 = vunpack.c.l.b16 %v32
  %v77 = vunpack.c.l.b16 %v33
  %v78 = vunpack.c.l.b16 %v34
  %v79 = vunpack.c.l.b16 %v35
  %v80 = vunpack.c.l.b16 %v36
  %v81 = vunpack.c.l.b16 %v37
  %v82 = vunpack.c.l.b16 %v38
  %v83 = vunpack.c.l.b16 %v39
  %v84 = vunpack.c.l.b16 %v40
  %v85 = vunpack.c.l.b16 %v41
  %v86 = vunpack.c.l.b16 %v42
  %v87 = vunpack.c.l.b16 %v43
  %v88 = vunpack.c.l.b16 %v44
  %v89 = vunpack.c.l.b16 %v45
  %v90 = vunpack.c.l.b16 %v46
  %v91 = vpack.c.b16 %v76, %v75
  %v92 = vpack.c.b16 %v78, %v77
  %v93 = vpack.c.b16 %v80, %v79
  %v94 = vpack.c.b16 %v82, %v81
  %v95 = vpack.c.b16 %v84, %v83
  %v96 = vpack.c.b16 %v86, %v85
  %v97 = vpack.c.b16 %v88, %v87
  %v98 = vpack.c.b16 %v90, %v89
  %107 = vmatprep.subr.bf16.mxu0 0
  %108 = vmatpush1.bf16.msra.mxu0 %v98
  %109 = vmatprep.subr.bf16.mxu0 0
  %110 = vmatpush1.bf16.msra.mxu0 %v97
  %111 = vmatprep.subr.bf16.mxu0 0
  %112 = vmatpush1.bf16.msra.mxu0 %v96
  %113 = vmatprep.subr.bf16.mxu0 0
  %114 = vmatpush1.bf16.msra.mxu0 %v95
  %115 = vmatprep.subr.bf16.mxu0 0
  %116 = vmatpush1.bf16.msra.mxu0 %v94
  %117 = vmatprep.subr.bf16.mxu0 0
  %118 = vmatpush1.bf16.msra.mxu0 %v93
  %119 = vmatprep.subr.bf16.mxu0 0
  %120 = vmatpush1.bf16.msra.mxu0 %v92
  %121 = vmatprep.subr.bf16.mxu0 0
  %122 = vmatpush1.bf16.msra.mxu0 %v91
  %123 = vmatprep.subr.bf16.mxu0 0
  %124 = vmatpush2.bf16.msra.mxu0 0
  %125 = vmatprep.subr.bf16.mxu0 0
  %126 = vmatpush2.bf16.msra.mxu0 0
  %127 = vmatprep.subr.bf16.mxu0 0
  %128 = vmatpush2.bf16.msra.mxu0 0
  %129 = vmatprep.subr.bf16.mxu0 0
  %130 = vmatpush2.bf16.msra.mxu0 0
  %131 = vmatprep.subr.bf16.mxu0 0
  %132 = vmatpush2.bf16.msra.mxu0 0
  %133 = vmatprep.subr.bf16.mxu0 0
  %134 = vmatpush2.bf16.msra.mxu0 0
  %135 = vmatprep.subr.bf16.mxu0 0
  %136 = vmatpush2.bf16.msra.mxu0 0
  %137 = vmatprep.subr.bf16.mxu0 0
  %138 = vmatpush2.bf16.msra.mxu0 0
  %139 = vmatprep.mubr.bf16.mxu0 0
  %140 = vmatmul.mubr.bf16.gmra.mxu0 %v55
  %v141 = vpop.f32.mrf.mxu0
  %v142 = vadd.f32 0.0, %v141
  %v143 = vpop.f32.mrf.mxu0
  %v144 = vpop.f32.mrf.mxu0
  %v145 = vadd.f32 0.0, %v144
  %v146 = vpop.f32.mrf.mxu0
  %147 = vmatprep.mubr.bf16.mxu0 0
  %148 = vmatmul.mubr.bf16.gmra.mxu0 %v56
  %v149 = vpop.f32.mrf.mxu0
  %v150 = vadd.f32 0.0, %v149
  %v151 = vpop.f32.mrf.mxu0
  %v152 = vpop.f32.mrf.mxu0
  %v153 = vadd.f32 0.0, %v152
  %v154 = vpop.f32.mrf.mxu0
  %155 = vdwg.mxu0
  %v156 = vadd.f32 %v23, %v142
  %v157 = vadd.f32 %v24, %v145
  %v158 = vadd.f32 %v25, %v150
  %v159 = vadd.f32 %v26, %v153
  %160 = vst [vmem:[#allocation2] sm:$0xff] %v156
  %161 = vst [vmem:[#allocation2 + $0x8] sm:$0xff] %v157
  %162 = vst [vmem:[#allocation2 + $0x10] sm:$0xff] %v158
  %163 = vst [vmem:[#allocation2 + $0x18] sm:$0xff] %v159
  // Predicated region
  $region18: #{_lambda_.36} parent=0 // pred_check
    %p164 = pneg %p15
  $region19: #{_lambda_.36} parent=0 // pred_check_branch
    %166 = sbr.rel (%p164) target = $region21
  $region20: #{_lambda_.36} parent=0 // pred_region
    %v167 = vld [vmem:[#allocation2] sm:$0xff]
    %v168 = vld [vmem:[#allocation2 + $0x8] sm:$0xff]
    %v169 = vld [vmem:[#allocation2 + $0x10] sm:$0xff]
    %v170 = vld [vmem:[#allocation2 + $0x18] sm:$0xff]
    %v171 = vld [vmem:[%s2] sm:$0x1]
    %v173 = vlaneseq
    %v174 = vshrl.u32 %v173, 7
    %v175 = vsub.s32 0, %v174
    %v176 = vrot.slane %v171, %v175
    %v178 = vadd.f32 %v167, %v176
    %v179 = vadd.f32 %v168, %v176
    %v180 = vadd.f32 %v169, %v176
    %v181 = vadd.f32 %v170, %v176
    %v182 = vmax.f32 %v178, 0.0
    %v183 = vmax.f32 %v179, 0.0
    %v184 = vmax.f32 %v180, 0.0
    %v185 = vmax.f32 %v181, 0.0
    %v186 = vpack.c.bf16 %v183, %v182
    %v187 = vpack.c.bf16 %v185, %v184
    %v190 = vunpack.c.l.b16 %v186
    %v191 = vunpack.c.h.b16 %v186
    %v192 = vunpack.c.l.b16 %v187
    %v193 = vunpack.c.h.b16 %v187
    %v194 = vpack.c.b16 %v190, %v190
    %v195 = vpack.c.b16 %v191, %v191
    %v196 = vpack.c.b16 %v192, %v192
    %v197 = vpack.c.b16 %v193, %v193
    %202 = vst [vmem:[%s3] sm:$0xf] %v194
    %203 = vst [vmem:[%s3 + $0x4] sm:$0xf] %v195
    %204 = vst [vmem:[%s3 + $0x8] sm:$0xf] %v196
    %205 = vst [vmem:[%s3 + $0xc] sm:$0xf] %v197
  $region21: #{_lambda_.36} parent=0 // pred_fallthru
    _
  // Predicated region
  $region22: #{_lambda_.36} parent=0 // pred_check
    _
  $region23: #{_lambda_.36} parent=0 // pred_check_branch
    %207 = sbr.rel (0) target = $region25
  $region24: #{_lambda_.36} parent=0 // pred_region
    _
  $region25: #{_lambda_.36} parent=0 // pred_fallthru
    _
  // Predicated region
  $region26: #{_lambda_.36} parent=0 // pred_check
    _
  $region27: #{_lambda_.36} parent=0 // pred_check_branch
    %209 = sbr.rel (0) target = $region29
  $region28: #{_lambda_.36} parent=0 // pred_region
    _
  $region29: #{_lambda_.36} parent=0 // pred_fallthru
    _

// kernel: _lambda_.35
$region0: #{_lambda_.35}
  #allocation0 [shape = 'u32[]', space=smem, size = 0x4, offset = 0x4, fixed_abs, tag = 'smem constant byte address 0x4 - core index']
  #allocation1 [shape = 'u32[144,128]{1,0:T(1,128)}', space=vmem, size = 0x12000, scoped, tag = 'internal scratch']
  #allocation2 [shape = 'f32[32,128]{1,0:T(8,128)}', space=vmem, size = 0x4000, scoped, tag = 'scratch operand']
  %s0 = inlined_call_operand.vmem [shape: bf16[1,32,128], index: 0, kind: input, shape index: {}]
  %s1 = inlined_call_operand.vmem [shape: bf16[1,128,128], index: 1, kind: input, shape index: {}]
  %s2 = inlined_call_operand.vmem [shape: f32[1,128], index: 2, kind: input, shape index: {}]
  %s3 = inlined_call_operand.vmem [shape: bf16[32,128], index: 3, kind: input, shape index: {}]
  %s4 = inlined_call_operand.vmem [shape: bf16[32,128], index: 4, kind: output, shape index: {}]
  %s5 = sld [smem:[#allocation0]]
  $region34: #{_lambda_.35} parent=0
    _
  %s7 = ssub.s32 1, %s5
  %s8 = scalar_select 0, %s7, %s5
  // Predicated region
  $region2: #{_lambda_.35} parent=0 // pred_check
    _
  $region3: #{_lambda_.35} parent=0 // pred_check_branch
    %10 = sbr.rel (0) target = $region5
  $region4: #{_lambda_.35} parent=0 // pred_region
    _
  $region5: #{_lambda_.35} parent=0 // pred_fallthru
    _
  // Predicated region
  $region6: #{_lambda_.35} parent=0 // pred_check
    _
  $region7: #{_lambda_.35} parent=0 // pred_check_branch
    %12 = sbr.rel (0) target = $region9
  $region8: #{_lambda_.35} parent=0 // pred_region
    _
  $region9: #{_lambda_.35} parent=0 // pred_fallthru
    _
  // Predicated region
  $region10: #{_lambda_.35} parent=0 // pred_check
    _
  $region11: #{_lambda_.35} parent=0 // pred_check_branch
    %14 = sbr.rel (0) target = $region13
  $region12: #{_lambda_.35} parent=0 // pred_region
    _
  $region13: #{_lambda_.35} parent=0 // pred_fallthru
    _
  // Predicated region
  $region14: #{_lambda_.35} parent=0 // pred_check
    _
  $region15: #{_lambda_.35} parent=0 // pred_check_branch
    %16 = sbr.rel (0) target = $region17
  $region16: #{_lambda_.35} parent=0 // pred_region
    _
  $region17: #{_lambda_.35} parent=0 // pred_fallthru
    _
  %p18 = scmp.eq.s32.totalorder 0, 0
  // Predicated region
  $region18: #{_lambda_.35} parent=0 // pred_check
    %p19 = pneg %p18
  $region19: #{_lambda_.35} parent=0 // pred_check_branch
    %21 = sbr.rel (%p19) target = $region21
  $region20: #{_lambda_.35} parent=0 // pred_region
    %22 = vst [vmem:[#allocation2] sm:$0xff] 0.0
    %23 = vst [vmem:[#allocation2 + $0x8] sm:$0xff] 0.0
    %24 = vst [vmem:[#allocation2 + $0x10] sm:$0xff] 0.0
    %25 = vst [vmem:[#allocation2 + $0x18] sm:$0xff] 0.0
  $region21: #{_lambda_.35} parent=0 // pred_fallthru
    _
  %v26 = vld [vmem:[#allocation2] sm:$0xff]
  %v27 = vld [vmem:[#allocation2 + $0x8] sm:$0xff]
  %v28 = vld [vmem:[#allocation2 + $0x10] sm:$0xff]
  %v29 = vld [vmem:[#allocation2 + $0x18] sm:$0xff]
  %v30 = vld [vmem:[%s0] sm:$0xf]
  %v31 = vld [vmem:[%s0 + $0x4] sm:$0xf]
  %v32 = vld [vmem:[%s0 + $0x8] sm:$0xf]
  %v33 = vld [vmem:[%s0 + $0xc] sm:$0xf]
  %v34 = vld [vmem:[%s1] sm:$0xf]
  %v35 = vld [vmem:[%s1 + $0x4] sm:$0xf]
  %v36 = vld [vmem:[%s1 + $0x8] sm:$0xf]
  %v37 = vld [vmem:[%s1 + $0xc] sm:$0xf]
  %v38 = vld [vmem:[%s1 + $0x10] sm:$0xf]
  %v39 = vld [vmem:[%s1 + $0x14] sm:$0xf]
  %v40 = vld [vmem:[%s1 + $0x18] sm:$0xf]
  %v41 = vld [vmem:[%s1 + $0x1c] sm:$0xf]
  %v42 = vld [vmem:[%s1 + $0x20] sm:$0xf]
  %v43 = vld [vmem:[%s1 + $0x24] sm:$0xf]
  %v44 = vld [vmem:[%s1 + $0x28] sm:$0xf]
  %v45 = vld [vmem:[%s1 + $0x2c] sm:$0xf]
  %v46 = vld [vmem:[%s1 + $0x30] sm:$0xf]
  %v47 = vld [vmem:[%s1 + $0x34] sm:$0xf]
  %v48 = vld [vmem:[%s1 + $0x38] sm:$0xf]
  %v49 = vld [vmem:[%s1 + $0x3c] sm:$0xf]
  %v54 = vunpack.c.l.b16 %v30
  %v55 = vunpack.c.l.b16 %v31
  %v56 = vunpack.c.l.b16 %v32
  %v57 = vunpack.c.l.b16 %v33
  %v58 = vpack.c.b16 %v55, %v54
  %v59 = vpack.c.b16 %v57, %v56
  %v78 = vunpack.c.l.b16 %v34
  %v79 = vunpack.c.l.b16 %v35
  %v80 = vunpack.c.l.b16 %v36
  %v81 = vunpack.c.l.b16 %v37
  %v82 = vunpack.c.l.b16 %v38
  %v83 = vunpack.c.l.b16 %v39
  %v84 = vunpack.c.l.b16 %v40
  %v85 = vunpack.c.l.b16 %v41
  %v86 = vunpack.c.l.b16 %v42
  %v87 = vunpack.c.l.b16 %v43
  %v88 = vunpack.c.l.b16 %v44
  %v89 = vunpack.c.l.b16 %v45
  %v90 = vunpack.c.l.b16 %v46
  %v91 = vunpack.c.l.b16 %v47
  %v92 = vunpack.c.l.b16 %v48
  %v93 = vunpack.c.l.b16 %v49
  %v94 = vpack.c.b16 %v79, %v78
  %v95 = vpack.c.b16 %v81, %v80
  %v96 = vpack.c.b16 %v83, %v82
  %v97 = vpack.c.b16 %v85, %v84
  %v98 = vpack.c.b16 %v87, %v86
  %v99 = vpack.c.b16 %v89, %v88
  %v100 = vpack.c.b16 %v91, %v90
  %v101 = vpack.c.b16 %v93, %v92
  %110 = vmatprep.subr.bf16.mxu0 0
  %111 = vmatpush1.bf16.msra.mxu0 %v101
  %112 = vmatprep.subr.bf16.mxu0 0
  %113 = vmatpush1.bf16.msra.mxu0 %v100
  %114 = vmatprep.subr.bf16.mxu0 0
  %115 = vmatpush1.bf16.msra.mxu0 %v99
  %116 = vmatprep.subr.bf16.mxu0 0
  %117 = vmatpush1.bf16.msra.mxu0 %v98
  %118 = vmatprep.subr.bf16.mxu0 0
  %119 = vmatpush1.bf16.msra.mxu0 %v97
  %120 = vmatprep.subr.bf16.mxu0 0
  %121 = vmatpush1.bf16.msra.mxu0 %v96
  %122 = vmatprep.subr.bf16.mxu0 0
  %123 = vmatpush1.bf16.msra.mxu0 %v95
  %124 = vmatprep.subr.bf16.mxu0 0
  %125 = vmatpush1.bf16.msra.mxu0 %v94
  %126 = vmatprep.subr.bf16.mxu0 0
  %127 = vmatpush2.bf16.msra.mxu0 0
  %128 = vmatprep.subr.bf16.mxu0 0
  %129 = vmatpush2.bf16.msra.mxu0 0
  %130 = vmatprep.subr.bf16.mxu0 0
  %131 = vmatpush2.bf16.msra.mxu0 0
  %132 = vmatprep.subr.bf16.mxu0 0
  %133 = vmatpush2.bf16.msra.mxu0 0
  %134 = vmatprep.subr.bf16.mxu0 0
  %135 = vmatpush2.bf16.msra.mxu0 0
  %136 = vmatprep.subr.bf16.mxu0 0
  %137 = vmatpush2.bf16.msra.mxu0 0
  %138 = vmatprep.subr.bf16.mxu0 0
  %139 = vmatpush2.bf16.msra.mxu0 0
  %140 = vmatprep.subr.bf16.mxu0 0
  %141 = vmatpush2.bf16.msra.mxu0 0
  %142 = vmatprep.mubr.bf16.mxu0 0
  %143 = vmatmul.mubr.bf16.gmra.mxu0 %v58
  %v144 = vpop.f32.mrf.mxu0
  %v145 = vadd.f32 0.0, %v144
  %v146 = vpop.f32.mrf.mxu0
  %v147 = vpop.f32.mrf.mxu0
  %v148 = vadd.f32 0.0, %v147
  %v149 = vpop.f32.mrf.mxu0
  %150 = vmatprep.mubr.bf16.mxu0 0
  %151 = vmatmul.mubr.bf16.gmra.mxu0 %v59
  %v152 = vpop.f32.mrf.mxu0
  %v153 = vadd.f32 0.0, %v152
  %v154 = vpop.f32.mrf.mxu0
  %v155 = vpop.f32.mrf.mxu0
  %v156 = vadd.f32 0.0, %v155
  %v157 = vpop.f32.mrf.mxu0
  %158 = vdwg.mxu0
  %v159 = vadd.f32 %v26, %v145
  %v160 = vadd.f32 %v27, %v148
  %v161 = vadd.f32 %v28, %v153
  %v162 = vadd.f32 %v29, %v156
  %163 = vst [vmem:[#allocation2] sm:$0xff] %v159
  %164 = vst [vmem:[#allocation2 + $0x8] sm:$0xff] %v160
  %165 = vst [vmem:[#allocation2 + $0x10] sm:$0xff] %v161
  %166 = vst [vmem:[#allocation2 + $0x18] sm:$0xff] %v162
  // Predicated region
  $region22: #{_lambda_.35} parent=0 // pred_check
    %p167 = pneg %p18
  $region23: #{_lambda_.35} parent=0 // pred_check_branch
    %169 = sbr.rel (%p167) target = $region25
  $region24: #{_lambda_.35} parent=0 // pred_region
    %v170 = vld [vmem:[#allocation2] sm:$0xff]
    %v171 = vld [vmem:[#allocation2 + $0x8] sm:$0xff]
    %v172 = vld [vmem:[#allocation2 + $0x10] sm:$0xff]
    %v173 = vld [vmem:[#allocation2 + $0x18] sm:$0xff]
    %v174 = vld [vmem:[%s2] sm:$0x1]
    %v176 = vlaneseq
    %v177 = vshrl.u32 %v176, 7
    %v178 = vsub.s32 0, %v177
    %v179 = vrot.slane %v174, %v178
    %v181 = vadd.f32 %v170, %v179
    %v182 = vadd.f32 %v171, %v179
    %v183 = vadd.f32 %v172, %v179
    %v184 = vadd.f32 %v173, %v179
    %v185 = vld [vmem:[%s3] sm:$0xf]
    %v186 = vld [vmem:[%s3 + $0x4] sm:$0xf]
    %v187 = vld [vmem:[%s3 + $0x8] sm:$0xf]
    %v188 = vld [vmem:[%s3 + $0xc] sm:$0xf]
    %v189 = vunpack.c.l.bf16 %v185
    %v190 = vunpack.c.l.bf16 %v186
    %v191 = vunpack.c.l.bf16 %v187
    %v192 = vunpack.c.l.bf16 %v188
    %v193 = vadd.f32 %v181, %v189
    %v194 = vadd.f32 %v182, %v190
    %v195 = vadd.f32 %v183, %v191
    %v196 = vadd.f32 %v184, %v192
    %v197 = vmax.f32 %v193, 0.0
    %v198 = vmax.f32 %v194, 0.0
    %v199 = vmax.f32 %v195, 0.0
    %v200 = vmax.f32 %v196, 0.0
    %v201 = vpack.c.bf16 %v198, %v197
    %v202 = vpack.c.bf16 %v200, %v199
    %v205 = vunpack.c.l.b16 %v201
    %v206 = vunpack.c.h.b16 %v201
    %v207 = vunpack.c.l.b16 %v202
    %v208 = vunpack.c.h.b16 %v202
    %v209 = vpack.c.b16 %v205, %v205
    %v210 = vpack.c.b16 %v206, %v206
    %v211 = vpack.c.b16 %v207, %v207
    %v212 = vpack.c.b16 %v208, %v208
    %217 = vst [vmem:[%s4] sm:$0xf] %v209
    %218 = vst [vmem:[%s4 + $0x4] sm:$0xf] %v210
    %219 = vst [vmem:[%s4 + $0x8] sm:$0xf] %v211
    %220 = vst [vmem:[%s4 + $0xc] sm:$0xf] %v212
  $region25: #{_lambda_.35} parent=0 // pred_fallthru
    _
  // Predicated region
  $region26: #{_lambda_.35} parent=0 // pred_check
    _
  $region27: #{_lambda_.35} parent=0 // pred_check_branch
    %222 = sbr.rel (0) target = $region29
  $region28: #{_lambda_.35} parent=0 // pred_region
    _
  $region29: #{_lambda_.35} parent=0 // pred_fallthru
    _
  // Predicated region
  $region30: #{_lambda_.35} parent=0 // pred_check
    _
  $region31: #{_lambda_.35} parent=0 // pred_check_branch
    %224 = sbr.rel (0) target = $region33
  $region32: #{_lambda_.35} parent=0 // pred_region
    _
  $region33: #{_lambda_.35} parent=0 // pred_fallthru
    _

// kernel: _lambda_.33
$region0: #{_lambda_.33}
  #allocation0 [shape = 'u32[]', space=smem, size = 0x4, offset = 0x4, fixed_abs, tag = 'smem constant byte address 0x4 - core index']
  #allocation1 [shape = 'u32[144,128]{1,0:T(1,128)}', space=vmem, size = 0x12000, scoped, tag = 'internal scratch']
  #allocation2 [shape = 'f32[32,128]{1,0:T(8,128)}', space=vmem, size = 0x4000, scoped, tag = 'scratch operand']
  %s0 = inlined_call_operand.vmem [shape: bf16[9,32,128], index: 0, kind: input, shape index: {}]
  %s1 = inlined_call_operand.vmem [shape: bf16[9,128,128], index: 1, kind: input, shape index: {}]
  %s2 = inlined_call_operand.vmem [shape: f32[1,128], index: 2, kind: input, shape index: {}]
  %s3 = inlined_call_operand.vmem [shape: bf16[32,128], index: 3, kind: output, shape index: {}]
  %s4 = sld [smem:[#allocation0]]
  $region53: #{_lambda_.33} parent=0
    _
  %s6 = ssub.s32 1, %s4
  %s7 = scalar_select 0, %s6, %s4
  loop: start=0, step=1, limit=11
  $region2: #{_lambda_.33} parent=0 // loop_pre_header
    _
  $region3: #{_lambda_.33} parent=0 // loop_header
    %s9 = sphi 0, %s13
    %p10 = scmp.ge.s32.totalorder %s9, 11
    %s16 = sphi 0, %s28
    %s17 = sphi 0, %s24
    %s18 = sphi 0, %s16
    %s19 = sphi 0, %s17
    %s20 = sphi 0, %s18
    %s21 = sphi 0, %s19
    %s33 = sphi 0, %s35
    %s36 = sphi 0, %s33
    %s37 = sphi 0, %s36
    %s53 = sphi 0, %s37
    %s59 = sphi 0, %s61
    %s62 = sphi 0, %s59
    %s63 = sphi 0, %s62
    %s79 = sphi 0, %s63
    %s83 = sphi 0, %s83
    %s85 = sphi 0, %s83
    %s86 = sphi 0, %s85
    %s100 = sphi 0, %s86
    %s106 = sphi 0, %s108
    %s109 = sphi 0, %s106
    %s110 = sphi 0, %s109
    %s126 = sphi 0, %s110
  $region4: #{_lambda_.33} parent=0 // loop_header_branch
    %12 = sbr.rel (%p10) target = $region8
  $region5: #{_lambda_.33} parent=0 // loop_body
    %s14 = ssub.s32 %s9, 1
    %s15 = ssub.s32 %s9, 2
    %s22 = sadd.s32 1, %s17
    %p23 = scmp.ge.s32.totalorder %s22, 9
    %s24 = scalar_select %p23, 0, %s22
    %s25 = sadd.s32 1, %s16
    %s26 = scalar_select %p23, %s25, %s16
    %p27 = scmp.ge.s32.totalorder %s26, 1
    %s28 = scalar_select %p27, 0, %s26
    %s29 = ssub.s32 %s17, %s24
    %s30 = ssub.s32 %s16, %s28
    %s31 = sor.u32 %s29, %s30
    %p32 = scmp.eq.s32.totalorder %s31, 0
    %s34 = sadd.s32 %s33, 1
    %s35 = scalar_select %p32, %s33, %s34
    %p38 = pneg %p32
    %p39 = scmp.eq.s32.totalorder %s9, 8
    %p40 = por %p38, %p39
    %p41 = scmp.ne.s32.totalorder %s33, %s36
    %p42 = scmp.eq.s32.totalorder %s9, 0
    %p43 = por %p41, %p42
    %p44 = scmp.ne.s32.totalorder %s33, %s36
    %p45 = scmp.eq.s32.totalorder %s14, 8
    %p46 = por %p44, %p45
    %p47 = scmp.ne.s32.totalorder %s36, %s37
    %p48 = scmp.eq.s32.totalorder %s14, 0
    %p49 = por %p47, %p48
    %p50 = scmp.ne.s32.totalorder %s36, %s37
    %p51 = scmp.eq.s32.totalorder %s15, 8
    %p52 = por %p50, %p51
    %p54 = scmp.ne.s32.totalorder %s37, %s53
    %p55 = scmp.eq.s32.totalorder %s15, 0
    %p56 = por %p54, %p55
    %s57 = ssub.s32 %s17, %s24
    %p58 = scmp.eq.s32.totalorder %s57, 0
    %s60 = sadd.s32 %s59, 1
    %s61 = scalar_select %p58, %s59, %s60
    %p64 = pneg %p58
    %p65 = scmp.eq.s32.totalorder %s9, 8
    %p66 = por %p64, %p65
    %p67 = scmp.ne.s32.totalorder %s59, %s62
    %p68 = scmp.eq.s32.totalorder %s9, 0
    %p69 = por %p67, %p68
    %p70 = scmp.ne.s32.totalorder %s59, %s62
    %p71 = scmp.eq.s32.totalorder %s14, 8
    %p72 = por %p70, %p71
    %p73 = scmp.ne.s32.totalorder %s62, %s63
    %p74 = scmp.eq.s32.totalorder %s14, 0
    %p75 = por %p73, %p74
    %p76 = scmp.ne.s32.totalorder %s62, %s63
    %p77 = scmp.eq.s32.totalorder %s15, 8
    %p78 = por %p76, %p77
    %p80 = scmp.ne.s32.totalorder %s63, %s79
    %p81 = scmp.eq.s32.totalorder %s15, 0
    %p82 = por %p80, %p81
    %s84 = sadd.s32 %s83, 1
    %p87 = scmp.eq.s32.totalorder %s9, 8
    %p88 = scmp.ne.s32.totalorder %s83, %s85
    %p89 = scmp.eq.s32.totalorder %s9, 0
    %p90 = por %p88, %p89
    %p91 = scmp.ne.s32.totalorder %s83, %s85
    %p92 = scmp.eq.s32.totalorder %s14, 8
    %p93 = por %p91, %p92
    %p94 = scmp.ne.s32.totalorder %s85, %s86
    %p95 = scmp.eq.s32.totalorder %s14, 0
    %p96 = por %p94, %p95
    %p97 = scmp.ne.s32.totalorder %s85, %s86
    %p98 = scmp.eq.s32.totalorder %s15, 8
    %p99 = por %p97, %p98
    %p101 = scmp.ne.s32.totalorder %s86, %s100
    %p102 = scmp.eq.s32.totalorder %s15, 0
    %p103 = por %p101, %p102
    %s104 = ssub.s32 %s16, %s28
    %p105 = scmp.eq.s32.totalorder %s104, 0
    %s107 = sadd.s32 %s106, 1
    %s108 = scalar_select %p105, %s106, %s107
    %p111 = pneg %p105
    %p112 = scmp.eq.s32.totalorder %s9, 8
    %p113 = por %p111, %p112
    %p114 = scmp.ne.s32.totalorder %s106, %s109
    %p115 = scmp.eq.s32.totalorder %s9, 0
    %p116 = por %p114, %p115
    %p117 = scmp.ne.s32.totalorder %s106, %s109
    %p118 = scmp.eq.s32.totalorder %s14, 8
    %p119 = por %p117, %p118
    %p120 = scmp.ne.s32.totalorder %s109, %s110
    %p121 = scmp.eq.s32.totalorder %s14, 0
    %p122 = por %p120, %p121
    %p123 = scmp.ne.s32.totalorder %s109, %s110
    %p124 = scmp.eq.s32.totalorder %s15, 8
    %p125 = por %p123, %p124
    %p127 = scmp.ne.s32.totalorder %s110, %s126
    %p128 = scmp.eq.s32.totalorder %s15, 0
    %p129 = por %p127, %p128
    %p130 = scmp.le.s32.totalorder 1, %s9
    %p131 = scmp.lt.s32.totalorder %s9, 10
    %p132 = pnand %p130, %p131
    %p133 = pneg %p132
    // Predicated region
    $region9: #{_lambda_.33} parent=5 // pred_check
      _
    $region10: #{_lambda_.33} parent=5 // pred_check_branch
      %135 = sbr.rel (%p132) target = $region12
    $region11: #{_lambda_.33} parent=5 // pred_region
      %s136 = ssub.s32 %s9, 1
      // Predicated region
      $region13: #{_lambda_.33} parent=11 // pred_check
        %p137 = pneg %p96
      $region14: #{_lambda_.33} parent=11 // pred_check_branch
        %139 = sbr.rel (%p137) target = $region16
      $region15: #{_lambda_.33} parent=11 // pred_region
        _
      $region16: #{_lambda_.33} parent=11 // pred_fallthru
        _
    $region12: #{_lambda_.33} parent=5 // pred_fallthru
      _
    %p140 = scmp.lt.s32.totalorder %s9, 9
    // Predicated region
    $region17: #{_lambda_.33} parent=5 // pred_check
      %p141 = pneg %p140
    $region18: #{_lambda_.33} parent=5 // pred_check_branch
      %143 = sbr.rel (%p141) target = $region20
    $region19: #{_lambda_.33} parent=5 // pred_region
      // Predicated region
      $region21: #{_lambda_.33} parent=19 // pred_check
        %p144 = pneg %p43
      $region22: #{_lambda_.33} parent=19 // pred_check_branch
        %146 = sbr.rel (%p144) target = $region24
      $region23: #{_lambda_.33} parent=19 // pred_region
        %s147 = smul.u32 4, %s16
        %p148 = scmp.lt.s32.totalorder %s17, 8
        %s149 = scalar_select %p148, %s17, 8
        %p150 = scmp.lt.s32.totalorder %s147, 3
        %s151 = scalar_select %p150, %s147, 3
        %s152 = smul.addr %s149, 4
        %s153 = sadd.s32 %s151, %s152
        %s154 = smul.addr %s153, 4
        %s155 = scalar_lea.vmem %s0, %s154
        %s156 = smul.u32 4, %s16
      $region24: #{_lambda_.33} parent=19 // pred_fallthru
        _
      // Predicated region
      $region25: #{_lambda_.33} parent=19 // pred_check
        %p157 = pneg %p69
      $region26: #{_lambda_.33} parent=19 // pred_check_branch
        %159 = sbr.rel (%p157) target = $region28
      $region27: #{_lambda_.33} parent=19 // pred_region
        %p160 = scmp.lt.s32.totalorder %s17, 8
        %s161 = scalar_select %p160, %s17, 8
        %s162 = smul.addr %s161, 16
        %s163 = smul.addr %s162, 4
        %s164 = scalar_lea.vmem %s1, %s163
      $region28: #{_lambda_.33} parent=19 // pred_fallthru
        _
    $region20: #{_lambda_.33} parent=5 // pred_fallthru
      _
    %p165 = scmp.le.s32.totalorder 1, %s9
    %p166 = scmp.lt.s32.totalorder %s9, 10
    %p167 = pnand %p165, %p166
    %p168 = pneg %p167
    // Predicated region
    $region29: #{_lambda_.33} parent=5 // pred_check
      _
    $region30: #{_lambda_.33} parent=5 // pred_check_branch
      %170 = sbr.rel (%p167) target = $region32
    $region31: #{_lambda_.33} parent=5 // pred_region
      %s171 = ssub.s32 %s9, 1
      %s172 = smul.u32 4, %s18
      %p173 = scmp.lt.s32.totalorder %s19, 8
      %s174 = scalar_select %p173, %s19, 8
      %p175 = scmp.lt.s32.totalorder %s172, 3
      %s176 = scalar_select %p175, %s172, 3
      %s177 = smul.addr %s174, 4
      %s178 = sadd.s32 %s176, %s177
      %s179 = smul.addr %s178, 4
      %s180 = scalar_lea.vmem %s0, %s179
      %p181 = pneg %p49
      %p182 = pneg %p46
      %p183 = scmp.lt.s32.totalorder %s19, 8
      %s184 = scalar_select %p183, %s19, 8
      %s185 = smul.addr %s184, 16
      %s186 = smul.addr %s185, 4
      %s187 = scalar_lea.vmem %s1, %s186
      %p188 = pneg %p75
      %p189 = pneg %p72
      %p190 = pneg %p96
      %p191 = pneg %p93
      %p192 = pneg %p122
      %p193 = pneg %p119
      %s194 = smul.u32 4, %s18
      %p195 = scmp.lt.s32.totalorder %s194, 3
      %s196 = scalar_select %p195, %s194, 3
      %s197 = smul.addr %s196, 4
      %s198 = scalar_lea.vmem %s3, %s197
      %s199 = smul.u32 4, %s18
      %p200 = scmp.lt.s32.totalorder %s19, 8
      %s201 = scalar_select %p200, %s19, 8
      %p202 = scmp.lt.s32.totalorder %s199, 3
      %s203 = scalar_select %p202, %s199, 3
      %s204 = smul.addr %s201, 4
      %s205 = sadd.s32 %s203, %s204
      %s206 = smul.addr %s205, 4
      %s207 = scalar_lea.vmem %s0, %s206
      %s208 = smul.u32 4, %s18
      %p209 = scmp.lt.s32.totalorder %s19, 8
      %s210 = scalar_select %p209, %s19, 8
      %s211 = smul.addr %s210, 16
      %s212 = smul.addr %s211, 4
      %s213 = scalar_lea.vmem %s1, %s212
      %s214 = smul.u32 4, %s18
      %p215 = scmp.lt.s32.totalorder %s214, 3
      %s216 = scalar_select %p215, %s214, 3
      %s217 = smul.addr %s216, 4
      %s218 = scalar_lea.vmem %s3, %s217
      %s219 = smul.u32 4, %s18
      %p221 = scmp.eq.s32.totalorder %s19, 0
      // Predicated region
      $region33: #{_lambda_.33} parent=31 // pred_check
        %p222 = pneg %p221
      $region34: #{_lambda_.33} parent=31 // pred_check_branch
        %224 = sbr.rel (%p222) target = $region36
      $region35: #{_lambda_.33} parent=31 // pred_region
        %225 = vst [vmem:[#allocation2] sm:$0xff] 0.0
        %226 = vst [vmem:[#allocation2 + $0x8] sm:$0xff] 0.0
        %227 = vst [vmem:[#allocation2 + $0x10] sm:$0xff] 0.0
        %228 = vst [vmem:[#allocation2 + $0x18] sm:$0xff] 0.0
      $region36: #{_lambda_.33} parent=31 // pred_fallthru
        _
      %v229 = vld [vmem:[#allocation2] sm:$0xff]
      %v230 = vld [vmem:[#allocation2 + $0x8] sm:$0xff]
      %v231 = vld [vmem:[#allocation2 + $0x10] sm:$0xff]
      %v232 = vld [vmem:[#allocation2 + $0x18] sm:$0xff]
      %v233 = vld [vmem:[%s207] sm:$0xf]
      %v234 = vld [vmem:[%s207 + $0x4] sm:$0xf]
      %v235 = vld [vmem:[%s207 + $0x8] sm:$0xf]
      %v236 = vld [vmem:[%s207 + $0xc] sm:$0xf]
      %v237 = vld [vmem:[%s213] sm:$0xf]
      %v238 = vld [vmem:[%s213 + $0x4] sm:$0xf]
      %v239 = vld [vmem:[%s213 + $0x8] sm:$0xf]
      %v240 = vld [vmem:[%s213 + $0xc] sm:$0xf]
      %v241 = vld [vmem:[%s213 + $0x10] sm:$0xf]
      %v242 = vld [vmem:[%s213 + $0x14] sm:$0xf]
      %v243 = vld [vmem:[%s213 + $0x18] sm:$0xf]
      %v244 = vld [vmem:[%s213 + $0x1c] sm:$0xf]
      %v245 = vld [vmem:[%s213 + $0x20] sm:$0xf]
      %v246 = vld [vmem:[%s213 + $0x24] sm:$0xf]
      %v247 = vld [vmem:[%s213 + $0x28] sm:$0xf]
      %v248 = vld [vmem:[%s213 + $0x2c] sm:$0xf]
      %v249 = vld [vmem:[%s213 + $0x30] sm:$0xf]
      %v250 = vld [vmem:[%s213 + $0x34] sm:$0xf]
      %v251 = vld [vmem:[%s213 + $0x38] sm:$0xf]
      %v252 = vld [vmem:[%s213 + $0x3c] sm:$0xf]
      %v257 = vunpack.c.l.b16 %v233
      %v258 = vunpack.c.l.b16 %v234
      %v259 = vunpack.c.l.b16 %v235
      %v260 = vunpack.c.l.b16 %v236
      %v261 = vpack.c.b16 %v258, %v257
      %v262 = vpack.c.b16 %v260, %v259
      %v281 = vunpack.c.l.b16 %v237
      %v282 = vunpack.c.l.b16 %v238
      %v283 = vunpack.c.l.b16 %v239
      %v284 = vunpack.c.l.b16 %v240
      %v285 = vunpack.c.l.b16 %v241
      %v286 = vunpack.c.l.b16 %v242
      %v287 = vunpack.c.l.b16 %v243
      %v288 = vunpack.c.l.b16 %v244
      %v289 = vunpack.c.l.b16 %v245
      %v290 = vunpack.c.l.b16 %v246
      %v291 = vunpack.c.l.b16 %v247
      %v292 = vunpack.c.l.b16 %v248
      %v293 = vunpack.c.l.b16 %v249
      %v294 = vunpack.c.l.b16 %v250
      %v295 = vunpack.c.l.b16 %v251
      %v296 = vunpack.c.l.b16 %v252
      %v297 = vpack.c.b16 %v282, %v281
      %v298 = vpack.c.b16 %v284, %v283
      %v299 = vpack.c.b16 %v286, %v285
      %v300 = vpack.c.b16 %v288, %v287
      %v301 = vpack.c.b16 %v290, %v289
      %v302 = vpack.c.b16 %v292, %v291
      %v303 = vpack.c.b16 %v294, %v293
      %v304 = vpack.c.b16 %v296, %v295
      %313 = vmatprep.subr.bf16.mxu0 0
      %314 = vmatpush1.bf16.msra.mxu0 %v304
      %315 = vmatprep.subr.bf16.mxu0 0
      %316 = vmatpush1.bf16.msra.mxu0 %v303
      %317 = vmatprep.subr.bf16.mxu0 0
      %318 = vmatpush1.bf16.msra.mxu0 %v302
      %319 = vmatprep.subr.bf16.mxu0 0
      %320 = vmatpush1.bf16.msra.mxu0 %v301
      %321 = vmatprep.subr.bf16.mxu0 0
      %322 = vmatpush1.bf16.msra.mxu0 %v300
      %323 = vmatprep.subr.bf16.mxu0 0
      %324 = vmatpush1.bf16.msra.mxu0 %v299
      %325 = vmatprep.subr.bf16.mxu0 0
      %326 = vmatpush1.bf16.msra.mxu0 %v298
      %327 = vmatprep.subr.bf16.mxu0 0
      %328 = vmatpush1.bf16.msra.mxu0 %v297
      %329 = vmatprep.subr.bf16.mxu0 0
      %330 = vmatpush2.bf16.msra.mxu0 0
      %331 = vmatprep.subr.bf16.mxu0 0
      %332 = vmatpush2.bf16.msra.mxu0 0
      %333 = vmatprep.subr.bf16.mxu0 0
      %334 = vmatpush2.bf16.msra.mxu0 0
      %335 = vmatprep.subr.bf16.mxu0 0
      %336 = vmatpush2.bf16.msra.mxu0 0
      %337 = vmatprep.subr.bf16.mxu0 0
      %338 = vmatpush2.bf16.msra.mxu0 0
      %339 = vmatprep.subr.bf16.mxu0 0
      %340 = vmatpush2.bf16.msra.mxu0 0
      %341 = vmatprep.subr.bf16.mxu0 0
      %342 = vmatpush2.bf16.msra.mxu0 0
      %343 = vmatprep.subr.bf16.mxu0 0
      %344 = vmatpush2.bf16.msra.mxu0 0
      %345 = vmatprep.mubr.bf16.mxu0 0
      %346 = vmatmul.mubr.bf16.gmra.mxu0 %v261
      %v347 = vpop.f32.mrf.mxu0
      %v348 = vadd.f32 0.0, %v347
      %v349 = vpop.f32.mrf.mxu0
      %v350 = vpop.f32.mrf.mxu0
      %v351 = vadd.f32 0.0, %v350
      %v352 = vpop.f32.mrf.mxu0
      %353 = vmatprep.mubr.bf16.mxu0 0
      %354 = vmatmul.mubr.bf16.gmra.mxu0 %v262
      %v355 = vpop.f32.mrf.mxu0
      %v356 = vadd.f32 0.0, %v355
      %v357 = vpop.f32.mrf.mxu0
      %v358 = vpop.f32.mrf.mxu0
      %v359 = vadd.f32 0.0, %v358
      %v360 = vpop.f32.mrf.mxu0
      %361 = vdwg.mxu0
      %v362 = vadd.f32 %v229, %v348
      %v363 = vadd.f32 %v230, %v351
      %v364 = vadd.f32 %v231, %v356
      %v365 = vadd.f32 %v232, %v359
      %366 = vst [vmem:[#allocation2] sm:$0xff] %v362
      %367 = vst [vmem:[#allocation2 + $0x8] sm:$0xff] %v363
      %368 = vst [vmem:[#allocation2 + $0x10] sm:$0xff] %v364
      %369 = vst [vmem:[#allocation2 + $0x18] sm:$0xff] %v365
      %p370 = scmp.eq.s32.totalorder %s19, 8
      // Predicated region
      $region37: #{_lambda_.33} parent=31 // pred_check
        %p371 = pneg %p370
      $region38: #{_lambda_.33} parent=31 // pred_check_branch
        %373 = sbr.rel (%p371) target = $region40
      $region39: #{_lambda_.33} parent=31 // pred_region
        %v374 = vld [vmem:[#allocation2] sm:$0xff]
        %v375 = vld [vmem:[#allocation2 + $0x8] sm:$0xff]
        %v376 = vld [vmem:[#allocation2 + $0x10] sm:$0xff]
        %v377 = vld [vmem:[#allocation2 + $0x18] sm:$0xff]
        %v378 = vld [vmem:[%s2] sm:$0x1]
        %v380 = vlaneseq
        %v381 = vshrl.u32 %v380, 7
        %v382 = vsub.s32 0, %v381
        %v383 = vrot.slane %v378, %v382
        %v385 = vadd.f32 %v374, %v383
        %v386 = vadd.f32 %v375, %v383
        %v387 = vadd.f32 %v376, %v383
        %v388 = vadd.f32 %v377, %v383
        %v389 = vmax.f32 %v385, 0.0
        %v390 = vmax.f32 %v386, 0.0
        %v391 = vmax.f32 %v387, 0.0
        %v392 = vmax.f32 %v388, 0.0
        %v393 = vpack.c.bf16 %v390, %v389
        %v394 = vpack.c.bf16 %v392, %v391
        %v397 = vunpack.c.l.b16 %v393
        %v398 = vunpack.c.h.b16 %v393
        %v399 = vunpack.c.l.b16 %v394
        %v400 = vunpack.c.h.b16 %v394
        %v401 = vpack.c.b16 %v397, %v397
        %v402 = vpack.c.b16 %v398, %v398
        %v403 = vpack.c.b16 %v399, %v399
        %v404 = vpack.c.b16 %v400, %v400
        %409 = vst [vmem:[%s218] sm:$0xf] %v401
        %410 = vst [vmem:[%s218 + $0x4] sm:$0xf] %v402
        %411 = vst [vmem:[%s218 + $0x8] sm:$0xf] %v403
        %412 = vst [vmem:[%s218 + $0xc] sm:$0xf] %v404
      $region40: #{_lambda_.33} parent=31 // pred_fallthru
        _
      %s413 = smul.u32 4, %s18
      %p414 = scmp.lt.s32.totalorder %s413, 3
      %s415 = scalar_select %p414, %s413, 3
      %s416 = smul.addr %s415, 4
      %s417 = scalar_lea.vmem %s3, %s416
      // Predicated region
      $region41: #{_lambda_.33} parent=31 // pred_check
        %p418 = pneg %p119
      $region42: #{_lambda_.33} parent=31 // pred_check_branch
        %420 = sbr.rel (%p418) target = $region44
      $region43: #{_lambda_.33} parent=31 // pred_region
        %s421 = smul.u32 4, %s18
      $region44: #{_lambda_.33} parent=31 // pred_fallthru
        _
      // Predicated region
      $region45: #{_lambda_.33} parent=31 // pred_check
        %p422 = pneg %p119
      $region46: #{_lambda_.33} parent=31 // pred_check_branch
        %424 = sbr.rel (%p422) target = $region48
      $region47: #{_lambda_.33} parent=31 // pred_region
        %s425 = smul.u32 4, %s18
        %p426 = scmp.lt.s32.totalorder %s425, 3
        %s427 = scalar_select %p426, %s425, 3
        %s428 = smul.addr %s427, 4
        %s429 = scalar_lea.vmem %s3, %s428
      $region48: #{_lambda_.33} parent=31 // pred_fallthru
        _
    $region32: #{_lambda_.33} parent=5 // pred_fallthru
      _
    %p430 = scmp.le.s32.totalorder 2, %s9
    // Predicated region
    $region49: #{_lambda_.33} parent=5 // pred_check
      %p431 = pneg %p430
    $region50: #{_lambda_.33} parent=5 // pred_check_branch
      %433 = sbr.rel (%p431) target = $region52
    $region51: #{_lambda_.33} parent=5 // pred_region
      %s434 = ssub.s32 %s9, 2
    $region52: #{_lambda_.33} parent=5 // pred_fallthru
      _
  $region6: #{_lambda_.33} parent=0 // loop_footer
    %s13 = sadd.s32 1, %s9
  $region7: #{_lambda_.33} parent=0 // loop_footer_branch
    %8 = sbr.rel target = $region3
  $region8: #{_lambda_.33} parent=0 // loop_exit
    _

// kernel: _lambda_.41
$region0: #{_lambda_.41}
  #allocation0 [shape = 'u32[]', space=smem, size = 0x4, offset = 0x4, fixed_abs, tag = 'smem constant byte address 0x4 - core index']
  #allocation1 [shape = 'u32[144,128]{1,0:T(1,128)}', space=vmem, size = 0x12000, scoped, tag = 'internal scratch']
  #allocation2 [shape = 'f32[8,128]{1,0:T(8,128)}', space=vmem, size = 0x1000, scoped, tag = 'scratch operand']
  %s0 = inlined_call_operand.vmem [shape: bf16[1,8,128], index: 0, kind: input, shape index: {}]
  %s1 = inlined_call_operand.vmem [shape: bf16[1,128,128], index: 1, kind: input, shape index: {}]
  %s2 = inlined_call_operand.vmem [shape: f32[1,128], index: 2, kind: input, shape index: {}]
  %s3 = inlined_call_operand.vmem [shape: bf16[8,128], index: 3, kind: output, shape index: {}]
  %s4 = sld [smem:[#allocation0]]
  $region30: #{_lambda_.41} parent=0
    _
  %s6 = ssub.s32 1, %s4
  %s7 = scalar_select 0, %s6, %s4
  // Predicated region
  $region2: #{_lambda_.41} parent=0 // pred_check
    _
  $region3: #{_lambda_.41} parent=0 // pred_check_branch
    %9 = sbr.rel (0) target = $region5
  $region4: #{_lambda_.41} parent=0 // pred_region
    _
  $region5: #{_lambda_.41} parent=0 // pred_fallthru
    _
  // Predicated region
  $region6: #{_lambda_.41} parent=0 // pred_check
    _
  $region7: #{_lambda_.41} parent=0 // pred_check_branch
    %11 = sbr.rel (0) target = $region9
  $region8: #{_lambda_.41} parent=0 // pred_region
    _
  $region9: #{_lambda_.41} parent=0 // pred_fallthru
    _
  // Predicated region
  $region10: #{_lambda_.41} parent=0 // pred_check
    _
  $region11: #{_lambda_.41} parent=0 // pred_check_branch
    %13 = sbr.rel (0) target = $region13
  $region12: #{_lambda_.41} parent=0 // pred_region
    _
  $region13: #{_lambda_.41} parent=0 // pred_fallthru
    _
  %p15 = scmp.eq.s32.totalorder 0, 0
  // Predicated region
  $region14: #{_lambda_.41} parent=0 // pred_check
    %p16 = pneg %p15
  $region15: #{_lambda_.41} parent=0 // pred_check_branch
    %18 = sbr.rel (%p16) target = $region17
  $region16: #{_lambda_.41} parent=0 // pred_region
    %19 = vst [vmem:[#allocation2] sm:$0xff] 0.0
  $region17: #{_lambda_.41} parent=0 // pred_fallthru
    _
  %v20 = vld [vmem:[#allocation2] sm:$0xff]
  %v21 = vld [vmem:[%s0] sm:$0xf]
  %v22 = vld [vmem:[%s1] sm:$0xf]
  %v23 = vld [vmem:[%s1 + $0x4] sm:$0xf]
  %v24 = vld [vmem:[%s1 + $0x8] sm:$0xf]
  %v25 = vld [vmem:[%s1 + $0xc] sm:$0xf]
  %v26 = vld [vmem:[%s1 + $0x10] sm:$0xf]
  %v27 = vld [vmem:[%s1 + $0x14] sm:$0xf]
  %v28 = vld [vmem:[%s1 + $0x18] sm:$0xf]
  %v29 = vld [vmem:[%s1 + $0x1c] sm:$0xf]
  %v30 = vld [vmem:[%s1 + $0x20] sm:$0xf]
  %v31 = vld [vmem:[%s1 + $0x24] sm:$0xf]
  %v32 = vld [vmem:[%s1 + $0x28] sm:$0xf]
  %v33 = vld [vmem:[%s1 + $0x2c] sm:$0xf]
  %v34 = vld [vmem:[%s1 + $0x30] sm:$0xf]
  %v35 = vld [vmem:[%s1 + $0x34] sm:$0xf]
  %v36 = vld [vmem:[%s1 + $0x38] sm:$0xf]
  %v37 = vld [vmem:[%s1 + $0x3c] sm:$0xf]
  %v54 = vunpack.c.l.b16 %v22
  %v55 = vunpack.c.l.b16 %v23
  %v56 = vunpack.c.l.b16 %v24
  %v57 = vunpack.c.l.b16 %v25
  %v58 = vunpack.c.l.b16 %v26
  %v59 = vunpack.c.l.b16 %v27
  %v60 = vunpack.c.l.b16 %v28
  %v61 = vunpack.c.l.b16 %v29
  %v62 = vunpack.c.l.b16 %v30
  %v63 = vunpack.c.l.b16 %v31
  %v64 = vunpack.c.l.b16 %v32
  %v65 = vunpack.c.l.b16 %v33
  %v66 = vunpack.c.l.b16 %v34
  %v67 = vunpack.c.l.b16 %v35
  %v68 = vunpack.c.l.b16 %v36
  %v69 = vunpack.c.l.b16 %v37
  %v70 = vpack.c.b16 %v55, %v54
  %v71 = vpack.c.b16 %v57, %v56
  %v72 = vpack.c.b16 %v59, %v58
  %v73 = vpack.c.b16 %v61, %v60
  %v74 = vpack.c.b16 %v63, %v62
  %v75 = vpack.c.b16 %v65, %v64
  %v76 = vpack.c.b16 %v67, %v66
  %v77 = vpack.c.b16 %v69, %v68
  %86 = vmatprep.subr.bf16.mxu0 0
  %87 = vmatpush1.bf16.msra.mxu0 %v77
  %88 = vmatprep.subr.bf16.mxu0 0
  %89 = vmatpush1.bf16.msra.mxu0 %v76
  %90 = vmatprep.subr.bf16.mxu0 0
  %91 = vmatpush1.bf16.msra.mxu0 %v75
  %92 = vmatprep.subr.bf16.mxu0 0
  %93 = vmatpush1.bf16.msra.mxu0 %v74
  %94 = vmatprep.subr.bf16.mxu0 0
  %95 = vmatpush1.bf16.msra.mxu0 %v73
  %96 = vmatprep.subr.bf16.mxu0 0
  %97 = vmatpush1.bf16.msra.mxu0 %v72
  %98 = vmatprep.subr.bf16.mxu0 0
  %99 = vmatpush1.bf16.msra.mxu0 %v71
  %100 = vmatprep.subr.bf16.mxu0 0
  %101 = vmatpush1.bf16.msra.mxu0 %v70
  %102 = vmatprep.subr.bf16.mxu0 0
  %103 = vmatpush2.bf16.msra.mxu0 0
  %104 = vmatprep.subr.bf16.mxu0 0
  %105 = vmatpush2.bf16.msra.mxu0 0
  %106 = vmatprep.subr.bf16.mxu0 0
  %107 = vmatpush2.bf16.msra.mxu0 0
  %108 = vmatprep.subr.bf16.mxu0 0
  %109 = vmatpush2.bf16.msra.mxu0 0
  %110 = vmatprep.subr.bf16.mxu0 0
  %111 = vmatpush2.bf16.msra.mxu0 0
  %112 = vmatprep.subr.bf16.mxu0 0
  %113 = vmatpush2.bf16.msra.mxu0 0
  %114 = vmatprep.subr.bf16.mxu0 0
  %115 = vmatpush2.bf16.msra.mxu0 0
  %116 = vmatprep.subr.bf16.mxu0 0
  %117 = vmatpush2.bf16.msra.mxu0 0
  %118 = vmatprep.mubr.bf16.mxu0 0
  %119 = vmatmul.mubr.bf16.gmra.mxu0 %v21
  %v120 = vpop.f32.mrf.mxu0
  %v121 = vadd.f32 0.0, %v120
  %v122 = vpop.f32.mrf.mxu0
  %v123 = vpop.f32.mrf.mxu0
  %v124 = vpop.f32.mrf.mxu0
  %125 = vdwg.mxu0
  %v126 = vadd.f32 %v20, %v121
  %127 = vst [vmem:[#allocation2] sm:$0xff] %v126
  // Predicated region
  $region18: #{_lambda_.41} parent=0 // pred_check
    %p128 = pneg %p15
  $region19: #{_lambda_.41} parent=0 // pred_check_branch
    %130 = sbr.rel (%p128) target = $region21
  $region20: #{_lambda_.41} parent=0 // pred_region
    %v131 = vld [vmem:[#allocation2] sm:$0xff]
    %v132 = vld [vmem:[%s2] sm:$0x1]
    %v134 = vlaneseq
    %v135 = vshrl.u32 %v134, 7
    %v136 = vsub.s32 0, %v135
    %v137 = vrot.slane %v132, %v136
    %v139 = vadd.f32 %v131, %v137
    %v140 = vpack.c.bf16 %v139, %v139
    %141 = vst [vmem:[%s3] sm:$0xf] %v140
  $region21: #{_lambda_.41} parent=0 // pred_fallthru
    _
  // Predicated region
  $region22: #{_lambda_.41} parent=0 // pred_check
    _
  $region23: #{_lambda_.41} parent=0 // pred_check_branch
    %143 = sbr.rel (0) target = $region25
  $region24: #{_lambda_.41} parent=0 // pred_region
    _
  $region25: #{_lambda_.41} parent=0 // pred_fallthru
    _
  // Predicated region
  $region26: #{_lambda_.41} parent=0 // pred_check
    _
  $region27: #{_lambda_.41} parent=0 // pred_check_branch
    %145 = sbr.rel (0) target = $region29
  $region28: #{_lambda_.41} parent=0 // pred_region
    _
  $region29: #{_lambda_.41} parent=0 // pred_fallthru
    _

// kernel: _lambda_.42
$region0: #{_lambda_.42}
  #allocation0 [shape = 'u32[]', space=smem, size = 0x4, offset = 0x4, fixed_abs, tag = 'smem constant byte address 0x4 - core index']
  #allocation1 [shape = 'u32[144,128]{1,0:T(1,128)}', space=vmem, size = 0x12000, scoped, tag = 'internal scratch']
  #allocation2 [shape = 'f32[8,128]{1,0:T(8,128)}', space=vmem, size = 0x1000, scoped, tag = 'scratch operand']
  %s0 = inlined_call_operand.vmem [shape: bf16[1,8,128], index: 0, kind: input, shape index: {}]
  %s1 = inlined_call_operand.vmem [shape: bf16[1,128,128], index: 1, kind: input, shape index: {}]
  %s2 = inlined_call_operand.vmem [shape: f32[1,128], index: 2, kind: input, shape index: {}]
  %s3 = inlined_call_operand.vmem [shape: bf16[8,128], index: 3, kind: input, shape index: {}]
  %s4 = inlined_call_operand.vmem [shape: bf16[8,128], index: 4, kind: output, shape index: {}]
  %s5 = sld [smem:[#allocation0]]
  $region34: #{_lambda_.42} parent=0
    _
  %s7 = ssub.s32 1, %s5
  %s8 = scalar_select 0, %s7, %s5
  // Predicated region
  $region2: #{_lambda_.42} parent=0 // pred_check
    _
  $region3: #{_lambda_.42} parent=0 // pred_check_branch
    %10 = sbr.rel (0) target = $region5
  $region4: #{_lambda_.42} parent=0 // pred_region
    _
  $region5: #{_lambda_.42} parent=0 // pred_fallthru
    _
  // Predicated region
  $region6: #{_lambda_.42} parent=0 // pred_check
    _
  $region7: #{_lambda_.42} parent=0 // pred_check_branch
    %12 = sbr.rel (0) target = $region9
  $region8: #{_lambda_.42} parent=0 // pred_region
    _
  $region9: #{_lambda_.42} parent=0 // pred_fallthru
    _
  // Predicated region
  $region10: #{_lambda_.42} parent=0 // pred_check
    _
  $region11: #{_lambda_.42} parent=0 // pred_check_branch
    %14 = sbr.rel (0) target = $region13
  $region12: #{_lambda_.42} parent=0 // pred_region
    _
  $region13: #{_lambda_.42} parent=0 // pred_fallthru
    _
  // Predicated region
  $region14: #{_lambda_.42} parent=0 // pred_check
    _
  $region15: #{_lambda_.42} parent=0 // pred_check_branch
    %16 = sbr.rel (0) target = $region17
  $region16: #{_lambda_.42} parent=0 // pred_region
    _
  $region17: #{_lambda_.42} parent=0 // pred_fallthru
    _
  %p18 = scmp.eq.s32.totalorder 0, 0
  // Predicated region
  $region18: #{_lambda_.42} parent=0 // pred_check
    %p19 = pneg %p18
  $region19: #{_lambda_.42} parent=0 // pred_check_branch
    %21 = sbr.rel (%p19) target = $region21
  $region20: #{_lambda_.42} parent=0 // pred_region
    %22 = vst [vmem:[#allocation2] sm:$0xff] 0.0
  $region21: #{_lambda_.42} parent=0 // pred_fallthru
    _
  %v23 = vld [vmem:[#allocation2] sm:$0xff]
  %v24 = vld [vmem:[%s0] sm:$0xf]
  %v25 = vld [vmem:[%s1] sm:$0xf]
  %v26 = vld [vmem:[%s1 + $0x4] sm:$0xf]
  %v27 = vld [vmem:[%s1 + $0x8] sm:$0xf]
  %v28 = vld [vmem:[%s1 + $0xc] sm:$0xf]
  %v29 = vld [vmem:[%s1 + $0x10] sm:$0xf]
  %v30 = vld [vmem:[%s1 + $0x14] sm:$0xf]
  %v31 = vld [vmem:[%s1 + $0x18] sm:$0xf]
  %v32 = vld [vmem:[%s1 + $0x1c] sm:$0xf]
  %v33 = vld [vmem:[%s1 + $0x20] sm:$0xf]
  %v34 = vld [vmem:[%s1 + $0x24] sm:$0xf]
  %v35 = vld [vmem:[%s1 + $0x28] sm:$0xf]
  %v36 = vld [vmem:[%s1 + $0x2c] sm:$0xf]
  %v37 = vld [vmem:[%s1 + $0x30] sm:$0xf]
  %v38 = vld [vmem:[%s1 + $0x34] sm:$0xf]
  %v39 = vld [vmem:[%s1 + $0x38] sm:$0xf]
  %v40 = vld [vmem:[%s1 + $0x3c] sm:$0xf]
  %v57 = vunpack.c.l.b16 %v25
  %v58 = vunpack.c.l.b16 %v26
  %v59 = vunpack.c.l.b16 %v27
  %v60 = vunpack.c.l.b16 %v28
  %v61 = vunpack.c.l.b16 %v29
  %v62 = vunpack.c.l.b16 %v30
  %v63 = vunpack.c.l.b16 %v31
  %v64 = vunpack.c.l.b16 %v32
  %v65 = vunpack.c.l.b16 %v33
  %v66 = vunpack.c.l.b16 %v34
  %v67 = vunpack.c.l.b16 %v35
  %v68 = vunpack.c.l.b16 %v36
  %v69 = vunpack.c.l.b16 %v37
  %v70 = vunpack.c.l.b16 %v38
  %v71 = vunpack.c.l.b16 %v39
  %v72 = vunpack.c.l.b16 %v40
  %v73 = vpack.c.b16 %v58, %v57
  %v74 = vpack.c.b16 %v60, %v59
  %v75 = vpack.c.b16 %v62, %v61
  %v76 = vpack.c.b16 %v64, %v63
  %v77 = vpack.c.b16 %v66, %v65
  %v78 = vpack.c.b16 %v68, %v67
  %v79 = vpack.c.b16 %v70, %v69
  %v80 = vpack.c.b16 %v72, %v71
  %89 = vmatprep.subr.bf16.mxu0 0
  %90 = vmatpush1.bf16.msra.mxu0 %v80
  %91 = vmatprep.subr.bf16.mxu0 0
  %92 = vmatpush1.bf16.msra.mxu0 %v79
  %93 = vmatprep.subr.bf16.mxu0 0
  %94 = vmatpush1.bf16.msra.mxu0 %v78
  %95 = vmatprep.subr.bf16.mxu0 0
  %96 = vmatpush1.bf16.msra.mxu0 %v77
  %97 = vmatprep.subr.bf16.mxu0 0
  %98 = vmatpush1.bf16.msra.mxu0 %v76
  %99 = vmatprep.subr.bf16.mxu0 0
  %100 = vmatpush1.bf16.msra.mxu0 %v75
  %101 = vmatprep.subr.bf16.mxu0 0
  %102 = vmatpush1.bf16.msra.mxu0 %v74
  %103 = vmatprep.subr.bf16.mxu0 0
  %104 = vmatpush1.bf16.msra.mxu0 %v73
  %105 = vmatprep.subr.bf16.mxu0 0
  %106 = vmatpush2.bf16.msra.mxu0 0
  %107 = vmatprep.subr.bf16.mxu0 0
  %108 = vmatpush2.bf16.msra.mxu0 0
  %109 = vmatprep.subr.bf16.mxu0 0
  %110 = vmatpush2.bf16.msra.mxu0 0
  %111 = vmatprep.subr.bf16.mxu0 0
  %112 = vmatpush2.bf16.msra.mxu0 0
  %113 = vmatprep.subr.bf16.mxu0 0
  %114 = vmatpush2.bf16.msra.mxu0 0
  %115 = vmatprep.subr.bf16.mxu0 0
  %116 = vmatpush2.bf16.msra.mxu0 0
  %117 = vmatprep.subr.bf16.mxu0 0
  %118 = vmatpush2.bf16.msra.mxu0 0
  %119 = vmatprep.subr.bf16.mxu0 0
  %120 = vmatpush2.bf16.msra.mxu0 0
  %121 = vmatprep.mubr.bf16.mxu0 0
  %122 = vmatmul.mubr.bf16.gmra.mxu0 %v24
  %v123 = vpop.f32.mrf.mxu0
  %v124 = vadd.f32 0.0, %v123
  %v125 = vpop.f32.mrf.mxu0
  %v126 = vpop.f32.mrf.mxu0
  %v127 = vpop.f32.mrf.mxu0
  %128 = vdwg.mxu0
  %v129 = vadd.f32 %v23, %v124
  %130 = vst [vmem:[#allocation2] sm:$0xff] %v129
  // Predicated region
  $region22: #{_lambda_.42} parent=0 // pred_check
    %p131 = pneg %p18
  $region23: #{_lambda_.42} parent=0 // pred_check_branch
    %133 = sbr.rel (%p131) target = $region25
  $region24: #{_lambda_.42} parent=0 // pred_region
    %v134 = vld [vmem:[#allocation2] sm:$0xff]
    %v135 = vld [vmem:[%s2] sm:$0x1]
    %v137 = vlaneseq
    %v138 = vshrl.u32 %v137, 7
    %v139 = vsub.s32 0, %v138
    %v140 = vrot.slane %v135, %v139
    %v142 = vadd.f32 %v134, %v140
    %v143 = vld [vmem:[%s3] sm:$0xf]
    %v144 = vunpack.c.l.bf16 %v143
    %v145 = vadd.f32 %v142, %v144
    %v146 = vmax.f32 %v145, 0.0
    %v147 = vpack.c.bf16 %v146, %v146
    %148 = vst [vmem:[%s4] sm:$0xf] %v147
  $region25: #{_lambda_.42} parent=0 // pred_fallthru
    _
  // Predicated region
  $region26: #{_lambda_.42} parent=0 // pred_check
    _
  $region27: #{_lambda_.42} parent=0 // pred_check_branch
    %150 = sbr.rel (0) target = $region29
  $region28: #{_lambda_.42} parent=0 // pred_region
    _
  $region29: #{_lambda_.42} parent=0 // pred_fallthru
    _
  // Predicated region
  $region30: #{_lambda_.42} parent=0 // pred_check
    _
  $region31: #{_lambda_.42} parent=0 // pred_check_branch
    %152 = sbr.rel (0) target = $region33
  $region32: #{_lambda_.42} parent=0 // pred_region
    _
  $region33: #{_lambda_.42} parent=0 // pred_fallthru
    _

// kernel: _lambda_.43
$region0: #{_lambda_.43}
  #allocation0 [shape = 'u32[]', space=smem, size = 0x4, offset = 0x4, fixed_abs, tag = 'smem constant byte address 0x4 - core index']
  #allocation1 [shape = 'u32[144,128]{1,0:T(1,128)}', space=vmem, size = 0x12000, scoped, tag = 'internal scratch']
  #allocation2 [shape = 'f32[8,128]{1,0:T(8,128)}', space=vmem, size = 0x1000, scoped, tag = 'scratch operand']
  %s0 = inlined_call_operand.vmem [shape: bf16[1,8,128], index: 0, kind: input, shape index: {}]
  %s1 = inlined_call_operand.vmem [shape: bf16[1,128,128], index: 1, kind: input, shape index: {}]
  %s2 = inlined_call_operand.vmem [shape: f32[1,128], index: 2, kind: input, shape index: {}]
  %s3 = inlined_call_operand.vmem [shape: bf16[8,128], index: 3, kind: output, shape index: {}]
  %s4 = sld [smem:[#allocation0]]
  $region30: #{_lambda_.43} parent=0
    _
  %s6 = ssub.s32 1, %s4
  %s7 = scalar_select 0, %s6, %s4
  // Predicated region
  $region2: #{_lambda_.43} parent=0 // pred_check
    _
  $region3: #{_lambda_.43} parent=0 // pred_check_branch
    %9 = sbr.rel (0) target = $region5
  $region4: #{_lambda_.43} parent=0 // pred_region
    _
  $region5: #{_lambda_.43} parent=0 // pred_fallthru
    _
  // Predicated region
  $region6: #{_lambda_.43} parent=0 // pred_check
    _
  $region7: #{_lambda_.43} parent=0 // pred_check_branch
    %11 = sbr.rel (0) target = $region9
  $region8: #{_lambda_.43} parent=0 // pred_region
    _
  $region9: #{_lambda_.43} parent=0 // pred_fallthru
    _
  // Predicated region
  $region10: #{_lambda_.43} parent=0 // pred_check
    _
  $region11: #{_lambda_.43} parent=0 // pred_check_branch
    %13 = sbr.rel (0) target = $region13
  $region12: #{_lambda_.43} parent=0 // pred_region
    _
  $region13: #{_lambda_.43} parent=0 // pred_fallthru
    _
  %p15 = scmp.eq.s32.totalorder 0, 0
  // Predicated region
  $region14: #{_lambda_.43} parent=0 // pred_check
    %p16 = pneg %p15
  $region15: #{_lambda_.43} parent=0 // pred_check_branch
    %18 = sbr.rel (%p16) target = $region17
  $region16: #{_lambda_.43} parent=0 // pred_region
    %19 = vst [vmem:[#allocation2] sm:$0xff] 0.0
  $region17: #{_lambda_.43} parent=0 // pred_fallthru
    _
  %v20 = vld [vmem:[#allocation2] sm:$0xff]
  %v21 = vld [vmem:[%s0] sm:$0xf]
  %v22 = vld [vmem:[%s1] sm:$0xf]
  %v23 = vld [vmem:[%s1 + $0x4] sm:$0xf]
  %v24 = vld [vmem:[%s1 + $0x8] sm:$0xf]
  %v25 = vld [vmem:[%s1 + $0xc] sm:$0xf]
  %v26 = vld [vmem:[%s1 + $0x10] sm:$0xf]
  %v27 = vld [vmem:[%s1 + $0x14] sm:$0xf]
  %v28 = vld [vmem:[%s1 + $0x18] sm:$0xf]
  %v29 = vld [vmem:[%s1 + $0x1c] sm:$0xf]
  %v30 = vld [vmem:[%s1 + $0x20] sm:$0xf]
  %v31 = vld [vmem:[%s1 + $0x24] sm:$0xf]
  %v32 = vld [vmem:[%s1 + $0x28] sm:$0xf]
  %v33 = vld [vmem:[%s1 + $0x2c] sm:$0xf]
  %v34 = vld [vmem:[%s1 + $0x30] sm:$0xf]
  %v35 = vld [vmem:[%s1 + $0x34] sm:$0xf]
  %v36 = vld [vmem:[%s1 + $0x38] sm:$0xf]
  %v37 = vld [vmem:[%s1 + $0x3c] sm:$0xf]
  %v54 = vunpack.c.l.b16 %v22
  %v55 = vunpack.c.l.b16 %v23
  %v56 = vunpack.c.l.b16 %v24
  %v57 = vunpack.c.l.b16 %v25
  %v58 = vunpack.c.l.b16 %v26
  %v59 = vunpack.c.l.b16 %v27
  %v60 = vunpack.c.l.b16 %v28
  %v61 = vunpack.c.l.b16 %v29
  %v62 = vunpack.c.l.b16 %v30
  %v63 = vunpack.c.l.b16 %v31
  %v64 = vunpack.c.l.b16 %v32
  %v65 = vunpack.c.l.b16 %v33
  %v66 = vunpack.c.l.b16 %v34
  %v67 = vunpack.c.l.b16 %v35
  %v68 = vunpack.c.l.b16 %v36
  %v69 = vunpack.c.l.b16 %v37
  %v70 = vpack.c.b16 %v55, %v54
  %v71 = vpack.c.b16 %v57, %v56
  %v72 = vpack.c.b16 %v59, %v58
  %v73 = vpack.c.b16 %v61, %v60
  %v74 = vpack.c.b16 %v63, %v62
  %v75 = vpack.c.b16 %v65, %v64
  %v76 = vpack.c.b16 %v67, %v66
  %v77 = vpack.c.b16 %v69, %v68
  %86 = vmatprep.subr.bf16.mxu0 0
  %87 = vmatpush1.bf16.msra.mxu0 %v77
  %88 = vmatprep.subr.bf16.mxu0 0
  %89 = vmatpush1.bf16.msra.mxu0 %v76
  %90 = vmatprep.subr.bf16.mxu0 0
  %91 = vmatpush1.bf16.msra.mxu0 %v75
  %92 = vmatprep.subr.bf16.mxu0 0
  %93 = vmatpush1.bf16.msra.mxu0 %v74
  %94 = vmatprep.subr.bf16.mxu0 0
  %95 = vmatpush1.bf16.msra.mxu0 %v73
  %96 = vmatprep.subr.bf16.mxu0 0
  %97 = vmatpush1.bf16.msra.mxu0 %v72
  %98 = vmatprep.subr.bf16.mxu0 0
  %99 = vmatpush1.bf16.msra.mxu0 %v71
  %100 = vmatprep.subr.bf16.mxu0 0
  %101 = vmatpush1.bf16.msra.mxu0 %v70
  %102 = vmatprep.subr.bf16.mxu0 0
  %103 = vmatpush2.bf16.msra.mxu0 0
  %104 = vmatprep.subr.bf16.mxu0 0
  %105 = vmatpush2.bf16.msra.mxu0 0
  %106 = vmatprep.subr.bf16.mxu0 0
  %107 = vmatpush2.bf16.msra.mxu0 0
  %108 = vmatprep.subr.bf16.mxu0 0
  %109 = vmatpush2.bf16.msra.mxu0 0
  %110 = vmatprep.subr.bf16.mxu0 0
  %111 = vmatpush2.bf16.msra.mxu0 0
  %112 = vmatprep.subr.bf16.mxu0 0
  %113 = vmatpush2.bf16.msra.mxu0 0
  %114 = vmatprep.subr.bf16.mxu0 0
  %115 = vmatpush2.bf16.msra.mxu0 0
  %116 = vmatprep.subr.bf16.mxu0 0
  %117 = vmatpush2.bf16.msra.mxu0 0
  %118 = vmatprep.mubr.bf16.mxu0 0
  %119 = vmatmul.mubr.bf16.gmra.mxu0 %v21
  %v120 = vpop.f32.mrf.mxu0
  %v121 = vadd.f32 0.0, %v120
  %v122 = vpop.f32.mrf.mxu0
  %v123 = vpop.f32.mrf.mxu0
  %v124 = vpop.f32.mrf.mxu0
  %125 = vdwg.mxu0
  %v126 = vadd.f32 %v20, %v121
  %127 = vst [vmem:[#allocation2] sm:$0xff] %v126
  // Predicated region
  $region18: #{_lambda_.43} parent=0 // pred_check
    %p128 = pneg %p15
  $region19: #{_lambda_.43} parent=0 // pred_check_branch
    %130 = sbr.rel (%p128) target = $region21
  $region20: #{_lambda_.43} parent=0 // pred_region
    %v131 = vld [vmem:[#allocation2] sm:$0xff]
    %v132 = vld [vmem:[%s2] sm:$0x1]
    %v134 = vlaneseq
    %v135 = vshrl.u32 %v134, 7
    %v136 = vsub.s32 0, %v135
    %v137 = vrot.slane %v132, %v136
    %v139 = vadd.f32 %v131, %v137
    %v140 = vmax.f32 %v139, 0.0
    %v141 = vpack.c.bf16 %v140, %v140
    %142 = vst [vmem:[%s3] sm:$0xf] %v141
  $region21: #{_lambda_.43} parent=0 // pred_fallthru
    _
  // Predicated region
  $region22: #{_lambda_.43} parent=0 // pred_check
    _
  $region23: #{_lambda_.43} parent=0 // pred_check_branch
    %144 = sbr.rel (0) target = $region25
  $region24: #{_lambda_.43} parent=0 // pred_region
    _
  $region25: #{_lambda_.43} parent=0 // pred_fallthru
    _
  // Predicated region
  $region26: #{_lambda_.43} parent=0 // pred_check
    _
  $region27: #{_lambda_.43} parent=0 // pred_check_branch
    %146 = sbr.rel (0) target = $region29
  $region28: #{_lambda_.43} parent=0 // pred_region
    _
  $region29: #{_lambda_.43} parent=0 // pred_fallthru
    _

// kernel: _lambda_.40
$region0: #{_lambda_.40}
  #allocation0 [shape = 'u32[]', space=smem, size = 0x4, offset = 0x4, fixed_abs, tag = 'smem constant byte address 0x4 - core index']
  #allocation1 [shape = 'u32[144,128]{1,0:T(1,128)}', space=vmem, size = 0x12000, scoped, tag = 'internal scratch']
  #allocation2 [shape = 'f32[8,128]{1,0:T(8,128)}', space=vmem, size = 0x1000, scoped, tag = 'scratch operand']
  %s0 = inlined_call_operand.vmem [shape: bf16[9,8,128], index: 0, kind: input, shape index: {}]
  %s1 = inlined_call_operand.vmem [shape: bf16[9,128,128], index: 1, kind: input, shape index: {}]
  %s2 = inlined_call_operand.vmem [shape: f32[1,128], index: 2, kind: input, shape index: {}]
  %s3 = inlined_call_operand.vmem [shape: bf16[8,128], index: 3, kind: output, shape index: {}]
  %s4 = sld [smem:[#allocation0]]
  $region53: #{_lambda_.40} parent=0
    _
  %s6 = ssub.s32 1, %s4
  %s7 = scalar_select 0, %s6, %s4
  loop: start=0, step=1, limit=11
  $region2: #{_lambda_.40} parent=0 // loop_pre_header
    _
  $region3: #{_lambda_.40} parent=0 // loop_header
    %s9 = sphi 0, %s13
    %p10 = scmp.ge.s32.totalorder %s9, 11
    %s16 = sphi 0, %s28
    %s17 = sphi 0, %s24
    %s18 = sphi 0, %s16
    %s19 = sphi 0, %s17
    %s20 = sphi 0, %s18
    %s21 = sphi 0, %s19
    %s33 = sphi 0, %s35
    %s36 = sphi 0, %s33
    %s37 = sphi 0, %s36
    %s53 = sphi 0, %s37
    %s59 = sphi 0, %s61
    %s62 = sphi 0, %s59
    %s63 = sphi 0, %s62
    %s79 = sphi 0, %s63
    %s83 = sphi 0, %s83
    %s85 = sphi 0, %s83
    %s86 = sphi 0, %s85
    %s100 = sphi 0, %s86
    %s106 = sphi 0, %s108
    %s109 = sphi 0, %s106
    %s110 = sphi 0, %s109
    %s126 = sphi 0, %s110
  $region4: #{_lambda_.40} parent=0 // loop_header_branch
    %12 = sbr.rel (%p10) target = $region8
  $region5: #{_lambda_.40} parent=0 // loop_body
    %s14 = ssub.s32 %s9, 1
    %s15 = ssub.s32 %s9, 2
    %s22 = sadd.s32 1, %s17
    %p23 = scmp.ge.s32.totalorder %s22, 9
    %s24 = scalar_select %p23, 0, %s22
    %s25 = sadd.s32 1, %s16
    %s26 = scalar_select %p23, %s25, %s16
    %p27 = scmp.ge.s32.totalorder %s26, 1
    %s28 = scalar_select %p27, 0, %s26
    %s29 = ssub.s32 %s17, %s24
    %s30 = ssub.s32 %s16, %s28
    %s31 = sor.u32 %s29, %s30
    %p32 = scmp.eq.s32.totalorder %s31, 0
    %s34 = sadd.s32 %s33, 1
    %s35 = scalar_select %p32, %s33, %s34
    %p38 = pneg %p32
    %p39 = scmp.eq.s32.totalorder %s9, 8
    %p40 = por %p38, %p39
    %p41 = scmp.ne.s32.totalorder %s33, %s36
    %p42 = scmp.eq.s32.totalorder %s9, 0
    %p43 = por %p41, %p42
    %p44 = scmp.ne.s32.totalorder %s33, %s36
    %p45 = scmp.eq.s32.totalorder %s14, 8
    %p46 = por %p44, %p45
    %p47 = scmp.ne.s32.totalorder %s36, %s37
    %p48 = scmp.eq.s32.totalorder %s14, 0
    %p49 = por %p47, %p48
    %p50 = scmp.ne.s32.totalorder %s36, %s37
    %p51 = scmp.eq.s32.totalorder %s15, 8
    %p52 = por %p50, %p51
    %p54 = scmp.ne.s32.totalorder %s37, %s53
    %p55 = scmp.eq.s32.totalorder %s15, 0
    %p56 = por %p54, %p55
    %s57 = ssub.s32 %s17, %s24
    %p58 = scmp.eq.s32.totalorder %s57, 0
    %s60 = sadd.s32 %s59, 1
    %s61 = scalar_select %p58, %s59, %s60
    %p64 = pneg %p58
    %p65 = scmp.eq.s32.totalorder %s9, 8
    %p66 = por %p64, %p65
    %p67 = scmp.ne.s32.totalorder %s59, %s62
    %p68 = scmp.eq.s32.totalorder %s9, 0
    %p69 = por %p67, %p68
    %p70 = scmp.ne.s32.totalorder %s59, %s62
    %p71 = scmp.eq.s32.totalorder %s14, 8
    %p72 = por %p70, %p71
    %p73 = scmp.ne.s32.totalorder %s62, %s63
    %p74 = scmp.eq.s32.totalorder %s14, 0
    %p75 = por %p73, %p74
    %p76 = scmp.ne.s32.totalorder %s62, %s63
    %p77 = scmp.eq.s32.totalorder %s15, 8
    %p78 = por %p76, %p77
    %p80 = scmp.ne.s32.totalorder %s63, %s79
    %p81 = scmp.eq.s32.totalorder %s15, 0
    %p82 = por %p80, %p81
    %s84 = sadd.s32 %s83, 1
    %p87 = scmp.eq.s32.totalorder %s9, 8
    %p88 = scmp.ne.s32.totalorder %s83, %s85
    %p89 = scmp.eq.s32.totalorder %s9, 0
    %p90 = por %p88, %p89
    %p91 = scmp.ne.s32.totalorder %s83, %s85
    %p92 = scmp.eq.s32.totalorder %s14, 8
    %p93 = por %p91, %p92
    %p94 = scmp.ne.s32.totalorder %s85, %s86
    %p95 = scmp.eq.s32.totalorder %s14, 0
    %p96 = por %p94, %p95
    %p97 = scmp.ne.s32.totalorder %s85, %s86
    %p98 = scmp.eq.s32.totalorder %s15, 8
    %p99 = por %p97, %p98
    %p101 = scmp.ne.s32.totalorder %s86, %s100
    %p102 = scmp.eq.s32.totalorder %s15, 0
    %p103 = por %p101, %p102
    %s104 = ssub.s32 %s16, %s28
    %p105 = scmp.eq.s32.totalorder %s104, 0
    %s107 = sadd.s32 %s106, 1
    %s108 = scalar_select %p105, %s106, %s107
    %p111 = pneg %p105
    %p112 = scmp.eq.s32.totalorder %s9, 8
    %p113 = por %p111, %p112
    %p114 = scmp.ne.s32.totalorder %s106, %s109
    %p115 = scmp.eq.s32.totalorder %s9, 0
    %p116 = por %p114, %p115
    %p117 = scmp.ne.s32.totalorder %s106, %s109
    %p118 = scmp.eq.s32.totalorder %s14, 8
    %p119 = por %p117, %p118
    %p120 = scmp.ne.s32.totalorder %s109, %s110
    %p121 = scmp.eq.s32.totalorder %s14, 0
    %p122 = por %p120, %p121
    %p123 = scmp.ne.s32.totalorder %s109, %s110
    %p124 = scmp.eq.s32.totalorder %s15, 8
    %p125 = por %p123, %p124
    %p127 = scmp.ne.s32.totalorder %s110, %s126
    %p128 = scmp.eq.s32.totalorder %s15, 0
    %p129 = por %p127, %p128
    %p130 = scmp.le.s32.totalorder 1, %s9
    %p131 = scmp.lt.s32.totalorder %s9, 10
    %p132 = pnand %p130, %p131
    %p133 = pneg %p132
    // Predicated region
    $region9: #{_lambda_.40} parent=5 // pred_check
      _
    $region10: #{_lambda_.40} parent=5 // pred_check_branch
      %135 = sbr.rel (%p132) target = $region12
    $region11: #{_lambda_.40} parent=5 // pred_region
      %s136 = ssub.s32 %s9, 1
      // Predicated region
      $region13: #{_lambda_.40} parent=11 // pred_check
        %p137 = pneg %p96
      $region14: #{_lambda_.40} parent=11 // pred_check_branch
        %139 = sbr.rel (%p137) target = $region16
      $region15: #{_lambda_.40} parent=11 // pred_region
        _
      $region16: #{_lambda_.40} parent=11 // pred_fallthru
        _
    $region12: #{_lambda_.40} parent=5 // pred_fallthru
      _
    %p140 = scmp.lt.s32.totalorder %s9, 9
    // Predicated region
    $region17: #{_lambda_.40} parent=5 // pred_check
      %p141 = pneg %p140
    $region18: #{_lambda_.40} parent=5 // pred_check_branch
      %143 = sbr.rel (%p141) target = $region20
    $region19: #{_lambda_.40} parent=5 // pred_region
      // Predicated region
      $region21: #{_lambda_.40} parent=19 // pred_check
        %p144 = pneg %p43
      $region22: #{_lambda_.40} parent=19 // pred_check_branch
        %146 = sbr.rel (%p144) target = $region24
      $region23: #{_lambda_.40} parent=19 // pred_region
        %p147 = scmp.lt.s32.totalorder %s17, 8
        %s148 = scalar_select %p147, %s17, 8
        %p149 = scmp.lt.s32.totalorder %s16, 0
        %s150 = scalar_select %p149, %s16, 0
        %s151 = sadd.s32 %s150, %s148
        %s152 = smul.addr %s151, 4
        %s153 = scalar_lea.vmem %s0, %s152
      $region24: #{_lambda_.40} parent=19 // pred_fallthru
        _
      // Predicated region
      $region25: #{_lambda_.40} parent=19 // pred_check
        %p154 = pneg %p69
      $region26: #{_lambda_.40} parent=19 // pred_check_branch
        %156 = sbr.rel (%p154) target = $region28
      $region27: #{_lambda_.40} parent=19 // pred_region
        %p157 = scmp.lt.s32.totalorder %s17, 8
        %s158 = scalar_select %p157, %s17, 8
        %s159 = smul.addr %s158, 16
        %s160 = smul.addr %s159, 4
        %s161 = scalar_lea.vmem %s1, %s160
      $region28: #{_lambda_.40} parent=19 // pred_fallthru
        _
    $region20: #{_lambda_.40} parent=5 // pred_fallthru
      _
    %p162 = scmp.le.s32.totalorder 1, %s9
    %p163 = scmp.lt.s32.totalorder %s9, 10
    %p164 = pnand %p162, %p163
    %p165 = pneg %p164
    // Predicated region
    $region29: #{_lambda_.40} parent=5 // pred_check
      _
    $region30: #{_lambda_.40} parent=5 // pred_check_branch
      %167 = sbr.rel (%p164) target = $region32
    $region31: #{_lambda_.40} parent=5 // pred_region
      %s168 = ssub.s32 %s9, 1
      %p169 = scmp.lt.s32.totalorder %s19, 8
      %s170 = scalar_select %p169, %s19, 8
      %p171 = scmp.lt.s32.totalorder %s18, 0
      %s172 = scalar_select %p171, %s18, 0
      %s173 = sadd.s32 %s172, %s170
      %s174 = smul.addr %s173, 4
      %s175 = scalar_lea.vmem %s0, %s174
      %p176 = pneg %p49
      %p177 = pneg %p46
      %p178 = scmp.lt.s32.totalorder %s19, 8
      %s179 = scalar_select %p178, %s19, 8
      %s180 = smul.addr %s179, 16
      %s181 = smul.addr %s180, 4
      %s182 = scalar_lea.vmem %s1, %s181
      %p183 = pneg %p75
      %p184 = pneg %p72
      %p185 = pneg %p96
      %p186 = pneg %p93
      %p187 = pneg %p122
      %p188 = pneg %p119
      %p189 = scmp.lt.s32.totalorder %s18, 0
      %s190 = scalar_select %p189, %s18, 0
      %s191 = smul.addr %s190, 4
      %s192 = scalar_lea.vmem %s3, %s191
      %p193 = scmp.lt.s32.totalorder %s19, 8
      %s194 = scalar_select %p193, %s19, 8
      %p195 = scmp.lt.s32.totalorder %s18, 0
      %s196 = scalar_select %p195, %s18, 0
      %s197 = sadd.s32 %s196, %s194
      %s198 = smul.addr %s197, 4
      %s199 = scalar_lea.vmem %s0, %s198
      %p200 = scmp.lt.s32.totalorder %s19, 8
      %s201 = scalar_select %p200, %s19, 8
      %s202 = smul.addr %s201, 16
      %s203 = smul.addr %s202, 4
      %s204 = scalar_lea.vmem %s1, %s203
      %p205 = scmp.lt.s32.totalorder %s18, 0
      %s206 = scalar_select %p205, %s18, 0
      %s207 = smul.addr %s206, 4
      %s208 = scalar_lea.vmem %s3, %s207
      %p210 = scmp.eq.s32.totalorder %s19, 0
      // Predicated region
      $region33: #{_lambda_.40} parent=31 // pred_check
        %p211 = pneg %p210
      $region34: #{_lambda_.40} parent=31 // pred_check_branch
        %213 = sbr.rel (%p211) target = $region36
      $region35: #{_lambda_.40} parent=31 // pred_region
        %214 = vst [vmem:[#allocation2] sm:$0xff] 0.0
      $region36: #{_lambda_.40} parent=31 // pred_fallthru
        _
      %v215 = vld [vmem:[#allocation2] sm:$0xff]
      %v216 = vld [vmem:[%s199] sm:$0xf]
      %v217 = vld [vmem:[%s204] sm:$0xf]
      %v218 = vld [vmem:[%s204 + $0x4] sm:$0xf]
      %v219 = vld [vmem:[%s204 + $0x8] sm:$0xf]
      %v220 = vld [vmem:[%s204 + $0xc] sm:$0xf]
      %v221 = vld [vmem:[%s204 + $0x10] sm:$0xf]
      %v222 = vld [vmem:[%s204 + $0x14] sm:$0xf]
      %v223 = vld [vmem:[%s204 + $0x18] sm:$0xf]
      %v224 = vld [vmem:[%s204 + $0x1c] sm:$0xf]
      %v225 = vld [vmem:[%s204 + $0x20] sm:$0xf]
      %v226 = vld [vmem:[%s204 + $0x24] sm:$0xf]
      %v227 = vld [vmem:[%s204 + $0x28] sm:$0xf]
      %v228 = vld [vmem:[%s204 + $0x2c] sm:$0xf]
      %v229 = vld [vmem:[%s204 + $0x30] sm:$0xf]
      %v230 = vld [vmem:[%s204 + $0x34] sm:$0xf]
      %v231 = vld [vmem:[%s204 + $0x38] sm:$0xf]
      %v232 = vld [vmem:[%s204 + $0x3c] sm:$0xf]
      %v249 = vunpack.c.l.b16 %v217
      %v250 = vunpack.c.l.b16 %v218
      %v251 = vunpack.c.l.b16 %v219
      %v252 = vunpack.c.l.b16 %v220
      %v253 = vunpack.c.l.b16 %v221
      %v254 = vunpack.c.l.b16 %v222
      %v255 = vunpack.c.l.b16 %v223
      %v256 = vunpack.c.l.b16 %v224
      %v257 = vunpack.c.l.b16 %v225
      %v258 = vunpack.c.l.b16 %v226
      %v259 = vunpack.c.l.b16 %v227
      %v260 = vunpack.c.l.b16 %v228
      %v261 = vunpack.c.l.b16 %v229
      %v262 = vunpack.c.l.b16 %v230
      %v263 = vunpack.c.l.b16 %v231
      %v264 = vunpack.c.l.b16 %v232
      %v265 = vpack.c.b16 %v250, %v249
      %v266 = vpack.c.b16 %v252, %v251
      %v267 = vpack.c.b16 %v254, %v253
      %v268 = vpack.c.b16 %v256, %v255
      %v269 = vpack.c.b16 %v258, %v257
      %v270 = vpack.c.b16 %v260, %v259
      %v271 = vpack.c.b16 %v262, %v261
      %v272 = vpack.c.b16 %v264, %v263
      %281 = vmatprep.subr.bf16.mxu0 0
      %282 = vmatpush1.bf16.msra.mxu0 %v272
      %283 = vmatprep.subr.bf16.mxu0 0
      %284 = vmatpush1.bf16.msra.mxu0 %v271
      %285 = vmatprep.subr.bf16.mxu0 0
      %286 = vmatpush1.bf16.msra.mxu0 %v270
      %287 = vmatprep.subr.bf16.mxu0 0
      %288 = vmatpush1.bf16.msra.mxu0 %v269
      %289 = vmatprep.subr.bf16.mxu0 0
      %290 = vmatpush1.bf16.msra.mxu0 %v268
      %291 = vmatprep.subr.bf16.mxu0 0
      %292 = vmatpush1.bf16.msra.mxu0 %v267
      %293 = vmatprep.subr.bf16.mxu0 0
      %294 = vmatpush1.bf16.msra.mxu0 %v266
      %295 = vmatprep.subr.bf16.mxu0 0
      %296 = vmatpush1.bf16.msra.mxu0 %v265
      %297 = vmatprep.subr.bf16.mxu0 0
      %298 = vmatpush2.bf16.msra.mxu0 0
      %299 = vmatprep.subr.bf16.mxu0 0
      %300 = vmatpush2.bf16.msra.mxu0 0
      %301 = vmatprep.subr.bf16.mxu0 0
      %302 = vmatpush2.bf16.msra.mxu0 0
      %303 = vmatprep.subr.bf16.mxu0 0
      %304 = vmatpush2.bf16.msra.mxu0 0
      %305 = vmatprep.subr.bf16.mxu0 0
      %306 = vmatpush2.bf16.msra.mxu0 0
      %307 = vmatprep.subr.bf16.mxu0 0
      %308 = vmatpush2.bf16.msra.mxu0 0
      %309 = vmatprep.subr.bf16.mxu0 0
      %310 = vmatpush2.bf16.msra.mxu0 0
      %311 = vmatprep.subr.bf16.mxu0 0
      %312 = vmatpush2.bf16.msra.mxu0 0
      %313 = vmatprep.mubr.bf16.mxu0 0
      %314 = vmatmul.mubr.bf16.gmra.mxu0 %v216
      %v315 = vpop.f32.mrf.mxu0
      %v316 = vadd.f32 0.0, %v315
      %v317 = vpop.f32.mrf.mxu0
      %v318 = vpop.f32.mrf.mxu0
      %v319 = vpop.f32.mrf.mxu0
      %320 = vdwg.mxu0
      %v321 = vadd.f32 %v215, %v316
      %322 = vst [vmem:[#allocation2] sm:$0xff] %v321
      %p323 = scmp.eq.s32.totalorder %s19, 8
      // Predicated region
      $region37: #{_lambda_.40} parent=31 // pred_check
        %p324 = pneg %p323
      $region38: #{_lambda_.40} parent=31 // pred_check_branch
        %326 = sbr.rel (%p324) target = $region40
      $region39: #{_lambda_.40} parent=31 // pred_region
        %v327 = vld [vmem:[#allocation2] sm:$0xff]
        %v328 = vld [vmem:[%s2] sm:$0x1]
        %v330 = vlaneseq
        %v331 = vshrl.u32 %v330, 7
        %v332 = vsub.s32 0, %v331
        %v333 = vrot.slane %v328, %v332
        %v335 = vadd.f32 %v327, %v333
        %v336 = vmax.f32 %v335, 0.0
        %v337 = vpack.c.bf16 %v336, %v336
        %338 = vst [vmem:[%s208] sm:$0xf] %v337
      $region40: #{_lambda_.40} parent=31 // pred_fallthru
        _
      %p339 = scmp.lt.s32.totalorder %s18, 0
      %s340 = scalar_select %p339, %s18, 0
      %s341 = smul.addr %s340, 4
      %s342 = scalar_lea.vmem %s3, %s341
      // Predicated region
      $region41: #{_lambda_.40} parent=31 // pred_check
        %p343 = pneg %p119
      $region42: #{_lambda_.40} parent=31 // pred_check_branch
        %345 = sbr.rel (%p343) target = $region44
      $region43: #{_lambda_.40} parent=31 // pred_region
        _
      $region44: #{_lambda_.40} parent=31 // pred_fallthru
        _
      // Predicated region
      $region45: #{_lambda_.40} parent=31 // pred_check
        %p346 = pneg %p119
      $region46: #{_lambda_.40} parent=31 // pred_check_branch
        %348 = sbr.rel (%p346) target = $region48
      $region47: #{_lambda_.40} parent=31 // pred_region
        %p349 = scmp.lt.s32.totalorder %s18, 0
        %s350 = scalar_select %p349, %s18, 0
        %s351 = smul.addr %s350, 4
        %s352 = scalar_lea.vmem %s3, %s351
      $region48: #{_lambda_.40} parent=31 // pred_fallthru
        _
    $region32: #{_lambda_.40} parent=5 // pred_fallthru
      _
    %p353 = scmp.le.s32.totalorder 2, %s9
    // Predicated region
    $region49: #{_lambda_.40} parent=5 // pred_check
      %p354 = pneg %p353
    $region50: #{_lambda_.40} parent=5 // pred_check_branch
      %356 = sbr.rel (%p354) target = $region52
    $region51: #{_lambda_.40} parent=5 // pred_region
      %s357 = ssub.s32 %s9, 2
    $region52: #{_lambda_.40} parent=5 // pred_fallthru
      _
  $region6: #{_lambda_.40} parent=0 // loop_footer
    %s13 = sadd.s32 1, %s9
  $region7: #{_lambda_.40} parent=0 // loop_footer_branch
    %8 = sbr.rel target = $region3
  $region8: #{_lambda_.40} parent=0 // loop_exit
    _

</llo_original>
